<compile_context>
chip_gen: v7x
topology: tpu7x:2x2x1
jax: 0.10.0
libtpu: 0.0.40
codegen_flags: <defaults>
</compile_context>

<pallas_src>
import functools

import jax
import jax.numpy as jnp
from jax.experimental import pallas as pl
from jax.experimental.pallas import tpu as pltpu


# ----------------------------------------------------------------------------
# Fused Pallas kernel (root_map -> n_layers x BiLSTM -> predictor + ReLU)
# ----------------------------------------------------------------------------
def _make_fused_kernel(T, H, n_layers):
    G = 4 * H  # gates per direction (PyTorch order i, f, g, o)

    def kernel(*refs):
        x_ref, root_w_ref, root_b_ref, pred_w_ref, pred_b_ref = refs[:5]
        layer_refs = refs[5:5 + 4 * n_layers]
        y_ref = refs[5 + 4 * n_layers]

        # root_map: Conv1d(kernel_size=1) == per-timestep linear map.
        h = (jnp.dot(x_ref[...], root_w_ref[...],
                     preferred_element_type=jnp.float32)
             + root_b_ref[...])                                          # (T, E)

        def lstm_cell(gates, c):
            # gates: (1, 4H). One full-vreg sigmoid + one full-vreg tanh (EUP),
            # then pick gate lanes with static slices.
            s = jax.nn.sigmoid(gates)
            t = jnp.tanh(gates)
            i_g = s[:, 0 * H:1 * H]
            f_g = s[:, 1 * H:2 * H]
            g_g = t[:, 2 * H:3 * H]
            o_g = s[:, 3 * H:4 * H]
            c_new = f_g * c + i_g * g_g
            h_new = o_g * jnp.tanh(c_new)
            return h_new, c_new

        for l in range(n_layers):
            wih_ref, whhf_ref, whhb_ref, b_ref = layer_refs[4 * l:4 * l + 4]

            # Hoisted input projection for BOTH directions in one MXU matmul.
            # Columns [0:4H) -> forward gates' x-part, [4H:8H) -> backward's.
            gx = (jnp.dot(h, wih_ref[...], preferred_element_type=jnp.float32)
                  + b_ref[...])                                          # (T, 8H)
            whh_f = whhf_ref[...]                                        # (H, 4H)
            whh_b = whhb_ref[...]                                        # (H, 4H)

            hf = jnp.zeros((1, H), jnp.float32)
            cf = jnp.zeros((1, H), jnp.float32)
            hb = jnp.zeros((1, H), jnp.float32)
            cb = jnp.zeros((1, H), jnp.float32)
            hf_rows = [None] * T
            hb_rows = [None] * T

            # Fully unrolled recurrence (T is small & static). Forward step i
            # and backward step T-1-i are independent -> scheduler interleaves.
            for i in range(T):
                tf, tb = i, T - 1 - i
                gf = gx[tf:tf + 1, 0:G] + jnp.dot(
                    hf, whh_f, preferred_element_type=jnp.float32)
                gb = gx[tb:tb + 1, G:2 * G] + jnp.dot(
                    hb, whh_b, preferred_element_type=jnp.float32)
                hf, cf = lstm_cell(gf, cf)
                hb, cb = lstm_cell(gb, cb)
                hf_rows[tf] = hf
                hb_rows[tb] = hb

            # Assemble the dense (T, 2H) layer output once (batched store
            # pattern; no per-step masked 1x32 writes).
            h = jnp.concatenate(
                [jnp.concatenate(hf_rows, axis=0),
                 jnp.concatenate(hb_rows, axis=0)], axis=1)              # (T, 2H)

        # predictor: Conv1d(2H -> 1, k=1) + ReLU, fused over VMEM-resident h.
        y = (jnp.dot(h, pred_w_ref[...], preferred_element_type=jnp.float32)
             + pred_b_ref[...])                                          # (T, 1)
        y_ref[...] = jnp.maximum(y, 0.0)

    return kernel


# ----------------------------------------------------------------------------
# Parameters (deterministic synthetic init; shapes follow nn.Module __init__)
# ----------------------------------------------------------------------------
def init_params(key, input_size, embedding_size, hidden_size, n_layers):
    H = hidden_size
    n_keys = 2 + 2 + n_layers * 2 * 4
    keys = iter(jax.random.split(key, n_keys))

    def u(shape, scale):
        return jax.random.uniform(next(keys), shape, jnp.float32, -scale, scale)

    params = {
        # root_map: Conv1d(input_size, E, k=1) -> stored transposed (Cin, Cout)
        "root_w": u((input_size, embedding_size), 1.0 / jnp.sqrt(input_size)),
        "root_b": u((embedding_size,), 1.0 / jnp.sqrt(input_size)),
        # predictor: Conv1d(2H, 1, k=1)
        "pred_w": u((2 * H, 1), 1.0 / jnp.sqrt(2 * H)),
        "pred_b": u((1,), 1.0 / jnp.sqrt(2 * H)),
    }
    s = 1.0 / jnp.sqrt(H)
    for l in range(n_layers):
        d_in = embedding_size if l == 0 else 2 * H
        for d in range(2):  # 0 = forward, 1 = backward (reverse)
            params[f"l{l}_d{d}"] = {
                "w_ih": u((d_in, 4 * H), s),   # PyTorch weight_ih (4H, Din), transposed
                "w_hh": u((H, 4 * H), s),      # PyTorch weight_hh (4H, H), transposed
                "b_ih": u((4 * H,), s),
                "b_hh": u((4 * H,), s),
            }
    return params


def fuse_params(params, n_layers):
    """One-time host-side repack: concat fwd/bwd W_ih, sum the two biases."""
    layers = []
    for l in range(n_layers):
        pf = params[f"l{l}_d0"]
        pb = params[f"l{l}_d1"]
        wih_cat = jnp.concatenate([pf["w_ih"], pb["w_ih"]], axis=1)          # (Din, 8H)
        b_cat = jnp.concatenate(
            [pf["b_ih"] + pf["b_hh"], pb["b_ih"] + pb["b_hh"]])[None, :]     # (1, 8H)
        layers.append((wih_cat, pf["w_hh"], pb["w_hh"], b_cat))
    return {
        "root_w": params["root_w"],
        "root_b": params["root_b"][None, :],       # (1, E)
        "pred_w": params["pred_w"],                # (2H, 1)
        "pred_b": params["pred_b"][None, :],       # (1, 1)
        "layers": tuple(layers),
    }


# ----------------------------------------------------------------------------
# Forward pass: one fused pallas_call
# ----------------------------------------------------------------------------
@jax.jit
def bilstm_forward(x, fused):
    assert x.shape[0] == 1, "Only one example can be processed at once"
    xs = x[0].astype(jnp.float32)                  # (T, input_size)
    T = xs.shape[0]
    layers = fused["layers"]
    n_layers = len(layers)
    H = layers[0][1].shape[0]                      # w_hh: (H, 4H)

    inputs = [xs, fused["root_w"], fused["root_b"], fused["pred_w"], fused["pred_b"]]
    for layer_weights in layers:
        inputs.extend(layer_weights)

    kernel = _make_fused_kernel(T, H, n_layers)
    y = pl.pallas_call(
        kernel,
        out_shape=jax.ShapeDtypeStruct((T, 1), jnp.float32),
        in_specs=[pl.BlockSpec(memory_space=pltpu.MemorySpace.VMEM)] * len(inputs),
        out_specs=pl.BlockSpec(memory_space=pltpu.MemorySpace.VMEM),
    )(*inputs)

    # Matches nn.ReLU()(self.predictor(z).squeeze(1)) -> (1, T)
    return y[:, 0][None, :]


# ----------------------------------------------------------------------------
if __name__ == "__main__":
    input_size = 16
    embedding_size = 32
    hidden_size = 32
    n_layers = 3
    T = 8

    key = jax.random.PRNGKey(0)
    k_x, k_p = jax.random.split(key)
    x = jax.random.normal(k_x, (1, T, input_size), jnp.float32)
    params = init_params(k_p, input_size, embedding_size, hidden_size, n_layers)
    fused = fuse_params(params, n_layers)

    y = bilstm_forward(x, fused)
    jax.block_until_ready(y)
    assert y.shape == (1, T), y.shape
    print("KERNEL_OK")
</pallas_src>

<mosaic_0001>
module attributes {stable_mosaic.version = 11 : i64} {
  func.func @kernel(%arg0: memref<8x16xf32, #tpu.memory_space<vmem>>, %arg1: memref<16x32xf32, #tpu.memory_space<vmem>>, %arg2: memref<1x32xf32, #tpu.memory_space<vmem>>, %arg3: memref<64x1xf32, #tpu.memory_space<vmem>>, %arg4: memref<1x1xf32, #tpu.memory_space<vmem>>, %arg5: memref<32x256xf32, #tpu.memory_space<vmem>>, %arg6: memref<32x128xf32, #tpu.memory_space<vmem>>, %arg7: memref<32x128xf32, #tpu.memory_space<vmem>>, %arg8: memref<1x256xf32, #tpu.memory_space<vmem>>, %arg9: memref<64x256xf32, #tpu.memory_space<vmem>>, %arg10: memref<32x128xf32, #tpu.memory_space<vmem>>, %arg11: memref<32x128xf32, #tpu.memory_space<vmem>>, %arg12: memref<1x256xf32, #tpu.memory_space<vmem>>, %arg13: memref<64x256xf32, #tpu.memory_space<vmem>>, %arg14: memref<32x128xf32, #tpu.memory_space<vmem>>, %arg15: memref<32x128xf32, #tpu.memory_space<vmem>>, %arg16: memref<1x256xf32, #tpu.memory_space<vmem>>, %arg17: memref<8x1xf32, #tpu.memory_space<vmem>>) attributes {dimension_semantics = [], scalar_prefetch = 0 : i64, scratch_operands = 0 : i64, tpu.core_type = #tpu.core_type<tc>} {
    %c0 = arith.constant 0 : index
    %c0_0 = arith.constant 0 : index
    %0 = vector.load %arg0[%c0, %c0_0] : memref<8x16xf32, #tpu.memory_space<vmem>>, vector<8x16xf32>
    %c0_1 = arith.constant 0 : index
    %c0_2 = arith.constant 0 : index
    %1 = vector.load %arg1[%c0_1, %c0_2] : memref<16x32xf32, #tpu.memory_space<vmem>>, vector<16x32xf32>
    %cst = arith.constant dense<0.000000e+00> : vector<8x32xf32>
    %2 = tpu.matmul %0, %1, %cst {dimension_numbers = #tpu.dot_dimension_numbers<[1], [0], [0], [1], [0, 0, 1, 1], [], []>} : vector<8x16xf32>, vector<16x32xf32>, vector<8x32xf32> -> vector<8x32xf32>
    %c0_3 = arith.constant 0 : index
    %c0_4 = arith.constant 0 : index
    %3 = vector.load %arg2[%c0_3, %c0_4] : memref<1x32xf32, #tpu.memory_space<vmem>>, vector<1x32xf32>
    %4 = vector.broadcast %3 : vector<1x32xf32> to vector<8x32xf32>
    %5 = arith.addf %2, %4 : vector<8x32xf32>
    %c0_5 = arith.constant 0 : index
    %c0_6 = arith.constant 0 : index
    %6 = vector.load %arg5[%c0_5, %c0_6] : memref<32x256xf32, #tpu.memory_space<vmem>>, vector<32x256xf32>
    %cst_7 = arith.constant dense<0.000000e+00> : vector<8x256xf32>
    %7 = tpu.matmul %5, %6, %cst_7 {dimension_numbers = #tpu.dot_dimension_numbers<[1], [0], [0], [1], [0, 0, 1, 1], [], []>} : vector<8x32xf32>, vector<32x256xf32>, vector<8x256xf32> -> vector<8x256xf32>
    %c0_8 = arith.constant 0 : index
    %c0_9 = arith.constant 0 : index
    %8 = vector.load %arg8[%c0_8, %c0_9] : memref<1x256xf32, #tpu.memory_space<vmem>>, vector<1x256xf32>
    %9 = vector.broadcast %8 : vector<1x256xf32> to vector<8x256xf32>
    %10 = arith.addf %7, %9 : vector<8x256xf32>
    %c0_10 = arith.constant 0 : index
    %c0_11 = arith.constant 0 : index
    %11 = vector.load %arg6[%c0_10, %c0_11] : memref<32x128xf32, #tpu.memory_space<vmem>>, vector<32x128xf32>
    %c0_12 = arith.constant 0 : index
    %c0_13 = arith.constant 0 : index
    %12 = vector.load %arg7[%c0_12, %c0_13] : memref<32x128xf32, #tpu.memory_space<vmem>>, vector<32x128xf32>
    %cst_14 = arith.constant 0.000000e+00 : f32
    %13 = vector.broadcast %cst_14 : f32 to vector<1x32xf32>
    %cst_15 = arith.constant 0.000000e+00 : f32
    %14 = vector.broadcast %cst_15 : f32 to vector<1x32xf32>
    %cst_16 = arith.constant 0.000000e+00 : f32
    %15 = vector.broadcast %cst_16 : f32 to vector<1x32xf32>
    %cst_17 = arith.constant 0.000000e+00 : f32
    %16 = vector.broadcast %cst_17 : f32 to vector<1x32xf32>
    %17 = vector.extract_strided_slice %10 {offsets = [0, 0], sizes = [1, 128], strides = [1, 1]} : vector<8x256xf32> to vector<1x128xf32>
    %cst_18 = arith.constant dense<0.000000e+00> : vector<1x128xf32>
    %18 = tpu.matmul %13, %11, %cst_18 {dimension_numbers = #tpu.dot_dimension_numbers<[1], [0], [0], [1], [0, 0, 1, 1], [], []>} : vector<1x32xf32>, vector<32x128xf32>, vector<1x128xf32> -> vector<1x128xf32>
    %19 = arith.addf %17, %18 : vector<1x128xf32>
    %20 = vector.extract_strided_slice %10 {offsets = [7, 128], sizes = [1, 128], strides = [1, 1]} : vector<8x256xf32> to vector<1x128xf32>
    %cst_19 = arith.constant dense<0.000000e+00> : vector<1x128xf32>
    %21 = tpu.matmul %15, %12, %cst_19 {dimension_numbers = #tpu.dot_dimension_numbers<[1], [0], [0], [1], [0, 0, 1, 1], [], []>} : vector<1x32xf32>, vector<32x128xf32>, vector<1x128xf32> -> vector<1x128xf32>
    %22 = arith.addf %20, %21 : vector<1x128xf32>
    %23 = arith.negf %19 : vector<1x128xf32>
    %24 = math.exp %23 : vector<1x128xf32>
    %cst_20 = arith.constant 1.000000e+00 : f32
    %25 = vector.broadcast %cst_20 : f32 to vector<1x128xf32>
    %26 = arith.addf %25, %24 : vector<1x128xf32>
    %27 = arith.divf %25, %26 : vector<1x128xf32>
    %28 = math.tanh %19 : vector<1x128xf32>
    %29 = vector.extract_strided_slice %27 {offsets = [0, 0], sizes = [1, 32], strides = [1, 1]} : vector<1x128xf32> to vector<1x32xf32>
    %30 = vector.extract_strided_slice %27 {offsets = [0, 32], sizes = [1, 32], strides = [1, 1]} : vector<1x128xf32> to vector<1x32xf32>
    %31 = vector.extract_strided_slice %28 {offsets = [0, 64], sizes = [1, 32], strides = [1, 1]} : vector<1x128xf32> to vector<1x32xf32>
    %32 = vector.extract_strided_slice %27 {offsets = [0, 96], sizes = [1, 32], strides = [1, 1]} : vector<1x128xf32> to vector<1x32xf32>
    %33 = arith.mulf %30, %14 : vector<1x32xf32>
    %34 = arith.mulf %29, %31 : vector<1x32xf32>
    %35 = arith.addf %33, %34 : vector<1x32xf32>
    %36 = math.tanh %35 : vector<1x32xf32>
    %37 = arith.mulf %32, %36 : vector<1x32xf32>
    %38 = arith.negf %22 : vector<1x128xf32>
    %39 = math.exp %38 : vector<1x128xf32>
    %cst_21 = arith.constant 1.000000e+00 : f32
    %40 = vector.broadcast %cst_21 : f32 to vector<1x128xf32>
    %41 = arith.addf %40, %39 : vector<1x128xf32>
    %42 = arith.divf %40, %41 : vector<1x128xf32>
    %43 = math.tanh %22 : vector<1x128xf32>
    %44 = vector.extract_strided_slice %42 {offsets = [0, 0], sizes = [1, 32], strides = [1, 1]} : vector<1x128xf32> to vector<1x32xf32>
    %45 = vector.extract_strided_slice %42 {offsets = [0, 32], sizes = [1, 32], strides = [1, 1]} : vector<1x128xf32> to vector<1x32xf32>
    %46 = vector.extract_strided_slice %43 {offsets = [0, 64], sizes = [1, 32], strides = [1, 1]} : vector<1x128xf32> to vector<1x32xf32>
    %47 = vector.extract_strided_slice %42 {offsets = [0, 96], sizes = [1, 32], strides = [1, 1]} : vector<1x128xf32> to vector<1x32xf32>
    %48 = arith.mulf %45, %16 : vector<1x32xf32>
    %49 = arith.mulf %44, %46 : vector<1x32xf32>
    %50 = arith.addf %48, %49 : vector<1x32xf32>
    %51 = math.tanh %50 : vector<1x32xf32>
    %52 = arith.mulf %47, %51 : vector<1x32xf32>
    %53 = vector.extract_strided_slice %10 {offsets = [1, 0], sizes = [1, 128], strides = [1, 1]} : vector<8x256xf32> to vector<1x128xf32>
    %cst_22 = arith.constant dense<0.000000e+00> : vector<1x128xf32>
    %54 = tpu.matmul %37, %11, %cst_22 {dimension_numbers = #tpu.dot_dimension_numbers<[1], [0], [0], [1], [0, 0, 1, 1], [], []>} : vector<1x32xf32>, vector<32x128xf32>, vector<1x128xf32> -> vector<1x128xf32>
    %55 = arith.addf %53, %54 : vector<1x128xf32>
    %56 = vector.extract_strided_slice %10 {offsets = [6, 128], sizes = [1, 128], strides = [1, 1]} : vector<8x256xf32> to vector<1x128xf32>
    %cst_23 = arith.constant dense<0.000000e+00> : vector<1x128xf32>
    %57 = tpu.matmul %52, %12, %cst_23 {dimension_numbers = #tpu.dot_dimension_numbers<[1], [0], [0], [1], [0, 0, 1, 1], [], []>} : vector<1x32xf32>, vector<32x128xf32>, vector<1x128xf32> -> vector<1x128xf32>
    %58 = arith.addf %56, %57 : vector<1x128xf32>
    %59 = arith.negf %55 : vector<1x128xf32>
    %60 = math.exp %59 : vector<1x128xf32>
    %cst_24 = arith.constant 1.000000e+00 : f32
    %61 = vector.broadcast %cst_24 : f32 to vector<1x128xf32>
    %62 = arith.addf %61, %60 : vector<1x128xf32>
    %63 = arith.divf %61, %62 : vector<1x128xf32>
    %64 = math.tanh %55 : vector<1x128xf32>
    %65 = vector.extract_strided_slice %63 {offsets = [0, 0], sizes = [1, 32], strides = [1, 1]} : vector<1x128xf32> to vector<1x32xf32>
    %66 = vector.extract_strided_slice %63 {offsets = [0, 32], sizes = [1, 32], strides = [1, 1]} : vector<1x128xf32> to vector<1x32xf32>
    %67 = vector.extract_strided_slice %64 {offsets = [0, 64], sizes = [1, 32], strides = [1, 1]} : vector<1x128xf32> to vector<1x32xf32>
    %68 = vector.extract_strided_slice %63 {offsets = [0, 96], sizes = [1, 32], strides = [1, 1]} : vector<1x128xf32> to vector<1x32xf32>
    %69 = arith.mulf %66, %35 : vector<1x32xf32>
    %70 = arith.mulf %65, %67 : vector<1x32xf32>
    %71 = arith.addf %69, %70 : vector<1x32xf32>
    %72 = math.tanh %71 : vector<1x32xf32>
    %73 = arith.mulf %68, %72 : vector<1x32xf32>
    %74 = arith.negf %58 : vector<1x128xf32>
    %75 = math.exp %74 : vector<1x128xf32>
    %cst_25 = arith.constant 1.000000e+00 : f32
    %76 = vector.broadcast %cst_25 : f32 to vector<1x128xf32>
    %77 = arith.addf %76, %75 : vector<1x128xf32>
    %78 = arith.divf %76, %77 : vector<1x128xf32>
    %79 = math.tanh %58 : vector<1x128xf32>
    %80 = vector.extract_strided_slice %78 {offsets = [0, 0], sizes = [1, 32], strides = [1, 1]} : vector<1x128xf32> to vector<1x32xf32>
    %81 = vector.extract_strided_slice %78 {offsets = [0, 32], sizes = [1, 32], strides = [1, 1]} : vector<1x128xf32> to vector<1x32xf32>
    %82 = vector.extract_strided_slice %79 {offsets = [0, 64], sizes = [1, 32], strides = [1, 1]} : vector<1x128xf32> to vector<1x32xf32>
    %83 = vector.extract_strided_slice %78 {offsets = [0, 96], sizes = [1, 32], strides = [1, 1]} : vector<1x128xf32> to vector<1x32xf32>
    %84 = arith.mulf %81, %50 : vector<1x32xf32>
    %85 = arith.mulf %80, %82 : vector<1x32xf32>
    %86 = arith.addf %84, %85 : vector<1x32xf32>
    %87 = math.tanh %86 : vector<1x32xf32>
    %88 = arith.mulf %83, %87 : vector<1x32xf32>
    %89 = vector.extract_strided_slice %10 {offsets = [2, 0], sizes = [1, 128], strides = [1, 1]} : vector<8x256xf32> to vector<1x128xf32>
    %cst_26 = arith.constant dense<0.000000e+00> : vector<1x128xf32>
    %90 = tpu.matmul %73, %11, %cst_26 {dimension_numbers = #tpu.dot_dimension_numbers<[1], [0], [0], [1], [0, 0, 1, 1], [], []>} : vector<1x32xf32>, vector<32x128xf32>, vector<1x128xf32> -> vector<1x128xf32>
    %91 = arith.addf %89, %90 : vector<1x128xf32>
    %92 = vector.extract_strided_slice %10 {offsets = [5, 128], sizes = [1, 128], strides = [1, 1]} : vector<8x256xf32> to vector<1x128xf32>
    %cst_27 = arith.constant dense<0.000000e+00> : vector<1x128xf32>
    %93 = tpu.matmul %88, %12, %cst_27 {dimension_numbers = #tpu.dot_dimension_numbers<[1], [0], [0], [1], [0, 0, 1, 1], [], []>} : vector<1x32xf32>, vector<32x128xf32>, vector<1x128xf32> -> vector<1x128xf32>
    %94 = arith.addf %92, %93 : vector<1x128xf32>
    %95 = arith.negf %91 : vector<1x128xf32>
    %96 = math.exp %95 : vector<1x128xf32>
    %cst_28 = arith.constant 1.000000e+00 : f32
    %97 = vector.broadcast %cst_28 : f32 to vector<1x128xf32>
    %98 = arith.addf %97, %96 : vector<1x128xf32>
    %99 = arith.divf %97, %98 : vector<1x128xf32>
    %100 = math.tanh %91 : vector<1x128xf32>
    %101 = vector.extract_strided_slice %99 {offsets = [0, 0], sizes = [1, 32], strides = [1, 1]} : vector<1x128xf32> to vector<1x32xf32>
    %102 = vector.extract_strided_slice %99 {offsets = [0, 32], sizes = [1, 32], strides = [1, 1]} : vector<1x128xf32> to vector<1x32xf32>
    %103 = vector.extract_strided_slice %100 {offsets = [0, 64], sizes = [1, 32], strides = [1, 1]} : vector<1x128xf32> to vector<1x32xf32>
    %104 = vector.extract_strided_slice %99 {offsets = [0, 96], sizes = [1, 32], strides = [1, 1]} : vector<1x128xf32> to vector<1x32xf32>
    %105 = arith.mulf %102, %71 : vector<1x32xf32>
    %106 = arith.mulf %101, %103 : vector<1x32xf32>
    %107 = arith.addf %105, %106 : vector<1x32xf32>
    %108 = math.tanh %107 : vector<1x32xf32>
    %109 = arith.mulf %104, %108 : vector<1x32xf32>
    %110 = arith.negf %94 : vector<1x128xf32>
    %111 = math.exp %110 : vector<1x128xf32>
    %cst_29 = arith.constant 1.000000e+00 : f32
    %112 = vector.broadcast %cst_29 : f32 to vector<1x128xf32>
    %113 = arith.addf %112, %111 : vector<1x128xf32>
    %114 = arith.divf %112, %113 : vector<1x128xf32>
    %115 = math.tanh %94 : vector<1x128xf32>
    %116 = vector.extract_strided_slice %114 {offsets = [0, 0], sizes = [1, 32], strides = [1, 1]} : vector<1x128xf32> to vector<1x32xf32>
    %117 = vector.extract_strided_slice %114 {offsets = [0, 32], sizes = [1, 32], strides = [1, 1]} : vector<1x128xf32> to vector<1x32xf32>
    %118 = vector.extract_strided_slice %115 {offsets = [0, 64], sizes = [1, 32], strides = [1, 1]} : vector<1x128xf32> to vector<1x32xf32>
    %119 = vector.extract_strided_slice %114 {offsets = [0, 96], sizes = [1, 32], strides = [1, 1]} : vector<1x128xf32> to vector<1x32xf32>
    %120 = arith.mulf %117, %86 : vector<1x32xf32>
    %121 = arith.mulf %116, %118 : vector<1x32xf32>
    %122 = arith.addf %120, %121 : vector<1x32xf32>
    %123 = math.tanh %122 : vector<1x32xf32>
    %124 = arith.mulf %119, %123 : vector<1x32xf32>
    %125 = vector.extract_strided_slice %10 {offsets = [3, 0], sizes = [1, 128], strides = [1, 1]} : vector<8x256xf32> to vector<1x128xf32>
    %cst_30 = arith.constant dense<0.000000e+00> : vector<1x128xf32>
    %126 = tpu.matmul %109, %11, %cst_30 {dimension_numbers = #tpu.dot_dimension_numbers<[1], [0], [0], [1], [0, 0, 1, 1], [], []>} : vector<1x32xf32>, vector<32x128xf32>, vector<1x128xf32> -> vector<1x128xf32>
    %127 = arith.addf %125, %126 : vector<1x128xf32>
    %128 = vector.extract_strided_slice %10 {offsets = [4, 128], sizes = [1, 128], strides = [1, 1]} : vector<8x256xf32> to vector<1x128xf32>
    %cst_31 = arith.constant dense<0.000000e+00> : vector<1x128xf32>
    %129 = tpu.matmul %124, %12, %cst_31 {dimension_numbers = #tpu.dot_dimension_numbers<[1], [0], [0], [1], [0, 0, 1, 1], [], []>} : vector<1x32xf32>, vector<32x128xf32>, vector<1x128xf32> -> vector<1x128xf32>
    %130 = arith.addf %128, %129 : vector<1x128xf32>
    %131 = arith.negf %127 : vector<1x128xf32>
    %132 = math.exp %131 : vector<1x128xf32>
    %cst_32 = arith.constant 1.000000e+00 : f32
    %133 = vector.broadcast %cst_32 : f32 to vector<1x128xf32>
    %134 = arith.addf %133, %132 : vector<1x128xf32>
    %135 = arith.divf %133, %134 : vector<1x128xf32>
    %136 = math.tanh %127 : vector<1x128xf32>
    %137 = vector.extract_strided_slice %135 {offsets = [0, 0], sizes = [1, 32], strides = [1, 1]} : vector<1x128xf32> to vector<1x32xf32>
    %138 = vector.extract_strided_slice %135 {offsets = [0, 32], sizes = [1, 32], strides = [1, 1]} : vector<1x128xf32> to vector<1x32xf32>
    %139 = vector.extract_strided_slice %136 {offsets = [0, 64], sizes = [1, 32], strides = [1, 1]} : vector<1x128xf32> to vector<1x32xf32>
    %140 = vector.extract_strided_slice %135 {offsets = [0, 96], sizes = [1, 32], strides = [1, 1]} : vector<1x128xf32> to vector<1x32xf32>
    %141 = arith.mulf %138, %107 : vector<1x32xf32>
    %142 = arith.mulf %137, %139 : vector<1x32xf32>
    %143 = arith.addf %141, %142 : vector<1x32xf32>
    %144 = math.tanh %143 : vector<1x32xf32>
    %145 = arith.mulf %140, %144 : vector<1x32xf32>
    %146 = arith.negf %130 : vector<1x128xf32>
    %147 = math.exp %146 : vector<1x128xf32>
    %cst_33 = arith.constant 1.000000e+00 : f32
    %148 = vector.broadcast %cst_33 : f32 to vector<1x128xf32>
    %149 = arith.addf %148, %147 : vector<1x128xf32>
    %150 = arith.divf %148, %149 : vector<1x128xf32>
    %151 = math.tanh %130 : vector<1x128xf32>
    %152 = vector.extract_strided_slice %150 {offsets = [0, 0], sizes = [1, 32], strides = [1, 1]} : vector<1x128xf32> to vector<1x32xf32>
    %153 = vector.extract_strided_slice %150 {offsets = [0, 32], sizes = [1, 32], strides = [1, 1]} : vector<1x128xf32> to vector<1x32xf32>
    %154 = vector.extract_strided_slice %151 {offsets = [0, 64], sizes = [1, 32], strides = [1, 1]} : vector<1x128xf32> to vector<1x32xf32>
    %155 = vector.extract_strided_slice %150 {offsets = [0, 96], sizes = [1, 32], strides = [1, 1]} : vector<1x128xf32> to vector<1x32xf32>
    %156 = arith.mulf %153, %122 : vector<1x32xf32>
    %157 = arith.mulf %152, %154 : vector<1x32xf32>
    %158 = arith.addf %156, %157 : vector<1x32xf32>
    %159 = math.tanh %158 : vector<1x32xf32>
    %160 = arith.mulf %155, %159 : vector<1x32xf32>
    %161 = vector.extract_strided_slice %10 {offsets = [4, 0], sizes = [1, 128], strides = [1, 1]} : vector<8x256xf32> to vector<1x128xf32>
    %cst_34 = arith.constant dense<0.000000e+00> : vector<1x128xf32>
    %162 = tpu.matmul %145, %11, %cst_34 {dimension_numbers = #tpu.dot_dimension_numbers<[1], [0], [0], [1], [0, 0, 1, 1], [], []>} : vector<1x32xf32>, vector<32x128xf32>, vector<1x128xf32> -> vector<1x128xf32>
    %163 = arith.addf %161, %162 : vector<1x128xf32>
    %164 = vector.extract_strided_slice %10 {offsets = [3, 128], sizes = [1, 128], strides = [1, 1]} : vector<8x256xf32> to vector<1x128xf32>
    %cst_35 = arith.constant dense<0.000000e+00> : vector<1x128xf32>
    %165 = tpu.matmul %160, %12, %cst_35 {dimension_numbers = #tpu.dot_dimension_numbers<[1], [0], [0], [1], [0, 0, 1, 1], [], []>} : vector<1x32xf32>, vector<32x128xf32>, vector<1x128xf32> -> vector<1x128xf32>
    %166 = arith.addf %164, %165 : vector<1x128xf32>
    %167 = arith.negf %163 : vector<1x128xf32>
    %168 = math.exp %167 : vector<1x128xf32>
    %cst_36 = arith.constant 1.000000e+00 : f32
    %169 = vector.broadcast %cst_36 : f32 to vector<1x128xf32>
    %170 = arith.addf %169, %168 : vector<1x128xf32>
    %171 = arith.divf %169, %170 : vector<1x128xf32>
    %172 = math.tanh %163 : vector<1x128xf32>
    %173 = vector.extract_strided_slice %171 {offsets = [0, 0], sizes = [1, 32], strides = [1, 1]} : vector<1x128xf32> to vector<1x32xf32>
    %174 = vector.extract_strided_slice %171 {offsets = [0, 32], sizes = [1, 32], strides = [1, 1]} : vector<1x128xf32> to vector<1x32xf32>
    %175 = vector.extract_strided_slice %172 {offsets = [0, 64], sizes = [1, 32], strides = [1, 1]} : vector<1x128xf32> to vector<1x32xf32>
    %176 = vector.extract_strided_slice %171 {offsets = [0, 96], sizes = [1, 32], strides = [1, 1]} : vector<1x128xf32> to vector<1x32xf32>
    %177 = arith.mulf %174, %143 : vector<1x32xf32>
    %178 = arith.mulf %173, %175 : vector<1x32xf32>
    %179 = arith.addf %177, %178 : vector<1x32xf32>
    %180 = math.tanh %179 : vector<1x32xf32>
    %181 = arith.mulf %176, %180 : vector<1x32xf32>
    %182 = arith.negf %166 : vector<1x128xf32>
    %183 = math.exp %182 : vector<1x128xf32>
    %cst_37 = arith.constant 1.000000e+00 : f32
    %184 = vector.broadcast %cst_37 : f32 to vector<1x128xf32>
    %185 = arith.addf %184, %183 : vector<1x128xf32>
    %186 = arith.divf %184, %185 : vector<1x128xf32>
    %187 = math.tanh %166 : vector<1x128xf32>
    %188 = vector.extract_strided_slice %186 {offsets = [0, 0], sizes = [1, 32], strides = [1, 1]} : vector<1x128xf32> to vector<1x32xf32>
    %189 = vector.extract_strided_slice %186 {offsets = [0, 32], sizes = [1, 32], strides = [1, 1]} : vector<1x128xf32> to vector<1x32xf32>
    %190 = vector.extract_strided_slice %187 {offsets = [0, 64], sizes = [1, 32], strides = [1, 1]} : vector<1x128xf32> to vector<1x32xf32>
    %191 = vector.extract_strided_slice %186 {offsets = [0, 96], sizes = [1, 32], strides = [1, 1]} : vector<1x128xf32> to vector<1x32xf32>
    %192 = arith.mulf %189, %158 : vector<1x32xf32>
    %193 = arith.mulf %188, %190 : vector<1x32xf32>
    %194 = arith.addf %192, %193 : vector<1x32xf32>
    %195 = math.tanh %194 : vector<1x32xf32>
    %196 = arith.mulf %191, %195 : vector<1x32xf32>
    %197 = vector.extract_strided_slice %10 {offsets = [5, 0], sizes = [1, 128], strides = [1, 1]} : vector<8x256xf32> to vector<1x128xf32>
    %cst_38 = arith.constant dense<0.000000e+00> : vector<1x128xf32>
    %198 = tpu.matmul %181, %11, %cst_38 {dimension_numbers = #tpu.dot_dimension_numbers<[1], [0], [0], [1], [0, 0, 1, 1], [], []>} : vector<1x32xf32>, vector<32x128xf32>, vector<1x128xf32> -> vector<1x128xf32>
    %199 = arith.addf %197, %198 : vector<1x128xf32>
    %200 = vector.extract_strided_slice %10 {offsets = [2, 128], sizes = [1, 128], strides = [1, 1]} : vector<8x256xf32> to vector<1x128xf32>
    %cst_39 = arith.constant dense<0.000000e+00> : vector<1x128xf32>
    %201 = tpu.matmul %196, %12, %cst_39 {dimension_numbers = #tpu.dot_dimension_numbers<[1], [0], [0], [1], [0, 0, 1, 1], [], []>} : vector<1x32xf32>, vector<32x128xf32>, vector<1x128xf32> -> vector<1x128xf32>
    %202 = arith.addf %200, %201 : vector<1x128xf32>
    %203 = arith.negf %199 : vector<1x128xf32>
    %204 = math.exp %203 : vector<1x128xf32>
    %cst_40 = arith.constant 1.000000e+00 : f32
    %205 = vector.broadcast %cst_40 : f32 to vector<1x128xf32>
    %206 = arith.addf %205, %204 : vector<1x128xf32>
    %207 = arith.divf %205, %206 : vector<1x128xf32>
    %208 = math.tanh %199 : vector<1x128xf32>
    %209 = vector.extract_strided_slice %207 {offsets = [0, 0], sizes = [1, 32], strides = [1, 1]} : vector<1x128xf32> to vector<1x32xf32>
    %210 = vector.extract_strided_slice %207 {offsets = [0, 32], sizes = [1, 32], strides = [1, 1]} : vector<1x128xf32> to vector<1x32xf32>
    %211 = vector.extract_strided_slice %208 {offsets = [0, 64], sizes = [1, 32], strides = [1, 1]} : vector<1x128xf32> to vector<1x32xf32>
    %212 = vector.extract_strided_slice %207 {offsets = [0, 96], sizes = [1, 32], strides = [1, 1]} : vector<1x128xf32> to vector<1x32xf32>
    %213 = arith.mulf %210, %179 : vector<1x32xf32>
    %214 = arith.mulf %209, %211 : vector<1x32xf32>
    %215 = arith.addf %213, %214 : vector<1x32xf32>
    %216 = math.tanh %215 : vector<1x32xf32>
    %217 = arith.mulf %212, %216 : vector<1x32xf32>
    %218 = arith.negf %202 : vector<1x128xf32>
    %219 = math.exp %218 : vector<1x128xf32>
    %cst_41 = arith.constant 1.000000e+00 : f32
    %220 = vector.broadcast %cst_41 : f32 to vector<1x128xf32>
    %221 = arith.addf %220, %219 : vector<1x128xf32>
    %222 = arith.divf %220, %221 : vector<1x128xf32>
    %223 = math.tanh %202 : vector<1x128xf32>
    %224 = vector.extract_strided_slice %222 {offsets = [0, 0], sizes = [1, 32], strides = [1, 1]} : vector<1x128xf32> to vector<1x32xf32>
    %225 = vector.extract_strided_slice %222 {offsets = [0, 32], sizes = [1, 32], strides = [1, 1]} : vector<1x128xf32> to vector<1x32xf32>
    %226 = vector.extract_strided_slice %223 {offsets = [0, 64], sizes = [1, 32], strides = [1, 1]} : vector<1x128xf32> to vector<1x32xf32>
    %227 = vector.extract_strided_slice %222 {offsets = [0, 96], sizes = [1, 32], strides = [1, 1]} : vector<1x128xf32> to vector<1x32xf32>
    %228 = arith.mulf %225, %194 : vector<1x32xf32>
    %229 = arith.mulf %224, %226 : vector<1x32xf32>
    %230 = arith.addf %228, %229 : vector<1x32xf32>
    %231 = math.tanh %230 : vector<1x32xf32>
    %232 = arith.mulf %227, %231 : vector<1x32xf32>
    %233 = vector.extract_strided_slice %10 {offsets = [6, 0], sizes = [1, 128], strides = [1, 1]} : vector<8x256xf32> to vector<1x128xf32>
    %cst_42 = arith.constant dense<0.000000e+00> : vector<1x128xf32>
    %234 = tpu.matmul %217, %11, %cst_42 {dimension_numbers = #tpu.dot_dimension_numbers<[1], [0], [0], [1], [0, 0, 1, 1], [], []>} : vector<1x32xf32>, vector<32x128xf32>, vector<1x128xf32> -> vector<1x128xf32>
    %235 = arith.addf %233, %234 : vector<1x128xf32>
    %236 = vector.extract_strided_slice %10 {offsets = [1, 128], sizes = [1, 128], strides = [1, 1]} : vector<8x256xf32> to vector<1x128xf32>
    %cst_43 = arith.constant dense<0.000000e+00> : vector<1x128xf32>
    %237 = tpu.matmul %232, %12, %cst_43 {dimension_numbers = #tpu.dot_dimension_numbers<[1], [0], [0], [1], [0, 0, 1, 1], [], []>} : vector<1x32xf32>, vector<32x128xf32>, vector<1x128xf32> -> vector<1x128xf32>
    %238 = arith.addf %236, %237 : vector<1x128xf32>
    %239 = arith.negf %235 : vector<1x128xf32>
    %240 = math.exp %239 : vector<1x128xf32>
    %cst_44 = arith.constant 1.000000e+00 : f32
    %241 = vector.broadcast %cst_44 : f32 to vector<1x128xf32>
    %242 = arith.addf %241, %240 : vector<1x128xf32>
    %243 = arith.divf %241, %242 : vector<1x128xf32>
    %244 = math.tanh %235 : vector<1x128xf32>
    %245 = vector.extract_strided_slice %243 {offsets = [0, 0], sizes = [1, 32], strides = [1, 1]} : vector<1x128xf32> to vector<1x32xf32>
    %246 = vector.extract_strided_slice %243 {offsets = [0, 32], sizes = [1, 32], strides = [1, 1]} : vector<1x128xf32> to vector<1x32xf32>
    %247 = vector.extract_strided_slice %244 {offsets = [0, 64], sizes = [1, 32], strides = [1, 1]} : vector<1x128xf32> to vector<1x32xf32>
    %248 = vector.extract_strided_slice %243 {offsets = [0, 96], sizes = [1, 32], strides = [1, 1]} : vector<1x128xf32> to vector<1x32xf32>
    %249 = arith.mulf %246, %215 : vector<1x32xf32>
    %250 = arith.mulf %245, %247 : vector<1x32xf32>
    %251 = arith.addf %249, %250 : vector<1x32xf32>
    %252 = math.tanh %251 : vector<1x32xf32>
    %253 = arith.mulf %248, %252 : vector<1x32xf32>
    %254 = arith.negf %238 : vector<1x128xf32>
    %255 = math.exp %254 : vector<1x128xf32>
    %cst_45 = arith.constant 1.000000e+00 : f32
    %256 = vector.broadcast %cst_45 : f32 to vector<1x128xf32>
    %257 = arith.addf %256, %255 : vector<1x128xf32>
    %258 = arith.divf %256, %257 : vector<1x128xf32>
    %259 = math.tanh %238 : vector<1x128xf32>
    %260 = vector.extract_strided_slice %258 {offsets = [0, 0], sizes = [1, 32], strides = [1, 1]} : vector<1x128xf32> to vector<1x32xf32>
    %261 = vector.extract_strided_slice %258 {offsets = [0, 32], sizes = [1, 32], strides = [1, 1]} : vector<1x128xf32> to vector<1x32xf32>
    %262 = vector.extract_strided_slice %259 {offsets = [0, 64], sizes = [1, 32], strides = [1, 1]} : vector<1x128xf32> to vector<1x32xf32>
    %263 = vector.extract_strided_slice %258 {offsets = [0, 96], sizes = [1, 32], strides = [1, 1]} : vector<1x128xf32> to vector<1x32xf32>
    %264 = arith.mulf %261, %230 : vector<1x32xf32>
    %265 = arith.mulf %260, %262 : vector<1x32xf32>
    %266 = arith.addf %264, %265 : vector<1x32xf32>
    %267 = math.tanh %266 : vector<1x32xf32>
    %268 = arith.mulf %263, %267 : vector<1x32xf32>
    %269 = vector.extract_strided_slice %10 {offsets = [7, 0], sizes = [1, 128], strides = [1, 1]} : vector<8x256xf32> to vector<1x128xf32>
    %cst_46 = arith.constant dense<0.000000e+00> : vector<1x128xf32>
    %270 = tpu.matmul %253, %11, %cst_46 {dimension_numbers = #tpu.dot_dimension_numbers<[1], [0], [0], [1], [0, 0, 1, 1], [], []>} : vector<1x32xf32>, vector<32x128xf32>, vector<1x128xf32> -> vector<1x128xf32>
    %271 = arith.addf %269, %270 : vector<1x128xf32>
    %272 = vector.extract_strided_slice %10 {offsets = [0, 128], sizes = [1, 128], strides = [1, 1]} : vector<8x256xf32> to vector<1x128xf32>
    %cst_47 = arith.constant dense<0.000000e+00> : vector<1x128xf32>
    %273 = tpu.matmul %268, %12, %cst_47 {dimension_numbers = #tpu.dot_dimension_numbers<[1], [0], [0], [1], [0, 0, 1, 1], [], []>} : vector<1x32xf32>, vector<32x128xf32>, vector<1x128xf32> -> vector<1x128xf32>
    %274 = arith.addf %272, %273 : vector<1x128xf32>
    %275 = arith.negf %271 : vector<1x128xf32>
    %276 = math.exp %275 : vector<1x128xf32>
    %cst_48 = arith.constant 1.000000e+00 : f32
    %277 = vector.broadcast %cst_48 : f32 to vector<1x128xf32>
    %278 = arith.addf %277, %276 : vector<1x128xf32>
    %279 = arith.divf %277, %278 : vector<1x128xf32>
    %280 = math.tanh %271 : vector<1x128xf32>
    %281 = vector.extract_strided_slice %279 {offsets = [0, 0], sizes = [1, 32], strides = [1, 1]} : vector<1x128xf32> to vector<1x32xf32>
    %282 = vector.extract_strided_slice %279 {offsets = [0, 32], sizes = [1, 32], strides = [1, 1]} : vector<1x128xf32> to vector<1x32xf32>
    %283 = vector.extract_strided_slice %280 {offsets = [0, 64], sizes = [1, 32], strides = [1, 1]} : vector<1x128xf32> to vector<1x32xf32>
    %284 = vector.extract_strided_slice %279 {offsets = [0, 96], sizes = [1, 32], strides = [1, 1]} : vector<1x128xf32> to vector<1x32xf32>
    %285 = arith.mulf %282, %251 : vector<1x32xf32>
    %286 = arith.mulf %281, %283 : vector<1x32xf32>
    %287 = arith.addf %285, %286 : vector<1x32xf32>
    %288 = math.tanh %287 : vector<1x32xf32>
    %289 = arith.mulf %284, %288 : vector<1x32xf32>
    %290 = arith.negf %274 : vector<1x128xf32>
    %291 = math.exp %290 : vector<1x128xf32>
    %cst_49 = arith.constant 1.000000e+00 : f32
    %292 = vector.broadcast %cst_49 : f32 to vector<1x128xf32>
    %293 = arith.addf %292, %291 : vector<1x128xf32>
    %294 = arith.divf %292, %293 : vector<1x128xf32>
    %295 = math.tanh %274 : vector<1x128xf32>
    %296 = vector.extract_strided_slice %294 {offsets = [0, 0], sizes = [1, 32], strides = [1, 1]} : vector<1x128xf32> to vector<1x32xf32>
    %297 = vector.extract_strided_slice %294 {offsets = [0, 32], sizes = [1, 32], strides = [1, 1]} : vector<1x128xf32> to vector<1x32xf32>
    %298 = vector.extract_strided_slice %295 {offsets = [0, 64], sizes = [1, 32], strides = [1, 1]} : vector<1x128xf32> to vector<1x32xf32>
    %299 = vector.extract_strided_slice %294 {offsets = [0, 96], sizes = [1, 32], strides = [1, 1]} : vector<1x128xf32> to vector<1x32xf32>
    %300 = arith.mulf %297, %266 : vector<1x32xf32>
    %301 = arith.mulf %296, %298 : vector<1x32xf32>
    %302 = arith.addf %300, %301 : vector<1x32xf32>
    %303 = math.tanh %302 : vector<1x32xf32>
    %304 = arith.mulf %299, %303 : vector<1x32xf32>
    %305 = tpu.concatenate %37, %73, %109, %145, %181, %217, %253, %289 in 0 : vector<1x32xf32>, vector<1x32xf32>, vector<1x32xf32>, vector<1x32xf32>, vector<1x32xf32>, vector<1x32xf32>, vector<1x32xf32>, vector<1x32xf32> -> vector<8x32xf32>
    %306 = tpu.concatenate %304, %268, %232, %196, %160, %124, %88, %52 in 0 : vector<1x32xf32>, vector<1x32xf32>, vector<1x32xf32>, vector<1x32xf32>, vector<1x32xf32>, vector<1x32xf32>, vector<1x32xf32>, vector<1x32xf32> -> vector<8x32xf32>
    %307 = tpu.concatenate %305, %306 in 1 : vector<8x32xf32>, vector<8x32xf32> -> vector<8x64xf32>
    %c0_50 = arith.constant 0 : index
    %c0_51 = arith.constant 0 : index
    %308 = vector.load %arg9[%c0_50, %c0_51] : memref<64x256xf32, #tpu.memory_space<vmem>>, vector<64x256xf32>
    %cst_52 = arith.constant dense<0.000000e+00> : vector<8x256xf32>
    %309 = tpu.matmul %307, %308, %cst_52 {dimension_numbers = #tpu.dot_dimension_numbers<[1], [0], [0], [1], [0, 0, 1, 1], [], []>} : vector<8x64xf32>, vector<64x256xf32>, vector<8x256xf32> -> vector<8x256xf32>
    %c0_53 = arith.constant 0 : index
    %c0_54 = arith.constant 0 : index
    %310 = vector.load %arg12[%c0_53, %c0_54] : memref<1x256xf32, #tpu.memory_space<vmem>>, vector<1x256xf32>
    %311 = vector.broadcast %310 : vector<1x256xf32> to vector<8x256xf32>
    %312 = arith.addf %309, %311 : vector<8x256xf32>
    %c0_55 = arith.constant 0 : index
    %c0_56 = arith.constant 0 : index
    %313 = vector.load %arg10[%c0_55, %c0_56] : memref<32x128xf32, #tpu.memory_space<vmem>>, vector<32x128xf32>
    %c0_57 = arith.constant 0 : index
    %c0_58 = arith.constant 0 : index
    %314 = vector.load %arg11[%c0_57, %c0_58] : memref<32x128xf32, #tpu.memory_space<vmem>>, vector<32x128xf32>
    %cst_59 = arith.constant 0.000000e+00 : f32
    %315 = vector.broadcast %cst_59 : f32 to vector<1x32xf32>
    %cst_60 = arith.constant 0.000000e+00 : f32
    %316 = vector.broadcast %cst_60 : f32 to vector<1x32xf32>
    %cst_61 = arith.constant 0.000000e+00 : f32
    %317 = vector.broadcast %cst_61 : f32 to vector<1x32xf32>
    %cst_62 = arith.constant 0.000000e+00 : f32
    %318 = vector.broadcast %cst_62 : f32 to vector<1x32xf32>
    %319 = vector.extract_strided_slice %312 {offsets = [0, 0], sizes = [1, 128], strides = [1, 1]} : vector<8x256xf32> to vector<1x128xf32>
    %cst_63 = arith.constant dense<0.000000e+00> : vector<1x128xf32>
    %320 = tpu.matmul %315, %313, %cst_63 {dimension_numbers = #tpu.dot_dimension_numbers<[1], [0], [0], [1], [0, 0, 1, 1], [], []>} : vector<1x32xf32>, vector<32x128xf32>, vector<1x128xf32> -> vector<1x128xf32>
    %321 = arith.addf %319, %320 : vector<1x128xf32>
    %322 = vector.extract_strided_slice %312 {offsets = [7, 128], sizes = [1, 128], strides = [1, 1]} : vector<8x256xf32> to vector<1x128xf32>
    %cst_64 = arith.constant dense<0.000000e+00> : vector<1x128xf32>
    %323 = tpu.matmul %317, %314, %cst_64 {dimension_numbers = #tpu.dot_dimension_numbers<[1], [0], [0], [1], [0, 0, 1, 1], [], []>} : vector<1x32xf32>, vector<32x128xf32>, vector<1x128xf32> -> vector<1x128xf32>
    %324 = arith.addf %322, %323 : vector<1x128xf32>
    %325 = arith.negf %321 : vector<1x128xf32>
    %326 = math.exp %325 : vector<1x128xf32>
    %cst_65 = arith.constant 1.000000e+00 : f32
    %327 = vector.broadcast %cst_65 : f32 to vector<1x128xf32>
    %328 = arith.addf %327, %326 : vector<1x128xf32>
    %329 = arith.divf %327, %328 : vector<1x128xf32>
    %330 = math.tanh %321 : vector<1x128xf32>
    %331 = vector.extract_strided_slice %329 {offsets = [0, 0], sizes = [1, 32], strides = [1, 1]} : vector<1x128xf32> to vector<1x32xf32>
    %332 = vector.extract_strided_slice %329 {offsets = [0, 32], sizes = [1, 32], strides = [1, 1]} : vector<1x128xf32> to vector<1x32xf32>
    %333 = vector.extract_strided_slice %330 {offsets = [0, 64], sizes = [1, 32], strides = [1, 1]} : vector<1x128xf32> to vector<1x32xf32>
    %334 = vector.extract_strided_slice %329 {offsets = [0, 96], sizes = [1, 32], strides = [1, 1]} : vector<1x128xf32> to vector<1x32xf32>
    %335 = arith.mulf %332, %316 : vector<1x32xf32>
    %336 = arith.mulf %331, %333 : vector<1x32xf32>
    %337 = arith.addf %335, %336 : vector<1x32xf32>
    %338 = math.tanh %337 : vector<1x32xf32>
    %339 = arith.mulf %334, %338 : vector<1x32xf32>
    %340 = arith.negf %324 : vector<1x128xf32>
    %341 = math.exp %340 : vector<1x128xf32>
    %cst_66 = arith.constant 1.000000e+00 : f32
    %342 = vector.broadcast %cst_66 : f32 to vector<1x128xf32>
    %343 = arith.addf %342, %341 : vector<1x128xf32>
    %344 = arith.divf %342, %343 : vector<1x128xf32>
    %345 = math.tanh %324 : vector<1x128xf32>
    %346 = vector.extract_strided_slice %344 {offsets = [0, 0], sizes = [1, 32], strides = [1, 1]} : vector<1x128xf32> to vector<1x32xf32>
    %347 = vector.extract_strided_slice %344 {offsets = [0, 32], sizes = [1, 32], strides = [1, 1]} : vector<1x128xf32> to vector<1x32xf32>
    %348 = vector.extract_strided_slice %345 {offsets = [0, 64], sizes = [1, 32], strides = [1, 1]} : vector<1x128xf32> to vector<1x32xf32>
    %349 = vector.extract_strided_slice %344 {offsets = [0, 96], sizes = [1, 32], strides = [1, 1]} : vector<1x128xf32> to vector<1x32xf32>
    %350 = arith.mulf %347, %318 : vector<1x32xf32>
    %351 = arith.mulf %346, %348 : vector<1x32xf32>
    %352 = arith.addf %350, %351 : vector<1x32xf32>
    %353 = math.tanh %352 : vector<1x32xf32>
    %354 = arith.mulf %349, %353 : vector<1x32xf32>
    %355 = vector.extract_strided_slice %312 {offsets = [1, 0], sizes = [1, 128], strides = [1, 1]} : vector<8x256xf32> to vector<1x128xf32>
    %cst_67 = arith.constant dense<0.000000e+00> : vector<1x128xf32>
    %356 = tpu.matmul %339, %313, %cst_67 {dimension_numbers = #tpu.dot_dimension_numbers<[1], [0], [0], [1], [0, 0, 1, 1], [], []>} : vector<1x32xf32>, vector<32x128xf32>, vector<1x128xf32> -> vector<1x128xf32>
    %357 = arith.addf %355, %356 : vector<1x128xf32>
    %358 = vector.extract_strided_slice %312 {offsets = [6, 128], sizes = [1, 128], strides = [1, 1]} : vector<8x256xf32> to vector<1x128xf32>
    %cst_68 = arith.constant dense<0.000000e+00> : vector<1x128xf32>
    %359 = tpu.matmul %354, %314, %cst_68 {dimension_numbers = #tpu.dot_dimension_numbers<[1], [0], [0], [1], [0, 0, 1, 1], [], []>} : vector<1x32xf32>, vector<32x128xf32>, vector<1x128xf32> -> vector<1x128xf32>
    %360 = arith.addf %358, %359 : vector<1x128xf32>
    %361 = arith.negf %357 : vector<1x128xf32>
    %362 = math.exp %361 : vector<1x128xf32>
    %cst_69 = arith.constant 1.000000e+00 : f32
    %363 = vector.broadcast %cst_69 : f32 to vector<1x128xf32>
    %364 = arith.addf %363, %362 : vector<1x128xf32>
    %365 = arith.divf %363, %364 : vector<1x128xf32>
    %366 = math.tanh %357 : vector<1x128xf32>
    %367 = vector.extract_strided_slice %365 {offsets = [0, 0], sizes = [1, 32], strides = [1, 1]} : vector<1x128xf32> to vector<1x32xf32>
    %368 = vector.extract_strided_slice %365 {offsets = [0, 32], sizes = [1, 32], strides = [1, 1]} : vector<1x128xf32> to vector<1x32xf32>
    %369 = vector.extract_strided_slice %366 {offsets = [0, 64], sizes = [1, 32], strides = [1, 1]} : vector<1x128xf32> to vector<1x32xf32>
    %370 = vector.extract_strided_slice %365 {offsets = [0, 96], sizes = [1, 32], strides = [1, 1]} : vector<1x128xf32> to vector<1x32xf32>
    %371 = arith.mulf %368, %337 : vector<1x32xf32>
    %372 = arith.mulf %367, %369 : vector<1x32xf32>
    %373 = arith.addf %371, %372 : vector<1x32xf32>
    %374 = math.tanh %373 : vector<1x32xf32>
    %375 = arith.mulf %370, %374 : vector<1x32xf32>
    %376 = arith.negf %360 : vector<1x128xf32>
    %377 = math.exp %376 : vector<1x128xf32>
    %cst_70 = arith.constant 1.000000e+00 : f32
    %378 = vector.broadcast %cst_70 : f32 to vector<1x128xf32>
    %379 = arith.addf %378, %377 : vector<1x128xf32>
    %380 = arith.divf %378, %379 : vector<1x128xf32>
    %381 = math.tanh %360 : vector<1x128xf32>
    %382 = vector.extract_strided_slice %380 {offsets = [0, 0], sizes = [1, 32], strides = [1, 1]} : vector<1x128xf32> to vector<1x32xf32>
    %383 = vector.extract_strided_slice %380 {offsets = [0, 32], sizes = [1, 32], strides = [1, 1]} : vector<1x128xf32> to vector<1x32xf32>
    %384 = vector.extract_strided_slice %381 {offsets = [0, 64], sizes = [1, 32], strides = [1, 1]} : vector<1x128xf32> to vector<1x32xf32>
    %385 = vector.extract_strided_slice %380 {offsets = [0, 96], sizes = [1, 32], strides = [1, 1]} : vector<1x128xf32> to vector<1x32xf32>
    %386 = arith.mulf %383, %352 : vector<1x32xf32>
    %387 = arith.mulf %382, %384 : vector<1x32xf32>
    %388 = arith.addf %386, %387 : vector<1x32xf32>
    %389 = math.tanh %388 : vector<1x32xf32>
    %390 = arith.mulf %385, %389 : vector<1x32xf32>
    %391 = vector.extract_strided_slice %312 {offsets = [2, 0], sizes = [1, 128], strides = [1, 1]} : vector<8x256xf32> to vector<1x128xf32>
    %cst_71 = arith.constant dense<0.000000e+00> : vector<1x128xf32>
    %392 = tpu.matmul %375, %313, %cst_71 {dimension_numbers = #tpu.dot_dimension_numbers<[1], [0], [0], [1], [0, 0, 1, 1], [], []>} : vector<1x32xf32>, vector<32x128xf32>, vector<1x128xf32> -> vector<1x128xf32>
    %393 = arith.addf %391, %392 : vector<1x128xf32>
    %394 = vector.extract_strided_slice %312 {offsets = [5, 128], sizes = [1, 128], strides = [1, 1]} : vector<8x256xf32> to vector<1x128xf32>
    %cst_72 = arith.constant dense<0.000000e+00> : vector<1x128xf32>
    %395 = tpu.matmul %390, %314, %cst_72 {dimension_numbers = #tpu.dot_dimension_numbers<[1], [0], [0], [1], [0, 0, 1, 1], [], []>} : vector<1x32xf32>, vector<32x128xf32>, vector<1x128xf32> -> vector<1x128xf32>
    %396 = arith.addf %394, %395 : vector<1x128xf32>
    %397 = arith.negf %393 : vector<1x128xf32>
    %398 = math.exp %397 : vector<1x128xf32>
    %cst_73 = arith.constant 1.000000e+00 : f32
    %399 = vector.broadcast %cst_73 : f32 to vector<1x128xf32>
    %400 = arith.addf %399, %398 : vector<1x128xf32>
    %401 = arith.divf %399, %400 : vector<1x128xf32>
    %402 = math.tanh %393 : vector<1x128xf32>
    %403 = vector.extract_strided_slice %401 {offsets = [0, 0], sizes = [1, 32], strides = [1, 1]} : vector<1x128xf32> to vector<1x32xf32>
    %404 = vector.extract_strided_slice %401 {offsets = [0, 32], sizes = [1, 32], strides = [1, 1]} : vector<1x128xf32> to vector<1x32xf32>
    %405 = vector.extract_strided_slice %402 {offsets = [0, 64], sizes = [1, 32], strides = [1, 1]} : vector<1x128xf32> to vector<1x32xf32>
    %406 = vector.extract_strided_slice %401 {offsets = [0, 96], sizes = [1, 32], strides = [1, 1]} : vector<1x128xf32> to vector<1x32xf32>
    %407 = arith.mulf %404, %373 : vector<1x32xf32>
    %408 = arith.mulf %403, %405 : vector<1x32xf32>
    %409 = arith.addf %407, %408 : vector<1x32xf32>
    %410 = math.tanh %409 : vector<1x32xf32>
    %411 = arith.mulf %406, %410 : vector<1x32xf32>
    %412 = arith.negf %396 : vector<1x128xf32>
    %413 = math.exp %412 : vector<1x128xf32>
    %cst_74 = arith.constant 1.000000e+00 : f32
    %414 = vector.broadcast %cst_74 : f32 to vector<1x128xf32>
    %415 = arith.addf %414, %413 : vector<1x128xf32>
    %416 = arith.divf %414, %415 : vector<1x128xf32>
    %417 = math.tanh %396 : vector<1x128xf32>
    %418 = vector.extract_strided_slice %416 {offsets = [0, 0], sizes = [1, 32], strides = [1, 1]} : vector<1x128xf32> to vector<1x32xf32>
    %419 = vector.extract_strided_slice %416 {offsets = [0, 32], sizes = [1, 32], strides = [1, 1]} : vector<1x128xf32> to vector<1x32xf32>
    %420 = vector.extract_strided_slice %417 {offsets = [0, 64], sizes = [1, 32], strides = [1, 1]} : vector<1x128xf32> to vector<1x32xf32>
    %421 = vector.extract_strided_slice %416 {offsets = [0, 96], sizes = [1, 32], strides = [1, 1]} : vector<1x128xf32> to vector<1x32xf32>
    %422 = arith.mulf %419, %388 : vector<1x32xf32>
    %423 = arith.mulf %418, %420 : vector<1x32xf32>
    %424 = arith.addf %422, %423 : vector<1x32xf32>
    %425 = math.tanh %424 : vector<1x32xf32>
    %426 = arith.mulf %421, %425 : vector<1x32xf32>
    %427 = vector.extract_strided_slice %312 {offsets = [3, 0], sizes = [1, 128], strides = [1, 1]} : vector<8x256xf32> to vector<1x128xf32>
    %cst_75 = arith.constant dense<0.000000e+00> : vector<1x128xf32>
    %428 = tpu.matmul %411, %313, %cst_75 {dimension_numbers = #tpu.dot_dimension_numbers<[1], [0], [0], [1], [0, 0, 1, 1], [], []>} : vector<1x32xf32>, vector<32x128xf32>, vector<1x128xf32> -> vector<1x128xf32>
    %429 = arith.addf %427, %428 : vector<1x128xf32>
    %430 = vector.extract_strided_slice %312 {offsets = [4, 128], sizes = [1, 128], strides = [1, 1]} : vector<8x256xf32> to vector<1x128xf32>
    %cst_76 = arith.constant dense<0.000000e+00> : vector<1x128xf32>
    %431 = tpu.matmul %426, %314, %cst_76 {dimension_numbers = #tpu.dot_dimension_numbers<[1], [0], [0], [1], [0, 0, 1, 1], [], []>} : vector<1x32xf32>, vector<32x128xf32>, vector<1x128xf32> -> vector<1x128xf32>
    %432 = arith.addf %430, %431 : vector<1x128xf32>
    %433 = arith.negf %429 : vector<1x128xf32>
    %434 = math.exp %433 : vector<1x128xf32>
    %cst_77 = arith.constant 1.000000e+00 : f32
    %435 = vector.broadcast %cst_77 : f32 to vector<1x128xf32>
    %436 = arith.addf %435, %434 : vector<1x128xf32>
    %437 = arith.divf %435, %436 : vector<1x128xf32>
    %438 = math.tanh %429 : vector<1x128xf32>
    %439 = vector.extract_strided_slice %437 {offsets = [0, 0], sizes = [1, 32], strides = [1, 1]} : vector<1x128xf32> to vector<1x32xf32>
    %440 = vector.extract_strided_slice %437 {offsets = [0, 32], sizes = [1, 32], strides = [1, 1]} : vector<1x128xf32> to vector<1x32xf32>
    %441 = vector.extract_strided_slice %438 {offsets = [0, 64], sizes = [1, 32], strides = [1, 1]} : vector<1x128xf32> to vector<1x32xf32>
    %442 = vector.extract_strided_slice %437 {offsets = [0, 96], sizes = [1, 32], strides = [1, 1]} : vector<1x128xf32> to vector<1x32xf32>
    %443 = arith.mulf %440, %409 : vector<1x32xf32>
    %444 = arith.mulf %439, %441 : vector<1x32xf32>
    %445 = arith.addf %443, %444 : vector<1x32xf32>
    %446 = math.tanh %445 : vector<1x32xf32>
    %447 = arith.mulf %442, %446 : vector<1x32xf32>
    %448 = arith.negf %432 : vector<1x128xf32>
    %449 = math.exp %448 : vector<1x128xf32>
    %cst_78 = arith.constant 1.000000e+00 : f32
    %450 = vector.broadcast %cst_78 : f32 to vector<1x128xf32>
    %451 = arith.addf %450, %449 : vector<1x128xf32>
    %452 = arith.divf %450, %451 : vector<1x128xf32>
    %453 = math.tanh %432 : vector<1x128xf32>
    %454 = vector.extract_strided_slice %452 {offsets = [0, 0], sizes = [1, 32], strides = [1, 1]} : vector<1x128xf32> to vector<1x32xf32>
    %455 = vector.extract_strided_slice %452 {offsets = [0, 32], sizes = [1, 32], strides = [1, 1]} : vector<1x128xf32> to vector<1x32xf32>
    %456 = vector.extract_strided_slice %453 {offsets = [0, 64], sizes = [1, 32], strides = [1, 1]} : vector<1x128xf32> to vector<1x32xf32>
    %457 = vector.extract_strided_slice %452 {offsets = [0, 96], sizes = [1, 32], strides = [1, 1]} : vector<1x128xf32> to vector<1x32xf32>
    %458 = arith.mulf %455, %424 : vector<1x32xf32>
    %459 = arith.mulf %454, %456 : vector<1x32xf32>
    %460 = arith.addf %458, %459 : vector<1x32xf32>
    %461 = math.tanh %460 : vector<1x32xf32>
    %462 = arith.mulf %457, %461 : vector<1x32xf32>
    %463 = vector.extract_strided_slice %312 {offsets = [4, 0], sizes = [1, 128], strides = [1, 1]} : vector<8x256xf32> to vector<1x128xf32>
    %cst_79 = arith.constant dense<0.000000e+00> : vector<1x128xf32>
    %464 = tpu.matmul %447, %313, %cst_79 {dimension_numbers = #tpu.dot_dimension_numbers<[1], [0], [0], [1], [0, 0, 1, 1], [], []>} : vector<1x32xf32>, vector<32x128xf32>, vector<1x128xf32> -> vector<1x128xf32>
    %465 = arith.addf %463, %464 : vector<1x128xf32>
    %466 = vector.extract_strided_slice %312 {offsets = [3, 128], sizes = [1, 128], strides = [1, 1]} : vector<8x256xf32> to vector<1x128xf32>
    %cst_80 = arith.constant dense<0.000000e+00> : vector<1x128xf32>
    %467 = tpu.matmul %462, %314, %cst_80 {dimension_numbers = #tpu.dot_dimension_numbers<[1], [0], [0], [1], [0, 0, 1, 1], [], []>} : vector<1x32xf32>, vector<32x128xf32>, vector<1x128xf32> -> vector<1x128xf32>
    %468 = arith.addf %466, %467 : vector<1x128xf32>
    %469 = arith.negf %465 : vector<1x128xf32>
    %470 = math.exp %469 : vector<1x128xf32>
    %cst_81 = arith.constant 1.000000e+00 : f32
    %471 = vector.broadcast %cst_81 : f32 to vector<1x128xf32>
    %472 = arith.addf %471, %470 : vector<1x128xf32>
    %473 = arith.divf %471, %472 : vector<1x128xf32>
    %474 = math.tanh %465 : vector<1x128xf32>
    %475 = vector.extract_strided_slice %473 {offsets = [0, 0], sizes = [1, 32], strides = [1, 1]} : vector<1x128xf32> to vector<1x32xf32>
    %476 = vector.extract_strided_slice %473 {offsets = [0, 32], sizes = [1, 32], strides = [1, 1]} : vector<1x128xf32> to vector<1x32xf32>
    %477 = vector.extract_strided_slice %474 {offsets = [0, 64], sizes = [1, 32], strides = [1, 1]} : vector<1x128xf32> to vector<1x32xf32>
    %478 = vector.extract_strided_slice %473 {offsets = [0, 96], sizes = [1, 32], strides = [1, 1]} : vector<1x128xf32> to vector<1x32xf32>
    %479 = arith.mulf %476, %445 : vector<1x32xf32>
    %480 = arith.mulf %475, %477 : vector<1x32xf32>
    %481 = arith.addf %479, %480 : vector<1x32xf32>
    %482 = math.tanh %481 : vector<1x32xf32>
    %483 = arith.mulf %478, %482 : vector<1x32xf32>
    %484 = arith.negf %468 : vector<1x128xf32>
    %485 = math.exp %484 : vector<1x128xf32>
    %cst_82 = arith.constant 1.000000e+00 : f32
    %486 = vector.broadcast %cst_82 : f32 to vector<1x128xf32>
    %487 = arith.addf %486, %485 : vector<1x128xf32>
    %488 = arith.divf %486, %487 : vector<1x128xf32>
    %489 = math.tanh %468 : vector<1x128xf32>
    %490 = vector.extract_strided_slice %488 {offsets = [0, 0], sizes = [1, 32], strides = [1, 1]} : vector<1x128xf32> to vector<1x32xf32>
    %491 = vector.extract_strided_slice %488 {offsets = [0, 32], sizes = [1, 32], strides = [1, 1]} : vector<1x128xf32> to vector<1x32xf32>
    %492 = vector.extract_strided_slice %489 {offsets = [0, 64], sizes = [1, 32], strides = [1, 1]} : vector<1x128xf32> to vector<1x32xf32>
    %493 = vector.extract_strided_slice %488 {offsets = [0, 96], sizes = [1, 32], strides = [1, 1]} : vector<1x128xf32> to vector<1x32xf32>
    %494 = arith.mulf %491, %460 : vector<1x32xf32>
    %495 = arith.mulf %490, %492 : vector<1x32xf32>
    %496 = arith.addf %494, %495 : vector<1x32xf32>
    %497 = math.tanh %496 : vector<1x32xf32>
    %498 = arith.mulf %493, %497 : vector<1x32xf32>
    %499 = vector.extract_strided_slice %312 {offsets = [5, 0], sizes = [1, 128], strides = [1, 1]} : vector<8x256xf32> to vector<1x128xf32>
    %cst_83 = arith.constant dense<0.000000e+00> : vector<1x128xf32>
    %500 = tpu.matmul %483, %313, %cst_83 {dimension_numbers = #tpu.dot_dimension_numbers<[1], [0], [0], [1], [0, 0, 1, 1], [], []>} : vector<1x32xf32>, vector<32x128xf32>, vector<1x128xf32> -> vector<1x128xf32>
    %501 = arith.addf %499, %500 : vector<1x128xf32>
    %502 = vector.extract_strided_slice %312 {offsets = [2, 128], sizes = [1, 128], strides = [1, 1]} : vector<8x256xf32> to vector<1x128xf32>
    %cst_84 = arith.constant dense<0.000000e+00> : vector<1x128xf32>
    %503 = tpu.matmul %498, %314, %cst_84 {dimension_numbers = #tpu.dot_dimension_numbers<[1], [0], [0], [1], [0, 0, 1, 1], [], []>} : vector<1x32xf32>, vector<32x128xf32>, vector<1x128xf32> -> vector<1x128xf32>
    %504 = arith.addf %502, %503 : vector<1x128xf32>
    %505 = arith.negf %501 : vector<1x128xf32>
    %506 = math.exp %505 : vector<1x128xf32>
    %cst_85 = arith.constant 1.000000e+00 : f32
    %507 = vector.broadcast %cst_85 : f32 to vector<1x128xf32>
    %508 = arith.addf %507, %506 : vector<1x128xf32>
    %509 = arith.divf %507, %508 : vector<1x128xf32>
    %510 = math.tanh %501 : vector<1x128xf32>
    %511 = vector.extract_strided_slice %509 {offsets = [0, 0], sizes = [1, 32], strides = [1, 1]} : vector<1x128xf32> to vector<1x32xf32>
    %512 = vector.extract_strided_slice %509 {offsets = [0, 32], sizes = [1, 32], strides = [1, 1]} : vector<1x128xf32> to vector<1x32xf32>
    %513 = vector.extract_strided_slice %510 {offsets = [0, 64], sizes = [1, 32], strides = [1, 1]} : vector<1x128xf32> to vector<1x32xf32>
    %514 = vector.extract_strided_slice %509 {offsets = [0, 96], sizes = [1, 32], strides = [1, 1]} : vector<1x128xf32> to vector<1x32xf32>
    %515 = arith.mulf %512, %481 : vector<1x32xf32>
    %516 = arith.mulf %511, %513 : vector<1x32xf32>
    %517 = arith.addf %515, %516 : vector<1x32xf32>
    %518 = math.tanh %517 : vector<1x32xf32>
    %519 = arith.mulf %514, %518 : vector<1x32xf32>
    %520 = arith.negf %504 : vector<1x128xf32>
    %521 = math.exp %520 : vector<1x128xf32>
    %cst_86 = arith.constant 1.000000e+00 : f32
    %522 = vector.broadcast %cst_86 : f32 to vector<1x128xf32>
    %523 = arith.addf %522, %521 : vector<1x128xf32>
    %524 = arith.divf %522, %523 : vector<1x128xf32>
    %525 = math.tanh %504 : vector<1x128xf32>
    %526 = vector.extract_strided_slice %524 {offsets = [0, 0], sizes = [1, 32], strides = [1, 1]} : vector<1x128xf32> to vector<1x32xf32>
    %527 = vector.extract_strided_slice %524 {offsets = [0, 32], sizes = [1, 32], strides = [1, 1]} : vector<1x128xf32> to vector<1x32xf32>
    %528 = vector.extract_strided_slice %525 {offsets = [0, 64], sizes = [1, 32], strides = [1, 1]} : vector<1x128xf32> to vector<1x32xf32>
    %529 = vector.extract_strided_slice %524 {offsets = [0, 96], sizes = [1, 32], strides = [1, 1]} : vector<1x128xf32> to vector<1x32xf32>
    %530 = arith.mulf %527, %496 : vector<1x32xf32>
    %531 = arith.mulf %526, %528 : vector<1x32xf32>
    %532 = arith.addf %530, %531 : vector<1x32xf32>
    %533 = math.tanh %532 : vector<1x32xf32>
    %534 = arith.mulf %529, %533 : vector<1x32xf32>
    %535 = vector.extract_strided_slice %312 {offsets = [6, 0], sizes = [1, 128], strides = [1, 1]} : vector<8x256xf32> to vector<1x128xf32>
    %cst_87 = arith.constant dense<0.000000e+00> : vector<1x128xf32>
    %536 = tpu.matmul %519, %313, %cst_87 {dimension_numbers = #tpu.dot_dimension_numbers<[1], [0], [0], [1], [0, 0, 1, 1], [], []>} : vector<1x32xf32>, vector<32x128xf32>, vector<1x128xf32> -> vector<1x128xf32>
    %537 = arith.addf %535, %536 : vector<1x128xf32>
    %538 = vector.extract_strided_slice %312 {offsets = [1, 128], sizes = [1, 128], strides = [1, 1]} : vector<8x256xf32> to vector<1x128xf32>
    %cst_88 = arith.constant dense<0.000000e+00> : vector<1x128xf32>
    %539 = tpu.matmul %534, %314, %cst_88 {dimension_numbers = #tpu.dot_dimension_numbers<[1], [0], [0], [1], [0, 0, 1, 1], [], []>} : vector<1x32xf32>, vector<32x128xf32>, vector<1x128xf32> -> vector<1x128xf32>
    %540 = arith.addf %538, %539 : vector<1x128xf32>
    %541 = arith.negf %537 : vector<1x128xf32>
    %542 = math.exp %541 : vector<1x128xf32>
    %cst_89 = arith.constant 1.000000e+00 : f32
    %543 = vector.broadcast %cst_89 : f32 to vector<1x128xf32>
    %544 = arith.addf %543, %542 : vector<1x128xf32>
    %545 = arith.divf %543, %544 : vector<1x128xf32>
    %546 = math.tanh %537 : vector<1x128xf32>
    %547 = vector.extract_strided_slice %545 {offsets = [0, 0], sizes = [1, 32], strides = [1, 1]} : vector<1x128xf32> to vector<1x32xf32>
    %548 = vector.extract_strided_slice %545 {offsets = [0, 32], sizes = [1, 32], strides = [1, 1]} : vector<1x128xf32> to vector<1x32xf32>
    %549 = vector.extract_strided_slice %546 {offsets = [0, 64], sizes = [1, 32], strides = [1, 1]} : vector<1x128xf32> to vector<1x32xf32>
    %550 = vector.extract_strided_slice %545 {offsets = [0, 96], sizes = [1, 32], strides = [1, 1]} : vector<1x128xf32> to vector<1x32xf32>
    %551 = arith.mulf %548, %517 : vector<1x32xf32>
    %552 = arith.mulf %547, %549 : vector<1x32xf32>
    %553 = arith.addf %551, %552 : vector<1x32xf32>
    %554 = math.tanh %553 : vector<1x32xf32>
    %555 = arith.mulf %550, %554 : vector<1x32xf32>
    %556 = arith.negf %540 : vector<1x128xf32>
    %557 = math.exp %556 : vector<1x128xf32>
    %cst_90 = arith.constant 1.000000e+00 : f32
    %558 = vector.broadcast %cst_90 : f32 to vector<1x128xf32>
    %559 = arith.addf %558, %557 : vector<1x128xf32>
    %560 = arith.divf %558, %559 : vector<1x128xf32>
    %561 = math.tanh %540 : vector<1x128xf32>
    %562 = vector.extract_strided_slice %560 {offsets = [0, 0], sizes = [1, 32], strides = [1, 1]} : vector<1x128xf32> to vector<1x32xf32>
    %563 = vector.extract_strided_slice %560 {offsets = [0, 32], sizes = [1, 32], strides = [1, 1]} : vector<1x128xf32> to vector<1x32xf32>
    %564 = vector.extract_strided_slice %561 {offsets = [0, 64], sizes = [1, 32], strides = [1, 1]} : vector<1x128xf32> to vector<1x32xf32>
    %565 = vector.extract_strided_slice %560 {offsets = [0, 96], sizes = [1, 32], strides = [1, 1]} : vector<1x128xf32> to vector<1x32xf32>
    %566 = arith.mulf %563, %532 : vector<1x32xf32>
    %567 = arith.mulf %562, %564 : vector<1x32xf32>
    %568 = arith.addf %566, %567 : vector<1x32xf32>
    %569 = math.tanh %568 : vector<1x32xf32>
    %570 = arith.mulf %565, %569 : vector<1x32xf32>
    %571 = vector.extract_strided_slice %312 {offsets = [7, 0], sizes = [1, 128], strides = [1, 1]} : vector<8x256xf32> to vector<1x128xf32>
    %cst_91 = arith.constant dense<0.000000e+00> : vector<1x128xf32>
    %572 = tpu.matmul %555, %313, %cst_91 {dimension_numbers = #tpu.dot_dimension_numbers<[1], [0], [0], [1], [0, 0, 1, 1], [], []>} : vector<1x32xf32>, vector<32x128xf32>, vector<1x128xf32> -> vector<1x128xf32>
    %573 = arith.addf %571, %572 : vector<1x128xf32>
    %574 = vector.extract_strided_slice %312 {offsets = [0, 128], sizes = [1, 128], strides = [1, 1]} : vector<8x256xf32> to vector<1x128xf32>
    %cst_92 = arith.constant dense<0.000000e+00> : vector<1x128xf32>
    %575 = tpu.matmul %570, %314, %cst_92 {dimension_numbers = #tpu.dot_dimension_numbers<[1], [0], [0], [1], [0, 0, 1, 1], [], []>} : vector<1x32xf32>, vector<32x128xf32>, vector<1x128xf32> -> vector<1x128xf32>
    %576 = arith.addf %574, %575 : vector<1x128xf32>
    %577 = arith.negf %573 : vector<1x128xf32>
    %578 = math.exp %577 : vector<1x128xf32>
    %cst_93 = arith.constant 1.000000e+00 : f32
    %579 = vector.broadcast %cst_93 : f32 to vector<1x128xf32>
    %580 = arith.addf %579, %578 : vector<1x128xf32>
    %581 = arith.divf %579, %580 : vector<1x128xf32>
    %582 = math.tanh %573 : vector<1x128xf32>
    %583 = vector.extract_strided_slice %581 {offsets = [0, 0], sizes = [1, 32], strides = [1, 1]} : vector<1x128xf32> to vector<1x32xf32>
    %584 = vector.extract_strided_slice %581 {offsets = [0, 32], sizes = [1, 32], strides = [1, 1]} : vector<1x128xf32> to vector<1x32xf32>
    %585 = vector.extract_strided_slice %582 {offsets = [0, 64], sizes = [1, 32], strides = [1, 1]} : vector<1x128xf32> to vector<1x32xf32>
    %586 = vector.extract_strided_slice %581 {offsets = [0, 96], sizes = [1, 32], strides = [1, 1]} : vector<1x128xf32> to vector<1x32xf32>
    %587 = arith.mulf %584, %553 : vector<1x32xf32>
    %588 = arith.mulf %583, %585 : vector<1x32xf32>
    %589 = arith.addf %587, %588 : vector<1x32xf32>
    %590 = math.tanh %589 : vector<1x32xf32>
    %591 = arith.mulf %586, %590 : vector<1x32xf32>
    %592 = arith.negf %576 : vector<1x128xf32>
    %593 = math.exp %592 : vector<1x128xf32>
    %cst_94 = arith.constant 1.000000e+00 : f32
    %594 = vector.broadcast %cst_94 : f32 to vector<1x128xf32>
    %595 = arith.addf %594, %593 : vector<1x128xf32>
    %596 = arith.divf %594, %595 : vector<1x128xf32>
    %597 = math.tanh %576 : vector<1x128xf32>
    %598 = vector.extract_strided_slice %596 {offsets = [0, 0], sizes = [1, 32], strides = [1, 1]} : vector<1x128xf32> to vector<1x32xf32>
    %599 = vector.extract_strided_slice %596 {offsets = [0, 32], sizes = [1, 32], strides = [1, 1]} : vector<1x128xf32> to vector<1x32xf32>
    %600 = vector.extract_strided_slice %597 {offsets = [0, 64], sizes = [1, 32], strides = [1, 1]} : vector<1x128xf32> to vector<1x32xf32>
    %601 = vector.extract_strided_slice %596 {offsets = [0, 96], sizes = [1, 32], strides = [1, 1]} : vector<1x128xf32> to vector<1x32xf32>
    %602 = arith.mulf %599, %568 : vector<1x32xf32>
    %603 = arith.mulf %598, %600 : vector<1x32xf32>
    %604 = arith.addf %602, %603 : vector<1x32xf32>
    %605 = math.tanh %604 : vector<1x32xf32>
    %606 = arith.mulf %601, %605 : vector<1x32xf32>
    %607 = tpu.concatenate %339, %375, %411, %447, %483, %519, %555, %591 in 0 : vector<1x32xf32>, vector<1x32xf32>, vector<1x32xf32>, vector<1x32xf32>, vector<1x32xf32>, vector<1x32xf32>, vector<1x32xf32>, vector<1x32xf32> -> vector<8x32xf32>
    %608 = tpu.concatenate %606, %570, %534, %498, %462, %426, %390, %354 in 0 : vector<1x32xf32>, vector<1x32xf32>, vector<1x32xf32>, vector<1x32xf32>, vector<1x32xf32>, vector<1x32xf32>, vector<1x32xf32>, vector<1x32xf32> -> vector<8x32xf32>
    %609 = tpu.concatenate %607, %608 in 1 : vector<8x32xf32>, vector<8x32xf32> -> vector<8x64xf32>
    %c0_95 = arith.constant 0 : index
    %c0_96 = arith.constant 0 : index
    %610 = vector.load %arg13[%c0_95, %c0_96] : memref<64x256xf32, #tpu.memory_space<vmem>>, vector<64x256xf32>
    %cst_97 = arith.constant dense<0.000000e+00> : vector<8x256xf32>
    %611 = tpu.matmul %609, %610, %cst_97 {dimension_numbers = #tpu.dot_dimension_numbers<[1], [0], [0], [1], [0, 0, 1, 1], [], []>} : vector<8x64xf32>, vector<64x256xf32>, vector<8x256xf32> -> vector<8x256xf32>
    %c0_98 = arith.constant 0 : index
    %c0_99 = arith.constant 0 : index
    %612 = vector.load %arg16[%c0_98, %c0_99] : memref<1x256xf32, #tpu.memory_space<vmem>>, vector<1x256xf32>
    %613 = vector.broadcast %612 : vector<1x256xf32> to vector<8x256xf32>
    %614 = arith.addf %611, %613 : vector<8x256xf32>
    %c0_100 = arith.constant 0 : index
    %c0_101 = arith.constant 0 : index
    %615 = vector.load %arg14[%c0_100, %c0_101] : memref<32x128xf32, #tpu.memory_space<vmem>>, vector<32x128xf32>
    %c0_102 = arith.constant 0 : index
    %c0_103 = arith.constant 0 : index
    %616 = vector.load %arg15[%c0_102, %c0_103] : memref<32x128xf32, #tpu.memory_space<vmem>>, vector<32x128xf32>
    %cst_104 = arith.constant 0.000000e+00 : f32
    %617 = vector.broadcast %cst_104 : f32 to vector<1x32xf32>
    %cst_105 = arith.constant 0.000000e+00 : f32
    %618 = vector.broadcast %cst_105 : f32 to vector<1x32xf32>
    %cst_106 = arith.constant 0.000000e+00 : f32
    %619 = vector.broadcast %cst_106 : f32 to vector<1x32xf32>
    %cst_107 = arith.constant 0.000000e+00 : f32
    %620 = vector.broadcast %cst_107 : f32 to vector<1x32xf32>
    %621 = vector.extract_strided_slice %614 {offsets = [0, 0], sizes = [1, 128], strides = [1, 1]} : vector<8x256xf32> to vector<1x128xf32>
    %cst_108 = arith.constant dense<0.000000e+00> : vector<1x128xf32>
    %622 = tpu.matmul %617, %615, %cst_108 {dimension_numbers = #tpu.dot_dimension_numbers<[1], [0], [0], [1], [0, 0, 1, 1], [], []>} : vector<1x32xf32>, vector<32x128xf32>, vector<1x128xf32> -> vector<1x128xf32>
    %623 = arith.addf %621, %622 : vector<1x128xf32>
    %624 = vector.extract_strided_slice %614 {offsets = [7, 128], sizes = [1, 128], strides = [1, 1]} : vector<8x256xf32> to vector<1x128xf32>
    %cst_109 = arith.constant dense<0.000000e+00> : vector<1x128xf32>
    %625 = tpu.matmul %619, %616, %cst_109 {dimension_numbers = #tpu.dot_dimension_numbers<[1], [0], [0], [1], [0, 0, 1, 1], [], []>} : vector<1x32xf32>, vector<32x128xf32>, vector<1x128xf32> -> vector<1x128xf32>
    %626 = arith.addf %624, %625 : vector<1x128xf32>
    %627 = arith.negf %623 : vector<1x128xf32>
    %628 = math.exp %627 : vector<1x128xf32>
    %cst_110 = arith.constant 1.000000e+00 : f32
    %629 = vector.broadcast %cst_110 : f32 to vector<1x128xf32>
    %630 = arith.addf %629, %628 : vector<1x128xf32>
    %631 = arith.divf %629, %630 : vector<1x128xf32>
    %632 = math.tanh %623 : vector<1x128xf32>
    %633 = vector.extract_strided_slice %631 {offsets = [0, 0], sizes = [1, 32], strides = [1, 1]} : vector<1x128xf32> to vector<1x32xf32>
    %634 = vector.extract_strided_slice %631 {offsets = [0, 32], sizes = [1, 32], strides = [1, 1]} : vector<1x128xf32> to vector<1x32xf32>
    %635 = vector.extract_strided_slice %632 {offsets = [0, 64], sizes = [1, 32], strides = [1, 1]} : vector<1x128xf32> to vector<1x32xf32>
    %636 = vector.extract_strided_slice %631 {offsets = [0, 96], sizes = [1, 32], strides = [1, 1]} : vector<1x128xf32> to vector<1x32xf32>
    %637 = arith.mulf %634, %618 : vector<1x32xf32>
    %638 = arith.mulf %633, %635 : vector<1x32xf32>
    %639 = arith.addf %637, %638 : vector<1x32xf32>
    %640 = math.tanh %639 : vector<1x32xf32>
    %641 = arith.mulf %636, %640 : vector<1x32xf32>
    %642 = arith.negf %626 : vector<1x128xf32>
    %643 = math.exp %642 : vector<1x128xf32>
    %cst_111 = arith.constant 1.000000e+00 : f32
    %644 = vector.broadcast %cst_111 : f32 to vector<1x128xf32>
    %645 = arith.addf %644, %643 : vector<1x128xf32>
    %646 = arith.divf %644, %645 : vector<1x128xf32>
    %647 = math.tanh %626 : vector<1x128xf32>
    %648 = vector.extract_strided_slice %646 {offsets = [0, 0], sizes = [1, 32], strides = [1, 1]} : vector<1x128xf32> to vector<1x32xf32>
    %649 = vector.extract_strided_slice %646 {offsets = [0, 32], sizes = [1, 32], strides = [1, 1]} : vector<1x128xf32> to vector<1x32xf32>
    %650 = vector.extract_strided_slice %647 {offsets = [0, 64], sizes = [1, 32], strides = [1, 1]} : vector<1x128xf32> to vector<1x32xf32>
    %651 = vector.extract_strided_slice %646 {offsets = [0, 96], sizes = [1, 32], strides = [1, 1]} : vector<1x128xf32> to vector<1x32xf32>
    %652 = arith.mulf %649, %620 : vector<1x32xf32>
    %653 = arith.mulf %648, %650 : vector<1x32xf32>
    %654 = arith.addf %652, %653 : vector<1x32xf32>
    %655 = math.tanh %654 : vector<1x32xf32>
    %656 = arith.mulf %651, %655 : vector<1x32xf32>
    %657 = vector.extract_strided_slice %614 {offsets = [1, 0], sizes = [1, 128], strides = [1, 1]} : vector<8x256xf32> to vector<1x128xf32>
    %cst_112 = arith.constant dense<0.000000e+00> : vector<1x128xf32>
    %658 = tpu.matmul %641, %615, %cst_112 {dimension_numbers = #tpu.dot_dimension_numbers<[1], [0], [0], [1], [0, 0, 1, 1], [], []>} : vector<1x32xf32>, vector<32x128xf32>, vector<1x128xf32> -> vector<1x128xf32>
    %659 = arith.addf %657, %658 : vector<1x128xf32>
    %660 = vector.extract_strided_slice %614 {offsets = [6, 128], sizes = [1, 128], strides = [1, 1]} : vector<8x256xf32> to vector<1x128xf32>
    %cst_113 = arith.constant dense<0.000000e+00> : vector<1x128xf32>
    %661 = tpu.matmul %656, %616, %cst_113 {dimension_numbers = #tpu.dot_dimension_numbers<[1], [0], [0], [1], [0, 0, 1, 1], [], []>} : vector<1x32xf32>, vector<32x128xf32>, vector<1x128xf32> -> vector<1x128xf32>
    %662 = arith.addf %660, %661 : vector<1x128xf32>
    %663 = arith.negf %659 : vector<1x128xf32>
    %664 = math.exp %663 : vector<1x128xf32>
    %cst_114 = arith.constant 1.000000e+00 : f32
    %665 = vector.broadcast %cst_114 : f32 to vector<1x128xf32>
    %666 = arith.addf %665, %664 : vector<1x128xf32>
    %667 = arith.divf %665, %666 : vector<1x128xf32>
    %668 = math.tanh %659 : vector<1x128xf32>
    %669 = vector.extract_strided_slice %667 {offsets = [0, 0], sizes = [1, 32], strides = [1, 1]} : vector<1x128xf32> to vector<1x32xf32>
    %670 = vector.extract_strided_slice %667 {offsets = [0, 32], sizes = [1, 32], strides = [1, 1]} : vector<1x128xf32> to vector<1x32xf32>
    %671 = vector.extract_strided_slice %668 {offsets = [0, 64], sizes = [1, 32], strides = [1, 1]} : vector<1x128xf32> to vector<1x32xf32>
    %672 = vector.extract_strided_slice %667 {offsets = [0, 96], sizes = [1, 32], strides = [1, 1]} : vector<1x128xf32> to vector<1x32xf32>
    %673 = arith.mulf %670, %639 : vector<1x32xf32>
    %674 = arith.mulf %669, %671 : vector<1x32xf32>
    %675 = arith.addf %673, %674 : vector<1x32xf32>
    %676 = math.tanh %675 : vector<1x32xf32>
    %677 = arith.mulf %672, %676 : vector<1x32xf32>
    %678 = arith.negf %662 : vector<1x128xf32>
    %679 = math.exp %678 : vector<1x128xf32>
    %cst_115 = arith.constant 1.000000e+00 : f32
    %680 = vector.broadcast %cst_115 : f32 to vector<1x128xf32>
    %681 = arith.addf %680, %679 : vector<1x128xf32>
    %682 = arith.divf %680, %681 : vector<1x128xf32>
    %683 = math.tanh %662 : vector<1x128xf32>
    %684 = vector.extract_strided_slice %682 {offsets = [0, 0], sizes = [1, 32], strides = [1, 1]} : vector<1x128xf32> to vector<1x32xf32>
    %685 = vector.extract_strided_slice %682 {offsets = [0, 32], sizes = [1, 32], strides = [1, 1]} : vector<1x128xf32> to vector<1x32xf32>
    %686 = vector.extract_strided_slice %683 {offsets = [0, 64], sizes = [1, 32], strides = [1, 1]} : vector<1x128xf32> to vector<1x32xf32>
    %687 = vector.extract_strided_slice %682 {offsets = [0, 96], sizes = [1, 32], strides = [1, 1]} : vector<1x128xf32> to vector<1x32xf32>
    %688 = arith.mulf %685, %654 : vector<1x32xf32>
    %689 = arith.mulf %684, %686 : vector<1x32xf32>
    %690 = arith.addf %688, %689 : vector<1x32xf32>
    %691 = math.tanh %690 : vector<1x32xf32>
    %692 = arith.mulf %687, %691 : vector<1x32xf32>
    %693 = vector.extract_strided_slice %614 {offsets = [2, 0], sizes = [1, 128], strides = [1, 1]} : vector<8x256xf32> to vector<1x128xf32>
    %cst_116 = arith.constant dense<0.000000e+00> : vector<1x128xf32>
    %694 = tpu.matmul %677, %615, %cst_116 {dimension_numbers = #tpu.dot_dimension_numbers<[1], [0], [0], [1], [0, 0, 1, 1], [], []>} : vector<1x32xf32>, vector<32x128xf32>, vector<1x128xf32> -> vector<1x128xf32>
    %695 = arith.addf %693, %694 : vector<1x128xf32>
    %696 = vector.extract_strided_slice %614 {offsets = [5, 128], sizes = [1, 128], strides = [1, 1]} : vector<8x256xf32> to vector<1x128xf32>
    %cst_117 = arith.constant dense<0.000000e+00> : vector<1x128xf32>
    %697 = tpu.matmul %692, %616, %cst_117 {dimension_numbers = #tpu.dot_dimension_numbers<[1], [0], [0], [1], [0, 0, 1, 1], [], []>} : vector<1x32xf32>, vector<32x128xf32>, vector<1x128xf32> -> vector<1x128xf32>
    %698 = arith.addf %696, %697 : vector<1x128xf32>
    %699 = arith.negf %695 : vector<1x128xf32>
    %700 = math.exp %699 : vector<1x128xf32>
    %cst_118 = arith.constant 1.000000e+00 : f32
    %701 = vector.broadcast %cst_118 : f32 to vector<1x128xf32>
    %702 = arith.addf %701, %700 : vector<1x128xf32>
    %703 = arith.divf %701, %702 : vector<1x128xf32>
    %704 = math.tanh %695 : vector<1x128xf32>
    %705 = vector.extract_strided_slice %703 {offsets = [0, 0], sizes = [1, 32], strides = [1, 1]} : vector<1x128xf32> to vector<1x32xf32>
    %706 = vector.extract_strided_slice %703 {offsets = [0, 32], sizes = [1, 32], strides = [1, 1]} : vector<1x128xf32> to vector<1x32xf32>
    %707 = vector.extract_strided_slice %704 {offsets = [0, 64], sizes = [1, 32], strides = [1, 1]} : vector<1x128xf32> to vector<1x32xf32>
    %708 = vector.extract_strided_slice %703 {offsets = [0, 96], sizes = [1, 32], strides = [1, 1]} : vector<1x128xf32> to vector<1x32xf32>
    %709 = arith.mulf %706, %675 : vector<1x32xf32>
    %710 = arith.mulf %705, %707 : vector<1x32xf32>
    %711 = arith.addf %709, %710 : vector<1x32xf32>
    %712 = math.tanh %711 : vector<1x32xf32>
    %713 = arith.mulf %708, %712 : vector<1x32xf32>
    %714 = arith.negf %698 : vector<1x128xf32>
    %715 = math.exp %714 : vector<1x128xf32>
    %cst_119 = arith.constant 1.000000e+00 : f32
    %716 = vector.broadcast %cst_119 : f32 to vector<1x128xf32>
    %717 = arith.addf %716, %715 : vector<1x128xf32>
    %718 = arith.divf %716, %717 : vector<1x128xf32>
    %719 = math.tanh %698 : vector<1x128xf32>
    %720 = vector.extract_strided_slice %718 {offsets = [0, 0], sizes = [1, 32], strides = [1, 1]} : vector<1x128xf32> to vector<1x32xf32>
    %721 = vector.extract_strided_slice %718 {offsets = [0, 32], sizes = [1, 32], strides = [1, 1]} : vector<1x128xf32> to vector<1x32xf32>
    %722 = vector.extract_strided_slice %719 {offsets = [0, 64], sizes = [1, 32], strides = [1, 1]} : vector<1x128xf32> to vector<1x32xf32>
    %723 = vector.extract_strided_slice %718 {offsets = [0, 96], sizes = [1, 32], strides = [1, 1]} : vector<1x128xf32> to vector<1x32xf32>
    %724 = arith.mulf %721, %690 : vector<1x32xf32>
    %725 = arith.mulf %720, %722 : vector<1x32xf32>
    %726 = arith.addf %724, %725 : vector<1x32xf32>
    %727 = math.tanh %726 : vector<1x32xf32>
    %728 = arith.mulf %723, %727 : vector<1x32xf32>
    %729 = vector.extract_strided_slice %614 {offsets = [3, 0], sizes = [1, 128], strides = [1, 1]} : vector<8x256xf32> to vector<1x128xf32>
    %cst_120 = arith.constant dense<0.000000e+00> : vector<1x128xf32>
    %730 = tpu.matmul %713, %615, %cst_120 {dimension_numbers = #tpu.dot_dimension_numbers<[1], [0], [0], [1], [0, 0, 1, 1], [], []>} : vector<1x32xf32>, vector<32x128xf32>, vector<1x128xf32> -> vector<1x128xf32>
    %731 = arith.addf %729, %730 : vector<1x128xf32>
    %732 = vector.extract_strided_slice %614 {offsets = [4, 128], sizes = [1, 128], strides = [1, 1]} : vector<8x256xf32> to vector<1x128xf32>
    %cst_121 = arith.constant dense<0.000000e+00> : vector<1x128xf32>
    %733 = tpu.matmul %728, %616, %cst_121 {dimension_numbers = #tpu.dot_dimension_numbers<[1], [0], [0], [1], [0, 0, 1, 1], [], []>} : vector<1x32xf32>, vector<32x128xf32>, vector<1x128xf32> -> vector<1x128xf32>
    %734 = arith.addf %732, %733 : vector<1x128xf32>
    %735 = arith.negf %731 : vector<1x128xf32>
    %736 = math.exp %735 : vector<1x128xf32>
    %cst_122 = arith.constant 1.000000e+00 : f32
    %737 = vector.broadcast %cst_122 : f32 to vector<1x128xf32>
    %738 = arith.addf %737, %736 : vector<1x128xf32>
    %739 = arith.divf %737, %738 : vector<1x128xf32>
    %740 = math.tanh %731 : vector<1x128xf32>
    %741 = vector.extract_strided_slice %739 {offsets = [0, 0], sizes = [1, 32], strides = [1, 1]} : vector<1x128xf32> to vector<1x32xf32>
    %742 = vector.extract_strided_slice %739 {offsets = [0, 32], sizes = [1, 32], strides = [1, 1]} : vector<1x128xf32> to vector<1x32xf32>
    %743 = vector.extract_strided_slice %740 {offsets = [0, 64], sizes = [1, 32], strides = [1, 1]} : vector<1x128xf32> to vector<1x32xf32>
    %744 = vector.extract_strided_slice %739 {offsets = [0, 96], sizes = [1, 32], strides = [1, 1]} : vector<1x128xf32> to vector<1x32xf32>
    %745 = arith.mulf %742, %711 : vector<1x32xf32>
    %746 = arith.mulf %741, %743 : vector<1x32xf32>
    %747 = arith.addf %745, %746 : vector<1x32xf32>
    %748 = math.tanh %747 : vector<1x32xf32>
    %749 = arith.mulf %744, %748 : vector<1x32xf32>
    %750 = arith.negf %734 : vector<1x128xf32>
    %751 = math.exp %750 : vector<1x128xf32>
    %cst_123 = arith.constant 1.000000e+00 : f32
    %752 = vector.broadcast %cst_123 : f32 to vector<1x128xf32>
    %753 = arith.addf %752, %751 : vector<1x128xf32>
    %754 = arith.divf %752, %753 : vector<1x128xf32>
    %755 = math.tanh %734 : vector<1x128xf32>
    %756 = vector.extract_strided_slice %754 {offsets = [0, 0], sizes = [1, 32], strides = [1, 1]} : vector<1x128xf32> to vector<1x32xf32>
    %757 = vector.extract_strided_slice %754 {offsets = [0, 32], sizes = [1, 32], strides = [1, 1]} : vector<1x128xf32> to vector<1x32xf32>
    %758 = vector.extract_strided_slice %755 {offsets = [0, 64], sizes = [1, 32], strides = [1, 1]} : vector<1x128xf32> to vector<1x32xf32>
    %759 = vector.extract_strided_slice %754 {offsets = [0, 96], sizes = [1, 32], strides = [1, 1]} : vector<1x128xf32> to vector<1x32xf32>
    %760 = arith.mulf %757, %726 : vector<1x32xf32>
    %761 = arith.mulf %756, %758 : vector<1x32xf32>
    %762 = arith.addf %760, %761 : vector<1x32xf32>
    %763 = math.tanh %762 : vector<1x32xf32>
    %764 = arith.mulf %759, %763 : vector<1x32xf32>
    %765 = vector.extract_strided_slice %614 {offsets = [4, 0], sizes = [1, 128], strides = [1, 1]} : vector<8x256xf32> to vector<1x128xf32>
    %cst_124 = arith.constant dense<0.000000e+00> : vector<1x128xf32>
    %766 = tpu.matmul %749, %615, %cst_124 {dimension_numbers = #tpu.dot_dimension_numbers<[1], [0], [0], [1], [0, 0, 1, 1], [], []>} : vector<1x32xf32>, vector<32x128xf32>, vector<1x128xf32> -> vector<1x128xf32>
    %767 = arith.addf %765, %766 : vector<1x128xf32>
    %768 = vector.extract_strided_slice %614 {offsets = [3, 128], sizes = [1, 128], strides = [1, 1]} : vector<8x256xf32> to vector<1x128xf32>
    %cst_125 = arith.constant dense<0.000000e+00> : vector<1x128xf32>
    %769 = tpu.matmul %764, %616, %cst_125 {dimension_numbers = #tpu.dot_dimension_numbers<[1], [0], [0], [1], [0, 0, 1, 1], [], []>} : vector<1x32xf32>, vector<32x128xf32>, vector<1x128xf32> -> vector<1x128xf32>
    %770 = arith.addf %768, %769 : vector<1x128xf32>
    %771 = arith.negf %767 : vector<1x128xf32>
    %772 = math.exp %771 : vector<1x128xf32>
    %cst_126 = arith.constant 1.000000e+00 : f32
    %773 = vector.broadcast %cst_126 : f32 to vector<1x128xf32>
    %774 = arith.addf %773, %772 : vector<1x128xf32>
    %775 = arith.divf %773, %774 : vector<1x128xf32>
    %776 = math.tanh %767 : vector<1x128xf32>
    %777 = vector.extract_strided_slice %775 {offsets = [0, 0], sizes = [1, 32], strides = [1, 1]} : vector<1x128xf32> to vector<1x32xf32>
    %778 = vector.extract_strided_slice %775 {offsets = [0, 32], sizes = [1, 32], strides = [1, 1]} : vector<1x128xf32> to vector<1x32xf32>
    %779 = vector.extract_strided_slice %776 {offsets = [0, 64], sizes = [1, 32], strides = [1, 1]} : vector<1x128xf32> to vector<1x32xf32>
    %780 = vector.extract_strided_slice %775 {offsets = [0, 96], sizes = [1, 32], strides = [1, 1]} : vector<1x128xf32> to vector<1x32xf32>
    %781 = arith.mulf %778, %747 : vector<1x32xf32>
    %782 = arith.mulf %777, %779 : vector<1x32xf32>
    %783 = arith.addf %781, %782 : vector<1x32xf32>
    %784 = math.tanh %783 : vector<1x32xf32>
    %785 = arith.mulf %780, %784 : vector<1x32xf32>
    %786 = arith.negf %770 : vector<1x128xf32>
    %787 = math.exp %786 : vector<1x128xf32>
    %cst_127 = arith.constant 1.000000e+00 : f32
    %788 = vector.broadcast %cst_127 : f32 to vector<1x128xf32>
    %789 = arith.addf %788, %787 : vector<1x128xf32>
    %790 = arith.divf %788, %789 : vector<1x128xf32>
    %791 = math.tanh %770 : vector<1x128xf32>
    %792 = vector.extract_strided_slice %790 {offsets = [0, 0], sizes = [1, 32], strides = [1, 1]} : vector<1x128xf32> to vector<1x32xf32>
    %793 = vector.extract_strided_slice %790 {offsets = [0, 32], sizes = [1, 32], strides = [1, 1]} : vector<1x128xf32> to vector<1x32xf32>
    %794 = vector.extract_strided_slice %791 {offsets = [0, 64], sizes = [1, 32], strides = [1, 1]} : vector<1x128xf32> to vector<1x32xf32>
    %795 = vector.extract_strided_slice %790 {offsets = [0, 96], sizes = [1, 32], strides = [1, 1]} : vector<1x128xf32> to vector<1x32xf32>
    %796 = arith.mulf %793, %762 : vector<1x32xf32>
    %797 = arith.mulf %792, %794 : vector<1x32xf32>
    %798 = arith.addf %796, %797 : vector<1x32xf32>
    %799 = math.tanh %798 : vector<1x32xf32>
    %800 = arith.mulf %795, %799 : vector<1x32xf32>
    %801 = vector.extract_strided_slice %614 {offsets = [5, 0], sizes = [1, 128], strides = [1, 1]} : vector<8x256xf32> to vector<1x128xf32>
    %cst_128 = arith.constant dense<0.000000e+00> : vector<1x128xf32>
    %802 = tpu.matmul %785, %615, %cst_128 {dimension_numbers = #tpu.dot_dimension_numbers<[1], [0], [0], [1], [0, 0, 1, 1], [], []>} : vector<1x32xf32>, vector<32x128xf32>, vector<1x128xf32> -> vector<1x128xf32>
    %803 = arith.addf %801, %802 : vector<1x128xf32>
    %804 = vector.extract_strided_slice %614 {offsets = [2, 128], sizes = [1, 128], strides = [1, 1]} : vector<8x256xf32> to vector<1x128xf32>
    %cst_129 = arith.constant dense<0.000000e+00> : vector<1x128xf32>
    %805 = tpu.matmul %800, %616, %cst_129 {dimension_numbers = #tpu.dot_dimension_numbers<[1], [0], [0], [1], [0, 0, 1, 1], [], []>} : vector<1x32xf32>, vector<32x128xf32>, vector<1x128xf32> -> vector<1x128xf32>
    %806 = arith.addf %804, %805 : vector<1x128xf32>
    %807 = arith.negf %803 : vector<1x128xf32>
    %808 = math.exp %807 : vector<1x128xf32>
    %cst_130 = arith.constant 1.000000e+00 : f32
    %809 = vector.broadcast %cst_130 : f32 to vector<1x128xf32>
    %810 = arith.addf %809, %808 : vector<1x128xf32>
    %811 = arith.divf %809, %810 : vector<1x128xf32>
    %812 = math.tanh %803 : vector<1x128xf32>
    %813 = vector.extract_strided_slice %811 {offsets = [0, 0], sizes = [1, 32], strides = [1, 1]} : vector<1x128xf32> to vector<1x32xf32>
    %814 = vector.extract_strided_slice %811 {offsets = [0, 32], sizes = [1, 32], strides = [1, 1]} : vector<1x128xf32> to vector<1x32xf32>
    %815 = vector.extract_strided_slice %812 {offsets = [0, 64], sizes = [1, 32], strides = [1, 1]} : vector<1x128xf32> to vector<1x32xf32>
    %816 = vector.extract_strided_slice %811 {offsets = [0, 96], sizes = [1, 32], strides = [1, 1]} : vector<1x128xf32> to vector<1x32xf32>
    %817 = arith.mulf %814, %783 : vector<1x32xf32>
    %818 = arith.mulf %813, %815 : vector<1x32xf32>
    %819 = arith.addf %817, %818 : vector<1x32xf32>
    %820 = math.tanh %819 : vector<1x32xf32>
    %821 = arith.mulf %816, %820 : vector<1x32xf32>
    %822 = arith.negf %806 : vector<1x128xf32>
    %823 = math.exp %822 : vector<1x128xf32>
    %cst_131 = arith.constant 1.000000e+00 : f32
    %824 = vector.broadcast %cst_131 : f32 to vector<1x128xf32>
    %825 = arith.addf %824, %823 : vector<1x128xf32>
    %826 = arith.divf %824, %825 : vector<1x128xf32>
    %827 = math.tanh %806 : vector<1x128xf32>
    %828 = vector.extract_strided_slice %826 {offsets = [0, 0], sizes = [1, 32], strides = [1, 1]} : vector<1x128xf32> to vector<1x32xf32>
    %829 = vector.extract_strided_slice %826 {offsets = [0, 32], sizes = [1, 32], strides = [1, 1]} : vector<1x128xf32> to vector<1x32xf32>
    %830 = vector.extract_strided_slice %827 {offsets = [0, 64], sizes = [1, 32], strides = [1, 1]} : vector<1x128xf32> to vector<1x32xf32>
    %831 = vector.extract_strided_slice %826 {offsets = [0, 96], sizes = [1, 32], strides = [1, 1]} : vector<1x128xf32> to vector<1x32xf32>
    %832 = arith.mulf %829, %798 : vector<1x32xf32>
    %833 = arith.mulf %828, %830 : vector<1x32xf32>
    %834 = arith.addf %832, %833 : vector<1x32xf32>
    %835 = math.tanh %834 : vector<1x32xf32>
    %836 = arith.mulf %831, %835 : vector<1x32xf32>
    %837 = vector.extract_strided_slice %614 {offsets = [6, 0], sizes = [1, 128], strides = [1, 1]} : vector<8x256xf32> to vector<1x128xf32>
    %cst_132 = arith.constant dense<0.000000e+00> : vector<1x128xf32>
    %838 = tpu.matmul %821, %615, %cst_132 {dimension_numbers = #tpu.dot_dimension_numbers<[1], [0], [0], [1], [0, 0, 1, 1], [], []>} : vector<1x32xf32>, vector<32x128xf32>, vector<1x128xf32> -> vector<1x128xf32>
    %839 = arith.addf %837, %838 : vector<1x128xf32>
    %840 = vector.extract_strided_slice %614 {offsets = [1, 128], sizes = [1, 128], strides = [1, 1]} : vector<8x256xf32> to vector<1x128xf32>
    %cst_133 = arith.constant dense<0.000000e+00> : vector<1x128xf32>
    %841 = tpu.matmul %836, %616, %cst_133 {dimension_numbers = #tpu.dot_dimension_numbers<[1], [0], [0], [1], [0, 0, 1, 1], [], []>} : vector<1x32xf32>, vector<32x128xf32>, vector<1x128xf32> -> vector<1x128xf32>
    %842 = arith.addf %840, %841 : vector<1x128xf32>
    %843 = arith.negf %839 : vector<1x128xf32>
    %844 = math.exp %843 : vector<1x128xf32>
    %cst_134 = arith.constant 1.000000e+00 : f32
    %845 = vector.broadcast %cst_134 : f32 to vector<1x128xf32>
    %846 = arith.addf %845, %844 : vector<1x128xf32>
    %847 = arith.divf %845, %846 : vector<1x128xf32>
    %848 = math.tanh %839 : vector<1x128xf32>
    %849 = vector.extract_strided_slice %847 {offsets = [0, 0], sizes = [1, 32], strides = [1, 1]} : vector<1x128xf32> to vector<1x32xf32>
    %850 = vector.extract_strided_slice %847 {offsets = [0, 32], sizes = [1, 32], strides = [1, 1]} : vector<1x128xf32> to vector<1x32xf32>
    %851 = vector.extract_strided_slice %848 {offsets = [0, 64], sizes = [1, 32], strides = [1, 1]} : vector<1x128xf32> to vector<1x32xf32>
    %852 = vector.extract_strided_slice %847 {offsets = [0, 96], sizes = [1, 32], strides = [1, 1]} : vector<1x128xf32> to vector<1x32xf32>
    %853 = arith.mulf %850, %819 : vector<1x32xf32>
    %854 = arith.mulf %849, %851 : vector<1x32xf32>
    %855 = arith.addf %853, %854 : vector<1x32xf32>
    %856 = math.tanh %855 : vector<1x32xf32>
    %857 = arith.mulf %852, %856 : vector<1x32xf32>
    %858 = arith.negf %842 : vector<1x128xf32>
    %859 = math.exp %858 : vector<1x128xf32>
    %cst_135 = arith.constant 1.000000e+00 : f32
    %860 = vector.broadcast %cst_135 : f32 to vector<1x128xf32>
    %861 = arith.addf %860, %859 : vector<1x128xf32>
    %862 = arith.divf %860, %861 : vector<1x128xf32>
    %863 = math.tanh %842 : vector<1x128xf32>
    %864 = vector.extract_strided_slice %862 {offsets = [0, 0], sizes = [1, 32], strides = [1, 1]} : vector<1x128xf32> to vector<1x32xf32>
    %865 = vector.extract_strided_slice %862 {offsets = [0, 32], sizes = [1, 32], strides = [1, 1]} : vector<1x128xf32> to vector<1x32xf32>
    %866 = vector.extract_strided_slice %863 {offsets = [0, 64], sizes = [1, 32], strides = [1, 1]} : vector<1x128xf32> to vector<1x32xf32>
    %867 = vector.extract_strided_slice %862 {offsets = [0, 96], sizes = [1, 32], strides = [1, 1]} : vector<1x128xf32> to vector<1x32xf32>
    %868 = arith.mulf %865, %834 : vector<1x32xf32>
    %869 = arith.mulf %864, %866 : vector<1x32xf32>
    %870 = arith.addf %868, %869 : vector<1x32xf32>
    %871 = math.tanh %870 : vector<1x32xf32>
    %872 = arith.mulf %867, %871 : vector<1x32xf32>
    %873 = vector.extract_strided_slice %614 {offsets = [7, 0], sizes = [1, 128], strides = [1, 1]} : vector<8x256xf32> to vector<1x128xf32>
    %cst_136 = arith.constant dense<0.000000e+00> : vector<1x128xf32>
    %874 = tpu.matmul %857, %615, %cst_136 {dimension_numbers = #tpu.dot_dimension_numbers<[1], [0], [0], [1], [0, 0, 1, 1], [], []>} : vector<1x32xf32>, vector<32x128xf32>, vector<1x128xf32> -> vector<1x128xf32>
    %875 = arith.addf %873, %874 : vector<1x128xf32>
    %876 = vector.extract_strided_slice %614 {offsets = [0, 128], sizes = [1, 128], strides = [1, 1]} : vector<8x256xf32> to vector<1x128xf32>
    %cst_137 = arith.constant dense<0.000000e+00> : vector<1x128xf32>
    %877 = tpu.matmul %872, %616, %cst_137 {dimension_numbers = #tpu.dot_dimension_numbers<[1], [0], [0], [1], [0, 0, 1, 1], [], []>} : vector<1x32xf32>, vector<32x128xf32>, vector<1x128xf32> -> vector<1x128xf32>
    %878 = arith.addf %876, %877 : vector<1x128xf32>
    %879 = arith.negf %875 : vector<1x128xf32>
    %880 = math.exp %879 : vector<1x128xf32>
    %cst_138 = arith.constant 1.000000e+00 : f32
    %881 = vector.broadcast %cst_138 : f32 to vector<1x128xf32>
    %882 = arith.addf %881, %880 : vector<1x128xf32>
    %883 = arith.divf %881, %882 : vector<1x128xf32>
    %884 = math.tanh %875 : vector<1x128xf32>
    %885 = vector.extract_strided_slice %883 {offsets = [0, 0], sizes = [1, 32], strides = [1, 1]} : vector<1x128xf32> to vector<1x32xf32>
    %886 = vector.extract_strided_slice %883 {offsets = [0, 32], sizes = [1, 32], strides = [1, 1]} : vector<1x128xf32> to vector<1x32xf32>
    %887 = vector.extract_strided_slice %884 {offsets = [0, 64], sizes = [1, 32], strides = [1, 1]} : vector<1x128xf32> to vector<1x32xf32>
    %888 = vector.extract_strided_slice %883 {offsets = [0, 96], sizes = [1, 32], strides = [1, 1]} : vector<1x128xf32> to vector<1x32xf32>
    %889 = arith.mulf %886, %855 : vector<1x32xf32>
    %890 = arith.mulf %885, %887 : vector<1x32xf32>
    %891 = arith.addf %889, %890 : vector<1x32xf32>
    %892 = math.tanh %891 : vector<1x32xf32>
    %893 = arith.mulf %888, %892 : vector<1x32xf32>
    %894 = arith.negf %878 : vector<1x128xf32>
    %895 = math.exp %894 : vector<1x128xf32>
    %cst_139 = arith.constant 1.000000e+00 : f32
    %896 = vector.broadcast %cst_139 : f32 to vector<1x128xf32>
    %897 = arith.addf %896, %895 : vector<1x128xf32>
    %898 = arith.divf %896, %897 : vector<1x128xf32>
    %899 = math.tanh %878 : vector<1x128xf32>
    %900 = vector.extract_strided_slice %898 {offsets = [0, 0], sizes = [1, 32], strides = [1, 1]} : vector<1x128xf32> to vector<1x32xf32>
    %901 = vector.extract_strided_slice %898 {offsets = [0, 32], sizes = [1, 32], strides = [1, 1]} : vector<1x128xf32> to vector<1x32xf32>
    %902 = vector.extract_strided_slice %899 {offsets = [0, 64], sizes = [1, 32], strides = [1, 1]} : vector<1x128xf32> to vector<1x32xf32>
    %903 = vector.extract_strided_slice %898 {offsets = [0, 96], sizes = [1, 32], strides = [1, 1]} : vector<1x128xf32> to vector<1x32xf32>
    %904 = arith.mulf %901, %870 : vector<1x32xf32>
    %905 = arith.mulf %900, %902 : vector<1x32xf32>
    %906 = arith.addf %904, %905 : vector<1x32xf32>
    %907 = math.tanh %906 : vector<1x32xf32>
    %908 = arith.mulf %903, %907 : vector<1x32xf32>
    %909 = tpu.concatenate %641, %677, %713, %749, %785, %821, %857, %893 in 0 : vector<1x32xf32>, vector<1x32xf32>, vector<1x32xf32>, vector<1x32xf32>, vector<1x32xf32>, vector<1x32xf32>, vector<1x32xf32>, vector<1x32xf32> -> vector<8x32xf32>
    %910 = tpu.concatenate %908, %872, %836, %800, %764, %728, %692, %656 in 0 : vector<1x32xf32>, vector<1x32xf32>, vector<1x32xf32>, vector<1x32xf32>, vector<1x32xf32>, vector<1x32xf32>, vector<1x32xf32>, vector<1x32xf32> -> vector<8x32xf32>
    %911 = tpu.concatenate %909, %910 in 1 : vector<8x32xf32>, vector<8x32xf32> -> vector<8x64xf32>
    %c0_140 = arith.constant 0 : index
    %c0_141 = arith.constant 0 : index
    %912 = vector.load %arg3[%c0_140, %c0_141] : memref<64x1xf32, #tpu.memory_space<vmem>>, vector<64x1xf32>
    %cst_142 = arith.constant dense<0.000000e+00> : vector<8x1xf32>
    %913 = tpu.matmul %911, %912, %cst_142 {dimension_numbers = #tpu.dot_dimension_numbers<[1], [0], [0], [1], [0, 0, 1, 1], [], []>} : vector<8x64xf32>, vector<64x1xf32>, vector<8x1xf32> -> vector<8x1xf32>
    %c0_143 = arith.constant 0 : index
    %c0_144 = arith.constant 0 : index
    %914 = vector.load %arg4[%c0_143, %c0_144] : memref<1x1xf32, #tpu.memory_space<vmem>>, vector<1x1xf32>
    %915 = vector.broadcast %914 : vector<1x1xf32> to vector<8x1xf32>
    %916 = arith.addf %913, %915 : vector<8x1xf32>
    %cst_145 = arith.constant 0.000000e+00 : f32
    %917 = vector.broadcast %cst_145 : f32 to vector<8x1xf32>
    %918 = arith.maximumf %916, %917 : vector<8x1xf32>
    %c0_146 = arith.constant 0 : index
    %c0_147 = arith.constant 0 : index
    %919 = vector.load %arg17[%c0_146, %c0_147] : memref<8x1xf32, #tpu.memory_space<vmem>>, vector<8x1xf32>
    tpu.vector_store %arg17[%c0_146, %c0_147], %918 {strides = array<i32>} : memref<8x1xf32, #tpu.memory_space<vmem>>, vector<8x1xf32>,
    return
  }
}

</mosaic_0001>

<llo_original>
// kernel: bilstm_forward.1
$region0: #{bilstm_forward.1}
  #allocation0 [shape = 'u32[]', space=smem, size = 0x4, offset = 0x4, fixed_abs, tag = 'smem constant byte address 0x4 - core index']
  #allocation1 [shape = 'u32[144,128]{1,0:T(1,128)}', space=vmem, size = 0x12000, scoped, tag = 'internal scratch']
  #allocation2 [shape = 'f32[1,1]{1,0:T(1,128)S(1)}', space=vmem, size = 0x200, scoped, tag = 'scoped memory for bilstm_forward.1']
  %s0 = inlined_call_operand.hbm [shape: f32[8,16], index: 0, kind: input, shape index: {}]
  %s1 = inlined_call_operand.vmem [shape: f32[16,32], index: 1, kind: input, shape index: {}]
  %s2 = inlined_call_operand.vmem [shape: f32[1,32], index: 2, kind: input, shape index: {}]
  %s3 = inlined_call_operand.vmem [shape: f32[64,1], index: 3, kind: input, shape index: {}]
  %s4 = inlined_call_operand.<no memory space> [shape: f32[1,1], index: 4, kind: input, shape index: {}]
  %s5 = inlined_call_operand.vmem [shape: f32[32,256], index: 5, kind: input, shape index: {}]
  %s6 = inlined_call_operand.hbm [shape: f32[32,128], index: 6, kind: input, shape index: {}]
  %s7 = inlined_call_operand.hbm [shape: f32[32,128], index: 7, kind: input, shape index: {}]
  %s8 = inlined_call_operand.vmem [shape: f32[1,256], index: 8, kind: input, shape index: {}]
  %s9 = inlined_call_operand.hbm [shape: f32[64,256], index: 9, kind: input, shape index: {}]
  %s10 = inlined_call_operand.hbm [shape: f32[32,128], index: 10, kind: input, shape index: {}]
  %s11 = inlined_call_operand.vmem [shape: f32[32,128], index: 11, kind: input, shape index: {}]
  %s12 = inlined_call_operand.hbm [shape: f32[1,256], index: 12, kind: input, shape index: {}]
  %s13 = inlined_call_operand.hbm [shape: f32[64,256], index: 13, kind: input, shape index: {}]
  %s14 = inlined_call_operand.hbm [shape: f32[32,128], index: 14, kind: input, shape index: {}]
  %s15 = inlined_call_operand.hbm [shape: f32[32,128], index: 15, kind: input, shape index: {}]
  %s16 = inlined_call_operand.vmem [shape: f32[1,256], index: 16, kind: input, shape index: {}]
  %s17 = inlined_call_operand.vmem [shape: f32[8,1], index: 17, kind: output, shape index: {}]
  %s18 = sld [smem:[#allocation0]]
  $region114: #{bilstm_forward.1} parent=0
    _
  %s20 = ssub.s32 1, %s18
  %s21 = scalar_select 0, %s20, %s18
  %v22 = vstv %s4
  %23 = vst [vmem:[#allocation2] sm:$0x1] %v22
  $region1: #{bilstm_forward.1} parent=0
    #allocation3 [shape = 'u8[4096]{0}', space=vmem, size = 0x1000, scoped, tag = 'input window, operand 0, single buffered']
    #allocation4 [shape = 's32[1]{0}', space=sflag, size = 0x4, scoped, tag = 'scoped memory for bilstm_forward.1']
    #allocation5 [shape = 'u8[16384]{0}', space=vmem, size = 0x4000, scoped, tag = 'input window, operand 6, single buffered']
    #allocation6 [shape = 's32[1]{0}', space=sflag, size = 0x4, scoped, tag = 'scoped memory for bilstm_forward.1']
    #allocation7 [shape = 'u8[16384]{0}', space=vmem, size = 0x4000, scoped, tag = 'input window, operand 7, single buffered']
    #allocation8 [shape = 'u8[65536]{0}', space=vmem, size = 0x10000, scoped, tag = 'input window, operand 9, single buffered']
    #allocation9 [shape = 's32[1]{0}', space=sflag, size = 0x4, scoped, tag = 'scoped memory for bilstm_forward.1']
    #allocation10 [shape = 'u8[16384]{0}', space=vmem, size = 0x4000, scoped, tag = 'input window, operand 10, single buffered']
    #allocation11 [shape = 'u8[1024]{0}', space=vmem, size = 0x400, scoped, tag = 'input window, operand 12, single buffered']
    #allocation12 [shape = 's32[1]{0}', space=sflag, size = 0x4, scoped, tag = 'scoped memory for bilstm_forward.1']
    #allocation13 [shape = 'u8[65536]{0}', space=vmem, size = 0x10000, scoped, tag = 'input window, operand 13, single buffered']
    #allocation14 [shape = 'u8[16384]{0}', space=vmem, size = 0x4000, scoped, tag = 'input window, operand 14, single buffered']
    #allocation15 [shape = 's32[1]{0}', space=sflag, size = 0x4, scoped, tag = 'scoped memory for bilstm_forward.1']
    #allocation16 [shape = 'u8[16384]{0}', space=vmem, size = 0x4000, scoped, tag = 'input window, operand 15, single buffered']
    %24 = vsyncpa [#allocation4], 0
    %25 = vsyncpa [#allocation6], 0
    %26 = vsyncpa [#allocation9], 0
    %27 = vsyncpa [#allocation12], 0
    %28 = vsyncpa [#allocation15], 0
    // Predicated region
    $region2: #{bilstm_forward.1} parent=1 // pred_check
      _
    $region3: #{bilstm_forward.1} parent=1 // pred_check_branch
      %30 = sbr.rel (0) target = $region5
    $region4: #{bilstm_forward.1} parent=1 // pred_region
      %s32 = ssub.s32 128, 128
      %33 = vsyncadd [#allocation4], %s32
      %s35 = sshll.u32 [#allocation3], 4
      %s36 = int_to_ptr.vmem [resolvable:$true] %s35
      %38 = dma.hbm_to_vmem [thread:$0]  %s0, 128, %s36, [#allocation4]
    $region5: #{bilstm_forward.1} parent=1 // pred_fallthru
      _
    // Predicated region
    $region6: #{bilstm_forward.1} parent=1 // pred_check
      _
    $region7: #{bilstm_forward.1} parent=1 // pred_check_branch
      %40 = sbr.rel (0) target = $region9
    $region8: #{bilstm_forward.1} parent=1 // pred_region
      _
    $region9: #{bilstm_forward.1} parent=1 // pred_fallthru
      _
    // Predicated region
    $region10: #{bilstm_forward.1} parent=1 // pred_check
      _
    $region11: #{bilstm_forward.1} parent=1 // pred_check_branch
      %42 = sbr.rel (0) target = $region13
    $region12: #{bilstm_forward.1} parent=1 // pred_region
      _
    $region13: #{bilstm_forward.1} parent=1 // pred_fallthru
      _
    // Predicated region
    $region14: #{bilstm_forward.1} parent=1 // pred_check
      _
    $region15: #{bilstm_forward.1} parent=1 // pred_check_branch
      %44 = sbr.rel (0) target = $region17
    $region16: #{bilstm_forward.1} parent=1 // pred_region
      _
    $region17: #{bilstm_forward.1} parent=1 // pred_fallthru
      _
    // Predicated region
    $region18: #{bilstm_forward.1} parent=1 // pred_check
      _
    $region19: #{bilstm_forward.1} parent=1 // pred_check_branch
      %46 = sbr.rel (0) target = $region21
    $region20: #{bilstm_forward.1} parent=1 // pred_region
      _
    $region21: #{bilstm_forward.1} parent=1 // pred_fallthru
      _
    // Predicated region
    $region22: #{bilstm_forward.1} parent=1 // pred_check
      _
    $region23: #{bilstm_forward.1} parent=1 // pred_check_branch
      %48 = sbr.rel (0) target = $region25
    $region24: #{bilstm_forward.1} parent=1 // pred_region
      _
    $region25: #{bilstm_forward.1} parent=1 // pred_fallthru
      _
    // Predicated region
    $region26: #{bilstm_forward.1} parent=1 // pred_check
      _
    $region27: #{bilstm_forward.1} parent=1 // pred_check_branch
      %50 = sbr.rel (0) target = $region29
    $region28: #{bilstm_forward.1} parent=1 // pred_region
      %s52 = ssub.s32 512, 512
      %53 = vsyncadd [#allocation6], %s52
      %s54 = sshll.u32 [#allocation5], 4
      %s55 = int_to_ptr.vmem [resolvable:$true] %s54
      %60 = dma.hbm_to_vmem [thread:$0]  %s6, 512, %s55, [#allocation6], 128, 128, 8
    $region29: #{bilstm_forward.1} parent=1 // pred_fallthru
      _
    // Predicated region
    $region30: #{bilstm_forward.1} parent=1 // pred_check
      _
    $region31: #{bilstm_forward.1} parent=1 // pred_check_branch
      %62 = sbr.rel (0) target = $region33
    $region32: #{bilstm_forward.1} parent=1 // pred_region
      %s64 = ssub.s32 512, 512
      %65 = vsyncadd [#allocation6], %s64
      %s66 = sshll.u32 [#allocation7], 4
      %s67 = int_to_ptr.vmem [resolvable:$true] %s66
      %72 = dma.hbm_to_vmem [thread:$0]  %s7, 512, %s67, [#allocation6], 128, 128, 8
    $region33: #{bilstm_forward.1} parent=1 // pred_fallthru
      _
    // Predicated region
    $region34: #{bilstm_forward.1} parent=1 // pred_check
      _
    $region35: #{bilstm_forward.1} parent=1 // pred_check_branch
      %74 = sbr.rel (0) target = $region37
    $region36: #{bilstm_forward.1} parent=1 // pred_region
      _
    $region37: #{bilstm_forward.1} parent=1 // pred_fallthru
      _
    // Predicated region
    $region38: #{bilstm_forward.1} parent=1 // pred_check
      _
    $region39: #{bilstm_forward.1} parent=1 // pred_check_branch
      %76 = sbr.rel (0) target = $region41
    $region40: #{bilstm_forward.1} parent=1 // pred_region
      %s78 = ssub.s32 2048, 2048
      %79 = vsyncadd [#allocation9], %s78
      %s80 = sshll.u32 [#allocation8], 4
      %s81 = int_to_ptr.vmem [resolvable:$true] %s80
      %86 = dma.hbm_to_vmem [thread:$0]  %s9, 2048, %s81, [#allocation9], 256, 256, 16
    $region41: #{bilstm_forward.1} parent=1 // pred_fallthru
      _
    // Predicated region
    $region42: #{bilstm_forward.1} parent=1 // pred_check
      _
    $region43: #{bilstm_forward.1} parent=1 // pred_check_branch
      %88 = sbr.rel (0) target = $region45
    $region44: #{bilstm_forward.1} parent=1 // pred_region
      %s90 = ssub.s32 512, 512
      %91 = vsyncadd [#allocation9], %s90
      %s92 = sshll.u32 [#allocation10], 4
      %s93 = int_to_ptr.vmem [resolvable:$true] %s92
      %98 = dma.hbm_to_vmem [thread:$0]  %s10, 512, %s93, [#allocation9], 128, 128, 8
    $region45: #{bilstm_forward.1} parent=1 // pred_fallthru
      _
    // Predicated region
    $region46: #{bilstm_forward.1} parent=1 // pred_check
      _
    $region47: #{bilstm_forward.1} parent=1 // pred_check_branch
      %100 = sbr.rel (0) target = $region49
    $region48: #{bilstm_forward.1} parent=1 // pred_region
      _
    $region49: #{bilstm_forward.1} parent=1 // pred_fallthru
      _
    // Predicated region
    $region50: #{bilstm_forward.1} parent=1 // pred_check
      _
    $region51: #{bilstm_forward.1} parent=1 // pred_check_branch
      %102 = sbr.rel (0) target = $region53
    $region52: #{bilstm_forward.1} parent=1 // pred_region
      %s104 = ssub.s32 32, 32
      %105 = vsyncadd [#allocation12], %s104
      %s107 = sshll.u32 [#allocation11], 4
      %s108 = int_to_ptr.vmem [resolvable:$true] %s107
      %110 = dma.hbm_to_vmem [thread:$0]  %s12, 32, %s108, [#allocation12]
    $region53: #{bilstm_forward.1} parent=1 // pred_fallthru
      _
    // Predicated region
    $region54: #{bilstm_forward.1} parent=1 // pred_check
      _
    $region55: #{bilstm_forward.1} parent=1 // pred_check_branch
      %112 = sbr.rel (0) target = $region57
    $region56: #{bilstm_forward.1} parent=1 // pred_region
      %s114 = ssub.s32 2048, 2048
      %115 = vsyncadd [#allocation12], %s114
      %s116 = sshll.u32 [#allocation13], 4
      %s117 = int_to_ptr.vmem [resolvable:$true] %s116
      %122 = dma.hbm_to_vmem [thread:$0]  %s13, 2048, %s117, [#allocation12], 256, 256, 16
    $region57: #{bilstm_forward.1} parent=1 // pred_fallthru
      _
    // Predicated region
    $region58: #{bilstm_forward.1} parent=1 // pred_check
      _
    $region59: #{bilstm_forward.1} parent=1 // pred_check_branch
      %124 = sbr.rel (0) target = $region61
    $region60: #{bilstm_forward.1} parent=1 // pred_region
      %s126 = ssub.s32 512, 512
      %127 = vsyncadd [#allocation15], %s126
      %s128 = sshll.u32 [#allocation14], 4
      %s129 = int_to_ptr.vmem [resolvable:$true] %s128
      %134 = dma.hbm_to_vmem [thread:$0]  %s14, 512, %s129, [#allocation15], 128, 128, 8
    $region61: #{bilstm_forward.1} parent=1 // pred_fallthru
      _
    // Predicated region
    $region62: #{bilstm_forward.1} parent=1 // pred_check
      _
    $region63: #{bilstm_forward.1} parent=1 // pred_check_branch
      %136 = sbr.rel (0) target = $region65
    $region64: #{bilstm_forward.1} parent=1 // pred_region
      %s138 = ssub.s32 512, 512
      %139 = vsyncadd [#allocation15], %s138
      %s140 = sshll.u32 [#allocation16], 4
      %s141 = int_to_ptr.vmem [resolvable:$true] %s140
      %146 = dma.hbm_to_vmem [thread:$0]  %s15, 512, %s141, [#allocation15], 128, 128, 8
    $region65: #{bilstm_forward.1} parent=1 // pred_fallthru
      _
    // Predicated region
    $region66: #{bilstm_forward.1} parent=1 // pred_check
      _
    $region67: #{bilstm_forward.1} parent=1 // pred_check_branch
      %148 = sbr.rel (0) target = $region69
    $region68: #{bilstm_forward.1} parent=1 // pred_region
      _
    $region69: #{bilstm_forward.1} parent=1 // pred_fallthru
      _
    // Predicated region
    $region70: #{bilstm_forward.1} parent=1 // pred_check
      _
    $region71: #{bilstm_forward.1} parent=1 // pred_check_branch
      %150 = sbr.rel (0) target = $region73
    $region72: #{bilstm_forward.1} parent=1 // pred_region
      %151 = dma.done [#allocation4], 128
    $region73: #{bilstm_forward.1} parent=1 // pred_fallthru
      _
    // Predicated region
    $region74: #{bilstm_forward.1} parent=1 // pred_check
      _
    $region75: #{bilstm_forward.1} parent=1 // pred_check_branch
      %153 = sbr.rel (0) target = $region77
    $region76: #{bilstm_forward.1} parent=1 // pred_region
      %154 = dma.done [#allocation6], 512
    $region77: #{bilstm_forward.1} parent=1 // pred_fallthru
      _
    // Predicated region
    $region78: #{bilstm_forward.1} parent=1 // pred_check
      _
    $region79: #{bilstm_forward.1} parent=1 // pred_check_branch
      %156 = sbr.rel (0) target = $region81
    $region80: #{bilstm_forward.1} parent=1 // pred_region
      %157 = dma.done [#allocation6], 512
    $region81: #{bilstm_forward.1} parent=1 // pred_fallthru
      _
    // Predicated region
    $region82: #{bilstm_forward.1} parent=1 // pred_check
      _
    $region83: #{bilstm_forward.1} parent=1 // pred_check_branch
      %159 = sbr.rel (0) target = $region85
    $region84: #{bilstm_forward.1} parent=1 // pred_region
      %160 = dma.done [#allocation9], 2048
    $region85: #{bilstm_forward.1} parent=1 // pred_fallthru
      _
    // Predicated region
    $region86: #{bilstm_forward.1} parent=1 // pred_check
      _
    $region87: #{bilstm_forward.1} parent=1 // pred_check_branch
      %162 = sbr.rel (0) target = $region89
    $region88: #{bilstm_forward.1} parent=1 // pred_region
      %163 = dma.done [#allocation9], 512
    $region89: #{bilstm_forward.1} parent=1 // pred_fallthru
      _
    // Predicated region
    $region90: #{bilstm_forward.1} parent=1 // pred_check
      _
    $region91: #{bilstm_forward.1} parent=1 // pred_check_branch
      %165 = sbr.rel (0) target = $region93
    $region92: #{bilstm_forward.1} parent=1 // pred_region
      %166 = dma.done [#allocation12], 32
    $region93: #{bilstm_forward.1} parent=1 // pred_fallthru
      _
    // Predicated region
    $region94: #{bilstm_forward.1} parent=1 // pred_check
      _
    $region95: #{bilstm_forward.1} parent=1 // pred_check_branch
      %168 = sbr.rel (0) target = $region97
    $region96: #{bilstm_forward.1} parent=1 // pred_region
      %169 = dma.done [#allocation12], 2048
    $region97: #{bilstm_forward.1} parent=1 // pred_fallthru
      _
    // Predicated region
    $region98: #{bilstm_forward.1} parent=1 // pred_check
      _
    $region99: #{bilstm_forward.1} parent=1 // pred_check_branch
      %171 = sbr.rel (0) target = $region101
    $region100: #{bilstm_forward.1} parent=1 // pred_region
      %172 = dma.done [#allocation15], 512
    $region101: #{bilstm_forward.1} parent=1 // pred_fallthru
      _
    // Predicated region
    $region102: #{bilstm_forward.1} parent=1 // pred_check
      _
    $region103: #{bilstm_forward.1} parent=1 // pred_check_branch
      %174 = sbr.rel (0) target = $region105
    $region104: #{bilstm_forward.1} parent=1 // pred_region
      %175 = dma.done [#allocation15], 512
    $region105: #{bilstm_forward.1} parent=1 // pred_fallthru
      _
    %v176 = vld [vmem:[#allocation3] sm:$0xff]
    %v177 = vld [vmem:[%s1] sm:$0xff]
    %v178 = vld [vmem:[%s1 + $0x8] sm:$0xff]
    %v179 = vld [vmem:[%s2] sm:$0x1]
    %v181 = vlaneseq
    %v182 = vshrl.u32 %v181, 7
    %v183 = vsub.s32 0, %v182
    %v184 = vrot.slane %v179, %v183
    %vm186 = vcmask 130048
    %v188 = vsel %vm186, %v176, 0
    %190 = vmatprep.subr.mxu0 0.0
    %191 = vmatpush1.msra.mxu0 %v177
    %192 = vmatprep.subr.mxu0 0.0
    %193 = vmatpush1.msra.mxu0 %v178
    %194 = vmatprep.subr.mxu0 0.0
    %195 = vmatpush1.msra.mxu0 0.0
    %196 = vmatprep.subr.mxu0 0.0
    %197 = vmatpush1.msra.mxu0 0.0
    %198 = vmatprep.subr.mxu0 0.0
    %199 = vmatpush1.msra.mxu0 0.0
    %200 = vmatprep.subr.mxu0 0.0
    %201 = vmatpush1.msra.mxu0 0.0
    %202 = vmatprep.subr.mxu0 0.0
    %203 = vmatpush1.msra.mxu0 0.0
    %204 = vmatprep.subr.mxu0 0.0
    %205 = vmatpush1.msra.mxu0 0.0
    %206 = vmatprep.subr.mxu0 0.0
    %207 = vmatpush1.msra.mxu0 0.0
    %208 = vmatprep.subr.mxu0 0.0
    %209 = vmatpush1.msra.mxu0 0.0
    %210 = vmatprep.subr.mxu0 0.0
    %211 = vmatpush1.msra.mxu0 0.0
    %212 = vmatprep.subr.mxu0 0.0
    %213 = vmatpush1.msra.mxu0 0.0
    %214 = vmatprep.subr.mxu0 0.0
    %215 = vmatpush1.msra.mxu0 0.0
    %216 = vmatprep.subr.mxu0 0.0
    %217 = vmatpush1.msra.mxu0 0.0
    %218 = vmatprep.subr.mxu0 0.0
    %219 = vmatpush1.msra.mxu0 0.0
    %220 = vmatprep.subr.mxu0 0.0
    %221 = vmatpush1.msra.mxu0 0.0
    %222 = vmatprep.subr.mxu0 0.0
    %223 = vmatpush1.msra.mxu0 0.0
    %224 = vmatprep.subr.mxu0 0.0
    %225 = vmatpush1.msra.mxu0 0.0
    %226 = vmatprep.subr.mxu0 0.0
    %227 = vmatpush1.msra.mxu0 0.0
    %228 = vmatprep.subr.mxu0 0.0
    %229 = vmatpush1.msra.mxu0 0.0
    %230 = vmatprep.subr.mxu0 0.0
    %231 = vmatpush1.msra.mxu0 0.0
    %232 = vmatprep.subr.mxu0 0.0
    %233 = vmatpush1.msra.mxu0 0.0
    %234 = vmatprep.subr.mxu0 0.0
    %235 = vmatpush1.msra.mxu0 0.0
    %236 = vmatprep.subr.mxu0 0.0
    %237 = vmatpush1.msra.mxu0 0.0
    %238 = vmatprep.subr.mxu0 0.0
    %239 = vmatpush1.msra.mxu0 0.0
    %240 = vmatprep.subr.mxu0 0.0
    %241 = vmatpush1.msra.mxu0 0.0
    %242 = vmatprep.subr.mxu0 0.0
    %243 = vmatpush1.msra.mxu0 0.0
    %244 = vmatprep.subr.mxu0 0.0
    %245 = vmatpush1.msra.mxu0 0.0
    %246 = vmatprep.subr.mxu0 0.0
    %247 = vmatpush1.msra.mxu0 0.0
    %248 = vmatprep.subr.mxu0 0.0
    %249 = vmatpush1.msra.mxu0 0.0
    %250 = vmatprep.subr.mxu0 0.0
    %251 = vmatpush1.msra.mxu0 0.0
    %252 = vmatprep.subr.mxu0 0.0
    %253 = vmatpush1.msra.mxu0 0.0
    %254 = vmatprep.mubr.f32.mxu0 0.0
    %255 = vmatmul.mubr.f32.gmra.mrb[0].mxu0 %v188
    %v256 = vpop.f32.mrb[0].mxu0
    %v257 = vadd.f32 %v184, %v256
    %v258 = vpop.f32.mrb[0].mxu0
    %259 = vdwg.mxu0
    %v260 = vld [vmem:[%s5] sm:$0xff]
    %v261 = vld [vmem:[%s5 + $0x8] sm:$0xff]
    %v262 = vld [vmem:[%s5 + $0x10] sm:$0xff]
    %v263 = vld [vmem:[%s5 + $0x18] sm:$0xff]
    %v264 = vld [vmem:[%s5 + $0x20] sm:$0xff]
    %v265 = vld [vmem:[%s5 + $0x28] sm:$0xff]
    %v266 = vld [vmem:[%s5 + $0x30] sm:$0xff]
    %v267 = vld [vmem:[%s5 + $0x38] sm:$0xff]
    %v268 = vld [vmem:[%s8] sm:$0x3]
    %v270 = vlaneseq
    %v271 = vshrl.u32 %v270, 7
    %v272 = vsub.s32 0, %v271
    %v273 = vrot.slane %v268, %v272
    %v274 = vlaneseq
    %v275 = vshrl.u32 %v274, 7
    %v276 = vsub.s32 1, %v275
    %v277 = vrot.slane %v268, %v276
    %vm280 = vcmask 261120
    %v282 = vsel %vm280, %v257, 0
    %284 = vmatprep.subr.mxu0 %v261
    %285 = vmatpush1.msra.mxu0 %v260
    %286 = vmatprep.subr.mxu0 %v263
    %287 = vmatpush1.msra.mxu0 %v262
    %288 = vmatprep.subr.mxu0 %v265
    %289 = vmatpush1.msra.mxu0 %v264
    %290 = vmatprep.subr.mxu0 %v267
    %291 = vmatpush1.msra.mxu0 %v266
    %292 = vmatprep.subr.mxu0 0.0
    %293 = vmatpush1.msra.mxu0 0.0
    %294 = vmatprep.subr.mxu0 0.0
    %295 = vmatpush1.msra.mxu0 0.0
    %296 = vmatprep.subr.mxu0 0.0
    %297 = vmatpush1.msra.mxu0 0.0
    %298 = vmatprep.subr.mxu0 0.0
    %299 = vmatpush1.msra.mxu0 0.0
    %300 = vmatprep.subr.mxu0 0.0
    %301 = vmatpush1.msra.mxu0 0.0
    %302 = vmatprep.subr.mxu0 0.0
    %303 = vmatpush1.msra.mxu0 0.0
    %304 = vmatprep.subr.mxu0 0.0
    %305 = vmatpush1.msra.mxu0 0.0
    %306 = vmatprep.subr.mxu0 0.0
    %307 = vmatpush1.msra.mxu0 0.0
    %308 = vmatprep.subr.mxu0 0.0
    %309 = vmatpush1.msra.mxu0 0.0
    %310 = vmatprep.subr.mxu0 0.0
    %311 = vmatpush1.msra.mxu0 0.0
    %312 = vmatprep.subr.mxu0 0.0
    %313 = vmatpush1.msra.mxu0 0.0
    %314 = vmatprep.subr.mxu0 0.0
    %315 = vmatpush1.msra.mxu0 0.0
    %316 = vmatprep.subr.mxu0 0.0
    %317 = vmatpush1.msra.mxu0 0.0
    %318 = vmatprep.subr.mxu0 0.0
    %319 = vmatpush1.msra.mxu0 0.0
    %320 = vmatprep.subr.mxu0 0.0
    %321 = vmatpush1.msra.mxu0 0.0
    %322 = vmatprep.subr.mxu0 0.0
    %323 = vmatpush1.msra.mxu0 0.0
    %324 = vmatprep.subr.mxu0 0.0
    %325 = vmatpush1.msra.mxu0 0.0
    %326 = vmatprep.subr.mxu0 0.0
    %327 = vmatpush1.msra.mxu0 0.0
    %328 = vmatprep.subr.mxu0 0.0
    %329 = vmatpush1.msra.mxu0 0.0
    %330 = vmatprep.subr.mxu0 0.0
    %331 = vmatpush1.msra.mxu0 0.0
    %332 = vmatprep.subr.mxu0 0.0
    %333 = vmatpush1.msra.mxu0 0.0
    %334 = vmatprep.subr.mxu0 0.0
    %335 = vmatpush1.msra.mxu0 0.0
    %336 = vmatprep.subr.mxu0 0.0
    %337 = vmatpush1.msra.mxu0 0.0
    %338 = vmatprep.subr.mxu0 0.0
    %339 = vmatpush1.msra.mxu0 0.0
    %340 = vmatprep.subr.mxu0 0.0
    %341 = vmatpush1.msra.mxu0 0.0
    %342 = vmatprep.subr.mxu0 0.0
    %343 = vmatpush1.msra.mxu0 0.0
    %344 = vmatprep.subr.mxu0 0.0
    %345 = vmatpush1.msra.mxu0 0.0
    %346 = vmatprep.subr.mxu0 0.0
    %347 = vmatpush1.msra.mxu0 0.0
    %348 = vmatprep.mubr.f32.mxu0 0.0
    %349 = vmatmul.mubr.f32.gmra.mrb[0].mxu0 %v282
    %v350 = vpop.f32.mrb[0].mxu0
    %v351 = vadd.f32 %v273, %v350
    %v352 = vpop.f32.mrb[0].mxu0
    %v353 = vadd.f32 %v277, %v352
    %354 = vdwg.mxu0
    %v355 = vld [vmem:[#allocation5] sm:$0xff]
    %v356 = vld [vmem:[#allocation5 + $0x8] sm:$0xff]
    %v357 = vld [vmem:[#allocation5 + $0x10] sm:$0xff]
    %v358 = vld [vmem:[#allocation5 + $0x18] sm:$0xff]
    %v359 = vld [vmem:[#allocation7] sm:$0xff]
    %v360 = vld [vmem:[#allocation7 + $0x8] sm:$0xff]
    %v361 = vld [vmem:[#allocation7 + $0x10] sm:$0xff]
    %v362 = vld [vmem:[#allocation7 + $0x18] sm:$0xff]
    %v364 = vsel %vm280, 0.0, 0
    %366 = vmatprep.subr.mxu0 0.0
    %367 = vmatpush1.msra.mxu0 %v355
    %368 = vmatprep.subr.mxu0 0.0
    %369 = vmatpush1.msra.mxu0 %v356
    %370 = vmatprep.subr.mxu0 0.0
    %371 = vmatpush1.msra.mxu0 %v357
    %372 = vmatprep.subr.mxu0 0.0
    %373 = vmatpush1.msra.mxu0 %v358
    %374 = vmatprep.subr.mxu0 0.0
    %375 = vmatpush1.msra.mxu0 0.0
    %376 = vmatprep.subr.mxu0 0.0
    %377 = vmatpush1.msra.mxu0 0.0
    %378 = vmatprep.subr.mxu0 0.0
    %379 = vmatpush1.msra.mxu0 0.0
    %380 = vmatprep.subr.mxu0 0.0
    %381 = vmatpush1.msra.mxu0 0.0
    %382 = vmatprep.subr.mxu0 0.0
    %383 = vmatpush1.msra.mxu0 0.0
    %384 = vmatprep.subr.mxu0 0.0
    %385 = vmatpush1.msra.mxu0 0.0
    %386 = vmatprep.subr.mxu0 0.0
    %387 = vmatpush1.msra.mxu0 0.0
    %388 = vmatprep.subr.mxu0 0.0
    %389 = vmatpush1.msra.mxu0 0.0
    %390 = vmatprep.subr.mxu0 0.0
    %391 = vmatpush1.msra.mxu0 0.0
    %392 = vmatprep.subr.mxu0 0.0
    %393 = vmatpush1.msra.mxu0 0.0
    %394 = vmatprep.subr.mxu0 0.0
    %395 = vmatpush1.msra.mxu0 0.0
    %396 = vmatprep.subr.mxu0 0.0
    %397 = vmatpush1.msra.mxu0 0.0
    %398 = vmatprep.subr.mxu0 0.0
    %399 = vmatpush1.msra.mxu0 0.0
    %400 = vmatprep.subr.mxu0 0.0
    %401 = vmatpush1.msra.mxu0 0.0
    %402 = vmatprep.subr.mxu0 0.0
    %403 = vmatpush1.msra.mxu0 0.0
    %404 = vmatprep.subr.mxu0 0.0
    %405 = vmatpush1.msra.mxu0 0.0
    %406 = vmatprep.subr.mxu0 0.0
    %407 = vmatpush1.msra.mxu0 0.0
    %408 = vmatprep.subr.mxu0 0.0
    %409 = vmatpush1.msra.mxu0 0.0
    %410 = vmatprep.subr.mxu0 0.0
    %411 = vmatpush1.msra.mxu0 0.0
    %412 = vmatprep.subr.mxu0 0.0
    %413 = vmatpush1.msra.mxu0 0.0
    %414 = vmatprep.subr.mxu0 0.0
    %415 = vmatpush1.msra.mxu0 0.0
    %416 = vmatprep.subr.mxu0 0.0
    %417 = vmatpush1.msra.mxu0 0.0
    %418 = vmatprep.subr.mxu0 0.0
    %419 = vmatpush1.msra.mxu0 0.0
    %420 = vmatprep.subr.mxu0 0.0
    %421 = vmatpush1.msra.mxu0 0.0
    %422 = vmatprep.subr.mxu0 0.0
    %423 = vmatpush1.msra.mxu0 0.0
    %424 = vmatprep.subr.mxu0 0.0
    %425 = vmatpush1.msra.mxu0 0.0
    %426 = vmatprep.subr.mxu0 0.0
    %427 = vmatpush1.msra.mxu0 0.0
    %428 = vmatprep.subr.mxu0 0.0
    %429 = vmatpush1.msra.mxu0 0.0
    %430 = vmatprep.mubr.f32.mxu0 0.0
    %431 = vmatmul.mubr.f32.gmra.mrb[0].mxu0 %v364
    %v432 = vpop.f32.mrb[0].mxu0
    %v433 = vadd.f32 0.0, %v432
    %v434 = vpop.f32.mrb[0].mxu0
    %435 = vdwg.mxu0
    %v436 = vadd.f32 %v351, %v433
    %437 = vmatprep.subr.mxu0 0.0
    %438 = vmatpush1.msra.mxu0 %v359
    %439 = vmatprep.subr.mxu0 0.0
    %440 = vmatpush1.msra.mxu0 %v360
    %441 = vmatprep.subr.mxu0 0.0
    %442 = vmatpush1.msra.mxu0 %v361
    %443 = vmatprep.subr.mxu0 0.0
    %444 = vmatpush1.msra.mxu0 %v362
    %445 = vmatprep.subr.mxu0 0.0
    %446 = vmatpush1.msra.mxu0 0.0
    %447 = vmatprep.subr.mxu0 0.0
    %448 = vmatpush1.msra.mxu0 0.0
    %449 = vmatprep.subr.mxu0 0.0
    %450 = vmatpush1.msra.mxu0 0.0
    %451 = vmatprep.subr.mxu0 0.0
    %452 = vmatpush1.msra.mxu0 0.0
    %453 = vmatprep.subr.mxu0 0.0
    %454 = vmatpush1.msra.mxu0 0.0
    %455 = vmatprep.subr.mxu0 0.0
    %456 = vmatpush1.msra.mxu0 0.0
    %457 = vmatprep.subr.mxu0 0.0
    %458 = vmatpush1.msra.mxu0 0.0
    %459 = vmatprep.subr.mxu0 0.0
    %460 = vmatpush1.msra.mxu0 0.0
    %461 = vmatprep.subr.mxu0 0.0
    %462 = vmatpush1.msra.mxu0 0.0
    %463 = vmatprep.subr.mxu0 0.0
    %464 = vmatpush1.msra.mxu0 0.0
    %465 = vmatprep.subr.mxu0 0.0
    %466 = vmatpush1.msra.mxu0 0.0
    %467 = vmatprep.subr.mxu0 0.0
    %468 = vmatpush1.msra.mxu0 0.0
    %469 = vmatprep.subr.mxu0 0.0
    %470 = vmatpush1.msra.mxu0 0.0
    %471 = vmatprep.subr.mxu0 0.0
    %472 = vmatpush1.msra.mxu0 0.0
    %473 = vmatprep.subr.mxu0 0.0
    %474 = vmatpush1.msra.mxu0 0.0
    %475 = vmatprep.subr.mxu0 0.0
    %476 = vmatpush1.msra.mxu0 0.0
    %477 = vmatprep.subr.mxu0 0.0
    %478 = vmatpush1.msra.mxu0 0.0
    %479 = vmatprep.subr.mxu0 0.0
    %480 = vmatpush1.msra.mxu0 0.0
    %481 = vmatprep.subr.mxu0 0.0
    %482 = vmatpush1.msra.mxu0 0.0
    %483 = vmatprep.subr.mxu0 0.0
    %484 = vmatpush1.msra.mxu0 0.0
    %485 = vmatprep.subr.mxu0 0.0
    %486 = vmatpush1.msra.mxu0 0.0
    %487 = vmatprep.subr.mxu0 0.0
    %488 = vmatpush1.msra.mxu0 0.0
    %489 = vmatprep.subr.mxu0 0.0
    %490 = vmatpush1.msra.mxu0 0.0
    %491 = vmatprep.subr.mxu0 0.0
    %492 = vmatpush1.msra.mxu0 0.0
    %493 = vmatprep.subr.mxu0 0.0
    %494 = vmatpush1.msra.mxu0 0.0
    %495 = vmatprep.subr.mxu0 0.0
    %496 = vmatpush1.msra.mxu0 0.0
    %497 = vmatprep.subr.mxu0 0.0
    %498 = vmatpush1.msra.mxu0 0.0
    %499 = vmatprep.subr.mxu0 0.0
    %500 = vmatpush1.msra.mxu0 0.0
    %501 = vmatprep.mubr.f32.mxu0 0.0
    %502 = vmatmul.mubr.f32.gmra.mrb[0].mxu0 %v364
    %v503 = vpop.f32.mrb[0].mxu0
    %v504 = vadd.f32 0.0, %v503
    %v505 = vpop.f32.mrb[0].mxu0
    %506 = vdwg.mxu0
    %v508 = vrot.slane %v504, 1
    %v510 = vadd.f32 %v353, %v508
    %v511 = vxor.u32 %v436, 2147483648
    %v512 = vmul.f32 %v511, 1.442695
    %v513 = vpow.pop %v512
    %v514 = vadd.f32 %v513, 1.0
    %v515 = vrcp.pop %v514
    %v516 = vmul.f32 1.0, %v515
    %v517 = vtanh.pop %v436
    %v518 = vmul.f32 %v516, 0.0
    %520 = vrot.lane.b32.xlu0 %v517, 64
    %v521 = vpop.permute.xlu0 %520
    %v523 = vmul.f32 %v516, %v521
    %525 = vrot.lane.b32.xlu0 %v523, 32
    %v526 = vpop.permute.xlu0 %525
    %v528 = vadd.f32 %v518, %v526
    %v529 = vtanh.pop %v528
    %531 = vrot.lane.b32.xlu0 %v529, 64
    %v532 = vpop.permute.xlu0 %531
    %v534 = vmul.f32 %v516, %v532
    %v535 = vxor.u32 %v510, 2147483648
    %v536 = vmul.f32 %v535, 1.442695
    %v537 = vpow.pop %v536
    %v538 = vadd.f32 %v537, 1.0
    %v539 = vrcp.pop %v538
    %v540 = vmul.f32 1.0, %v539
    %v541 = vtanh.pop %v510
    %v542 = vmul.f32 %v540, 0.0
    %544 = vrot.lane.b32.xlu0 %v541, 64
    %v545 = vpop.permute.xlu0 %544
    %v547 = vmul.f32 %v540, %v545
    %549 = vrot.lane.b32.xlu0 %v547, 32
    %v550 = vpop.permute.xlu0 %549
    %v552 = vadd.f32 %v542, %v550
    %v553 = vtanh.pop %v552
    %555 = vrot.lane.b32.xlu0 %v553, 64
    %v556 = vpop.permute.xlu0 %555
    %v558 = vmul.f32 %v540, %v556
    %560 = vrot.lane.b32.xlu0 %v534, 32
    %v561 = vpop.permute.xlu0 %560
    %v562 = vsel %vm280, %v561, 0
    %564 = vmatprep.subr.mxu0 0.0
    %565 = vmatpush1.msra.mxu0 %v355
    %566 = vmatprep.subr.mxu0 0.0
    %567 = vmatpush1.msra.mxu0 %v356
    %568 = vmatprep.subr.mxu0 0.0
    %569 = vmatpush1.msra.mxu0 %v357
    %570 = vmatprep.subr.mxu0 0.0
    %571 = vmatpush1.msra.mxu0 %v358
    %572 = vmatprep.subr.mxu0 0.0
    %573 = vmatpush1.msra.mxu0 0.0
    %574 = vmatprep.subr.mxu0 0.0
    %575 = vmatpush1.msra.mxu0 0.0
    %576 = vmatprep.subr.mxu0 0.0
    %577 = vmatpush1.msra.mxu0 0.0
    %578 = vmatprep.subr.mxu0 0.0
    %579 = vmatpush1.msra.mxu0 0.0
    %580 = vmatprep.subr.mxu0 0.0
    %581 = vmatpush1.msra.mxu0 0.0
    %582 = vmatprep.subr.mxu0 0.0
    %583 = vmatpush1.msra.mxu0 0.0
    %584 = vmatprep.subr.mxu0 0.0
    %585 = vmatpush1.msra.mxu0 0.0
    %586 = vmatprep.subr.mxu0 0.0
    %587 = vmatpush1.msra.mxu0 0.0
    %588 = vmatprep.subr.mxu0 0.0
    %589 = vmatpush1.msra.mxu0 0.0
    %590 = vmatprep.subr.mxu0 0.0
    %591 = vmatpush1.msra.mxu0 0.0
    %592 = vmatprep.subr.mxu0 0.0
    %593 = vmatpush1.msra.mxu0 0.0
    %594 = vmatprep.subr.mxu0 0.0
    %595 = vmatpush1.msra.mxu0 0.0
    %596 = vmatprep.subr.mxu0 0.0
    %597 = vmatpush1.msra.mxu0 0.0
    %598 = vmatprep.subr.mxu0 0.0
    %599 = vmatpush1.msra.mxu0 0.0
    %600 = vmatprep.subr.mxu0 0.0
    %601 = vmatpush1.msra.mxu0 0.0
    %602 = vmatprep.subr.mxu0 0.0
    %603 = vmatpush1.msra.mxu0 0.0
    %604 = vmatprep.subr.mxu0 0.0
    %605 = vmatpush1.msra.mxu0 0.0
    %606 = vmatprep.subr.mxu0 0.0
    %607 = vmatpush1.msra.mxu0 0.0
    %608 = vmatprep.subr.mxu0 0.0
    %609 = vmatpush1.msra.mxu0 0.0
    %610 = vmatprep.subr.mxu0 0.0
    %611 = vmatpush1.msra.mxu0 0.0
    %612 = vmatprep.subr.mxu0 0.0
    %613 = vmatpush1.msra.mxu0 0.0
    %614 = vmatprep.subr.mxu0 0.0
    %615 = vmatpush1.msra.mxu0 0.0
    %616 = vmatprep.subr.mxu0 0.0
    %617 = vmatpush1.msra.mxu0 0.0
    %618 = vmatprep.subr.mxu0 0.0
    %619 = vmatpush1.msra.mxu0 0.0
    %620 = vmatprep.subr.mxu0 0.0
    %621 = vmatpush1.msra.mxu0 0.0
    %622 = vmatprep.subr.mxu0 0.0
    %623 = vmatpush1.msra.mxu0 0.0
    %624 = vmatprep.subr.mxu0 0.0
    %625 = vmatpush1.msra.mxu0 0.0
    %626 = vmatprep.subr.mxu0 0.0
    %627 = vmatpush1.msra.mxu0 0.0
    %628 = vmatprep.mubr.f32.mxu0 0.0
    %629 = vmatmul.mubr.f32.gmra.mrb[0].mxu0 %v562
    %v630 = vpop.f32.mrb[0].mxu0
    %v631 = vadd.f32 0.0, %v630
    %v632 = vpop.f32.mrb[0].mxu0
    %633 = vdwg.mxu0
    %v635 = vrot.slane %v631, 7
    %v637 = vadd.f32 %v351, %v635
    %v639 = vrot.slane %v558, 7
    %640 = vrot.lane.b32.xlu0 %v639, 32
    %v641 = vpop.permute.xlu0 %640
    %v642 = vsel %vm280, %v641, 0
    %644 = vmatprep.subr.mxu0 0.0
    %645 = vmatpush1.msra.mxu0 %v359
    %646 = vmatprep.subr.mxu0 0.0
    %647 = vmatpush1.msra.mxu0 %v360
    %648 = vmatprep.subr.mxu0 0.0
    %649 = vmatpush1.msra.mxu0 %v361
    %650 = vmatprep.subr.mxu0 0.0
    %651 = vmatpush1.msra.mxu0 %v362
    %652 = vmatprep.subr.mxu0 0.0
    %653 = vmatpush1.msra.mxu0 0.0
    %654 = vmatprep.subr.mxu0 0.0
    %655 = vmatpush1.msra.mxu0 0.0
    %656 = vmatprep.subr.mxu0 0.0
    %657 = vmatpush1.msra.mxu0 0.0
    %658 = vmatprep.subr.mxu0 0.0
    %659 = vmatpush1.msra.mxu0 0.0
    %660 = vmatprep.subr.mxu0 0.0
    %661 = vmatpush1.msra.mxu0 0.0
    %662 = vmatprep.subr.mxu0 0.0
    %663 = vmatpush1.msra.mxu0 0.0
    %664 = vmatprep.subr.mxu0 0.0
    %665 = vmatpush1.msra.mxu0 0.0
    %666 = vmatprep.subr.mxu0 0.0
    %667 = vmatpush1.msra.mxu0 0.0
    %668 = vmatprep.subr.mxu0 0.0
    %669 = vmatpush1.msra.mxu0 0.0
    %670 = vmatprep.subr.mxu0 0.0
    %671 = vmatpush1.msra.mxu0 0.0
    %672 = vmatprep.subr.mxu0 0.0
    %673 = vmatpush1.msra.mxu0 0.0
    %674 = vmatprep.subr.mxu0 0.0
    %675 = vmatpush1.msra.mxu0 0.0
    %676 = vmatprep.subr.mxu0 0.0
    %677 = vmatpush1.msra.mxu0 0.0
    %678 = vmatprep.subr.mxu0 0.0
    %679 = vmatpush1.msra.mxu0 0.0
    %680 = vmatprep.subr.mxu0 0.0
    %681 = vmatpush1.msra.mxu0 0.0
    %682 = vmatprep.subr.mxu0 0.0
    %683 = vmatpush1.msra.mxu0 0.0
    %684 = vmatprep.subr.mxu0 0.0
    %685 = vmatpush1.msra.mxu0 0.0
    %686 = vmatprep.subr.mxu0 0.0
    %687 = vmatpush1.msra.mxu0 0.0
    %688 = vmatprep.subr.mxu0 0.0
    %689 = vmatpush1.msra.mxu0 0.0
    %690 = vmatprep.subr.mxu0 0.0
    %691 = vmatpush1.msra.mxu0 0.0
    %692 = vmatprep.subr.mxu0 0.0
    %693 = vmatpush1.msra.mxu0 0.0
    %694 = vmatprep.subr.mxu0 0.0
    %695 = vmatpush1.msra.mxu0 0.0
    %696 = vmatprep.subr.mxu0 0.0
    %697 = vmatpush1.msra.mxu0 0.0
    %698 = vmatprep.subr.mxu0 0.0
    %699 = vmatpush1.msra.mxu0 0.0
    %700 = vmatprep.subr.mxu0 0.0
    %701 = vmatpush1.msra.mxu0 0.0
    %702 = vmatprep.subr.mxu0 0.0
    %703 = vmatpush1.msra.mxu0 0.0
    %704 = vmatprep.subr.mxu0 0.0
    %705 = vmatpush1.msra.mxu0 0.0
    %706 = vmatprep.subr.mxu0 0.0
    %707 = vmatpush1.msra.mxu0 0.0
    %708 = vmatprep.mubr.f32.mxu0 0.0
    %709 = vmatmul.mubr.f32.gmra.mrb[0].mxu0 %v642
    %v710 = vpop.f32.mrb[0].mxu0
    %v711 = vadd.f32 0.0, %v710
    %v712 = vpop.f32.mrb[0].mxu0
    %713 = vdwg.mxu0
    %v715 = vrot.slane %v711, 2
    %v717 = vadd.f32 %v353, %v715
    %v718 = vxor.u32 %v637, 2147483648
    %v719 = vmul.f32 %v718, 1.442695
    %v720 = vpow.pop %v719
    %v721 = vadd.f32 %v720, 1.0
    %v722 = vrcp.pop %v721
    %v723 = vmul.f32 1.0, %v722
    %v724 = vtanh.pop %v637
    %v726 = vrot.slane %v528, 7
    %v728 = vmul.f32 %v723, %v726
    %730 = vrot.lane.b32.xlu0 %v724, 64
    %v731 = vpop.permute.xlu0 %730
    %v733 = vmul.f32 %v723, %v731
    %735 = vrot.lane.b32.xlu0 %v733, 32
    %v736 = vpop.permute.xlu0 %735
    %v738 = vadd.f32 %v728, %v736
    %v739 = vtanh.pop %v738
    %741 = vrot.lane.b32.xlu0 %v739, 64
    %v742 = vpop.permute.xlu0 %741
    %v744 = vmul.f32 %v723, %v742
    %v745 = vxor.u32 %v717, 2147483648
    %v746 = vmul.f32 %v745, 1.442695
    %v747 = vpow.pop %v746
    %v748 = vadd.f32 %v747, 1.0
    %v749 = vrcp.pop %v748
    %v750 = vmul.f32 1.0, %v749
    %v751 = vtanh.pop %v717
    %v753 = vrot.slane %v552, 1
    %v755 = vmul.f32 %v750, %v753
    %757 = vrot.lane.b32.xlu0 %v751, 64
    %v758 = vpop.permute.xlu0 %757
    %v760 = vmul.f32 %v750, %v758
    %762 = vrot.lane.b32.xlu0 %v760, 32
    %v763 = vpop.permute.xlu0 %762
    %v765 = vadd.f32 %v755, %v763
    %v766 = vtanh.pop %v765
    %768 = vrot.lane.b32.xlu0 %v766, 64
    %v769 = vpop.permute.xlu0 %768
    %v771 = vmul.f32 %v750, %v769
    %v773 = vrot.slane %v744, 1
    %774 = vrot.lane.b32.xlu0 %v773, 32
    %v775 = vpop.permute.xlu0 %774
    %v776 = vsel %vm280, %v775, 0
    %778 = vmatprep.subr.mxu0 0.0
    %779 = vmatpush1.msra.mxu0 %v355
    %780 = vmatprep.subr.mxu0 0.0
    %781 = vmatpush1.msra.mxu0 %v356
    %782 = vmatprep.subr.mxu0 0.0
    %783 = vmatpush1.msra.mxu0 %v357
    %784 = vmatprep.subr.mxu0 0.0
    %785 = vmatpush1.msra.mxu0 %v358
    %786 = vmatprep.subr.mxu0 0.0
    %787 = vmatpush1.msra.mxu0 0.0
    %788 = vmatprep.subr.mxu0 0.0
    %789 = vmatpush1.msra.mxu0 0.0
    %790 = vmatprep.subr.mxu0 0.0
    %791 = vmatpush1.msra.mxu0 0.0
    %792 = vmatprep.subr.mxu0 0.0
    %793 = vmatpush1.msra.mxu0 0.0
    %794 = vmatprep.subr.mxu0 0.0
    %795 = vmatpush1.msra.mxu0 0.0
    %796 = vmatprep.subr.mxu0 0.0
    %797 = vmatpush1.msra.mxu0 0.0
    %798 = vmatprep.subr.mxu0 0.0
    %799 = vmatpush1.msra.mxu0 0.0
    %800 = vmatprep.subr.mxu0 0.0
    %801 = vmatpush1.msra.mxu0 0.0
    %802 = vmatprep.subr.mxu0 0.0
    %803 = vmatpush1.msra.mxu0 0.0
    %804 = vmatprep.subr.mxu0 0.0
    %805 = vmatpush1.msra.mxu0 0.0
    %806 = vmatprep.subr.mxu0 0.0
    %807 = vmatpush1.msra.mxu0 0.0
    %808 = vmatprep.subr.mxu0 0.0
    %809 = vmatpush1.msra.mxu0 0.0
    %810 = vmatprep.subr.mxu0 0.0
    %811 = vmatpush1.msra.mxu0 0.0
    %812 = vmatprep.subr.mxu0 0.0
    %813 = vmatpush1.msra.mxu0 0.0
    %814 = vmatprep.subr.mxu0 0.0
    %815 = vmatpush1.msra.mxu0 0.0
    %816 = vmatprep.subr.mxu0 0.0
    %817 = vmatpush1.msra.mxu0 0.0
    %818 = vmatprep.subr.mxu0 0.0
    %819 = vmatpush1.msra.mxu0 0.0
    %820 = vmatprep.subr.mxu0 0.0
    %821 = vmatpush1.msra.mxu0 0.0
    %822 = vmatprep.subr.mxu0 0.0
    %823 = vmatpush1.msra.mxu0 0.0
    %824 = vmatprep.subr.mxu0 0.0
    %825 = vmatpush1.msra.mxu0 0.0
    %826 = vmatprep.subr.mxu0 0.0
    %827 = vmatpush1.msra.mxu0 0.0
    %828 = vmatprep.subr.mxu0 0.0
    %829 = vmatpush1.msra.mxu0 0.0
    %830 = vmatprep.subr.mxu0 0.0
    %831 = vmatpush1.msra.mxu0 0.0
    %832 = vmatprep.subr.mxu0 0.0
    %833 = vmatpush1.msra.mxu0 0.0
    %834 = vmatprep.subr.mxu0 0.0
    %835 = vmatpush1.msra.mxu0 0.0
    %836 = vmatprep.subr.mxu0 0.0
    %837 = vmatpush1.msra.mxu0 0.0
    %838 = vmatprep.subr.mxu0 0.0
    %839 = vmatpush1.msra.mxu0 0.0
    %840 = vmatprep.subr.mxu0 0.0
    %841 = vmatpush1.msra.mxu0 0.0
    %842 = vmatprep.mubr.f32.mxu0 0.0
    %843 = vmatmul.mubr.f32.gmra.mrb[0].mxu0 %v776
    %v844 = vpop.f32.mrb[0].mxu0
    %v845 = vadd.f32 0.0, %v844
    %v846 = vpop.f32.mrb[0].mxu0
    %847 = vdwg.mxu0
    %v849 = vrot.slane %v845, 6
    %v851 = vadd.f32 %v351, %v849
    %v853 = vrot.slane %v771, 6
    %854 = vrot.lane.b32.xlu0 %v853, 32
    %v855 = vpop.permute.xlu0 %854
    %v856 = vsel %vm280, %v855, 0
    %858 = vmatprep.subr.mxu0 0.0
    %859 = vmatpush1.msra.mxu0 %v359
    %860 = vmatprep.subr.mxu0 0.0
    %861 = vmatpush1.msra.mxu0 %v360
    %862 = vmatprep.subr.mxu0 0.0
    %863 = vmatpush1.msra.mxu0 %v361
    %864 = vmatprep.subr.mxu0 0.0
    %865 = vmatpush1.msra.mxu0 %v362
    %866 = vmatprep.subr.mxu0 0.0
    %867 = vmatpush1.msra.mxu0 0.0
    %868 = vmatprep.subr.mxu0 0.0
    %869 = vmatpush1.msra.mxu0 0.0
    %870 = vmatprep.subr.mxu0 0.0
    %871 = vmatpush1.msra.mxu0 0.0
    %872 = vmatprep.subr.mxu0 0.0
    %873 = vmatpush1.msra.mxu0 0.0
    %874 = vmatprep.subr.mxu0 0.0
    %875 = vmatpush1.msra.mxu0 0.0
    %876 = vmatprep.subr.mxu0 0.0
    %877 = vmatpush1.msra.mxu0 0.0
    %878 = vmatprep.subr.mxu0 0.0
    %879 = vmatpush1.msra.mxu0 0.0
    %880 = vmatprep.subr.mxu0 0.0
    %881 = vmatpush1.msra.mxu0 0.0
    %882 = vmatprep.subr.mxu0 0.0
    %883 = vmatpush1.msra.mxu0 0.0
    %884 = vmatprep.subr.mxu0 0.0
    %885 = vmatpush1.msra.mxu0 0.0
    %886 = vmatprep.subr.mxu0 0.0
    %887 = vmatpush1.msra.mxu0 0.0
    %888 = vmatprep.subr.mxu0 0.0
    %889 = vmatpush1.msra.mxu0 0.0
    %890 = vmatprep.subr.mxu0 0.0
    %891 = vmatpush1.msra.mxu0 0.0
    %892 = vmatprep.subr.mxu0 0.0
    %893 = vmatpush1.msra.mxu0 0.0
    %894 = vmatprep.subr.mxu0 0.0
    %895 = vmatpush1.msra.mxu0 0.0
    %896 = vmatprep.subr.mxu0 0.0
    %897 = vmatpush1.msra.mxu0 0.0
    %898 = vmatprep.subr.mxu0 0.0
    %899 = vmatpush1.msra.mxu0 0.0
    %900 = vmatprep.subr.mxu0 0.0
    %901 = vmatpush1.msra.mxu0 0.0
    %902 = vmatprep.subr.mxu0 0.0
    %903 = vmatpush1.msra.mxu0 0.0
    %904 = vmatprep.subr.mxu0 0.0
    %905 = vmatpush1.msra.mxu0 0.0
    %906 = vmatprep.subr.mxu0 0.0
    %907 = vmatpush1.msra.mxu0 0.0
    %908 = vmatprep.subr.mxu0 0.0
    %909 = vmatpush1.msra.mxu0 0.0
    %910 = vmatprep.subr.mxu0 0.0
    %911 = vmatpush1.msra.mxu0 0.0
    %912 = vmatprep.subr.mxu0 0.0
    %913 = vmatpush1.msra.mxu0 0.0
    %914 = vmatprep.subr.mxu0 0.0
    %915 = vmatpush1.msra.mxu0 0.0
    %916 = vmatprep.subr.mxu0 0.0
    %917 = vmatpush1.msra.mxu0 0.0
    %918 = vmatprep.subr.mxu0 0.0
    %919 = vmatpush1.msra.mxu0 0.0
    %920 = vmatprep.subr.mxu0 0.0
    %921 = vmatpush1.msra.mxu0 0.0
    %922 = vmatprep.mubr.f32.mxu0 0.0
    %923 = vmatmul.mubr.f32.gmra.mrb[0].mxu0 %v856
    %v924 = vpop.f32.mrb[0].mxu0
    %v925 = vadd.f32 0.0, %v924
    %v926 = vpop.f32.mrb[0].mxu0
    %927 = vdwg.mxu0
    %v929 = vrot.slane %v925, 3
    %v931 = vadd.f32 %v353, %v929
    %v932 = vxor.u32 %v851, 2147483648
    %v933 = vmul.f32 %v932, 1.442695
    %v934 = vpow.pop %v933
    %v935 = vadd.f32 %v934, 1.0
    %v936 = vrcp.pop %v935
    %v937 = vmul.f32 1.0, %v936
    %v938 = vtanh.pop %v851
    %v940 = vrot.slane %v738, 7
    %v942 = vmul.f32 %v937, %v940
    %944 = vrot.lane.b32.xlu0 %v938, 64
    %v945 = vpop.permute.xlu0 %944
    %v947 = vmul.f32 %v937, %v945
    %949 = vrot.lane.b32.xlu0 %v947, 32
    %v950 = vpop.permute.xlu0 %949
    %v952 = vadd.f32 %v942, %v950
    %v953 = vtanh.pop %v952
    %955 = vrot.lane.b32.xlu0 %v953, 64
    %v956 = vpop.permute.xlu0 %955
    %v958 = vmul.f32 %v937, %v956
    %v959 = vxor.u32 %v931, 2147483648
    %v960 = vmul.f32 %v959, 1.442695
    %v961 = vpow.pop %v960
    %v962 = vadd.f32 %v961, 1.0
    %v963 = vrcp.pop %v962
    %v964 = vmul.f32 1.0, %v963
    %v965 = vtanh.pop %v931
    %v967 = vrot.slane %v765, 1
    %v969 = vmul.f32 %v964, %v967
    %971 = vrot.lane.b32.xlu0 %v965, 64
    %v972 = vpop.permute.xlu0 %971
    %v974 = vmul.f32 %v964, %v972
    %976 = vrot.lane.b32.xlu0 %v974, 32
    %v977 = vpop.permute.xlu0 %976
    %v979 = vadd.f32 %v969, %v977
    %v980 = vtanh.pop %v979
    %982 = vrot.lane.b32.xlu0 %v980, 64
    %v983 = vpop.permute.xlu0 %982
    %v985 = vmul.f32 %v964, %v983
    %v987 = vrot.slane %v958, 2
    %988 = vrot.lane.b32.xlu0 %v987, 32
    %v989 = vpop.permute.xlu0 %988
    %v990 = vsel %vm280, %v989, 0
    %992 = vmatprep.subr.mxu0 0.0
    %993 = vmatpush1.msra.mxu0 %v355
    %994 = vmatprep.subr.mxu0 0.0
    %995 = vmatpush1.msra.mxu0 %v356
    %996 = vmatprep.subr.mxu0 0.0
    %997 = vmatpush1.msra.mxu0 %v357
    %998 = vmatprep.subr.mxu0 0.0
    %999 = vmatpush1.msra.mxu0 %v358
    %1000 = vmatprep.subr.mxu0 0.0
    %1001 = vmatpush1.msra.mxu0 0.0
    %1002 = vmatprep.subr.mxu0 0.0
    %1003 = vmatpush1.msra.mxu0 0.0
    %1004 = vmatprep.subr.mxu0 0.0
    %1005 = vmatpush1.msra.mxu0 0.0
    %1006 = vmatprep.subr.mxu0 0.0
    %1007 = vmatpush1.msra.mxu0 0.0
    %1008 = vmatprep.subr.mxu0 0.0
    %1009 = vmatpush1.msra.mxu0 0.0
    %1010 = vmatprep.subr.mxu0 0.0
    %1011 = vmatpush1.msra.mxu0 0.0
    %1012 = vmatprep.subr.mxu0 0.0
    %1013 = vmatpush1.msra.mxu0 0.0
    %1014 = vmatprep.subr.mxu0 0.0
    %1015 = vmatpush1.msra.mxu0 0.0
    %1016 = vmatprep.subr.mxu0 0.0
    %1017 = vmatpush1.msra.mxu0 0.0
    %1018 = vmatprep.subr.mxu0 0.0
    %1019 = vmatpush1.msra.mxu0 0.0
    %1020 = vmatprep.subr.mxu0 0.0
    %1021 = vmatpush1.msra.mxu0 0.0
    %1022 = vmatprep.subr.mxu0 0.0
    %1023 = vmatpush1.msra.mxu0 0.0
    %1024 = vmatprep.subr.mxu0 0.0
    %1025 = vmatpush1.msra.mxu0 0.0
    %1026 = vmatprep.subr.mxu0 0.0
    %1027 = vmatpush1.msra.mxu0 0.0
    %1028 = vmatprep.subr.mxu0 0.0
    %1029 = vmatpush1.msra.mxu0 0.0
    %1030 = vmatprep.subr.mxu0 0.0
    %1031 = vmatpush1.msra.mxu0 0.0
    %1032 = vmatprep.subr.mxu0 0.0
    %1033 = vmatpush1.msra.mxu0 0.0
    %1034 = vmatprep.subr.mxu0 0.0
    %1035 = vmatpush1.msra.mxu0 0.0
    %1036 = vmatprep.subr.mxu0 0.0
    %1037 = vmatpush1.msra.mxu0 0.0
    %1038 = vmatprep.subr.mxu0 0.0
    %1039 = vmatpush1.msra.mxu0 0.0
    %1040 = vmatprep.subr.mxu0 0.0
    %1041 = vmatpush1.msra.mxu0 0.0
    %1042 = vmatprep.subr.mxu0 0.0
    %1043 = vmatpush1.msra.mxu0 0.0
    %1044 = vmatprep.subr.mxu0 0.0
    %1045 = vmatpush1.msra.mxu0 0.0
    %1046 = vmatprep.subr.mxu0 0.0
    %1047 = vmatpush1.msra.mxu0 0.0
    %1048 = vmatprep.subr.mxu0 0.0
    %1049 = vmatpush1.msra.mxu0 0.0
    %1050 = vmatprep.subr.mxu0 0.0
    %1051 = vmatpush1.msra.mxu0 0.0
    %1052 = vmatprep.subr.mxu0 0.0
    %1053 = vmatpush1.msra.mxu0 0.0
    %1054 = vmatprep.subr.mxu0 0.0
    %1055 = vmatpush1.msra.mxu0 0.0
    %1056 = vmatprep.mubr.f32.mxu0 0.0
    %1057 = vmatmul.mubr.f32.gmra.mrb[0].mxu0 %v990
    %v1058 = vpop.f32.mrb[0].mxu0
    %v1059 = vadd.f32 0.0, %v1058
    %v1060 = vpop.f32.mrb[0].mxu0
    %1061 = vdwg.mxu0
    %v1063 = vrot.slane %v1059, 5
    %v1065 = vadd.f32 %v351, %v1063
    %v1067 = vrot.slane %v985, 5
    %1068 = vrot.lane.b32.xlu0 %v1067, 32
    %v1069 = vpop.permute.xlu0 %1068
    %v1070 = vsel %vm280, %v1069, 0
    %1072 = vmatprep.subr.mxu0 0.0
    %1073 = vmatpush1.msra.mxu0 %v359
    %1074 = vmatprep.subr.mxu0 0.0
    %1075 = vmatpush1.msra.mxu0 %v360
    %1076 = vmatprep.subr.mxu0 0.0
    %1077 = vmatpush1.msra.mxu0 %v361
    %1078 = vmatprep.subr.mxu0 0.0
    %1079 = vmatpush1.msra.mxu0 %v362
    %1080 = vmatprep.subr.mxu0 0.0
    %1081 = vmatpush1.msra.mxu0 0.0
    %1082 = vmatprep.subr.mxu0 0.0
    %1083 = vmatpush1.msra.mxu0 0.0
    %1084 = vmatprep.subr.mxu0 0.0
    %1085 = vmatpush1.msra.mxu0 0.0
    %1086 = vmatprep.subr.mxu0 0.0
    %1087 = vmatpush1.msra.mxu0 0.0
    %1088 = vmatprep.subr.mxu0 0.0
    %1089 = vmatpush1.msra.mxu0 0.0
    %1090 = vmatprep.subr.mxu0 0.0
    %1091 = vmatpush1.msra.mxu0 0.0
    %1092 = vmatprep.subr.mxu0 0.0
    %1093 = vmatpush1.msra.mxu0 0.0
    %1094 = vmatprep.subr.mxu0 0.0
    %1095 = vmatpush1.msra.mxu0 0.0
    %1096 = vmatprep.subr.mxu0 0.0
    %1097 = vmatpush1.msra.mxu0 0.0
    %1098 = vmatprep.subr.mxu0 0.0
    %1099 = vmatpush1.msra.mxu0 0.0
    %1100 = vmatprep.subr.mxu0 0.0
    %1101 = vmatpush1.msra.mxu0 0.0
    %1102 = vmatprep.subr.mxu0 0.0
    %1103 = vmatpush1.msra.mxu0 0.0
    %1104 = vmatprep.subr.mxu0 0.0
    %1105 = vmatpush1.msra.mxu0 0.0
    %1106 = vmatprep.subr.mxu0 0.0
    %1107 = vmatpush1.msra.mxu0 0.0
    %1108 = vmatprep.subr.mxu0 0.0
    %1109 = vmatpush1.msra.mxu0 0.0
    %1110 = vmatprep.subr.mxu0 0.0
    %1111 = vmatpush1.msra.mxu0 0.0
    %1112 = vmatprep.subr.mxu0 0.0
    %1113 = vmatpush1.msra.mxu0 0.0
    %1114 = vmatprep.subr.mxu0 0.0
    %1115 = vmatpush1.msra.mxu0 0.0
    %1116 = vmatprep.subr.mxu0 0.0
    %1117 = vmatpush1.msra.mxu0 0.0
    %1118 = vmatprep.subr.mxu0 0.0
    %1119 = vmatpush1.msra.mxu0 0.0
    %1120 = vmatprep.subr.mxu0 0.0
    %1121 = vmatpush1.msra.mxu0 0.0
    %1122 = vmatprep.subr.mxu0 0.0
    %1123 = vmatpush1.msra.mxu0 0.0
    %1124 = vmatprep.subr.mxu0 0.0
    %1125 = vmatpush1.msra.mxu0 0.0
    %1126 = vmatprep.subr.mxu0 0.0
    %1127 = vmatpush1.msra.mxu0 0.0
    %1128 = vmatprep.subr.mxu0 0.0
    %1129 = vmatpush1.msra.mxu0 0.0
    %1130 = vmatprep.subr.mxu0 0.0
    %1131 = vmatpush1.msra.mxu0 0.0
    %1132 = vmatprep.subr.mxu0 0.0
    %1133 = vmatpush1.msra.mxu0 0.0
    %1134 = vmatprep.subr.mxu0 0.0
    %1135 = vmatpush1.msra.mxu0 0.0
    %1136 = vmatprep.mubr.f32.mxu0 0.0
    %1137 = vmatmul.mubr.f32.gmra.mrb[0].mxu0 %v1070
    %v1138 = vpop.f32.mrb[0].mxu0
    %v1139 = vadd.f32 0.0, %v1138
    %v1140 = vpop.f32.mrb[0].mxu0
    %1141 = vdwg.mxu0
    %v1143 = vrot.slane %v1139, 4
    %v1145 = vadd.f32 %v353, %v1143
    %v1146 = vxor.u32 %v1065, 2147483648
    %v1147 = vmul.f32 %v1146, 1.442695
    %v1148 = vpow.pop %v1147
    %v1149 = vadd.f32 %v1148, 1.0
    %v1150 = vrcp.pop %v1149
    %v1151 = vmul.f32 1.0, %v1150
    %v1152 = vtanh.pop %v1065
    %v1154 = vrot.slane %v952, 7
    %v1156 = vmul.f32 %v1151, %v1154
    %1158 = vrot.lane.b32.xlu0 %v1152, 64
    %v1159 = vpop.permute.xlu0 %1158
    %v1161 = vmul.f32 %v1151, %v1159
    %1163 = vrot.lane.b32.xlu0 %v1161, 32
    %v1164 = vpop.permute.xlu0 %1163
    %v1166 = vadd.f32 %v1156, %v1164
    %v1167 = vtanh.pop %v1166
    %1169 = vrot.lane.b32.xlu0 %v1167, 64
    %v1170 = vpop.permute.xlu0 %1169
    %v1172 = vmul.f32 %v1151, %v1170
    %v1173 = vxor.u32 %v1145, 2147483648
    %v1174 = vmul.f32 %v1173, 1.442695
    %v1175 = vpow.pop %v1174
    %v1176 = vadd.f32 %v1175, 1.0
    %v1177 = vrcp.pop %v1176
    %v1178 = vmul.f32 1.0, %v1177
    %v1179 = vtanh.pop %v1145
    %v1181 = vrot.slane %v979, 1
    %v1183 = vmul.f32 %v1178, %v1181
    %1185 = vrot.lane.b32.xlu0 %v1179, 64
    %v1186 = vpop.permute.xlu0 %1185
    %v1188 = vmul.f32 %v1178, %v1186
    %1190 = vrot.lane.b32.xlu0 %v1188, 32
    %v1191 = vpop.permute.xlu0 %1190
    %v1193 = vadd.f32 %v1183, %v1191
    %v1194 = vtanh.pop %v1193
    %1196 = vrot.lane.b32.xlu0 %v1194, 64
    %v1197 = vpop.permute.xlu0 %1196
    %v1199 = vmul.f32 %v1178, %v1197
    %v1201 = vrot.slane %v1172, 3
    %1202 = vrot.lane.b32.xlu0 %v1201, 32
    %v1203 = vpop.permute.xlu0 %1202
    %v1204 = vsel %vm280, %v1203, 0
    %1206 = vmatprep.subr.mxu0 0.0
    %1207 = vmatpush1.msra.mxu0 %v355
    %1208 = vmatprep.subr.mxu0 0.0
    %1209 = vmatpush1.msra.mxu0 %v356
    %1210 = vmatprep.subr.mxu0 0.0
    %1211 = vmatpush1.msra.mxu0 %v357
    %1212 = vmatprep.subr.mxu0 0.0
    %1213 = vmatpush1.msra.mxu0 %v358
    %1214 = vmatprep.subr.mxu0 0.0
    %1215 = vmatpush1.msra.mxu0 0.0
    %1216 = vmatprep.subr.mxu0 0.0
    %1217 = vmatpush1.msra.mxu0 0.0
    %1218 = vmatprep.subr.mxu0 0.0
    %1219 = vmatpush1.msra.mxu0 0.0
    %1220 = vmatprep.subr.mxu0 0.0
    %1221 = vmatpush1.msra.mxu0 0.0
    %1222 = vmatprep.subr.mxu0 0.0
    %1223 = vmatpush1.msra.mxu0 0.0
    %1224 = vmatprep.subr.mxu0 0.0
    %1225 = vmatpush1.msra.mxu0 0.0
    %1226 = vmatprep.subr.mxu0 0.0
    %1227 = vmatpush1.msra.mxu0 0.0
    %1228 = vmatprep.subr.mxu0 0.0
    %1229 = vmatpush1.msra.mxu0 0.0
    %1230 = vmatprep.subr.mxu0 0.0
    %1231 = vmatpush1.msra.mxu0 0.0
    %1232 = vmatprep.subr.mxu0 0.0
    %1233 = vmatpush1.msra.mxu0 0.0
    %1234 = vmatprep.subr.mxu0 0.0
    %1235 = vmatpush1.msra.mxu0 0.0
    %1236 = vmatprep.subr.mxu0 0.0
    %1237 = vmatpush1.msra.mxu0 0.0
    %1238 = vmatprep.subr.mxu0 0.0
    %1239 = vmatpush1.msra.mxu0 0.0
    %1240 = vmatprep.subr.mxu0 0.0
    %1241 = vmatpush1.msra.mxu0 0.0
    %1242 = vmatprep.subr.mxu0 0.0
    %1243 = vmatpush1.msra.mxu0 0.0
    %1244 = vmatprep.subr.mxu0 0.0
    %1245 = vmatpush1.msra.mxu0 0.0
    %1246 = vmatprep.subr.mxu0 0.0
    %1247 = vmatpush1.msra.mxu0 0.0
    %1248 = vmatprep.subr.mxu0 0.0
    %1249 = vmatpush1.msra.mxu0 0.0
    %1250 = vmatprep.subr.mxu0 0.0
    %1251 = vmatpush1.msra.mxu0 0.0
    %1252 = vmatprep.subr.mxu0 0.0
    %1253 = vmatpush1.msra.mxu0 0.0
    %1254 = vmatprep.subr.mxu0 0.0
    %1255 = vmatpush1.msra.mxu0 0.0
    %1256 = vmatprep.subr.mxu0 0.0
    %1257 = vmatpush1.msra.mxu0 0.0
    %1258 = vmatprep.subr.mxu0 0.0
    %1259 = vmatpush1.msra.mxu0 0.0
    %1260 = vmatprep.subr.mxu0 0.0
    %1261 = vmatpush1.msra.mxu0 0.0
    %1262 = vmatprep.subr.mxu0 0.0
    %1263 = vmatpush1.msra.mxu0 0.0
    %1264 = vmatprep.subr.mxu0 0.0
    %1265 = vmatpush1.msra.mxu0 0.0
    %1266 = vmatprep.subr.mxu0 0.0
    %1267 = vmatpush1.msra.mxu0 0.0
    %1268 = vmatprep.subr.mxu0 0.0
    %1269 = vmatpush1.msra.mxu0 0.0
    %1270 = vmatprep.mubr.f32.mxu0 0.0
    %1271 = vmatmul.mubr.f32.gmra.mrb[0].mxu0 %v1204
    %v1272 = vpop.f32.mrb[0].mxu0
    %v1273 = vadd.f32 0.0, %v1272
    %v1274 = vpop.f32.mrb[0].mxu0
    %1275 = vdwg.mxu0
    %v1277 = vrot.slane %v1273, 4
    %v1279 = vadd.f32 %v351, %v1277
    %v1281 = vrot.slane %v1199, 4
    %1282 = vrot.lane.b32.xlu0 %v1281, 32
    %v1283 = vpop.permute.xlu0 %1282
    %v1284 = vsel %vm280, %v1283, 0
    %1286 = vmatprep.subr.mxu0 0.0
    %1287 = vmatpush1.msra.mxu0 %v359
    %1288 = vmatprep.subr.mxu0 0.0
    %1289 = vmatpush1.msra.mxu0 %v360
    %1290 = vmatprep.subr.mxu0 0.0
    %1291 = vmatpush1.msra.mxu0 %v361
    %1292 = vmatprep.subr.mxu0 0.0
    %1293 = vmatpush1.msra.mxu0 %v362
    %1294 = vmatprep.subr.mxu0 0.0
    %1295 = vmatpush1.msra.mxu0 0.0
    %1296 = vmatprep.subr.mxu0 0.0
    %1297 = vmatpush1.msra.mxu0 0.0
    %1298 = vmatprep.subr.mxu0 0.0
    %1299 = vmatpush1.msra.mxu0 0.0
    %1300 = vmatprep.subr.mxu0 0.0
    %1301 = vmatpush1.msra.mxu0 0.0
    %1302 = vmatprep.subr.mxu0 0.0
    %1303 = vmatpush1.msra.mxu0 0.0
    %1304 = vmatprep.subr.mxu0 0.0
    %1305 = vmatpush1.msra.mxu0 0.0
    %1306 = vmatprep.subr.mxu0 0.0
    %1307 = vmatpush1.msra.mxu0 0.0
    %1308 = vmatprep.subr.mxu0 0.0
    %1309 = vmatpush1.msra.mxu0 0.0
    %1310 = vmatprep.subr.mxu0 0.0
    %1311 = vmatpush1.msra.mxu0 0.0
    %1312 = vmatprep.subr.mxu0 0.0
    %1313 = vmatpush1.msra.mxu0 0.0
    %1314 = vmatprep.subr.mxu0 0.0
    %1315 = vmatpush1.msra.mxu0 0.0
    %1316 = vmatprep.subr.mxu0 0.0
    %1317 = vmatpush1.msra.mxu0 0.0
    %1318 = vmatprep.subr.mxu0 0.0
    %1319 = vmatpush1.msra.mxu0 0.0
    %1320 = vmatprep.subr.mxu0 0.0
    %1321 = vmatpush1.msra.mxu0 0.0
    %1322 = vmatprep.subr.mxu0 0.0
    %1323 = vmatpush1.msra.mxu0 0.0
    %1324 = vmatprep.subr.mxu0 0.0
    %1325 = vmatpush1.msra.mxu0 0.0
    %1326 = vmatprep.subr.mxu0 0.0
    %1327 = vmatpush1.msra.mxu0 0.0
    %1328 = vmatprep.subr.mxu0 0.0
    %1329 = vmatpush1.msra.mxu0 0.0
    %1330 = vmatprep.subr.mxu0 0.0
    %1331 = vmatpush1.msra.mxu0 0.0
    %1332 = vmatprep.subr.mxu0 0.0
    %1333 = vmatpush1.msra.mxu0 0.0
    %1334 = vmatprep.subr.mxu0 0.0
    %1335 = vmatpush1.msra.mxu0 0.0
    %1336 = vmatprep.subr.mxu0 0.0
    %1337 = vmatpush1.msra.mxu0 0.0
    %1338 = vmatprep.subr.mxu0 0.0
    %1339 = vmatpush1.msra.mxu0 0.0
    %1340 = vmatprep.subr.mxu0 0.0
    %1341 = vmatpush1.msra.mxu0 0.0
    %1342 = vmatprep.subr.mxu0 0.0
    %1343 = vmatpush1.msra.mxu0 0.0
    %1344 = vmatprep.subr.mxu0 0.0
    %1345 = vmatpush1.msra.mxu0 0.0
    %1346 = vmatprep.subr.mxu0 0.0
    %1347 = vmatpush1.msra.mxu0 0.0
    %1348 = vmatprep.subr.mxu0 0.0
    %1349 = vmatpush1.msra.mxu0 0.0
    %1350 = vmatprep.mubr.f32.mxu0 0.0
    %1351 = vmatmul.mubr.f32.gmra.mrb[0].mxu0 %v1284
    %v1352 = vpop.f32.mrb[0].mxu0
    %v1353 = vadd.f32 0.0, %v1352
    %v1354 = vpop.f32.mrb[0].mxu0
    %1355 = vdwg.mxu0
    %v1357 = vrot.slane %v1353, 5
    %v1359 = vadd.f32 %v353, %v1357
    %v1360 = vxor.u32 %v1279, 2147483648
    %v1361 = vmul.f32 %v1360, 1.442695
    %v1362 = vpow.pop %v1361
    %v1363 = vadd.f32 %v1362, 1.0
    %v1364 = vrcp.pop %v1363
    %v1365 = vmul.f32 1.0, %v1364
    %v1366 = vtanh.pop %v1279
    %v1368 = vrot.slane %v1166, 7
    %v1370 = vmul.f32 %v1365, %v1368
    %1372 = vrot.lane.b32.xlu0 %v1366, 64
    %v1373 = vpop.permute.xlu0 %1372
    %v1375 = vmul.f32 %v1365, %v1373
    %1377 = vrot.lane.b32.xlu0 %v1375, 32
    %v1378 = vpop.permute.xlu0 %1377
    %v1380 = vadd.f32 %v1370, %v1378
    %v1381 = vtanh.pop %v1380
    %1383 = vrot.lane.b32.xlu0 %v1381, 64
    %v1384 = vpop.permute.xlu0 %1383
    %v1386 = vmul.f32 %v1365, %v1384
    %v1387 = vxor.u32 %v1359, 2147483648
    %v1388 = vmul.f32 %v1387, 1.442695
    %v1389 = vpow.pop %v1388
    %v1390 = vadd.f32 %v1389, 1.0
    %v1391 = vrcp.pop %v1390
    %v1392 = vmul.f32 1.0, %v1391
    %v1393 = vtanh.pop %v1359
    %v1395 = vrot.slane %v1193, 1
    %v1397 = vmul.f32 %v1392, %v1395
    %1399 = vrot.lane.b32.xlu0 %v1393, 64
    %v1400 = vpop.permute.xlu0 %1399
    %v1402 = vmul.f32 %v1392, %v1400
    %1404 = vrot.lane.b32.xlu0 %v1402, 32
    %v1405 = vpop.permute.xlu0 %1404
    %v1407 = vadd.f32 %v1397, %v1405
    %v1408 = vtanh.pop %v1407
    %1410 = vrot.lane.b32.xlu0 %v1408, 64
    %v1411 = vpop.permute.xlu0 %1410
    %v1413 = vmul.f32 %v1392, %v1411
    %v1415 = vrot.slane %v1386, 4
    %1416 = vrot.lane.b32.xlu0 %v1415, 32
    %v1417 = vpop.permute.xlu0 %1416
    %v1418 = vsel %vm280, %v1417, 0
    %1420 = vmatprep.subr.mxu0 0.0
    %1421 = vmatpush1.msra.mxu0 %v355
    %1422 = vmatprep.subr.mxu0 0.0
    %1423 = vmatpush1.msra.mxu0 %v356
    %1424 = vmatprep.subr.mxu0 0.0
    %1425 = vmatpush1.msra.mxu0 %v357
    %1426 = vmatprep.subr.mxu0 0.0
    %1427 = vmatpush1.msra.mxu0 %v358
    %1428 = vmatprep.subr.mxu0 0.0
    %1429 = vmatpush1.msra.mxu0 0.0
    %1430 = vmatprep.subr.mxu0 0.0
    %1431 = vmatpush1.msra.mxu0 0.0
    %1432 = vmatprep.subr.mxu0 0.0
    %1433 = vmatpush1.msra.mxu0 0.0
    %1434 = vmatprep.subr.mxu0 0.0
    %1435 = vmatpush1.msra.mxu0 0.0
    %1436 = vmatprep.subr.mxu0 0.0
    %1437 = vmatpush1.msra.mxu0 0.0
    %1438 = vmatprep.subr.mxu0 0.0
    %1439 = vmatpush1.msra.mxu0 0.0
    %1440 = vmatprep.subr.mxu0 0.0
    %1441 = vmatpush1.msra.mxu0 0.0
    %1442 = vmatprep.subr.mxu0 0.0
    %1443 = vmatpush1.msra.mxu0 0.0
    %1444 = vmatprep.subr.mxu0 0.0
    %1445 = vmatpush1.msra.mxu0 0.0
    %1446 = vmatprep.subr.mxu0 0.0
    %1447 = vmatpush1.msra.mxu0 0.0
    %1448 = vmatprep.subr.mxu0 0.0
    %1449 = vmatpush1.msra.mxu0 0.0
    %1450 = vmatprep.subr.mxu0 0.0
    %1451 = vmatpush1.msra.mxu0 0.0
    %1452 = vmatprep.subr.mxu0 0.0
    %1453 = vmatpush1.msra.mxu0 0.0
    %1454 = vmatprep.subr.mxu0 0.0
    %1455 = vmatpush1.msra.mxu0 0.0
    %1456 = vmatprep.subr.mxu0 0.0
    %1457 = vmatpush1.msra.mxu0 0.0
    %1458 = vmatprep.subr.mxu0 0.0
    %1459 = vmatpush1.msra.mxu0 0.0
    %1460 = vmatprep.subr.mxu0 0.0
    %1461 = vmatpush1.msra.mxu0 0.0
    %1462 = vmatprep.subr.mxu0 0.0
    %1463 = vmatpush1.msra.mxu0 0.0
    %1464 = vmatprep.subr.mxu0 0.0
    %1465 = vmatpush1.msra.mxu0 0.0
    %1466 = vmatprep.subr.mxu0 0.0
    %1467 = vmatpush1.msra.mxu0 0.0
    %1468 = vmatprep.subr.mxu0 0.0
    %1469 = vmatpush1.msra.mxu0 0.0
    %1470 = vmatprep.subr.mxu0 0.0
    %1471 = vmatpush1.msra.mxu0 0.0
    %1472 = vmatprep.subr.mxu0 0.0
    %1473 = vmatpush1.msra.mxu0 0.0
    %1474 = vmatprep.subr.mxu0 0.0
    %1475 = vmatpush1.msra.mxu0 0.0
    %1476 = vmatprep.subr.mxu0 0.0
    %1477 = vmatpush1.msra.mxu0 0.0
    %1478 = vmatprep.subr.mxu0 0.0
    %1479 = vmatpush1.msra.mxu0 0.0
    %1480 = vmatprep.subr.mxu0 0.0
    %1481 = vmatpush1.msra.mxu0 0.0
    %1482 = vmatprep.subr.mxu0 0.0
    %1483 = vmatpush1.msra.mxu0 0.0
    %1484 = vmatprep.mubr.f32.mxu0 0.0
    %1485 = vmatmul.mubr.f32.gmra.mrb[0].mxu0 %v1418
    %v1486 = vpop.f32.mrb[0].mxu0
    %v1487 = vadd.f32 0.0, %v1486
    %v1488 = vpop.f32.mrb[0].mxu0
    %1489 = vdwg.mxu0
    %v1491 = vrot.slane %v1487, 3
    %v1493 = vadd.f32 %v351, %v1491
    %v1495 = vrot.slane %v1413, 3
    %1496 = vrot.lane.b32.xlu0 %v1495, 32
    %v1497 = vpop.permute.xlu0 %1496
    %v1498 = vsel %vm280, %v1497, 0
    %1500 = vmatprep.subr.mxu0 0.0
    %1501 = vmatpush1.msra.mxu0 %v359
    %1502 = vmatprep.subr.mxu0 0.0
    %1503 = vmatpush1.msra.mxu0 %v360
    %1504 = vmatprep.subr.mxu0 0.0
    %1505 = vmatpush1.msra.mxu0 %v361
    %1506 = vmatprep.subr.mxu0 0.0
    %1507 = vmatpush1.msra.mxu0 %v362
    %1508 = vmatprep.subr.mxu0 0.0
    %1509 = vmatpush1.msra.mxu0 0.0
    %1510 = vmatprep.subr.mxu0 0.0
    %1511 = vmatpush1.msra.mxu0 0.0
    %1512 = vmatprep.subr.mxu0 0.0
    %1513 = vmatpush1.msra.mxu0 0.0
    %1514 = vmatprep.subr.mxu0 0.0
    %1515 = vmatpush1.msra.mxu0 0.0
    %1516 = vmatprep.subr.mxu0 0.0
    %1517 = vmatpush1.msra.mxu0 0.0
    %1518 = vmatprep.subr.mxu0 0.0
    %1519 = vmatpush1.msra.mxu0 0.0
    %1520 = vmatprep.subr.mxu0 0.0
    %1521 = vmatpush1.msra.mxu0 0.0
    %1522 = vmatprep.subr.mxu0 0.0
    %1523 = vmatpush1.msra.mxu0 0.0
    %1524 = vmatprep.subr.mxu0 0.0
    %1525 = vmatpush1.msra.mxu0 0.0
    %1526 = vmatprep.subr.mxu0 0.0
    %1527 = vmatpush1.msra.mxu0 0.0
    %1528 = vmatprep.subr.mxu0 0.0
    %1529 = vmatpush1.msra.mxu0 0.0
    %1530 = vmatprep.subr.mxu0 0.0
    %1531 = vmatpush1.msra.mxu0 0.0
    %1532 = vmatprep.subr.mxu0 0.0
    %1533 = vmatpush1.msra.mxu0 0.0
    %1534 = vmatprep.subr.mxu0 0.0
    %1535 = vmatpush1.msra.mxu0 0.0
    %1536 = vmatprep.subr.mxu0 0.0
    %1537 = vmatpush1.msra.mxu0 0.0
    %1538 = vmatprep.subr.mxu0 0.0
    %1539 = vmatpush1.msra.mxu0 0.0
    %1540 = vmatprep.subr.mxu0 0.0
    %1541 = vmatpush1.msra.mxu0 0.0
    %1542 = vmatprep.subr.mxu0 0.0
    %1543 = vmatpush1.msra.mxu0 0.0
    %1544 = vmatprep.subr.mxu0 0.0
    %1545 = vmatpush1.msra.mxu0 0.0
    %1546 = vmatprep.subr.mxu0 0.0
    %1547 = vmatpush1.msra.mxu0 0.0
    %1548 = vmatprep.subr.mxu0 0.0
    %1549 = vmatpush1.msra.mxu0 0.0
    %1550 = vmatprep.subr.mxu0 0.0
    %1551 = vmatpush1.msra.mxu0 0.0
    %1552 = vmatprep.subr.mxu0 0.0
    %1553 = vmatpush1.msra.mxu0 0.0
    %1554 = vmatprep.subr.mxu0 0.0
    %1555 = vmatpush1.msra.mxu0 0.0
    %1556 = vmatprep.subr.mxu0 0.0
    %1557 = vmatpush1.msra.mxu0 0.0
    %1558 = vmatprep.subr.mxu0 0.0
    %1559 = vmatpush1.msra.mxu0 0.0
    %1560 = vmatprep.subr.mxu0 0.0
    %1561 = vmatpush1.msra.mxu0 0.0
    %1562 = vmatprep.subr.mxu0 0.0
    %1563 = vmatpush1.msra.mxu0 0.0
    %1564 = vmatprep.mubr.f32.mxu0 0.0
    %1565 = vmatmul.mubr.f32.gmra.mrb[0].mxu0 %v1498
    %v1566 = vpop.f32.mrb[0].mxu0
    %v1567 = vadd.f32 0.0, %v1566
    %v1568 = vpop.f32.mrb[0].mxu0
    %1569 = vdwg.mxu0
    %v1571 = vrot.slane %v1567, 6
    %v1573 = vadd.f32 %v353, %v1571
    %v1574 = vxor.u32 %v1493, 2147483648
    %v1575 = vmul.f32 %v1574, 1.442695
    %v1576 = vpow.pop %v1575
    %v1577 = vadd.f32 %v1576, 1.0
    %v1578 = vrcp.pop %v1577
    %v1579 = vmul.f32 1.0, %v1578
    %v1580 = vtanh.pop %v1493
    %v1582 = vrot.slane %v1380, 7
    %v1584 = vmul.f32 %v1579, %v1582
    %1586 = vrot.lane.b32.xlu0 %v1580, 64
    %v1587 = vpop.permute.xlu0 %1586
    %v1589 = vmul.f32 %v1579, %v1587
    %1591 = vrot.lane.b32.xlu0 %v1589, 32
    %v1592 = vpop.permute.xlu0 %1591
    %v1594 = vadd.f32 %v1584, %v1592
    %v1595 = vtanh.pop %v1594
    %1597 = vrot.lane.b32.xlu0 %v1595, 64
    %v1598 = vpop.permute.xlu0 %1597
    %v1600 = vmul.f32 %v1579, %v1598
    %v1601 = vxor.u32 %v1573, 2147483648
    %v1602 = vmul.f32 %v1601, 1.442695
    %v1603 = vpow.pop %v1602
    %v1604 = vadd.f32 %v1603, 1.0
    %v1605 = vrcp.pop %v1604
    %v1606 = vmul.f32 1.0, %v1605
    %v1607 = vtanh.pop %v1573
    %v1609 = vrot.slane %v1407, 1
    %v1611 = vmul.f32 %v1606, %v1609
    %1613 = vrot.lane.b32.xlu0 %v1607, 64
    %v1614 = vpop.permute.xlu0 %1613
    %v1616 = vmul.f32 %v1606, %v1614
    %1618 = vrot.lane.b32.xlu0 %v1616, 32
    %v1619 = vpop.permute.xlu0 %1618
    %v1621 = vadd.f32 %v1611, %v1619
    %v1622 = vtanh.pop %v1621
    %1624 = vrot.lane.b32.xlu0 %v1622, 64
    %v1625 = vpop.permute.xlu0 %1624
    %v1627 = vmul.f32 %v1606, %v1625
    %v1629 = vrot.slane %v1600, 5
    %1630 = vrot.lane.b32.xlu0 %v1629, 32
    %v1631 = vpop.permute.xlu0 %1630
    %v1632 = vsel %vm280, %v1631, 0
    %1634 = vmatprep.subr.mxu0 0.0
    %1635 = vmatpush1.msra.mxu0 %v355
    %1636 = vmatprep.subr.mxu0 0.0
    %1637 = vmatpush1.msra.mxu0 %v356
    %1638 = vmatprep.subr.mxu0 0.0
    %1639 = vmatpush1.msra.mxu0 %v357
    %1640 = vmatprep.subr.mxu0 0.0
    %1641 = vmatpush1.msra.mxu0 %v358
    %1642 = vmatprep.subr.mxu0 0.0
    %1643 = vmatpush1.msra.mxu0 0.0
    %1644 = vmatprep.subr.mxu0 0.0
    %1645 = vmatpush1.msra.mxu0 0.0
    %1646 = vmatprep.subr.mxu0 0.0
    %1647 = vmatpush1.msra.mxu0 0.0
    %1648 = vmatprep.subr.mxu0 0.0
    %1649 = vmatpush1.msra.mxu0 0.0
    %1650 = vmatprep.subr.mxu0 0.0
    %1651 = vmatpush1.msra.mxu0 0.0
    %1652 = vmatprep.subr.mxu0 0.0
    %1653 = vmatpush1.msra.mxu0 0.0
    %1654 = vmatprep.subr.mxu0 0.0
    %1655 = vmatpush1.msra.mxu0 0.0
    %1656 = vmatprep.subr.mxu0 0.0
    %1657 = vmatpush1.msra.mxu0 0.0
    %1658 = vmatprep.subr.mxu0 0.0
    %1659 = vmatpush1.msra.mxu0 0.0
    %1660 = vmatprep.subr.mxu0 0.0
    %1661 = vmatpush1.msra.mxu0 0.0
    %1662 = vmatprep.subr.mxu0 0.0
    %1663 = vmatpush1.msra.mxu0 0.0
    %1664 = vmatprep.subr.mxu0 0.0
    %1665 = vmatpush1.msra.mxu0 0.0
    %1666 = vmatprep.subr.mxu0 0.0
    %1667 = vmatpush1.msra.mxu0 0.0
    %1668 = vmatprep.subr.mxu0 0.0
    %1669 = vmatpush1.msra.mxu0 0.0
    %1670 = vmatprep.subr.mxu0 0.0
    %1671 = vmatpush1.msra.mxu0 0.0
    %1672 = vmatprep.subr.mxu0 0.0
    %1673 = vmatpush1.msra.mxu0 0.0
    %1674 = vmatprep.subr.mxu0 0.0
    %1675 = vmatpush1.msra.mxu0 0.0
    %1676 = vmatprep.subr.mxu0 0.0
    %1677 = vmatpush1.msra.mxu0 0.0
    %1678 = vmatprep.subr.mxu0 0.0
    %1679 = vmatpush1.msra.mxu0 0.0
    %1680 = vmatprep.subr.mxu0 0.0
    %1681 = vmatpush1.msra.mxu0 0.0
    %1682 = vmatprep.subr.mxu0 0.0
    %1683 = vmatpush1.msra.mxu0 0.0
    %1684 = vmatprep.subr.mxu0 0.0
    %1685 = vmatpush1.msra.mxu0 0.0
    %1686 = vmatprep.subr.mxu0 0.0
    %1687 = vmatpush1.msra.mxu0 0.0
    %1688 = vmatprep.subr.mxu0 0.0
    %1689 = vmatpush1.msra.mxu0 0.0
    %1690 = vmatprep.subr.mxu0 0.0
    %1691 = vmatpush1.msra.mxu0 0.0
    %1692 = vmatprep.subr.mxu0 0.0
    %1693 = vmatpush1.msra.mxu0 0.0
    %1694 = vmatprep.subr.mxu0 0.0
    %1695 = vmatpush1.msra.mxu0 0.0
    %1696 = vmatprep.subr.mxu0 0.0
    %1697 = vmatpush1.msra.mxu0 0.0
    %1698 = vmatprep.mubr.f32.mxu0 0.0
    %1699 = vmatmul.mubr.f32.gmra.mrb[0].mxu0 %v1632
    %v1700 = vpop.f32.mrb[0].mxu0
    %v1701 = vadd.f32 0.0, %v1700
    %v1702 = vpop.f32.mrb[0].mxu0
    %1703 = vdwg.mxu0
    %v1705 = vrot.slane %v1701, 2
    %v1707 = vadd.f32 %v351, %v1705
    %v1709 = vrot.slane %v1627, 2
    %1710 = vrot.lane.b32.xlu0 %v1709, 32
    %v1711 = vpop.permute.xlu0 %1710
    %v1712 = vsel %vm280, %v1711, 0
    %1714 = vmatprep.subr.mxu0 0.0
    %1715 = vmatpush1.msra.mxu0 %v359
    %1716 = vmatprep.subr.mxu0 0.0
    %1717 = vmatpush1.msra.mxu0 %v360
    %1718 = vmatprep.subr.mxu0 0.0
    %1719 = vmatpush1.msra.mxu0 %v361
    %1720 = vmatprep.subr.mxu0 0.0
    %1721 = vmatpush1.msra.mxu0 %v362
    %1722 = vmatprep.subr.mxu0 0.0
    %1723 = vmatpush1.msra.mxu0 0.0
    %1724 = vmatprep.subr.mxu0 0.0
    %1725 = vmatpush1.msra.mxu0 0.0
    %1726 = vmatprep.subr.mxu0 0.0
    %1727 = vmatpush1.msra.mxu0 0.0
    %1728 = vmatprep.subr.mxu0 0.0
    %1729 = vmatpush1.msra.mxu0 0.0
    %1730 = vmatprep.subr.mxu0 0.0
    %1731 = vmatpush1.msra.mxu0 0.0
    %1732 = vmatprep.subr.mxu0 0.0
    %1733 = vmatpush1.msra.mxu0 0.0
    %1734 = vmatprep.subr.mxu0 0.0
    %1735 = vmatpush1.msra.mxu0 0.0
    %1736 = vmatprep.subr.mxu0 0.0
    %1737 = vmatpush1.msra.mxu0 0.0
    %1738 = vmatprep.subr.mxu0 0.0
    %1739 = vmatpush1.msra.mxu0 0.0
    %1740 = vmatprep.subr.mxu0 0.0
    %1741 = vmatpush1.msra.mxu0 0.0
    %1742 = vmatprep.subr.mxu0 0.0
    %1743 = vmatpush1.msra.mxu0 0.0
    %1744 = vmatprep.subr.mxu0 0.0
    %1745 = vmatpush1.msra.mxu0 0.0
    %1746 = vmatprep.subr.mxu0 0.0
    %1747 = vmatpush1.msra.mxu0 0.0
    %1748 = vmatprep.subr.mxu0 0.0
    %1749 = vmatpush1.msra.mxu0 0.0
    %1750 = vmatprep.subr.mxu0 0.0
    %1751 = vmatpush1.msra.mxu0 0.0
    %1752 = vmatprep.subr.mxu0 0.0
    %1753 = vmatpush1.msra.mxu0 0.0
    %1754 = vmatprep.subr.mxu0 0.0
    %1755 = vmatpush1.msra.mxu0 0.0
    %1756 = vmatprep.subr.mxu0 0.0
    %1757 = vmatpush1.msra.mxu0 0.0
    %1758 = vmatprep.subr.mxu0 0.0
    %1759 = vmatpush1.msra.mxu0 0.0
    %1760 = vmatprep.subr.mxu0 0.0
    %1761 = vmatpush1.msra.mxu0 0.0
    %1762 = vmatprep.subr.mxu0 0.0
    %1763 = vmatpush1.msra.mxu0 0.0
    %1764 = vmatprep.subr.mxu0 0.0
    %1765 = vmatpush1.msra.mxu0 0.0
    %1766 = vmatprep.subr.mxu0 0.0
    %1767 = vmatpush1.msra.mxu0 0.0
    %1768 = vmatprep.subr.mxu0 0.0
    %1769 = vmatpush1.msra.mxu0 0.0
    %1770 = vmatprep.subr.mxu0 0.0
    %1771 = vmatpush1.msra.mxu0 0.0
    %1772 = vmatprep.subr.mxu0 0.0
    %1773 = vmatpush1.msra.mxu0 0.0
    %1774 = vmatprep.subr.mxu0 0.0
    %1775 = vmatpush1.msra.mxu0 0.0
    %1776 = vmatprep.subr.mxu0 0.0
    %1777 = vmatpush1.msra.mxu0 0.0
    %1778 = vmatprep.mubr.f32.mxu0 0.0
    %1779 = vmatmul.mubr.f32.gmra.mrb[0].mxu0 %v1712
    %v1780 = vpop.f32.mrb[0].mxu0
    %v1781 = vadd.f32 0.0, %v1780
    %v1782 = vpop.f32.mrb[0].mxu0
    %1783 = vdwg.mxu0
    %v1785 = vrot.slane %v1781, 7
    %v1787 = vadd.f32 %v353, %v1785
    %v1788 = vxor.u32 %v1707, 2147483648
    %v1789 = vmul.f32 %v1788, 1.442695
    %v1790 = vpow.pop %v1789
    %v1791 = vadd.f32 %v1790, 1.0
    %v1792 = vrcp.pop %v1791
    %v1793 = vmul.f32 1.0, %v1792
    %v1794 = vtanh.pop %v1707
    %v1796 = vrot.slane %v1594, 7
    %v1798 = vmul.f32 %v1793, %v1796
    %1800 = vrot.lane.b32.xlu0 %v1794, 64
    %v1801 = vpop.permute.xlu0 %1800
    %v1803 = vmul.f32 %v1793, %v1801
    %1805 = vrot.lane.b32.xlu0 %v1803, 32
    %v1806 = vpop.permute.xlu0 %1805
    %v1808 = vadd.f32 %v1798, %v1806
    %v1809 = vtanh.pop %v1808
    %1811 = vrot.lane.b32.xlu0 %v1809, 64
    %v1812 = vpop.permute.xlu0 %1811
    %v1814 = vmul.f32 %v1793, %v1812
    %v1815 = vxor.u32 %v1787, 2147483648
    %v1816 = vmul.f32 %v1815, 1.442695
    %v1817 = vpow.pop %v1816
    %v1818 = vadd.f32 %v1817, 1.0
    %v1819 = vrcp.pop %v1818
    %v1820 = vmul.f32 1.0, %v1819
    %v1821 = vtanh.pop %v1787
    %v1823 = vrot.slane %v1621, 1
    %v1825 = vmul.f32 %v1820, %v1823
    %1827 = vrot.lane.b32.xlu0 %v1821, 64
    %v1828 = vpop.permute.xlu0 %1827
    %v1830 = vmul.f32 %v1820, %v1828
    %1832 = vrot.lane.b32.xlu0 %v1830, 32
    %v1833 = vpop.permute.xlu0 %1832
    %v1835 = vadd.f32 %v1825, %v1833
    %v1836 = vtanh.pop %v1835
    %1838 = vrot.lane.b32.xlu0 %v1836, 64
    %v1839 = vpop.permute.xlu0 %1838
    %v1841 = vmul.f32 %v1820, %v1839
    %v1843 = vrot.slane %v1814, 6
    %1844 = vrot.lane.b32.xlu0 %v1843, 32
    %v1845 = vpop.permute.xlu0 %1844
    %v1846 = vsel %vm280, %v1845, 0
    %1848 = vmatprep.subr.mxu0 0.0
    %1849 = vmatpush1.msra.mxu0 %v355
    %1850 = vmatprep.subr.mxu0 0.0
    %1851 = vmatpush1.msra.mxu0 %v356
    %1852 = vmatprep.subr.mxu0 0.0
    %1853 = vmatpush1.msra.mxu0 %v357
    %1854 = vmatprep.subr.mxu0 0.0
    %1855 = vmatpush1.msra.mxu0 %v358
    %1856 = vmatprep.subr.mxu0 0.0
    %1857 = vmatpush1.msra.mxu0 0.0
    %1858 = vmatprep.subr.mxu0 0.0
    %1859 = vmatpush1.msra.mxu0 0.0
    %1860 = vmatprep.subr.mxu0 0.0
    %1861 = vmatpush1.msra.mxu0 0.0
    %1862 = vmatprep.subr.mxu0 0.0
    %1863 = vmatpush1.msra.mxu0 0.0
    %1864 = vmatprep.subr.mxu0 0.0
    %1865 = vmatpush1.msra.mxu0 0.0
    %1866 = vmatprep.subr.mxu0 0.0
    %1867 = vmatpush1.msra.mxu0 0.0
    %1868 = vmatprep.subr.mxu0 0.0
    %1869 = vmatpush1.msra.mxu0 0.0
    %1870 = vmatprep.subr.mxu0 0.0
    %1871 = vmatpush1.msra.mxu0 0.0
    %1872 = vmatprep.subr.mxu0 0.0
    %1873 = vmatpush1.msra.mxu0 0.0
    %1874 = vmatprep.subr.mxu0 0.0
    %1875 = vmatpush1.msra.mxu0 0.0
    %1876 = vmatprep.subr.mxu0 0.0
    %1877 = vmatpush1.msra.mxu0 0.0
    %1878 = vmatprep.subr.mxu0 0.0
    %1879 = vmatpush1.msra.mxu0 0.0
    %1880 = vmatprep.subr.mxu0 0.0
    %1881 = vmatpush1.msra.mxu0 0.0
    %1882 = vmatprep.subr.mxu0 0.0
    %1883 = vmatpush1.msra.mxu0 0.0
    %1884 = vmatprep.subr.mxu0 0.0
    %1885 = vmatpush1.msra.mxu0 0.0
    %1886 = vmatprep.subr.mxu0 0.0
    %1887 = vmatpush1.msra.mxu0 0.0
    %1888 = vmatprep.subr.mxu0 0.0
    %1889 = vmatpush1.msra.mxu0 0.0
    %1890 = vmatprep.subr.mxu0 0.0
    %1891 = vmatpush1.msra.mxu0 0.0
    %1892 = vmatprep.subr.mxu0 0.0
    %1893 = vmatpush1.msra.mxu0 0.0
    %1894 = vmatprep.subr.mxu0 0.0
    %1895 = vmatpush1.msra.mxu0 0.0
    %1896 = vmatprep.subr.mxu0 0.0
    %1897 = vmatpush1.msra.mxu0 0.0
    %1898 = vmatprep.subr.mxu0 0.0
    %1899 = vmatpush1.msra.mxu0 0.0
    %1900 = vmatprep.subr.mxu0 0.0
    %1901 = vmatpush1.msra.mxu0 0.0
    %1902 = vmatprep.subr.mxu0 0.0
    %1903 = vmatpush1.msra.mxu0 0.0
    %1904 = vmatprep.subr.mxu0 0.0
    %1905 = vmatpush1.msra.mxu0 0.0
    %1906 = vmatprep.subr.mxu0 0.0
    %1907 = vmatpush1.msra.mxu0 0.0
    %1908 = vmatprep.subr.mxu0 0.0
    %1909 = vmatpush1.msra.mxu0 0.0
    %1910 = vmatprep.subr.mxu0 0.0
    %1911 = vmatpush1.msra.mxu0 0.0
    %1912 = vmatprep.mubr.f32.mxu0 0.0
    %1913 = vmatmul.mubr.f32.gmra.mrb[0].mxu0 %v1846
    %v1914 = vpop.f32.mrb[0].mxu0
    %v1915 = vadd.f32 0.0, %v1914
    %v1916 = vpop.f32.mrb[0].mxu0
    %1917 = vdwg.mxu0
    %v1919 = vrot.slane %v1915, 1
    %v1921 = vadd.f32 %v351, %v1919
    %v1923 = vrot.slane %v1841, 1
    %1924 = vrot.lane.b32.xlu0 %v1923, 32
    %v1925 = vpop.permute.xlu0 %1924
    %v1926 = vsel %vm280, %v1925, 0
    %1928 = vmatprep.subr.mxu0 0.0
    %1929 = vmatpush1.msra.mxu0 %v359
    %1930 = vmatprep.subr.mxu0 0.0
    %1931 = vmatpush1.msra.mxu0 %v360
    %1932 = vmatprep.subr.mxu0 0.0
    %1933 = vmatpush1.msra.mxu0 %v361
    %1934 = vmatprep.subr.mxu0 0.0
    %1935 = vmatpush1.msra.mxu0 %v362
    %1936 = vmatprep.subr.mxu0 0.0
    %1937 = vmatpush1.msra.mxu0 0.0
    %1938 = vmatprep.subr.mxu0 0.0
    %1939 = vmatpush1.msra.mxu0 0.0
    %1940 = vmatprep.subr.mxu0 0.0
    %1941 = vmatpush1.msra.mxu0 0.0
    %1942 = vmatprep.subr.mxu0 0.0
    %1943 = vmatpush1.msra.mxu0 0.0
    %1944 = vmatprep.subr.mxu0 0.0
    %1945 = vmatpush1.msra.mxu0 0.0
    %1946 = vmatprep.subr.mxu0 0.0
    %1947 = vmatpush1.msra.mxu0 0.0
    %1948 = vmatprep.subr.mxu0 0.0
    %1949 = vmatpush1.msra.mxu0 0.0
    %1950 = vmatprep.subr.mxu0 0.0
    %1951 = vmatpush1.msra.mxu0 0.0
    %1952 = vmatprep.subr.mxu0 0.0
    %1953 = vmatpush1.msra.mxu0 0.0
    %1954 = vmatprep.subr.mxu0 0.0
    %1955 = vmatpush1.msra.mxu0 0.0
    %1956 = vmatprep.subr.mxu0 0.0
    %1957 = vmatpush1.msra.mxu0 0.0
    %1958 = vmatprep.subr.mxu0 0.0
    %1959 = vmatpush1.msra.mxu0 0.0
    %1960 = vmatprep.subr.mxu0 0.0
    %1961 = vmatpush1.msra.mxu0 0.0
    %1962 = vmatprep.subr.mxu0 0.0
    %1963 = vmatpush1.msra.mxu0 0.0
    %1964 = vmatprep.subr.mxu0 0.0
    %1965 = vmatpush1.msra.mxu0 0.0
    %1966 = vmatprep.subr.mxu0 0.0
    %1967 = vmatpush1.msra.mxu0 0.0
    %1968 = vmatprep.subr.mxu0 0.0
    %1969 = vmatpush1.msra.mxu0 0.0
    %1970 = vmatprep.subr.mxu0 0.0
    %1971 = vmatpush1.msra.mxu0 0.0
    %1972 = vmatprep.subr.mxu0 0.0
    %1973 = vmatpush1.msra.mxu0 0.0
    %1974 = vmatprep.subr.mxu0 0.0
    %1975 = vmatpush1.msra.mxu0 0.0
    %1976 = vmatprep.subr.mxu0 0.0
    %1977 = vmatpush1.msra.mxu0 0.0
    %1978 = vmatprep.subr.mxu0 0.0
    %1979 = vmatpush1.msra.mxu0 0.0
    %1980 = vmatprep.subr.mxu0 0.0
    %1981 = vmatpush1.msra.mxu0 0.0
    %1982 = vmatprep.subr.mxu0 0.0
    %1983 = vmatpush1.msra.mxu0 0.0
    %1984 = vmatprep.subr.mxu0 0.0
    %1985 = vmatpush1.msra.mxu0 0.0
    %1986 = vmatprep.subr.mxu0 0.0
    %1987 = vmatpush1.msra.mxu0 0.0
    %1988 = vmatprep.subr.mxu0 0.0
    %1989 = vmatpush1.msra.mxu0 0.0
    %1990 = vmatprep.subr.mxu0 0.0
    %1991 = vmatpush1.msra.mxu0 0.0
    %1992 = vmatprep.mubr.f32.mxu0 0.0
    %1993 = vmatmul.mubr.f32.gmra.mrb[0].mxu0 %v1926
    %v1994 = vpop.f32.mrb[0].mxu0
    %v1995 = vadd.f32 0.0, %v1994
    %v1996 = vpop.f32.mrb[0].mxu0
    %1997 = vdwg.mxu0
    %v1998 = vadd.f32 %v353, %v1995
    %v1999 = vxor.u32 %v1921, 2147483648
    %v2000 = vmul.f32 %v1999, 1.442695
    %v2001 = vpow.pop %v2000
    %v2002 = vadd.f32 %v2001, 1.0
    %v2003 = vrcp.pop %v2002
    %v2004 = vmul.f32 1.0, %v2003
    %v2005 = vtanh.pop %v1921
    %v2007 = vrot.slane %v1808, 7
    %v2009 = vmul.f32 %v2004, %v2007
    %2011 = vrot.lane.b32.xlu0 %v2005, 64
    %v2012 = vpop.permute.xlu0 %2011
    %v2014 = vmul.f32 %v2004, %v2012
    %2016 = vrot.lane.b32.xlu0 %v2014, 32
    %v2017 = vpop.permute.xlu0 %2016
    %v2019 = vadd.f32 %v2009, %v2017
    %v2020 = vtanh.pop %v2019
    %2022 = vrot.lane.b32.xlu0 %v2020, 64
    %v2023 = vpop.permute.xlu0 %2022
    %v2025 = vmul.f32 %v2004, %v2023
    %v2026 = vxor.u32 %v1998, 2147483648
    %v2027 = vmul.f32 %v2026, 1.442695
    %v2028 = vpow.pop %v2027
    %v2029 = vadd.f32 %v2028, 1.0
    %v2030 = vrcp.pop %v2029
    %v2031 = vmul.f32 1.0, %v2030
    %v2032 = vtanh.pop %v1998
    %v2034 = vrot.slane %v1835, 1
    %v2036 = vmul.f32 %v2031, %v2034
    %2038 = vrot.lane.b32.xlu0 %v2032, 64
    %v2039 = vpop.permute.xlu0 %2038
    %v2041 = vmul.f32 %v2031, %v2039
    %2043 = vrot.lane.b32.xlu0 %v2041, 32
    %v2044 = vpop.permute.xlu0 %2043
    %v2046 = vadd.f32 %v2036, %v2044
    %v2047 = vtanh.pop %v2046
    %2049 = vrot.lane.b32.xlu0 %v2047, 64
    %v2050 = vpop.permute.xlu0 %2049
    %v2052 = vmul.f32 %v2031, %v2050
    %vm2053 = vcmask 1040384
    %v2054 = vsel %vm2053, %v534, %v744
    %vm2055 = vcmask 1041408
    %v2056 = vsel %vm2055, %v2054, %v958
    %vm2057 = vcmask 1042432
    %v2058 = vsel %vm2057, %v2056, %v1172
    %vm2059 = vcmask 1043456
    %v2060 = vsel %vm2059, %v2058, %v1386
    %vm2061 = vcmask 1044480
    %v2062 = vsel %vm2061, %v2060, %v1600
    %vm2063 = vcmask 1045504
    %v2064 = vsel %vm2063, %v2062, %v1814
    %vm2065 = vcmask 1046528
    %v2066 = vsel %vm2065, %v2064, %v2025
    %v2067 = vsel %vm2053, %v2052, %v1841
    %v2068 = vsel %vm2055, %v2067, %v1627
    %v2069 = vsel %vm2057, %v2068, %v1413
    %v2070 = vsel %vm2059, %v2069, %v1199
    %v2071 = vsel %vm2061, %v2070, %v985
    %v2072 = vsel %vm2063, %v2071, %v771
    %v2073 = vsel %vm2065, %v2072, %v558
    %2075 = vrot.lane.b32.xlu0 %v2066, 32
    %v2076 = vpop.permute.xlu0 %2075
    %2079 = vrot.lane.b32.xlu0 %v2073, 64
    %v2080 = vpop.permute.xlu0 %2079
    %v2082 = vsel %vm280, %v2076, %v2080
    %v2083 = vld [vmem:[#allocation8] sm:$0xff]
    %v2084 = vld [vmem:[#allocation8 + $0x8] sm:$0xff]
    %v2085 = vld [vmem:[#allocation8 + $0x10] sm:$0xff]
    %v2086 = vld [vmem:[#allocation8 + $0x18] sm:$0xff]
    %v2087 = vld [vmem:[#allocation8 + $0x20] sm:$0xff]
    %v2088 = vld [vmem:[#allocation8 + $0x28] sm:$0xff]
    %v2089 = vld [vmem:[#allocation8 + $0x30] sm:$0xff]
    %v2090 = vld [vmem:[#allocation8 + $0x38] sm:$0xff]
    %v2091 = vld [vmem:[#allocation8 + $0x40] sm:$0xff]
    %v2092 = vld [vmem:[#allocation8 + $0x48] sm:$0xff]
    %v2093 = vld [vmem:[#allocation8 + $0x50] sm:$0xff]
    %v2094 = vld [vmem:[#allocation8 + $0x58] sm:$0xff]
    %v2095 = vld [vmem:[#allocation8 + $0x60] sm:$0xff]
    %v2096 = vld [vmem:[#allocation8 + $0x68] sm:$0xff]
    %v2097 = vld [vmem:[#allocation8 + $0x70] sm:$0xff]
    %v2098 = vld [vmem:[#allocation8 + $0x78] sm:$0xff]
    %v2099 = vld [vmem:[#allocation11] sm:$0x3]
    %v2101 = vlaneseq
    %v2102 = vshrl.u32 %v2101, 7
    %v2103 = vsub.s32 0, %v2102
    %v2104 = vrot.slane %v2099, %v2103
    %v2105 = vlaneseq
    %v2106 = vshrl.u32 %v2105, 7
    %v2107 = vsub.s32 1, %v2106
    %v2108 = vrot.slane %v2099, %v2107
    %vm2111 = vcmask 523264
    %v2113 = vsel %vm2111, %v2082, 0
    %2115 = vmatprep.subr.mxu0 %v2084
    %2116 = vmatpush1.msra.mxu0 %v2083
    %2117 = vmatprep.subr.mxu0 %v2086
    %2118 = vmatpush1.msra.mxu0 %v2085
    %2119 = vmatprep.subr.mxu0 %v2088
    %2120 = vmatpush1.msra.mxu0 %v2087
    %2121 = vmatprep.subr.mxu0 %v2090
    %2122 = vmatpush1.msra.mxu0 %v2089
    %2123 = vmatprep.subr.mxu0 %v2092
    %2124 = vmatpush1.msra.mxu0 %v2091
    %2125 = vmatprep.subr.mxu0 %v2094
    %2126 = vmatpush1.msra.mxu0 %v2093
    %2127 = vmatprep.subr.mxu0 %v2096
    %2128 = vmatpush1.msra.mxu0 %v2095
    %2129 = vmatprep.subr.mxu0 %v2098
    %2130 = vmatpush1.msra.mxu0 %v2097
    %2131 = vmatprep.subr.mxu0 0.0
    %2132 = vmatpush1.msra.mxu0 0.0
    %2133 = vmatprep.subr.mxu0 0.0
    %2134 = vmatpush1.msra.mxu0 0.0
    %2135 = vmatprep.subr.mxu0 0.0
    %2136 = vmatpush1.msra.mxu0 0.0
    %2137 = vmatprep.subr.mxu0 0.0
    %2138 = vmatpush1.msra.mxu0 0.0
    %2139 = vmatprep.subr.mxu0 0.0
    %2140 = vmatpush1.msra.mxu0 0.0
    %2141 = vmatprep.subr.mxu0 0.0
    %2142 = vmatpush1.msra.mxu0 0.0
    %2143 = vmatprep.subr.mxu0 0.0
    %2144 = vmatpush1.msra.mxu0 0.0
    %2145 = vmatprep.subr.mxu0 0.0
    %2146 = vmatpush1.msra.mxu0 0.0
    %2147 = vmatprep.subr.mxu0 0.0
    %2148 = vmatpush1.msra.mxu0 0.0
    %2149 = vmatprep.subr.mxu0 0.0
    %2150 = vmatpush1.msra.mxu0 0.0
    %2151 = vmatprep.subr.mxu0 0.0
    %2152 = vmatpush1.msra.mxu0 0.0
    %2153 = vmatprep.subr.mxu0 0.0
    %2154 = vmatpush1.msra.mxu0 0.0
    %2155 = vmatprep.subr.mxu0 0.0
    %2156 = vmatpush1.msra.mxu0 0.0
    %2157 = vmatprep.subr.mxu0 0.0
    %2158 = vmatpush1.msra.mxu0 0.0
    %2159 = vmatprep.subr.mxu0 0.0
    %2160 = vmatpush1.msra.mxu0 0.0
    %2161 = vmatprep.subr.mxu0 0.0
    %2162 = vmatpush1.msra.mxu0 0.0
    %2163 = vmatprep.subr.mxu0 0.0
    %2164 = vmatpush1.msra.mxu0 0.0
    %2165 = vmatprep.subr.mxu0 0.0
    %2166 = vmatpush1.msra.mxu0 0.0
    %2167 = vmatprep.subr.mxu0 0.0
    %2168 = vmatpush1.msra.mxu0 0.0
    %2169 = vmatprep.subr.mxu0 0.0
    %2170 = vmatpush1.msra.mxu0 0.0
    %2171 = vmatprep.subr.mxu0 0.0
    %2172 = vmatpush1.msra.mxu0 0.0
    %2173 = vmatprep.subr.mxu0 0.0
    %2174 = vmatpush1.msra.mxu0 0.0
    %2175 = vmatprep.subr.mxu0 0.0
    %2176 = vmatpush1.msra.mxu0 0.0
    %2177 = vmatprep.subr.mxu0 0.0
    %2178 = vmatpush1.msra.mxu0 0.0
    %2179 = vmatprep.mubr.f32.mxu0 0.0
    %2180 = vmatmul.mubr.f32.gmra.mrb[0].mxu0 %v2113
    %v2181 = vpop.f32.mrb[0].mxu0
    %v2182 = vadd.f32 %v2104, %v2181
    %v2183 = vpop.f32.mrb[0].mxu0
    %v2184 = vadd.f32 %v2108, %v2183
    %2185 = vdwg.mxu0
    %v2186 = vld [vmem:[#allocation10] sm:$0xff]
    %v2187 = vld [vmem:[#allocation10 + $0x8] sm:$0xff]
    %v2188 = vld [vmem:[#allocation10 + $0x10] sm:$0xff]
    %v2189 = vld [vmem:[#allocation10 + $0x18] sm:$0xff]
    %v2190 = vld [vmem:[%s11] sm:$0xff]
    %v2191 = vld [vmem:[%s11 + $0x8] sm:$0xff]
    %v2192 = vld [vmem:[%s11 + $0x10] sm:$0xff]
    %v2193 = vld [vmem:[%s11 + $0x18] sm:$0xff]
    %2194 = vmatprep.subr.mxu0 0.0
    %2195 = vmatpush1.msra.mxu0 %v2186
    %2196 = vmatprep.subr.mxu0 0.0
    %2197 = vmatpush1.msra.mxu0 %v2187
    %2198 = vmatprep.subr.mxu0 0.0
    %2199 = vmatpush1.msra.mxu0 %v2188
    %2200 = vmatprep.subr.mxu0 0.0
    %2201 = vmatpush1.msra.mxu0 %v2189
    %2202 = vmatprep.subr.mxu0 0.0
    %2203 = vmatpush1.msra.mxu0 0.0
    %2204 = vmatprep.subr.mxu0 0.0
    %2205 = vmatpush1.msra.mxu0 0.0
    %2206 = vmatprep.subr.mxu0 0.0
    %2207 = vmatpush1.msra.mxu0 0.0
    %2208 = vmatprep.subr.mxu0 0.0
    %2209 = vmatpush1.msra.mxu0 0.0
    %2210 = vmatprep.subr.mxu0 0.0
    %2211 = vmatpush1.msra.mxu0 0.0
    %2212 = vmatprep.subr.mxu0 0.0
    %2213 = vmatpush1.msra.mxu0 0.0
    %2214 = vmatprep.subr.mxu0 0.0
    %2215 = vmatpush1.msra.mxu0 0.0
    %2216 = vmatprep.subr.mxu0 0.0
    %2217 = vmatpush1.msra.mxu0 0.0
    %2218 = vmatprep.subr.mxu0 0.0
    %2219 = vmatpush1.msra.mxu0 0.0
    %2220 = vmatprep.subr.mxu0 0.0
    %2221 = vmatpush1.msra.mxu0 0.0
    %2222 = vmatprep.subr.mxu0 0.0
    %2223 = vmatpush1.msra.mxu0 0.0
    %2224 = vmatprep.subr.mxu0 0.0
    %2225 = vmatpush1.msra.mxu0 0.0
    %2226 = vmatprep.subr.mxu0 0.0
    %2227 = vmatpush1.msra.mxu0 0.0
    %2228 = vmatprep.subr.mxu0 0.0
    %2229 = vmatpush1.msra.mxu0 0.0
    %2230 = vmatprep.subr.mxu0 0.0
    %2231 = vmatpush1.msra.mxu0 0.0
    %2232 = vmatprep.subr.mxu0 0.0
    %2233 = vmatpush1.msra.mxu0 0.0
    %2234 = vmatprep.subr.mxu0 0.0
    %2235 = vmatpush1.msra.mxu0 0.0
    %2236 = vmatprep.subr.mxu0 0.0
    %2237 = vmatpush1.msra.mxu0 0.0
    %2238 = vmatprep.subr.mxu0 0.0
    %2239 = vmatpush1.msra.mxu0 0.0
    %2240 = vmatprep.subr.mxu0 0.0
    %2241 = vmatpush1.msra.mxu0 0.0
    %2242 = vmatprep.subr.mxu0 0.0
    %2243 = vmatpush1.msra.mxu0 0.0
    %2244 = vmatprep.subr.mxu0 0.0
    %2245 = vmatpush1.msra.mxu0 0.0
    %2246 = vmatprep.subr.mxu0 0.0
    %2247 = vmatpush1.msra.mxu0 0.0
    %2248 = vmatprep.subr.mxu0 0.0
    %2249 = vmatpush1.msra.mxu0 0.0
    %2250 = vmatprep.subr.mxu0 0.0
    %2251 = vmatpush1.msra.mxu0 0.0
    %2252 = vmatprep.subr.mxu0 0.0
    %2253 = vmatpush1.msra.mxu0 0.0
    %2254 = vmatprep.subr.mxu0 0.0
    %2255 = vmatpush1.msra.mxu0 0.0
    %2256 = vmatprep.subr.mxu0 0.0
    %2257 = vmatpush1.msra.mxu0 0.0
    %2258 = vmatprep.mubr.f32.mxu0 0.0
    %2259 = vmatmul.mubr.f32.gmra.mrb[0].mxu0 %v364
    %v2260 = vpop.f32.mrb[0].mxu0
    %v2261 = vadd.f32 0.0, %v2260
    %v2262 = vpop.f32.mrb[0].mxu0
    %2263 = vdwg.mxu0
    %v2264 = vadd.f32 %v2182, %v2261
    %2265 = vmatprep.subr.mxu0 0.0
    %2266 = vmatpush1.msra.mxu0 %v2190
    %2267 = vmatprep.subr.mxu0 0.0
    %2268 = vmatpush1.msra.mxu0 %v2191
    %2269 = vmatprep.subr.mxu0 0.0
    %2270 = vmatpush1.msra.mxu0 %v2192
    %2271 = vmatprep.subr.mxu0 0.0
    %2272 = vmatpush1.msra.mxu0 %v2193
    %2273 = vmatprep.subr.mxu0 0.0
    %2274 = vmatpush1.msra.mxu0 0.0
    %2275 = vmatprep.subr.mxu0 0.0
    %2276 = vmatpush1.msra.mxu0 0.0
    %2277 = vmatprep.subr.mxu0 0.0
    %2278 = vmatpush1.msra.mxu0 0.0
    %2279 = vmatprep.subr.mxu0 0.0
    %2280 = vmatpush1.msra.mxu0 0.0
    %2281 = vmatprep.subr.mxu0 0.0
    %2282 = vmatpush1.msra.mxu0 0.0
    %2283 = vmatprep.subr.mxu0 0.0
    %2284 = vmatpush1.msra.mxu0 0.0
    %2285 = vmatprep.subr.mxu0 0.0
    %2286 = vmatpush1.msra.mxu0 0.0
    %2287 = vmatprep.subr.mxu0 0.0
    %2288 = vmatpush1.msra.mxu0 0.0
    %2289 = vmatprep.subr.mxu0 0.0
    %2290 = vmatpush1.msra.mxu0 0.0
    %2291 = vmatprep.subr.mxu0 0.0
    %2292 = vmatpush1.msra.mxu0 0.0
    %2293 = vmatprep.subr.mxu0 0.0
    %2294 = vmatpush1.msra.mxu0 0.0
    %2295 = vmatprep.subr.mxu0 0.0
    %2296 = vmatpush1.msra.mxu0 0.0
    %2297 = vmatprep.subr.mxu0 0.0
    %2298 = vmatpush1.msra.mxu0 0.0
    %2299 = vmatprep.subr.mxu0 0.0
    %2300 = vmatpush1.msra.mxu0 0.0
    %2301 = vmatprep.subr.mxu0 0.0
    %2302 = vmatpush1.msra.mxu0 0.0
    %2303 = vmatprep.subr.mxu0 0.0
    %2304 = vmatpush1.msra.mxu0 0.0
    %2305 = vmatprep.subr.mxu0 0.0
    %2306 = vmatpush1.msra.mxu0 0.0
    %2307 = vmatprep.subr.mxu0 0.0
    %2308 = vmatpush1.msra.mxu0 0.0
    %2309 = vmatprep.subr.mxu0 0.0
    %2310 = vmatpush1.msra.mxu0 0.0
    %2311 = vmatprep.subr.mxu0 0.0
    %2312 = vmatpush1.msra.mxu0 0.0
    %2313 = vmatprep.subr.mxu0 0.0
    %2314 = vmatpush1.msra.mxu0 0.0
    %2315 = vmatprep.subr.mxu0 0.0
    %2316 = vmatpush1.msra.mxu0 0.0
    %2317 = vmatprep.subr.mxu0 0.0
    %2318 = vmatpush1.msra.mxu0 0.0
    %2319 = vmatprep.subr.mxu0 0.0
    %2320 = vmatpush1.msra.mxu0 0.0
    %2321 = vmatprep.subr.mxu0 0.0
    %2322 = vmatpush1.msra.mxu0 0.0
    %2323 = vmatprep.subr.mxu0 0.0
    %2324 = vmatpush1.msra.mxu0 0.0
    %2325 = vmatprep.subr.mxu0 0.0
    %2326 = vmatpush1.msra.mxu0 0.0
    %2327 = vmatprep.subr.mxu0 0.0
    %2328 = vmatpush1.msra.mxu0 0.0
    %2329 = vmatprep.mubr.f32.mxu0 0.0
    %2330 = vmatmul.mubr.f32.gmra.mrb[0].mxu0 %v364
    %v2331 = vpop.f32.mrb[0].mxu0
    %v2332 = vadd.f32 0.0, %v2331
    %v2333 = vpop.f32.mrb[0].mxu0
    %2334 = vdwg.mxu0
    %v2336 = vrot.slane %v2332, 1
    %v2338 = vadd.f32 %v2184, %v2336
    %v2339 = vxor.u32 %v2264, 2147483648
    %v2340 = vmul.f32 %v2339, 1.442695
    %v2341 = vpow.pop %v2340
    %v2342 = vadd.f32 %v2341, 1.0
    %v2343 = vrcp.pop %v2342
    %v2344 = vmul.f32 1.0, %v2343
    %v2345 = vtanh.pop %v2264
    %v2346 = vmul.f32 %v2344, 0.0
    %2348 = vrot.lane.b32.xlu0 %v2345, 64
    %v2349 = vpop.permute.xlu0 %2348
    %v2351 = vmul.f32 %v2344, %v2349
    %2353 = vrot.lane.b32.xlu0 %v2351, 32
    %v2354 = vpop.permute.xlu0 %2353
    %v2356 = vadd.f32 %v2346, %v2354
    %v2357 = vtanh.pop %v2356
    %2359 = vrot.lane.b32.xlu0 %v2357, 64
    %v2360 = vpop.permute.xlu0 %2359
    %v2362 = vmul.f32 %v2344, %v2360
    %v2363 = vxor.u32 %v2338, 2147483648
    %v2364 = vmul.f32 %v2363, 1.442695
    %v2365 = vpow.pop %v2364
    %v2366 = vadd.f32 %v2365, 1.0
    %v2367 = vrcp.pop %v2366
    %v2368 = vmul.f32 1.0, %v2367
    %v2369 = vtanh.pop %v2338
    %v2370 = vmul.f32 %v2368, 0.0
    %2372 = vrot.lane.b32.xlu0 %v2369, 64
    %v2373 = vpop.permute.xlu0 %2372
    %v2375 = vmul.f32 %v2368, %v2373
    %2377 = vrot.lane.b32.xlu0 %v2375, 32
    %v2378 = vpop.permute.xlu0 %2377
    %v2380 = vadd.f32 %v2370, %v2378
    %v2381 = vtanh.pop %v2380
    %2383 = vrot.lane.b32.xlu0 %v2381, 64
    %v2384 = vpop.permute.xlu0 %2383
    %v2386 = vmul.f32 %v2368, %v2384
    %2388 = vrot.lane.b32.xlu0 %v2362, 32
    %v2389 = vpop.permute.xlu0 %2388
    %v2390 = vsel %vm280, %v2389, 0
    %2392 = vmatprep.subr.mxu0 0.0
    %2393 = vmatpush1.msra.mxu0 %v2186
    %2394 = vmatprep.subr.mxu0 0.0
    %2395 = vmatpush1.msra.mxu0 %v2187
    %2396 = vmatprep.subr.mxu0 0.0
    %2397 = vmatpush1.msra.mxu0 %v2188
    %2398 = vmatprep.subr.mxu0 0.0
    %2399 = vmatpush1.msra.mxu0 %v2189
    %2400 = vmatprep.subr.mxu0 0.0
    %2401 = vmatpush1.msra.mxu0 0.0
    %2402 = vmatprep.subr.mxu0 0.0
    %2403 = vmatpush1.msra.mxu0 0.0
    %2404 = vmatprep.subr.mxu0 0.0
    %2405 = vmatpush1.msra.mxu0 0.0
    %2406 = vmatprep.subr.mxu0 0.0
    %2407 = vmatpush1.msra.mxu0 0.0
    %2408 = vmatprep.subr.mxu0 0.0
    %2409 = vmatpush1.msra.mxu0 0.0
    %2410 = vmatprep.subr.mxu0 0.0
    %2411 = vmatpush1.msra.mxu0 0.0
    %2412 = vmatprep.subr.mxu0 0.0
    %2413 = vmatpush1.msra.mxu0 0.0
    %2414 = vmatprep.subr.mxu0 0.0
    %2415 = vmatpush1.msra.mxu0 0.0
    %2416 = vmatprep.subr.mxu0 0.0
    %2417 = vmatpush1.msra.mxu0 0.0
    %2418 = vmatprep.subr.mxu0 0.0
    %2419 = vmatpush1.msra.mxu0 0.0
    %2420 = vmatprep.subr.mxu0 0.0
    %2421 = vmatpush1.msra.mxu0 0.0
    %2422 = vmatprep.subr.mxu0 0.0
    %2423 = vmatpush1.msra.mxu0 0.0
    %2424 = vmatprep.subr.mxu0 0.0
    %2425 = vmatpush1.msra.mxu0 0.0
    %2426 = vmatprep.subr.mxu0 0.0
    %2427 = vmatpush1.msra.mxu0 0.0
    %2428 = vmatprep.subr.mxu0 0.0
    %2429 = vmatpush1.msra.mxu0 0.0
    %2430 = vmatprep.subr.mxu0 0.0
    %2431 = vmatpush1.msra.mxu0 0.0
    %2432 = vmatprep.subr.mxu0 0.0
    %2433 = vmatpush1.msra.mxu0 0.0
    %2434 = vmatprep.subr.mxu0 0.0
    %2435 = vmatpush1.msra.mxu0 0.0
    %2436 = vmatprep.subr.mxu0 0.0
    %2437 = vmatpush1.msra.mxu0 0.0
    %2438 = vmatprep.subr.mxu0 0.0
    %2439 = vmatpush1.msra.mxu0 0.0
    %2440 = vmatprep.subr.mxu0 0.0
    %2441 = vmatpush1.msra.mxu0 0.0
    %2442 = vmatprep.subr.mxu0 0.0
    %2443 = vmatpush1.msra.mxu0 0.0
    %2444 = vmatprep.subr.mxu0 0.0
    %2445 = vmatpush1.msra.mxu0 0.0
    %2446 = vmatprep.subr.mxu0 0.0
    %2447 = vmatpush1.msra.mxu0 0.0
    %2448 = vmatprep.subr.mxu0 0.0
    %2449 = vmatpush1.msra.mxu0 0.0
    %2450 = vmatprep.subr.mxu0 0.0
    %2451 = vmatpush1.msra.mxu0 0.0
    %2452 = vmatprep.subr.mxu0 0.0
    %2453 = vmatpush1.msra.mxu0 0.0
    %2454 = vmatprep.subr.mxu0 0.0
    %2455 = vmatpush1.msra.mxu0 0.0
    %2456 = vmatprep.mubr.f32.mxu0 0.0
    %2457 = vmatmul.mubr.f32.gmra.mrb[0].mxu0 %v2390
    %v2458 = vpop.f32.mrb[0].mxu0
    %v2459 = vadd.f32 0.0, %v2458
    %v2460 = vpop.f32.mrb[0].mxu0
    %2461 = vdwg.mxu0
    %v2463 = vrot.slane %v2459, 7
    %v2465 = vadd.f32 %v2182, %v2463
    %v2467 = vrot.slane %v2386, 7
    %2468 = vrot.lane.b32.xlu0 %v2467, 32
    %v2469 = vpop.permute.xlu0 %2468
    %v2470 = vsel %vm280, %v2469, 0
    %2472 = vmatprep.subr.mxu0 0.0
    %2473 = vmatpush1.msra.mxu0 %v2190
    %2474 = vmatprep.subr.mxu0 0.0
    %2475 = vmatpush1.msra.mxu0 %v2191
    %2476 = vmatprep.subr.mxu0 0.0
    %2477 = vmatpush1.msra.mxu0 %v2192
    %2478 = vmatprep.subr.mxu0 0.0
    %2479 = vmatpush1.msra.mxu0 %v2193
    %2480 = vmatprep.subr.mxu0 0.0
    %2481 = vmatpush1.msra.mxu0 0.0
    %2482 = vmatprep.subr.mxu0 0.0
    %2483 = vmatpush1.msra.mxu0 0.0
    %2484 = vmatprep.subr.mxu0 0.0
    %2485 = vmatpush1.msra.mxu0 0.0
    %2486 = vmatprep.subr.mxu0 0.0
    %2487 = vmatpush1.msra.mxu0 0.0
    %2488 = vmatprep.subr.mxu0 0.0
    %2489 = vmatpush1.msra.mxu0 0.0
    %2490 = vmatprep.subr.mxu0 0.0
    %2491 = vmatpush1.msra.mxu0 0.0
    %2492 = vmatprep.subr.mxu0 0.0
    %2493 = vmatpush1.msra.mxu0 0.0
    %2494 = vmatprep.subr.mxu0 0.0
    %2495 = vmatpush1.msra.mxu0 0.0
    %2496 = vmatprep.subr.mxu0 0.0
    %2497 = vmatpush1.msra.mxu0 0.0
    %2498 = vmatprep.subr.mxu0 0.0
    %2499 = vmatpush1.msra.mxu0 0.0
    %2500 = vmatprep.subr.mxu0 0.0
    %2501 = vmatpush1.msra.mxu0 0.0
    %2502 = vmatprep.subr.mxu0 0.0
    %2503 = vmatpush1.msra.mxu0 0.0
    %2504 = vmatprep.subr.mxu0 0.0
    %2505 = vmatpush1.msra.mxu0 0.0
    %2506 = vmatprep.subr.mxu0 0.0
    %2507 = vmatpush1.msra.mxu0 0.0
    %2508 = vmatprep.subr.mxu0 0.0
    %2509 = vmatpush1.msra.mxu0 0.0
    %2510 = vmatprep.subr.mxu0 0.0
    %2511 = vmatpush1.msra.mxu0 0.0
    %2512 = vmatprep.subr.mxu0 0.0
    %2513 = vmatpush1.msra.mxu0 0.0
    %2514 = vmatprep.subr.mxu0 0.0
    %2515 = vmatpush1.msra.mxu0 0.0
    %2516 = vmatprep.subr.mxu0 0.0
    %2517 = vmatpush1.msra.mxu0 0.0
    %2518 = vmatprep.subr.mxu0 0.0
    %2519 = vmatpush1.msra.mxu0 0.0
    %2520 = vmatprep.subr.mxu0 0.0
    %2521 = vmatpush1.msra.mxu0 0.0
    %2522 = vmatprep.subr.mxu0 0.0
    %2523 = vmatpush1.msra.mxu0 0.0
    %2524 = vmatprep.subr.mxu0 0.0
    %2525 = vmatpush1.msra.mxu0 0.0
    %2526 = vmatprep.subr.mxu0 0.0
    %2527 = vmatpush1.msra.mxu0 0.0
    %2528 = vmatprep.subr.mxu0 0.0
    %2529 = vmatpush1.msra.mxu0 0.0
    %2530 = vmatprep.subr.mxu0 0.0
    %2531 = vmatpush1.msra.mxu0 0.0
    %2532 = vmatprep.subr.mxu0 0.0
    %2533 = vmatpush1.msra.mxu0 0.0
    %2534 = vmatprep.subr.mxu0 0.0
    %2535 = vmatpush1.msra.mxu0 0.0
    %2536 = vmatprep.mubr.f32.mxu0 0.0
    %2537 = vmatmul.mubr.f32.gmra.mrb[0].mxu0 %v2470
    %v2538 = vpop.f32.mrb[0].mxu0
    %v2539 = vadd.f32 0.0, %v2538
    %v2540 = vpop.f32.mrb[0].mxu0
    %2541 = vdwg.mxu0
    %v2543 = vrot.slane %v2539, 2
    %v2545 = vadd.f32 %v2184, %v2543
    %v2546 = vxor.u32 %v2465, 2147483648
    %v2547 = vmul.f32 %v2546, 1.442695
    %v2548 = vpow.pop %v2547
    %v2549 = vadd.f32 %v2548, 1.0
    %v2550 = vrcp.pop %v2549
    %v2551 = vmul.f32 1.0, %v2550
    %v2552 = vtanh.pop %v2465
    %v2554 = vrot.slane %v2356, 7
    %v2556 = vmul.f32 %v2551, %v2554
    %2558 = vrot.lane.b32.xlu0 %v2552, 64
    %v2559 = vpop.permute.xlu0 %2558
    %v2561 = vmul.f32 %v2551, %v2559
    %2563 = vrot.lane.b32.xlu0 %v2561, 32
    %v2564 = vpop.permute.xlu0 %2563
    %v2566 = vadd.f32 %v2556, %v2564
    %v2567 = vtanh.pop %v2566
    %2569 = vrot.lane.b32.xlu0 %v2567, 64
    %v2570 = vpop.permute.xlu0 %2569
    %v2572 = vmul.f32 %v2551, %v2570
    %v2573 = vxor.u32 %v2545, 2147483648
    %v2574 = vmul.f32 %v2573, 1.442695
    %v2575 = vpow.pop %v2574
    %v2576 = vadd.f32 %v2575, 1.0
    %v2577 = vrcp.pop %v2576
    %v2578 = vmul.f32 1.0, %v2577
    %v2579 = vtanh.pop %v2545
    %v2581 = vrot.slane %v2380, 1
    %v2583 = vmul.f32 %v2578, %v2581
    %2585 = vrot.lane.b32.xlu0 %v2579, 64
    %v2586 = vpop.permute.xlu0 %2585
    %v2588 = vmul.f32 %v2578, %v2586
    %2590 = vrot.lane.b32.xlu0 %v2588, 32
    %v2591 = vpop.permute.xlu0 %2590
    %v2593 = vadd.f32 %v2583, %v2591
    %v2594 = vtanh.pop %v2593
    %2596 = vrot.lane.b32.xlu0 %v2594, 64
    %v2597 = vpop.permute.xlu0 %2596
    %v2599 = vmul.f32 %v2578, %v2597
    %v2601 = vrot.slane %v2572, 1
    %2602 = vrot.lane.b32.xlu0 %v2601, 32
    %v2603 = vpop.permute.xlu0 %2602
    %v2604 = vsel %vm280, %v2603, 0
    %2606 = vmatprep.subr.mxu0 0.0
    %2607 = vmatpush1.msra.mxu0 %v2186
    %2608 = vmatprep.subr.mxu0 0.0
    %2609 = vmatpush1.msra.mxu0 %v2187
    %2610 = vmatprep.subr.mxu0 0.0
    %2611 = vmatpush1.msra.mxu0 %v2188
    %2612 = vmatprep.subr.mxu0 0.0
    %2613 = vmatpush1.msra.mxu0 %v2189
    %2614 = vmatprep.subr.mxu0 0.0
    %2615 = vmatpush1.msra.mxu0 0.0
    %2616 = vmatprep.subr.mxu0 0.0
    %2617 = vmatpush1.msra.mxu0 0.0
    %2618 = vmatprep.subr.mxu0 0.0
    %2619 = vmatpush1.msra.mxu0 0.0
    %2620 = vmatprep.subr.mxu0 0.0
    %2621 = vmatpush1.msra.mxu0 0.0
    %2622 = vmatprep.subr.mxu0 0.0
    %2623 = vmatpush1.msra.mxu0 0.0
    %2624 = vmatprep.subr.mxu0 0.0
    %2625 = vmatpush1.msra.mxu0 0.0
    %2626 = vmatprep.subr.mxu0 0.0
    %2627 = vmatpush1.msra.mxu0 0.0
    %2628 = vmatprep.subr.mxu0 0.0
    %2629 = vmatpush1.msra.mxu0 0.0
    %2630 = vmatprep.subr.mxu0 0.0
    %2631 = vmatpush1.msra.mxu0 0.0
    %2632 = vmatprep.subr.mxu0 0.0
    %2633 = vmatpush1.msra.mxu0 0.0
    %2634 = vmatprep.subr.mxu0 0.0
    %2635 = vmatpush1.msra.mxu0 0.0
    %2636 = vmatprep.subr.mxu0 0.0
    %2637 = vmatpush1.msra.mxu0 0.0
    %2638 = vmatprep.subr.mxu0 0.0
    %2639 = vmatpush1.msra.mxu0 0.0
    %2640 = vmatprep.subr.mxu0 0.0
    %2641 = vmatpush1.msra.mxu0 0.0
    %2642 = vmatprep.subr.mxu0 0.0
    %2643 = vmatpush1.msra.mxu0 0.0
    %2644 = vmatprep.subr.mxu0 0.0
    %2645 = vmatpush1.msra.mxu0 0.0
    %2646 = vmatprep.subr.mxu0 0.0
    %2647 = vmatpush1.msra.mxu0 0.0
    %2648 = vmatprep.subr.mxu0 0.0
    %2649 = vmatpush1.msra.mxu0 0.0
    %2650 = vmatprep.subr.mxu0 0.0
    %2651 = vmatpush1.msra.mxu0 0.0
    %2652 = vmatprep.subr.mxu0 0.0
    %2653 = vmatpush1.msra.mxu0 0.0
    %2654 = vmatprep.subr.mxu0 0.0
    %2655 = vmatpush1.msra.mxu0 0.0
    %2656 = vmatprep.subr.mxu0 0.0
    %2657 = vmatpush1.msra.mxu0 0.0
    %2658 = vmatprep.subr.mxu0 0.0
    %2659 = vmatpush1.msra.mxu0 0.0
    %2660 = vmatprep.subr.mxu0 0.0
    %2661 = vmatpush1.msra.mxu0 0.0
    %2662 = vmatprep.subr.mxu0 0.0
    %2663 = vmatpush1.msra.mxu0 0.0
    %2664 = vmatprep.subr.mxu0 0.0
    %2665 = vmatpush1.msra.mxu0 0.0
    %2666 = vmatprep.subr.mxu0 0.0
    %2667 = vmatpush1.msra.mxu0 0.0
    %2668 = vmatprep.subr.mxu0 0.0
    %2669 = vmatpush1.msra.mxu0 0.0
    %2670 = vmatprep.mubr.f32.mxu0 0.0
    %2671 = vmatmul.mubr.f32.gmra.mrb[0].mxu0 %v2604
    %v2672 = vpop.f32.mrb[0].mxu0
    %v2673 = vadd.f32 0.0, %v2672
    %v2674 = vpop.f32.mrb[0].mxu0
    %2675 = vdwg.mxu0
    %v2677 = vrot.slane %v2673, 6
    %v2679 = vadd.f32 %v2182, %v2677
    %v2681 = vrot.slane %v2599, 6
    %2682 = vrot.lane.b32.xlu0 %v2681, 32
    %v2683 = vpop.permute.xlu0 %2682
    %v2684 = vsel %vm280, %v2683, 0
    %2686 = vmatprep.subr.mxu0 0.0
    %2687 = vmatpush1.msra.mxu0 %v2190
    %2688 = vmatprep.subr.mxu0 0.0
    %2689 = vmatpush1.msra.mxu0 %v2191
    %2690 = vmatprep.subr.mxu0 0.0
    %2691 = vmatpush1.msra.mxu0 %v2192
    %2692 = vmatprep.subr.mxu0 0.0
    %2693 = vmatpush1.msra.mxu0 %v2193
    %2694 = vmatprep.subr.mxu0 0.0
    %2695 = vmatpush1.msra.mxu0 0.0
    %2696 = vmatprep.subr.mxu0 0.0
    %2697 = vmatpush1.msra.mxu0 0.0
    %2698 = vmatprep.subr.mxu0 0.0
    %2699 = vmatpush1.msra.mxu0 0.0
    %2700 = vmatprep.subr.mxu0 0.0
    %2701 = vmatpush1.msra.mxu0 0.0
    %2702 = vmatprep.subr.mxu0 0.0
    %2703 = vmatpush1.msra.mxu0 0.0
    %2704 = vmatprep.subr.mxu0 0.0
    %2705 = vmatpush1.msra.mxu0 0.0
    %2706 = vmatprep.subr.mxu0 0.0
    %2707 = vmatpush1.msra.mxu0 0.0
    %2708 = vmatprep.subr.mxu0 0.0
    %2709 = vmatpush1.msra.mxu0 0.0
    %2710 = vmatprep.subr.mxu0 0.0
    %2711 = vmatpush1.msra.mxu0 0.0
    %2712 = vmatprep.subr.mxu0 0.0
    %2713 = vmatpush1.msra.mxu0 0.0
    %2714 = vmatprep.subr.mxu0 0.0
    %2715 = vmatpush1.msra.mxu0 0.0
    %2716 = vmatprep.subr.mxu0 0.0
    %2717 = vmatpush1.msra.mxu0 0.0
    %2718 = vmatprep.subr.mxu0 0.0
    %2719 = vmatpush1.msra.mxu0 0.0
    %2720 = vmatprep.subr.mxu0 0.0
    %2721 = vmatpush1.msra.mxu0 0.0
    %2722 = vmatprep.subr.mxu0 0.0
    %2723 = vmatpush1.msra.mxu0 0.0
    %2724 = vmatprep.subr.mxu0 0.0
    %2725 = vmatpush1.msra.mxu0 0.0
    %2726 = vmatprep.subr.mxu0 0.0
    %2727 = vmatpush1.msra.mxu0 0.0
    %2728 = vmatprep.subr.mxu0 0.0
    %2729 = vmatpush1.msra.mxu0 0.0
    %2730 = vmatprep.subr.mxu0 0.0
    %2731 = vmatpush1.msra.mxu0 0.0
    %2732 = vmatprep.subr.mxu0 0.0
    %2733 = vmatpush1.msra.mxu0 0.0
    %2734 = vmatprep.subr.mxu0 0.0
    %2735 = vmatpush1.msra.mxu0 0.0
    %2736 = vmatprep.subr.mxu0 0.0
    %2737 = vmatpush1.msra.mxu0 0.0
    %2738 = vmatprep.subr.mxu0 0.0
    %2739 = vmatpush1.msra.mxu0 0.0
    %2740 = vmatprep.subr.mxu0 0.0
    %2741 = vmatpush1.msra.mxu0 0.0
    %2742 = vmatprep.subr.mxu0 0.0
    %2743 = vmatpush1.msra.mxu0 0.0
    %2744 = vmatprep.subr.mxu0 0.0
    %2745 = vmatpush1.msra.mxu0 0.0
    %2746 = vmatprep.subr.mxu0 0.0
    %2747 = vmatpush1.msra.mxu0 0.0
    %2748 = vmatprep.subr.mxu0 0.0
    %2749 = vmatpush1.msra.mxu0 0.0
    %2750 = vmatprep.mubr.f32.mxu0 0.0
    %2751 = vmatmul.mubr.f32.gmra.mrb[0].mxu0 %v2684
    %v2752 = vpop.f32.mrb[0].mxu0
    %v2753 = vadd.f32 0.0, %v2752
    %v2754 = vpop.f32.mrb[0].mxu0
    %2755 = vdwg.mxu0
    %v2757 = vrot.slane %v2753, 3
    %v2759 = vadd.f32 %v2184, %v2757
    %v2760 = vxor.u32 %v2679, 2147483648
    %v2761 = vmul.f32 %v2760, 1.442695
    %v2762 = vpow.pop %v2761
    %v2763 = vadd.f32 %v2762, 1.0
    %v2764 = vrcp.pop %v2763
    %v2765 = vmul.f32 1.0, %v2764
    %v2766 = vtanh.pop %v2679
    %v2768 = vrot.slane %v2566, 7
    %v2770 = vmul.f32 %v2765, %v2768
    %2772 = vrot.lane.b32.xlu0 %v2766, 64
    %v2773 = vpop.permute.xlu0 %2772
    %v2775 = vmul.f32 %v2765, %v2773
    %2777 = vrot.lane.b32.xlu0 %v2775, 32
    %v2778 = vpop.permute.xlu0 %2777
    %v2780 = vadd.f32 %v2770, %v2778
    %v2781 = vtanh.pop %v2780
    %2783 = vrot.lane.b32.xlu0 %v2781, 64
    %v2784 = vpop.permute.xlu0 %2783
    %v2786 = vmul.f32 %v2765, %v2784
    %v2787 = vxor.u32 %v2759, 2147483648
    %v2788 = vmul.f32 %v2787, 1.442695
    %v2789 = vpow.pop %v2788
    %v2790 = vadd.f32 %v2789, 1.0
    %v2791 = vrcp.pop %v2790
    %v2792 = vmul.f32 1.0, %v2791
    %v2793 = vtanh.pop %v2759
    %v2795 = vrot.slane %v2593, 1
    %v2797 = vmul.f32 %v2792, %v2795
    %2799 = vrot.lane.b32.xlu0 %v2793, 64
    %v2800 = vpop.permute.xlu0 %2799
    %v2802 = vmul.f32 %v2792, %v2800
    %2804 = vrot.lane.b32.xlu0 %v2802, 32
    %v2805 = vpop.permute.xlu0 %2804
    %v2807 = vadd.f32 %v2797, %v2805
    %v2808 = vtanh.pop %v2807
    %2810 = vrot.lane.b32.xlu0 %v2808, 64
    %v2811 = vpop.permute.xlu0 %2810
    %v2813 = vmul.f32 %v2792, %v2811
    %v2815 = vrot.slane %v2786, 2
    %2816 = vrot.lane.b32.xlu0 %v2815, 32
    %v2817 = vpop.permute.xlu0 %2816
    %v2818 = vsel %vm280, %v2817, 0
    %2820 = vmatprep.subr.mxu0 0.0
    %2821 = vmatpush1.msra.mxu0 %v2186
    %2822 = vmatprep.subr.mxu0 0.0
    %2823 = vmatpush1.msra.mxu0 %v2187
    %2824 = vmatprep.subr.mxu0 0.0
    %2825 = vmatpush1.msra.mxu0 %v2188
    %2826 = vmatprep.subr.mxu0 0.0
    %2827 = vmatpush1.msra.mxu0 %v2189
    %2828 = vmatprep.subr.mxu0 0.0
    %2829 = vmatpush1.msra.mxu0 0.0
    %2830 = vmatprep.subr.mxu0 0.0
    %2831 = vmatpush1.msra.mxu0 0.0
    %2832 = vmatprep.subr.mxu0 0.0
    %2833 = vmatpush1.msra.mxu0 0.0
    %2834 = vmatprep.subr.mxu0 0.0
    %2835 = vmatpush1.msra.mxu0 0.0
    %2836 = vmatprep.subr.mxu0 0.0
    %2837 = vmatpush1.msra.mxu0 0.0
    %2838 = vmatprep.subr.mxu0 0.0
    %2839 = vmatpush1.msra.mxu0 0.0
    %2840 = vmatprep.subr.mxu0 0.0
    %2841 = vmatpush1.msra.mxu0 0.0
    %2842 = vmatprep.subr.mxu0 0.0
    %2843 = vmatpush1.msra.mxu0 0.0
    %2844 = vmatprep.subr.mxu0 0.0
    %2845 = vmatpush1.msra.mxu0 0.0
    %2846 = vmatprep.subr.mxu0 0.0
    %2847 = vmatpush1.msra.mxu0 0.0
    %2848 = vmatprep.subr.mxu0 0.0
    %2849 = vmatpush1.msra.mxu0 0.0
    %2850 = vmatprep.subr.mxu0 0.0
    %2851 = vmatpush1.msra.mxu0 0.0
    %2852 = vmatprep.subr.mxu0 0.0
    %2853 = vmatpush1.msra.mxu0 0.0
    %2854 = vmatprep.subr.mxu0 0.0
    %2855 = vmatpush1.msra.mxu0 0.0
    %2856 = vmatprep.subr.mxu0 0.0
    %2857 = vmatpush1.msra.mxu0 0.0
    %2858 = vmatprep.subr.mxu0 0.0
    %2859 = vmatpush1.msra.mxu0 0.0
    %2860 = vmatprep.subr.mxu0 0.0
    %2861 = vmatpush1.msra.mxu0 0.0
    %2862 = vmatprep.subr.mxu0 0.0
    %2863 = vmatpush1.msra.mxu0 0.0
    %2864 = vmatprep.subr.mxu0 0.0
    %2865 = vmatpush1.msra.mxu0 0.0
    %2866 = vmatprep.subr.mxu0 0.0
    %2867 = vmatpush1.msra.mxu0 0.0
    %2868 = vmatprep.subr.mxu0 0.0
    %2869 = vmatpush1.msra.mxu0 0.0
    %2870 = vmatprep.subr.mxu0 0.0
    %2871 = vmatpush1.msra.mxu0 0.0
    %2872 = vmatprep.subr.mxu0 0.0
    %2873 = vmatpush1.msra.mxu0 0.0
    %2874 = vmatprep.subr.mxu0 0.0
    %2875 = vmatpush1.msra.mxu0 0.0
    %2876 = vmatprep.subr.mxu0 0.0
    %2877 = vmatpush1.msra.mxu0 0.0
    %2878 = vmatprep.subr.mxu0 0.0
    %2879 = vmatpush1.msra.mxu0 0.0
    %2880 = vmatprep.subr.mxu0 0.0
    %2881 = vmatpush1.msra.mxu0 0.0
    %2882 = vmatprep.subr.mxu0 0.0
    %2883 = vmatpush1.msra.mxu0 0.0
    %2884 = vmatprep.mubr.f32.mxu0 0.0
    %2885 = vmatmul.mubr.f32.gmra.mrb[0].mxu0 %v2818
    %v2886 = vpop.f32.mrb[0].mxu0
    %v2887 = vadd.f32 0.0, %v2886
    %v2888 = vpop.f32.mrb[0].mxu0
    %2889 = vdwg.mxu0
    %v2891 = vrot.slane %v2887, 5
    %v2893 = vadd.f32 %v2182, %v2891
    %v2895 = vrot.slane %v2813, 5
    %2896 = vrot.lane.b32.xlu0 %v2895, 32
    %v2897 = vpop.permute.xlu0 %2896
    %v2898 = vsel %vm280, %v2897, 0
    %2900 = vmatprep.subr.mxu0 0.0
    %2901 = vmatpush1.msra.mxu0 %v2190
    %2902 = vmatprep.subr.mxu0 0.0
    %2903 = vmatpush1.msra.mxu0 %v2191
    %2904 = vmatprep.subr.mxu0 0.0
    %2905 = vmatpush1.msra.mxu0 %v2192
    %2906 = vmatprep.subr.mxu0 0.0
    %2907 = vmatpush1.msra.mxu0 %v2193
    %2908 = vmatprep.subr.mxu0 0.0
    %2909 = vmatpush1.msra.mxu0 0.0
    %2910 = vmatprep.subr.mxu0 0.0
    %2911 = vmatpush1.msra.mxu0 0.0
    %2912 = vmatprep.subr.mxu0 0.0
    %2913 = vmatpush1.msra.mxu0 0.0
    %2914 = vmatprep.subr.mxu0 0.0
    %2915 = vmatpush1.msra.mxu0 0.0
    %2916 = vmatprep.subr.mxu0 0.0
    %2917 = vmatpush1.msra.mxu0 0.0
    %2918 = vmatprep.subr.mxu0 0.0
    %2919 = vmatpush1.msra.mxu0 0.0
    %2920 = vmatprep.subr.mxu0 0.0
    %2921 = vmatpush1.msra.mxu0 0.0
    %2922 = vmatprep.subr.mxu0 0.0
    %2923 = vmatpush1.msra.mxu0 0.0
    %2924 = vmatprep.subr.mxu0 0.0
    %2925 = vmatpush1.msra.mxu0 0.0
    %2926 = vmatprep.subr.mxu0 0.0
    %2927 = vmatpush1.msra.mxu0 0.0
    %2928 = vmatprep.subr.mxu0 0.0
    %2929 = vmatpush1.msra.mxu0 0.0
    %2930 = vmatprep.subr.mxu0 0.0
    %2931 = vmatpush1.msra.mxu0 0.0
    %2932 = vmatprep.subr.mxu0 0.0
    %2933 = vmatpush1.msra.mxu0 0.0
    %2934 = vmatprep.subr.mxu0 0.0
    %2935 = vmatpush1.msra.mxu0 0.0
    %2936 = vmatprep.subr.mxu0 0.0
    %2937 = vmatpush1.msra.mxu0 0.0
    %2938 = vmatprep.subr.mxu0 0.0
    %2939 = vmatpush1.msra.mxu0 0.0
    %2940 = vmatprep.subr.mxu0 0.0
    %2941 = vmatpush1.msra.mxu0 0.0
    %2942 = vmatprep.subr.mxu0 0.0
    %2943 = vmatpush1.msra.mxu0 0.0
    %2944 = vmatprep.subr.mxu0 0.0
    %2945 = vmatpush1.msra.mxu0 0.0
    %2946 = vmatprep.subr.mxu0 0.0
    %2947 = vmatpush1.msra.mxu0 0.0
    %2948 = vmatprep.subr.mxu0 0.0
    %2949 = vmatpush1.msra.mxu0 0.0
    %2950 = vmatprep.subr.mxu0 0.0
    %2951 = vmatpush1.msra.mxu0 0.0
    %2952 = vmatprep.subr.mxu0 0.0
    %2953 = vmatpush1.msra.mxu0 0.0
    %2954 = vmatprep.subr.mxu0 0.0
    %2955 = vmatpush1.msra.mxu0 0.0
    %2956 = vmatprep.subr.mxu0 0.0
    %2957 = vmatpush1.msra.mxu0 0.0
    %2958 = vmatprep.subr.mxu0 0.0
    %2959 = vmatpush1.msra.mxu0 0.0
    %2960 = vmatprep.subr.mxu0 0.0
    %2961 = vmatpush1.msra.mxu0 0.0
    %2962 = vmatprep.subr.mxu0 0.0
    %2963 = vmatpush1.msra.mxu0 0.0
    %2964 = vmatprep.mubr.f32.mxu0 0.0
    %2965 = vmatmul.mubr.f32.gmra.mrb[0].mxu0 %v2898
    %v2966 = vpop.f32.mrb[0].mxu0
    %v2967 = vadd.f32 0.0, %v2966
    %v2968 = vpop.f32.mrb[0].mxu0
    %2969 = vdwg.mxu0
    %v2971 = vrot.slane %v2967, 4
    %v2973 = vadd.f32 %v2184, %v2971
    %v2974 = vxor.u32 %v2893, 2147483648
    %v2975 = vmul.f32 %v2974, 1.442695
    %v2976 = vpow.pop %v2975
    %v2977 = vadd.f32 %v2976, 1.0
    %v2978 = vrcp.pop %v2977
    %v2979 = vmul.f32 1.0, %v2978
    %v2980 = vtanh.pop %v2893
    %v2982 = vrot.slane %v2780, 7
    %v2984 = vmul.f32 %v2979, %v2982
    %2986 = vrot.lane.b32.xlu0 %v2980, 64
    %v2987 = vpop.permute.xlu0 %2986
    %v2989 = vmul.f32 %v2979, %v2987
    %2991 = vrot.lane.b32.xlu0 %v2989, 32
    %v2992 = vpop.permute.xlu0 %2991
    %v2994 = vadd.f32 %v2984, %v2992
    %v2995 = vtanh.pop %v2994
    %2997 = vrot.lane.b32.xlu0 %v2995, 64
    %v2998 = vpop.permute.xlu0 %2997
    %v3000 = vmul.f32 %v2979, %v2998
    %v3001 = vxor.u32 %v2973, 2147483648
    %v3002 = vmul.f32 %v3001, 1.442695
    %v3003 = vpow.pop %v3002
    %v3004 = vadd.f32 %v3003, 1.0
    %v3005 = vrcp.pop %v3004
    %v3006 = vmul.f32 1.0, %v3005
    %v3007 = vtanh.pop %v2973
    %v3009 = vrot.slane %v2807, 1
    %v3011 = vmul.f32 %v3006, %v3009
    %3013 = vrot.lane.b32.xlu0 %v3007, 64
    %v3014 = vpop.permute.xlu0 %3013
    %v3016 = vmul.f32 %v3006, %v3014
    %3018 = vrot.lane.b32.xlu0 %v3016, 32
    %v3019 = vpop.permute.xlu0 %3018
    %v3021 = vadd.f32 %v3011, %v3019
    %v3022 = vtanh.pop %v3021
    %3024 = vrot.lane.b32.xlu0 %v3022, 64
    %v3025 = vpop.permute.xlu0 %3024
    %v3027 = vmul.f32 %v3006, %v3025
    %v3029 = vrot.slane %v3000, 3
    %3030 = vrot.lane.b32.xlu0 %v3029, 32
    %v3031 = vpop.permute.xlu0 %3030
    %v3032 = vsel %vm280, %v3031, 0
    %3034 = vmatprep.subr.mxu0 0.0
    %3035 = vmatpush1.msra.mxu0 %v2186
    %3036 = vmatprep.subr.mxu0 0.0
    %3037 = vmatpush1.msra.mxu0 %v2187
    %3038 = vmatprep.subr.mxu0 0.0
    %3039 = vmatpush1.msra.mxu0 %v2188
    %3040 = vmatprep.subr.mxu0 0.0
    %3041 = vmatpush1.msra.mxu0 %v2189
    %3042 = vmatprep.subr.mxu0 0.0
    %3043 = vmatpush1.msra.mxu0 0.0
    %3044 = vmatprep.subr.mxu0 0.0
    %3045 = vmatpush1.msra.mxu0 0.0
    %3046 = vmatprep.subr.mxu0 0.0
    %3047 = vmatpush1.msra.mxu0 0.0
    %3048 = vmatprep.subr.mxu0 0.0
    %3049 = vmatpush1.msra.mxu0 0.0
    %3050 = vmatprep.subr.mxu0 0.0
    %3051 = vmatpush1.msra.mxu0 0.0
    %3052 = vmatprep.subr.mxu0 0.0
    %3053 = vmatpush1.msra.mxu0 0.0
    %3054 = vmatprep.subr.mxu0 0.0
    %3055 = vmatpush1.msra.mxu0 0.0
    %3056 = vmatprep.subr.mxu0 0.0
    %3057 = vmatpush1.msra.mxu0 0.0
    %3058 = vmatprep.subr.mxu0 0.0
    %3059 = vmatpush1.msra.mxu0 0.0
    %3060 = vmatprep.subr.mxu0 0.0
    %3061 = vmatpush1.msra.mxu0 0.0
    %3062 = vmatprep.subr.mxu0 0.0
    %3063 = vmatpush1.msra.mxu0 0.0
    %3064 = vmatprep.subr.mxu0 0.0
    %3065 = vmatpush1.msra.mxu0 0.0
    %3066 = vmatprep.subr.mxu0 0.0
    %3067 = vmatpush1.msra.mxu0 0.0
    %3068 = vmatprep.subr.mxu0 0.0
    %3069 = vmatpush1.msra.mxu0 0.0
    %3070 = vmatprep.subr.mxu0 0.0
    %3071 = vmatpush1.msra.mxu0 0.0
    %3072 = vmatprep.subr.mxu0 0.0
    %3073 = vmatpush1.msra.mxu0 0.0
    %3074 = vmatprep.subr.mxu0 0.0
    %3075 = vmatpush1.msra.mxu0 0.0
    %3076 = vmatprep.subr.mxu0 0.0
    %3077 = vmatpush1.msra.mxu0 0.0
    %3078 = vmatprep.subr.mxu0 0.0
    %3079 = vmatpush1.msra.mxu0 0.0
    %3080 = vmatprep.subr.mxu0 0.0
    %3081 = vmatpush1.msra.mxu0 0.0
    %3082 = vmatprep.subr.mxu0 0.0
    %3083 = vmatpush1.msra.mxu0 0.0
    %3084 = vmatprep.subr.mxu0 0.0
    %3085 = vmatpush1.msra.mxu0 0.0
    %3086 = vmatprep.subr.mxu0 0.0
    %3087 = vmatpush1.msra.mxu0 0.0
    %3088 = vmatprep.subr.mxu0 0.0
    %3089 = vmatpush1.msra.mxu0 0.0
    %3090 = vmatprep.subr.mxu0 0.0
    %3091 = vmatpush1.msra.mxu0 0.0
    %3092 = vmatprep.subr.mxu0 0.0
    %3093 = vmatpush1.msra.mxu0 0.0
    %3094 = vmatprep.subr.mxu0 0.0
    %3095 = vmatpush1.msra.mxu0 0.0
    %3096 = vmatprep.subr.mxu0 0.0
    %3097 = vmatpush1.msra.mxu0 0.0
    %3098 = vmatprep.mubr.f32.mxu0 0.0
    %3099 = vmatmul.mubr.f32.gmra.mrb[0].mxu0 %v3032
    %v3100 = vpop.f32.mrb[0].mxu0
    %v3101 = vadd.f32 0.0, %v3100
    %v3102 = vpop.f32.mrb[0].mxu0
    %3103 = vdwg.mxu0
    %v3105 = vrot.slane %v3101, 4
    %v3107 = vadd.f32 %v2182, %v3105
    %v3109 = vrot.slane %v3027, 4
    %3110 = vrot.lane.b32.xlu0 %v3109, 32
    %v3111 = vpop.permute.xlu0 %3110
    %v3112 = vsel %vm280, %v3111, 0
    %3114 = vmatprep.subr.mxu0 0.0
    %3115 = vmatpush1.msra.mxu0 %v2190
    %3116 = vmatprep.subr.mxu0 0.0
    %3117 = vmatpush1.msra.mxu0 %v2191
    %3118 = vmatprep.subr.mxu0 0.0
    %3119 = vmatpush1.msra.mxu0 %v2192
    %3120 = vmatprep.subr.mxu0 0.0
    %3121 = vmatpush1.msra.mxu0 %v2193
    %3122 = vmatprep.subr.mxu0 0.0
    %3123 = vmatpush1.msra.mxu0 0.0
    %3124 = vmatprep.subr.mxu0 0.0
    %3125 = vmatpush1.msra.mxu0 0.0
    %3126 = vmatprep.subr.mxu0 0.0
    %3127 = vmatpush1.msra.mxu0 0.0
    %3128 = vmatprep.subr.mxu0 0.0
    %3129 = vmatpush1.msra.mxu0 0.0
    %3130 = vmatprep.subr.mxu0 0.0
    %3131 = vmatpush1.msra.mxu0 0.0
    %3132 = vmatprep.subr.mxu0 0.0
    %3133 = vmatpush1.msra.mxu0 0.0
    %3134 = vmatprep.subr.mxu0 0.0
    %3135 = vmatpush1.msra.mxu0 0.0
    %3136 = vmatprep.subr.mxu0 0.0
    %3137 = vmatpush1.msra.mxu0 0.0
    %3138 = vmatprep.subr.mxu0 0.0
    %3139 = vmatpush1.msra.mxu0 0.0
    %3140 = vmatprep.subr.mxu0 0.0
    %3141 = vmatpush1.msra.mxu0 0.0
    %3142 = vmatprep.subr.mxu0 0.0
    %3143 = vmatpush1.msra.mxu0 0.0
    %3144 = vmatprep.subr.mxu0 0.0
    %3145 = vmatpush1.msra.mxu0 0.0
    %3146 = vmatprep.subr.mxu0 0.0
    %3147 = vmatpush1.msra.mxu0 0.0
    %3148 = vmatprep.subr.mxu0 0.0
    %3149 = vmatpush1.msra.mxu0 0.0
    %3150 = vmatprep.subr.mxu0 0.0
    %3151 = vmatpush1.msra.mxu0 0.0
    %3152 = vmatprep.subr.mxu0 0.0
    %3153 = vmatpush1.msra.mxu0 0.0
    %3154 = vmatprep.subr.mxu0 0.0
    %3155 = vmatpush1.msra.mxu0 0.0
    %3156 = vmatprep.subr.mxu0 0.0
    %3157 = vmatpush1.msra.mxu0 0.0
    %3158 = vmatprep.subr.mxu0 0.0
    %3159 = vmatpush1.msra.mxu0 0.0
    %3160 = vmatprep.subr.mxu0 0.0
    %3161 = vmatpush1.msra.mxu0 0.0
    %3162 = vmatprep.subr.mxu0 0.0
    %3163 = vmatpush1.msra.mxu0 0.0
    %3164 = vmatprep.subr.mxu0 0.0
    %3165 = vmatpush1.msra.mxu0 0.0
    %3166 = vmatprep.subr.mxu0 0.0
    %3167 = vmatpush1.msra.mxu0 0.0
    %3168 = vmatprep.subr.mxu0 0.0
    %3169 = vmatpush1.msra.mxu0 0.0
    %3170 = vmatprep.subr.mxu0 0.0
    %3171 = vmatpush1.msra.mxu0 0.0
    %3172 = vmatprep.subr.mxu0 0.0
    %3173 = vmatpush1.msra.mxu0 0.0
    %3174 = vmatprep.subr.mxu0 0.0
    %3175 = vmatpush1.msra.mxu0 0.0
    %3176 = vmatprep.subr.mxu0 0.0
    %3177 = vmatpush1.msra.mxu0 0.0
    %3178 = vmatprep.mubr.f32.mxu0 0.0
    %3179 = vmatmul.mubr.f32.gmra.mrb[0].mxu0 %v3112
    %v3180 = vpop.f32.mrb[0].mxu0
    %v3181 = vadd.f32 0.0, %v3180
    %v3182 = vpop.f32.mrb[0].mxu0
    %3183 = vdwg.mxu0
    %v3185 = vrot.slane %v3181, 5
    %v3187 = vadd.f32 %v2184, %v3185
    %v3188 = vxor.u32 %v3107, 2147483648
    %v3189 = vmul.f32 %v3188, 1.442695
    %v3190 = vpow.pop %v3189
    %v3191 = vadd.f32 %v3190, 1.0
    %v3192 = vrcp.pop %v3191
    %v3193 = vmul.f32 1.0, %v3192
    %v3194 = vtanh.pop %v3107
    %v3196 = vrot.slane %v2994, 7
    %v3198 = vmul.f32 %v3193, %v3196
    %3200 = vrot.lane.b32.xlu0 %v3194, 64
    %v3201 = vpop.permute.xlu0 %3200
    %v3203 = vmul.f32 %v3193, %v3201
    %3205 = vrot.lane.b32.xlu0 %v3203, 32
    %v3206 = vpop.permute.xlu0 %3205
    %v3208 = vadd.f32 %v3198, %v3206
    %v3209 = vtanh.pop %v3208
    %3211 = vrot.lane.b32.xlu0 %v3209, 64
    %v3212 = vpop.permute.xlu0 %3211
    %v3214 = vmul.f32 %v3193, %v3212
    %v3215 = vxor.u32 %v3187, 2147483648
    %v3216 = vmul.f32 %v3215, 1.442695
    %v3217 = vpow.pop %v3216
    %v3218 = vadd.f32 %v3217, 1.0
    %v3219 = vrcp.pop %v3218
    %v3220 = vmul.f32 1.0, %v3219
    %v3221 = vtanh.pop %v3187
    %v3223 = vrot.slane %v3021, 1
    %v3225 = vmul.f32 %v3220, %v3223
    %3227 = vrot.lane.b32.xlu0 %v3221, 64
    %v3228 = vpop.permute.xlu0 %3227
    %v3230 = vmul.f32 %v3220, %v3228
    %3232 = vrot.lane.b32.xlu0 %v3230, 32
    %v3233 = vpop.permute.xlu0 %3232
    %v3235 = vadd.f32 %v3225, %v3233
    %v3236 = vtanh.pop %v3235
    %3238 = vrot.lane.b32.xlu0 %v3236, 64
    %v3239 = vpop.permute.xlu0 %3238
    %v3241 = vmul.f32 %v3220, %v3239
    %v3243 = vrot.slane %v3214, 4
    %3244 = vrot.lane.b32.xlu0 %v3243, 32
    %v3245 = vpop.permute.xlu0 %3244
    %v3246 = vsel %vm280, %v3245, 0
    %3248 = vmatprep.subr.mxu0 0.0
    %3249 = vmatpush1.msra.mxu0 %v2186
    %3250 = vmatprep.subr.mxu0 0.0
    %3251 = vmatpush1.msra.mxu0 %v2187
    %3252 = vmatprep.subr.mxu0 0.0
    %3253 = vmatpush1.msra.mxu0 %v2188
    %3254 = vmatprep.subr.mxu0 0.0
    %3255 = vmatpush1.msra.mxu0 %v2189
    %3256 = vmatprep.subr.mxu0 0.0
    %3257 = vmatpush1.msra.mxu0 0.0
    %3258 = vmatprep.subr.mxu0 0.0
    %3259 = vmatpush1.msra.mxu0 0.0
    %3260 = vmatprep.subr.mxu0 0.0
    %3261 = vmatpush1.msra.mxu0 0.0
    %3262 = vmatprep.subr.mxu0 0.0
    %3263 = vmatpush1.msra.mxu0 0.0
    %3264 = vmatprep.subr.mxu0 0.0
    %3265 = vmatpush1.msra.mxu0 0.0
    %3266 = vmatprep.subr.mxu0 0.0
    %3267 = vmatpush1.msra.mxu0 0.0
    %3268 = vmatprep.subr.mxu0 0.0
    %3269 = vmatpush1.msra.mxu0 0.0
    %3270 = vmatprep.subr.mxu0 0.0
    %3271 = vmatpush1.msra.mxu0 0.0
    %3272 = vmatprep.subr.mxu0 0.0
    %3273 = vmatpush1.msra.mxu0 0.0
    %3274 = vmatprep.subr.mxu0 0.0
    %3275 = vmatpush1.msra.mxu0 0.0
    %3276 = vmatprep.subr.mxu0 0.0
    %3277 = vmatpush1.msra.mxu0 0.0
    %3278 = vmatprep.subr.mxu0 0.0
    %3279 = vmatpush1.msra.mxu0 0.0
    %3280 = vmatprep.subr.mxu0 0.0
    %3281 = vmatpush1.msra.mxu0 0.0
    %3282 = vmatprep.subr.mxu0 0.0
    %3283 = vmatpush1.msra.mxu0 0.0
    %3284 = vmatprep.subr.mxu0 0.0
    %3285 = vmatpush1.msra.mxu0 0.0
    %3286 = vmatprep.subr.mxu0 0.0
    %3287 = vmatpush1.msra.mxu0 0.0
    %3288 = vmatprep.subr.mxu0 0.0
    %3289 = vmatpush1.msra.mxu0 0.0
    %3290 = vmatprep.subr.mxu0 0.0
    %3291 = vmatpush1.msra.mxu0 0.0
    %3292 = vmatprep.subr.mxu0 0.0
    %3293 = vmatpush1.msra.mxu0 0.0
    %3294 = vmatprep.subr.mxu0 0.0
    %3295 = vmatpush1.msra.mxu0 0.0
    %3296 = vmatprep.subr.mxu0 0.0
    %3297 = vmatpush1.msra.mxu0 0.0
    %3298 = vmatprep.subr.mxu0 0.0
    %3299 = vmatpush1.msra.mxu0 0.0
    %3300 = vmatprep.subr.mxu0 0.0
    %3301 = vmatpush1.msra.mxu0 0.0
    %3302 = vmatprep.subr.mxu0 0.0
    %3303 = vmatpush1.msra.mxu0 0.0
    %3304 = vmatprep.subr.mxu0 0.0
    %3305 = vmatpush1.msra.mxu0 0.0
    %3306 = vmatprep.subr.mxu0 0.0
    %3307 = vmatpush1.msra.mxu0 0.0
    %3308 = vmatprep.subr.mxu0 0.0
    %3309 = vmatpush1.msra.mxu0 0.0
    %3310 = vmatprep.subr.mxu0 0.0
    %3311 = vmatpush1.msra.mxu0 0.0
    %3312 = vmatprep.mubr.f32.mxu0 0.0
    %3313 = vmatmul.mubr.f32.gmra.mrb[0].mxu0 %v3246
    %v3314 = vpop.f32.mrb[0].mxu0
    %v3315 = vadd.f32 0.0, %v3314
    %v3316 = vpop.f32.mrb[0].mxu0
    %3317 = vdwg.mxu0
    %v3319 = vrot.slane %v3315, 3
    %v3321 = vadd.f32 %v2182, %v3319
    %v3323 = vrot.slane %v3241, 3
    %3324 = vrot.lane.b32.xlu0 %v3323, 32
    %v3325 = vpop.permute.xlu0 %3324
    %v3326 = vsel %vm280, %v3325, 0
    %3328 = vmatprep.subr.mxu0 0.0
    %3329 = vmatpush1.msra.mxu0 %v2190
    %3330 = vmatprep.subr.mxu0 0.0
    %3331 = vmatpush1.msra.mxu0 %v2191
    %3332 = vmatprep.subr.mxu0 0.0
    %3333 = vmatpush1.msra.mxu0 %v2192
    %3334 = vmatprep.subr.mxu0 0.0
    %3335 = vmatpush1.msra.mxu0 %v2193
    %3336 = vmatprep.subr.mxu0 0.0
    %3337 = vmatpush1.msra.mxu0 0.0
    %3338 = vmatprep.subr.mxu0 0.0
    %3339 = vmatpush1.msra.mxu0 0.0
    %3340 = vmatprep.subr.mxu0 0.0
    %3341 = vmatpush1.msra.mxu0 0.0
    %3342 = vmatprep.subr.mxu0 0.0
    %3343 = vmatpush1.msra.mxu0 0.0
    %3344 = vmatprep.subr.mxu0 0.0
    %3345 = vmatpush1.msra.mxu0 0.0
    %3346 = vmatprep.subr.mxu0 0.0
    %3347 = vmatpush1.msra.mxu0 0.0
    %3348 = vmatprep.subr.mxu0 0.0
    %3349 = vmatpush1.msra.mxu0 0.0
    %3350 = vmatprep.subr.mxu0 0.0
    %3351 = vmatpush1.msra.mxu0 0.0
    %3352 = vmatprep.subr.mxu0 0.0
    %3353 = vmatpush1.msra.mxu0 0.0
    %3354 = vmatprep.subr.mxu0 0.0
    %3355 = vmatpush1.msra.mxu0 0.0
    %3356 = vmatprep.subr.mxu0 0.0
    %3357 = vmatpush1.msra.mxu0 0.0
    %3358 = vmatprep.subr.mxu0 0.0
    %3359 = vmatpush1.msra.mxu0 0.0
    %3360 = vmatprep.subr.mxu0 0.0
    %3361 = vmatpush1.msra.mxu0 0.0
    %3362 = vmatprep.subr.mxu0 0.0
    %3363 = vmatpush1.msra.mxu0 0.0
    %3364 = vmatprep.subr.mxu0 0.0
    %3365 = vmatpush1.msra.mxu0 0.0
    %3366 = vmatprep.subr.mxu0 0.0
    %3367 = vmatpush1.msra.mxu0 0.0
    %3368 = vmatprep.subr.mxu0 0.0
    %3369 = vmatpush1.msra.mxu0 0.0
    %3370 = vmatprep.subr.mxu0 0.0
    %3371 = vmatpush1.msra.mxu0 0.0
    %3372 = vmatprep.subr.mxu0 0.0
    %3373 = vmatpush1.msra.mxu0 0.0
    %3374 = vmatprep.subr.mxu0 0.0
    %3375 = vmatpush1.msra.mxu0 0.0
    %3376 = vmatprep.subr.mxu0 0.0
    %3377 = vmatpush1.msra.mxu0 0.0
    %3378 = vmatprep.subr.mxu0 0.0
    %3379 = vmatpush1.msra.mxu0 0.0
    %3380 = vmatprep.subr.mxu0 0.0
    %3381 = vmatpush1.msra.mxu0 0.0
    %3382 = vmatprep.subr.mxu0 0.0
    %3383 = vmatpush1.msra.mxu0 0.0
    %3384 = vmatprep.subr.mxu0 0.0
    %3385 = vmatpush1.msra.mxu0 0.0
    %3386 = vmatprep.subr.mxu0 0.0
    %3387 = vmatpush1.msra.mxu0 0.0
    %3388 = vmatprep.subr.mxu0 0.0
    %3389 = vmatpush1.msra.mxu0 0.0
    %3390 = vmatprep.subr.mxu0 0.0
    %3391 = vmatpush1.msra.mxu0 0.0
    %3392 = vmatprep.mubr.f32.mxu0 0.0
    %3393 = vmatmul.mubr.f32.gmra.mrb[0].mxu0 %v3326
    %v3394 = vpop.f32.mrb[0].mxu0
    %v3395 = vadd.f32 0.0, %v3394
    %v3396 = vpop.f32.mrb[0].mxu0
    %3397 = vdwg.mxu0
    %v3399 = vrot.slane %v3395, 6
    %v3401 = vadd.f32 %v2184, %v3399
    %v3402 = vxor.u32 %v3321, 2147483648
    %v3403 = vmul.f32 %v3402, 1.442695
    %v3404 = vpow.pop %v3403
    %v3405 = vadd.f32 %v3404, 1.0
    %v3406 = vrcp.pop %v3405
    %v3407 = vmul.f32 1.0, %v3406
    %v3408 = vtanh.pop %v3321
    %v3410 = vrot.slane %v3208, 7
    %v3412 = vmul.f32 %v3407, %v3410
    %3414 = vrot.lane.b32.xlu0 %v3408, 64
    %v3415 = vpop.permute.xlu0 %3414
    %v3417 = vmul.f32 %v3407, %v3415
    %3419 = vrot.lane.b32.xlu0 %v3417, 32
    %v3420 = vpop.permute.xlu0 %3419
    %v3422 = vadd.f32 %v3412, %v3420
    %v3423 = vtanh.pop %v3422
    %3425 = vrot.lane.b32.xlu0 %v3423, 64
    %v3426 = vpop.permute.xlu0 %3425
    %v3428 = vmul.f32 %v3407, %v3426
    %v3429 = vxor.u32 %v3401, 2147483648
    %v3430 = vmul.f32 %v3429, 1.442695
    %v3431 = vpow.pop %v3430
    %v3432 = vadd.f32 %v3431, 1.0
    %v3433 = vrcp.pop %v3432
    %v3434 = vmul.f32 1.0, %v3433
    %v3435 = vtanh.pop %v3401
    %v3437 = vrot.slane %v3235, 1
    %v3439 = vmul.f32 %v3434, %v3437
    %3441 = vrot.lane.b32.xlu0 %v3435, 64
    %v3442 = vpop.permute.xlu0 %3441
    %v3444 = vmul.f32 %v3434, %v3442
    %3446 = vrot.lane.b32.xlu0 %v3444, 32
    %v3447 = vpop.permute.xlu0 %3446
    %v3449 = vadd.f32 %v3439, %v3447
    %v3450 = vtanh.pop %v3449
    %3452 = vrot.lane.b32.xlu0 %v3450, 64
    %v3453 = vpop.permute.xlu0 %3452
    %v3455 = vmul.f32 %v3434, %v3453
    %v3457 = vrot.slane %v3428, 5
    %3458 = vrot.lane.b32.xlu0 %v3457, 32
    %v3459 = vpop.permute.xlu0 %3458
    %v3460 = vsel %vm280, %v3459, 0
    %3462 = vmatprep.subr.mxu0 0.0
    %3463 = vmatpush1.msra.mxu0 %v2186
    %3464 = vmatprep.subr.mxu0 0.0
    %3465 = vmatpush1.msra.mxu0 %v2187
    %3466 = vmatprep.subr.mxu0 0.0
    %3467 = vmatpush1.msra.mxu0 %v2188
    %3468 = vmatprep.subr.mxu0 0.0
    %3469 = vmatpush1.msra.mxu0 %v2189
    %3470 = vmatprep.subr.mxu0 0.0
    %3471 = vmatpush1.msra.mxu0 0.0
    %3472 = vmatprep.subr.mxu0 0.0
    %3473 = vmatpush1.msra.mxu0 0.0
    %3474 = vmatprep.subr.mxu0 0.0
    %3475 = vmatpush1.msra.mxu0 0.0
    %3476 = vmatprep.subr.mxu0 0.0
    %3477 = vmatpush1.msra.mxu0 0.0
    %3478 = vmatprep.subr.mxu0 0.0
    %3479 = vmatpush1.msra.mxu0 0.0
    %3480 = vmatprep.subr.mxu0 0.0
    %3481 = vmatpush1.msra.mxu0 0.0
    %3482 = vmatprep.subr.mxu0 0.0
    %3483 = vmatpush1.msra.mxu0 0.0
    %3484 = vmatprep.subr.mxu0 0.0
    %3485 = vmatpush1.msra.mxu0 0.0
    %3486 = vmatprep.subr.mxu0 0.0
    %3487 = vmatpush1.msra.mxu0 0.0
    %3488 = vmatprep.subr.mxu0 0.0
    %3489 = vmatpush1.msra.mxu0 0.0
    %3490 = vmatprep.subr.mxu0 0.0
    %3491 = vmatpush1.msra.mxu0 0.0
    %3492 = vmatprep.subr.mxu0 0.0
    %3493 = vmatpush1.msra.mxu0 0.0
    %3494 = vmatprep.subr.mxu0 0.0
    %3495 = vmatpush1.msra.mxu0 0.0
    %3496 = vmatprep.subr.mxu0 0.0
    %3497 = vmatpush1.msra.mxu0 0.0
    %3498 = vmatprep.subr.mxu0 0.0
    %3499 = vmatpush1.msra.mxu0 0.0
    %3500 = vmatprep.subr.mxu0 0.0
    %3501 = vmatpush1.msra.mxu0 0.0
    %3502 = vmatprep.subr.mxu0 0.0
    %3503 = vmatpush1.msra.mxu0 0.0
    %3504 = vmatprep.subr.mxu0 0.0
    %3505 = vmatpush1.msra.mxu0 0.0
    %3506 = vmatprep.subr.mxu0 0.0
    %3507 = vmatpush1.msra.mxu0 0.0
    %3508 = vmatprep.subr.mxu0 0.0
    %3509 = vmatpush1.msra.mxu0 0.0
    %3510 = vmatprep.subr.mxu0 0.0
    %3511 = vmatpush1.msra.mxu0 0.0
    %3512 = vmatprep.subr.mxu0 0.0
    %3513 = vmatpush1.msra.mxu0 0.0
    %3514 = vmatprep.subr.mxu0 0.0
    %3515 = vmatpush1.msra.mxu0 0.0
    %3516 = vmatprep.subr.mxu0 0.0
    %3517 = vmatpush1.msra.mxu0 0.0
    %3518 = vmatprep.subr.mxu0 0.0
    %3519 = vmatpush1.msra.mxu0 0.0
    %3520 = vmatprep.subr.mxu0 0.0
    %3521 = vmatpush1.msra.mxu0 0.0
    %3522 = vmatprep.subr.mxu0 0.0
    %3523 = vmatpush1.msra.mxu0 0.0
    %3524 = vmatprep.subr.mxu0 0.0
    %3525 = vmatpush1.msra.mxu0 0.0
    %3526 = vmatprep.mubr.f32.mxu0 0.0
    %3527 = vmatmul.mubr.f32.gmra.mrb[0].mxu0 %v3460
    %v3528 = vpop.f32.mrb[0].mxu0
    %v3529 = vadd.f32 0.0, %v3528
    %v3530 = vpop.f32.mrb[0].mxu0
    %3531 = vdwg.mxu0
    %v3533 = vrot.slane %v3529, 2
    %v3535 = vadd.f32 %v2182, %v3533
    %v3537 = vrot.slane %v3455, 2
    %3538 = vrot.lane.b32.xlu0 %v3537, 32
    %v3539 = vpop.permute.xlu0 %3538
    %v3540 = vsel %vm280, %v3539, 0
    %3542 = vmatprep.subr.mxu0 0.0
    %3543 = vmatpush1.msra.mxu0 %v2190
    %3544 = vmatprep.subr.mxu0 0.0
    %3545 = vmatpush1.msra.mxu0 %v2191
    %3546 = vmatprep.subr.mxu0 0.0
    %3547 = vmatpush1.msra.mxu0 %v2192
    %3548 = vmatprep.subr.mxu0 0.0
    %3549 = vmatpush1.msra.mxu0 %v2193
    %3550 = vmatprep.subr.mxu0 0.0
    %3551 = vmatpush1.msra.mxu0 0.0
    %3552 = vmatprep.subr.mxu0 0.0
    %3553 = vmatpush1.msra.mxu0 0.0
    %3554 = vmatprep.subr.mxu0 0.0
    %3555 = vmatpush1.msra.mxu0 0.0
    %3556 = vmatprep.subr.mxu0 0.0
    %3557 = vmatpush1.msra.mxu0 0.0
    %3558 = vmatprep.subr.mxu0 0.0
    %3559 = vmatpush1.msra.mxu0 0.0
    %3560 = vmatprep.subr.mxu0 0.0
    %3561 = vmatpush1.msra.mxu0 0.0
    %3562 = vmatprep.subr.mxu0 0.0
    %3563 = vmatpush1.msra.mxu0 0.0
    %3564 = vmatprep.subr.mxu0 0.0
    %3565 = vmatpush1.msra.mxu0 0.0
    %3566 = vmatprep.subr.mxu0 0.0
    %3567 = vmatpush1.msra.mxu0 0.0
    %3568 = vmatprep.subr.mxu0 0.0
    %3569 = vmatpush1.msra.mxu0 0.0
    %3570 = vmatprep.subr.mxu0 0.0
    %3571 = vmatpush1.msra.mxu0 0.0
    %3572 = vmatprep.subr.mxu0 0.0
    %3573 = vmatpush1.msra.mxu0 0.0
    %3574 = vmatprep.subr.mxu0 0.0
    %3575 = vmatpush1.msra.mxu0 0.0
    %3576 = vmatprep.subr.mxu0 0.0
    %3577 = vmatpush1.msra.mxu0 0.0
    %3578 = vmatprep.subr.mxu0 0.0
    %3579 = vmatpush1.msra.mxu0 0.0
    %3580 = vmatprep.subr.mxu0 0.0
    %3581 = vmatpush1.msra.mxu0 0.0
    %3582 = vmatprep.subr.mxu0 0.0
    %3583 = vmatpush1.msra.mxu0 0.0
    %3584 = vmatprep.subr.mxu0 0.0
    %3585 = vmatpush1.msra.mxu0 0.0
    %3586 = vmatprep.subr.mxu0 0.0
    %3587 = vmatpush1.msra.mxu0 0.0
    %3588 = vmatprep.subr.mxu0 0.0
    %3589 = vmatpush1.msra.mxu0 0.0
    %3590 = vmatprep.subr.mxu0 0.0
    %3591 = vmatpush1.msra.mxu0 0.0
    %3592 = vmatprep.subr.mxu0 0.0
    %3593 = vmatpush1.msra.mxu0 0.0
    %3594 = vmatprep.subr.mxu0 0.0
    %3595 = vmatpush1.msra.mxu0 0.0
    %3596 = vmatprep.subr.mxu0 0.0
    %3597 = vmatpush1.msra.mxu0 0.0
    %3598 = vmatprep.subr.mxu0 0.0
    %3599 = vmatpush1.msra.mxu0 0.0
    %3600 = vmatprep.subr.mxu0 0.0
    %3601 = vmatpush1.msra.mxu0 0.0
    %3602 = vmatprep.subr.mxu0 0.0
    %3603 = vmatpush1.msra.mxu0 0.0
    %3604 = vmatprep.subr.mxu0 0.0
    %3605 = vmatpush1.msra.mxu0 0.0
    %3606 = vmatprep.mubr.f32.mxu0 0.0
    %3607 = vmatmul.mubr.f32.gmra.mrb[0].mxu0 %v3540
    %v3608 = vpop.f32.mrb[0].mxu0
    %v3609 = vadd.f32 0.0, %v3608
    %v3610 = vpop.f32.mrb[0].mxu0
    %3611 = vdwg.mxu0
    %v3613 = vrot.slane %v3609, 7
    %v3615 = vadd.f32 %v2184, %v3613
    %v3616 = vxor.u32 %v3535, 2147483648
    %v3617 = vmul.f32 %v3616, 1.442695
    %v3618 = vpow.pop %v3617
    %v3619 = vadd.f32 %v3618, 1.0
    %v3620 = vrcp.pop %v3619
    %v3621 = vmul.f32 1.0, %v3620
    %v3622 = vtanh.pop %v3535
    %v3624 = vrot.slane %v3422, 7
    %v3626 = vmul.f32 %v3621, %v3624
    %3628 = vrot.lane.b32.xlu0 %v3622, 64
    %v3629 = vpop.permute.xlu0 %3628
    %v3631 = vmul.f32 %v3621, %v3629
    %3633 = vrot.lane.b32.xlu0 %v3631, 32
    %v3634 = vpop.permute.xlu0 %3633
    %v3636 = vadd.f32 %v3626, %v3634
    %v3637 = vtanh.pop %v3636
    %3639 = vrot.lane.b32.xlu0 %v3637, 64
    %v3640 = vpop.permute.xlu0 %3639
    %v3642 = vmul.f32 %v3621, %v3640
    %v3643 = vxor.u32 %v3615, 2147483648
    %v3644 = vmul.f32 %v3643, 1.442695
    %v3645 = vpow.pop %v3644
    %v3646 = vadd.f32 %v3645, 1.0
    %v3647 = vrcp.pop %v3646
    %v3648 = vmul.f32 1.0, %v3647
    %v3649 = vtanh.pop %v3615
    %v3651 = vrot.slane %v3449, 1
    %v3653 = vmul.f32 %v3648, %v3651
    %3655 = vrot.lane.b32.xlu0 %v3649, 64
    %v3656 = vpop.permute.xlu0 %3655
    %v3658 = vmul.f32 %v3648, %v3656
    %3660 = vrot.lane.b32.xlu0 %v3658, 32
    %v3661 = vpop.permute.xlu0 %3660
    %v3663 = vadd.f32 %v3653, %v3661
    %v3664 = vtanh.pop %v3663
    %3666 = vrot.lane.b32.xlu0 %v3664, 64
    %v3667 = vpop.permute.xlu0 %3666
    %v3669 = vmul.f32 %v3648, %v3667
    %v3671 = vrot.slane %v3642, 6
    %3672 = vrot.lane.b32.xlu0 %v3671, 32
    %v3673 = vpop.permute.xlu0 %3672
    %v3674 = vsel %vm280, %v3673, 0
    %3676 = vmatprep.subr.mxu0 0.0
    %3677 = vmatpush1.msra.mxu0 %v2186
    %3678 = vmatprep.subr.mxu0 0.0
    %3679 = vmatpush1.msra.mxu0 %v2187
    %3680 = vmatprep.subr.mxu0 0.0
    %3681 = vmatpush1.msra.mxu0 %v2188
    %3682 = vmatprep.subr.mxu0 0.0
    %3683 = vmatpush1.msra.mxu0 %v2189
    %3684 = vmatprep.subr.mxu0 0.0
    %3685 = vmatpush1.msra.mxu0 0.0
    %3686 = vmatprep.subr.mxu0 0.0
    %3687 = vmatpush1.msra.mxu0 0.0
    %3688 = vmatprep.subr.mxu0 0.0
    %3689 = vmatpush1.msra.mxu0 0.0
    %3690 = vmatprep.subr.mxu0 0.0
    %3691 = vmatpush1.msra.mxu0 0.0
    %3692 = vmatprep.subr.mxu0 0.0
    %3693 = vmatpush1.msra.mxu0 0.0
    %3694 = vmatprep.subr.mxu0 0.0
    %3695 = vmatpush1.msra.mxu0 0.0
    %3696 = vmatprep.subr.mxu0 0.0
    %3697 = vmatpush1.msra.mxu0 0.0
    %3698 = vmatprep.subr.mxu0 0.0
    %3699 = vmatpush1.msra.mxu0 0.0
    %3700 = vmatprep.subr.mxu0 0.0
    %3701 = vmatpush1.msra.mxu0 0.0
    %3702 = vmatprep.subr.mxu0 0.0
    %3703 = vmatpush1.msra.mxu0 0.0
    %3704 = vmatprep.subr.mxu0 0.0
    %3705 = vmatpush1.msra.mxu0 0.0
    %3706 = vmatprep.subr.mxu0 0.0
    %3707 = vmatpush1.msra.mxu0 0.0
    %3708 = vmatprep.subr.mxu0 0.0
    %3709 = vmatpush1.msra.mxu0 0.0
    %3710 = vmatprep.subr.mxu0 0.0
    %3711 = vmatpush1.msra.mxu0 0.0
    %3712 = vmatprep.subr.mxu0 0.0
    %3713 = vmatpush1.msra.mxu0 0.0
    %3714 = vmatprep.subr.mxu0 0.0
    %3715 = vmatpush1.msra.mxu0 0.0
    %3716 = vmatprep.subr.mxu0 0.0
    %3717 = vmatpush1.msra.mxu0 0.0
    %3718 = vmatprep.subr.mxu0 0.0
    %3719 = vmatpush1.msra.mxu0 0.0
    %3720 = vmatprep.subr.mxu0 0.0
    %3721 = vmatpush1.msra.mxu0 0.0
    %3722 = vmatprep.subr.mxu0 0.0
    %3723 = vmatpush1.msra.mxu0 0.0
    %3724 = vmatprep.subr.mxu0 0.0
    %3725 = vmatpush1.msra.mxu0 0.0
    %3726 = vmatprep.subr.mxu0 0.0
    %3727 = vmatpush1.msra.mxu0 0.0
    %3728 = vmatprep.subr.mxu0 0.0
    %3729 = vmatpush1.msra.mxu0 0.0
    %3730 = vmatprep.subr.mxu0 0.0
    %3731 = vmatpush1.msra.mxu0 0.0
    %3732 = vmatprep.subr.mxu0 0.0
    %3733 = vmatpush1.msra.mxu0 0.0
    %3734 = vmatprep.subr.mxu0 0.0
    %3735 = vmatpush1.msra.mxu0 0.0
    %3736 = vmatprep.subr.mxu0 0.0
    %3737 = vmatpush1.msra.mxu0 0.0
    %3738 = vmatprep.subr.mxu0 0.0
    %3739 = vmatpush1.msra.mxu0 0.0
    %3740 = vmatprep.mubr.f32.mxu0 0.0
    %3741 = vmatmul.mubr.f32.gmra.mrb[0].mxu0 %v3674
    %v3742 = vpop.f32.mrb[0].mxu0
    %v3743 = vadd.f32 0.0, %v3742
    %v3744 = vpop.f32.mrb[0].mxu0
    %3745 = vdwg.mxu0
    %v3747 = vrot.slane %v3743, 1
    %v3749 = vadd.f32 %v2182, %v3747
    %v3751 = vrot.slane %v3669, 1
    %3752 = vrot.lane.b32.xlu0 %v3751, 32
    %v3753 = vpop.permute.xlu0 %3752
    %v3754 = vsel %vm280, %v3753, 0
    %3756 = vmatprep.subr.mxu0 0.0
    %3757 = vmatpush1.msra.mxu0 %v2190
    %3758 = vmatprep.subr.mxu0 0.0
    %3759 = vmatpush1.msra.mxu0 %v2191
    %3760 = vmatprep.subr.mxu0 0.0
    %3761 = vmatpush1.msra.mxu0 %v2192
    %3762 = vmatprep.subr.mxu0 0.0
    %3763 = vmatpush1.msra.mxu0 %v2193
    %3764 = vmatprep.subr.mxu0 0.0
    %3765 = vmatpush1.msra.mxu0 0.0
    %3766 = vmatprep.subr.mxu0 0.0
    %3767 = vmatpush1.msra.mxu0 0.0
    %3768 = vmatprep.subr.mxu0 0.0
    %3769 = vmatpush1.msra.mxu0 0.0
    %3770 = vmatprep.subr.mxu0 0.0
    %3771 = vmatpush1.msra.mxu0 0.0
    %3772 = vmatprep.subr.mxu0 0.0
    %3773 = vmatpush1.msra.mxu0 0.0
    %3774 = vmatprep.subr.mxu0 0.0
    %3775 = vmatpush1.msra.mxu0 0.0
    %3776 = vmatprep.subr.mxu0 0.0
    %3777 = vmatpush1.msra.mxu0 0.0
    %3778 = vmatprep.subr.mxu0 0.0
    %3779 = vmatpush1.msra.mxu0 0.0
    %3780 = vmatprep.subr.mxu0 0.0
    %3781 = vmatpush1.msra.mxu0 0.0
    %3782 = vmatprep.subr.mxu0 0.0
    %3783 = vmatpush1.msra.mxu0 0.0
    %3784 = vmatprep.subr.mxu0 0.0
    %3785 = vmatpush1.msra.mxu0 0.0
    %3786 = vmatprep.subr.mxu0 0.0
    %3787 = vmatpush1.msra.mxu0 0.0
    %3788 = vmatprep.subr.mxu0 0.0
    %3789 = vmatpush1.msra.mxu0 0.0
    %3790 = vmatprep.subr.mxu0 0.0
    %3791 = vmatpush1.msra.mxu0 0.0
    %3792 = vmatprep.subr.mxu0 0.0
    %3793 = vmatpush1.msra.mxu0 0.0
    %3794 = vmatprep.subr.mxu0 0.0
    %3795 = vmatpush1.msra.mxu0 0.0
    %3796 = vmatprep.subr.mxu0 0.0
    %3797 = vmatpush1.msra.mxu0 0.0
    %3798 = vmatprep.subr.mxu0 0.0
    %3799 = vmatpush1.msra.mxu0 0.0
    %3800 = vmatprep.subr.mxu0 0.0
    %3801 = vmatpush1.msra.mxu0 0.0
    %3802 = vmatprep.subr.mxu0 0.0
    %3803 = vmatpush1.msra.mxu0 0.0
    %3804 = vmatprep.subr.mxu0 0.0
    %3805 = vmatpush1.msra.mxu0 0.0
    %3806 = vmatprep.subr.mxu0 0.0
    %3807 = vmatpush1.msra.mxu0 0.0
    %3808 = vmatprep.subr.mxu0 0.0
    %3809 = vmatpush1.msra.mxu0 0.0
    %3810 = vmatprep.subr.mxu0 0.0
    %3811 = vmatpush1.msra.mxu0 0.0
    %3812 = vmatprep.subr.mxu0 0.0
    %3813 = vmatpush1.msra.mxu0 0.0
    %3814 = vmatprep.subr.mxu0 0.0
    %3815 = vmatpush1.msra.mxu0 0.0
    %3816 = vmatprep.subr.mxu0 0.0
    %3817 = vmatpush1.msra.mxu0 0.0
    %3818 = vmatprep.subr.mxu0 0.0
    %3819 = vmatpush1.msra.mxu0 0.0
    %3820 = vmatprep.mubr.f32.mxu0 0.0
    %3821 = vmatmul.mubr.f32.gmra.mrb[0].mxu0 %v3754
    %v3822 = vpop.f32.mrb[0].mxu0
    %v3823 = vadd.f32 0.0, %v3822
    %v3824 = vpop.f32.mrb[0].mxu0
    %3825 = vdwg.mxu0
    %v3826 = vadd.f32 %v2184, %v3823
    %v3827 = vxor.u32 %v3749, 2147483648
    %v3828 = vmul.f32 %v3827, 1.442695
    %v3829 = vpow.pop %v3828
    %v3830 = vadd.f32 %v3829, 1.0
    %v3831 = vrcp.pop %v3830
    %v3832 = vmul.f32 1.0, %v3831
    %v3833 = vtanh.pop %v3749
    %v3835 = vrot.slane %v3636, 7
    %v3837 = vmul.f32 %v3832, %v3835
    %3839 = vrot.lane.b32.xlu0 %v3833, 64
    %v3840 = vpop.permute.xlu0 %3839
    %v3842 = vmul.f32 %v3832, %v3840
    %3844 = vrot.lane.b32.xlu0 %v3842, 32
    %v3845 = vpop.permute.xlu0 %3844
    %v3847 = vadd.f32 %v3837, %v3845
    %v3848 = vtanh.pop %v3847
    %3850 = vrot.lane.b32.xlu0 %v3848, 64
    %v3851 = vpop.permute.xlu0 %3850
    %v3853 = vmul.f32 %v3832, %v3851
    %v3854 = vxor.u32 %v3826, 2147483648
    %v3855 = vmul.f32 %v3854, 1.442695
    %v3856 = vpow.pop %v3855
    %v3857 = vadd.f32 %v3856, 1.0
    %v3858 = vrcp.pop %v3857
    %v3859 = vmul.f32 1.0, %v3858
    %v3860 = vtanh.pop %v3826
    %v3862 = vrot.slane %v3663, 1
    %v3864 = vmul.f32 %v3859, %v3862
    %3866 = vrot.lane.b32.xlu0 %v3860, 64
    %v3867 = vpop.permute.xlu0 %3866
    %v3869 = vmul.f32 %v3859, %v3867
    %3871 = vrot.lane.b32.xlu0 %v3869, 32
    %v3872 = vpop.permute.xlu0 %3871
    %v3874 = vadd.f32 %v3864, %v3872
    %v3875 = vtanh.pop %v3874
    %3877 = vrot.lane.b32.xlu0 %v3875, 64
    %v3878 = vpop.permute.xlu0 %3877
    %v3880 = vmul.f32 %v3859, %v3878
    %v3881 = vsel %vm2053, %v2362, %v2572
    %v3882 = vsel %vm2055, %v3881, %v2786
    %v3883 = vsel %vm2057, %v3882, %v3000
    %v3884 = vsel %vm2059, %v3883, %v3214
    %v3885 = vsel %vm2061, %v3884, %v3428
    %v3886 = vsel %vm2063, %v3885, %v3642
    %v3887 = vsel %vm2065, %v3886, %v3853
    %v3888 = vsel %vm2053, %v3880, %v3669
    %v3889 = vsel %vm2055, %v3888, %v3455
    %v3890 = vsel %vm2057, %v3889, %v3241
    %v3891 = vsel %vm2059, %v3890, %v3027
    %v3892 = vsel %vm2061, %v3891, %v2813
    %v3893 = vsel %vm2063, %v3892, %v2599
    %v3894 = vsel %vm2065, %v3893, %v2386
    %3896 = vrot.lane.b32.xlu0 %v3887, 32
    %v3897 = vpop.permute.xlu0 %3896
    %3900 = vrot.lane.b32.xlu0 %v3894, 64
    %v3901 = vpop.permute.xlu0 %3900
    %v3903 = vsel %vm280, %v3897, %v3901
    %v3904 = vld [vmem:[#allocation13] sm:$0xff]
    %v3905 = vld [vmem:[#allocation13 + $0x8] sm:$0xff]
    %v3906 = vld [vmem:[#allocation13 + $0x10] sm:$0xff]
    %v3907 = vld [vmem:[#allocation13 + $0x18] sm:$0xff]
    %v3908 = vld [vmem:[#allocation13 + $0x20] sm:$0xff]
    %v3909 = vld [vmem:[#allocation13 + $0x28] sm:$0xff]
    %v3910 = vld [vmem:[#allocation13 + $0x30] sm:$0xff]
    %v3911 = vld [vmem:[#allocation13 + $0x38] sm:$0xff]
    %v3912 = vld [vmem:[#allocation13 + $0x40] sm:$0xff]
    %v3913 = vld [vmem:[#allocation13 + $0x48] sm:$0xff]
    %v3914 = vld [vmem:[#allocation13 + $0x50] sm:$0xff]
    %v3915 = vld [vmem:[#allocation13 + $0x58] sm:$0xff]
    %v3916 = vld [vmem:[#allocation13 + $0x60] sm:$0xff]
    %v3917 = vld [vmem:[#allocation13 + $0x68] sm:$0xff]
    %v3918 = vld [vmem:[#allocation13 + $0x70] sm:$0xff]
    %v3919 = vld [vmem:[#allocation13 + $0x78] sm:$0xff]
    %v3920 = vld [vmem:[%s16] sm:$0x3]
    %v3922 = vlaneseq
    %v3923 = vshrl.u32 %v3922, 7
    %v3924 = vsub.s32 0, %v3923
    %v3925 = vrot.slane %v3920, %v3924
    %v3926 = vlaneseq
    %v3927 = vshrl.u32 %v3926, 7
    %v3928 = vsub.s32 1, %v3927
    %v3929 = vrot.slane %v3920, %v3928
    %v3933 = vsel %vm2111, %v3903, 0
    %3935 = vmatprep.subr.mxu0 %v3905
    %3936 = vmatpush1.msra.mxu0 %v3904
    %3937 = vmatprep.subr.mxu0 %v3907
    %3938 = vmatpush1.msra.mxu0 %v3906
    %3939 = vmatprep.subr.mxu0 %v3909
    %3940 = vmatpush1.msra.mxu0 %v3908
    %3941 = vmatprep.subr.mxu0 %v3911
    %3942 = vmatpush1.msra.mxu0 %v3910
    %3943 = vmatprep.subr.mxu0 %v3913
    %3944 = vmatpush1.msra.mxu0 %v3912
    %3945 = vmatprep.subr.mxu0 %v3915
    %3946 = vmatpush1.msra.mxu0 %v3914
    %3947 = vmatprep.subr.mxu0 %v3917
    %3948 = vmatpush1.msra.mxu0 %v3916
    %3949 = vmatprep.subr.mxu0 %v3919
    %3950 = vmatpush1.msra.mxu0 %v3918
    %3951 = vmatprep.subr.mxu0 0.0
    %3952 = vmatpush1.msra.mxu0 0.0
    %3953 = vmatprep.subr.mxu0 0.0
    %3954 = vmatpush1.msra.mxu0 0.0
    %3955 = vmatprep.subr.mxu0 0.0
    %3956 = vmatpush1.msra.mxu0 0.0
    %3957 = vmatprep.subr.mxu0 0.0
    %3958 = vmatpush1.msra.mxu0 0.0
    %3959 = vmatprep.subr.mxu0 0.0
    %3960 = vmatpush1.msra.mxu0 0.0
    %3961 = vmatprep.subr.mxu0 0.0
    %3962 = vmatpush1.msra.mxu0 0.0
    %3963 = vmatprep.subr.mxu0 0.0
    %3964 = vmatpush1.msra.mxu0 0.0
    %3965 = vmatprep.subr.mxu0 0.0
    %3966 = vmatpush1.msra.mxu0 0.0
    %3967 = vmatprep.subr.mxu0 0.0
    %3968 = vmatpush1.msra.mxu0 0.0
    %3969 = vmatprep.subr.mxu0 0.0
    %3970 = vmatpush1.msra.mxu0 0.0
    %3971 = vmatprep.subr.mxu0 0.0
    %3972 = vmatpush1.msra.mxu0 0.0
    %3973 = vmatprep.subr.mxu0 0.0
    %3974 = vmatpush1.msra.mxu0 0.0
    %3975 = vmatprep.subr.mxu0 0.0
    %3976 = vmatpush1.msra.mxu0 0.0
    %3977 = vmatprep.subr.mxu0 0.0
    %3978 = vmatpush1.msra.mxu0 0.0
    %3979 = vmatprep.subr.mxu0 0.0
    %3980 = vmatpush1.msra.mxu0 0.0
    %3981 = vmatprep.subr.mxu0 0.0
    %3982 = vmatpush1.msra.mxu0 0.0
    %3983 = vmatprep.subr.mxu0 0.0
    %3984 = vmatpush1.msra.mxu0 0.0
    %3985 = vmatprep.subr.mxu0 0.0
    %3986 = vmatpush1.msra.mxu0 0.0
    %3987 = vmatprep.subr.mxu0 0.0
    %3988 = vmatpush1.msra.mxu0 0.0
    %3989 = vmatprep.subr.mxu0 0.0
    %3990 = vmatpush1.msra.mxu0 0.0
    %3991 = vmatprep.subr.mxu0 0.0
    %3992 = vmatpush1.msra.mxu0 0.0
    %3993 = vmatprep.subr.mxu0 0.0
    %3994 = vmatpush1.msra.mxu0 0.0
    %3995 = vmatprep.subr.mxu0 0.0
    %3996 = vmatpush1.msra.mxu0 0.0
    %3997 = vmatprep.subr.mxu0 0.0
    %3998 = vmatpush1.msra.mxu0 0.0
    %3999 = vmatprep.mubr.f32.mxu0 0.0
    %4000 = vmatmul.mubr.f32.gmra.mrb[0].mxu0 %v3933
    %v4001 = vpop.f32.mrb[0].mxu0
    %v4002 = vadd.f32 %v3925, %v4001
    %v4003 = vpop.f32.mrb[0].mxu0
    %v4004 = vadd.f32 %v3929, %v4003
    %4005 = vdwg.mxu0
    %v4006 = vld [vmem:[#allocation14] sm:$0xff]
    %v4007 = vld [vmem:[#allocation14 + $0x8] sm:$0xff]
    %v4008 = vld [vmem:[#allocation14 + $0x10] sm:$0xff]
    %v4009 = vld [vmem:[#allocation14 + $0x18] sm:$0xff]
    %v4010 = vld [vmem:[#allocation16] sm:$0xff]
    %v4011 = vld [vmem:[#allocation16 + $0x8] sm:$0xff]
    %v4012 = vld [vmem:[#allocation16 + $0x10] sm:$0xff]
    %v4013 = vld [vmem:[#allocation16 + $0x18] sm:$0xff]
    %4014 = vmatprep.subr.mxu0 0.0
    %4015 = vmatpush1.msra.mxu0 %v4006
    %4016 = vmatprep.subr.mxu0 0.0
    %4017 = vmatpush1.msra.mxu0 %v4007
    %4018 = vmatprep.subr.mxu0 0.0
    %4019 = vmatpush1.msra.mxu0 %v4008
    %4020 = vmatprep.subr.mxu0 0.0
    %4021 = vmatpush1.msra.mxu0 %v4009
    %4022 = vmatprep.subr.mxu0 0.0
    %4023 = vmatpush1.msra.mxu0 0.0
    %4024 = vmatprep.subr.mxu0 0.0
    %4025 = vmatpush1.msra.mxu0 0.0
    %4026 = vmatprep.subr.mxu0 0.0
    %4027 = vmatpush1.msra.mxu0 0.0
    %4028 = vmatprep.subr.mxu0 0.0
    %4029 = vmatpush1.msra.mxu0 0.0
    %4030 = vmatprep.subr.mxu0 0.0
    %4031 = vmatpush1.msra.mxu0 0.0
    %4032 = vmatprep.subr.mxu0 0.0
    %4033 = vmatpush1.msra.mxu0 0.0
    %4034 = vmatprep.subr.mxu0 0.0
    %4035 = vmatpush1.msra.mxu0 0.0
    %4036 = vmatprep.subr.mxu0 0.0
    %4037 = vmatpush1.msra.mxu0 0.0
    %4038 = vmatprep.subr.mxu0 0.0
    %4039 = vmatpush1.msra.mxu0 0.0
    %4040 = vmatprep.subr.mxu0 0.0
    %4041 = vmatpush1.msra.mxu0 0.0
    %4042 = vmatprep.subr.mxu0 0.0
    %4043 = vmatpush1.msra.mxu0 0.0
    %4044 = vmatprep.subr.mxu0 0.0
    %4045 = vmatpush1.msra.mxu0 0.0
    %4046 = vmatprep.subr.mxu0 0.0
    %4047 = vmatpush1.msra.mxu0 0.0
    %4048 = vmatprep.subr.mxu0 0.0
    %4049 = vmatpush1.msra.mxu0 0.0
    %4050 = vmatprep.subr.mxu0 0.0
    %4051 = vmatpush1.msra.mxu0 0.0
    %4052 = vmatprep.subr.mxu0 0.0
    %4053 = vmatpush1.msra.mxu0 0.0
    %4054 = vmatprep.subr.mxu0 0.0
    %4055 = vmatpush1.msra.mxu0 0.0
    %4056 = vmatprep.subr.mxu0 0.0
    %4057 = vmatpush1.msra.mxu0 0.0
    %4058 = vmatprep.subr.mxu0 0.0
    %4059 = vmatpush1.msra.mxu0 0.0
    %4060 = vmatprep.subr.mxu0 0.0
    %4061 = vmatpush1.msra.mxu0 0.0
    %4062 = vmatprep.subr.mxu0 0.0
    %4063 = vmatpush1.msra.mxu0 0.0
    %4064 = vmatprep.subr.mxu0 0.0
    %4065 = vmatpush1.msra.mxu0 0.0
    %4066 = vmatprep.subr.mxu0 0.0
    %4067 = vmatpush1.msra.mxu0 0.0
    %4068 = vmatprep.subr.mxu0 0.0
    %4069 = vmatpush1.msra.mxu0 0.0
    %4070 = vmatprep.subr.mxu0 0.0
    %4071 = vmatpush1.msra.mxu0 0.0
    %4072 = vmatprep.subr.mxu0 0.0
    %4073 = vmatpush1.msra.mxu0 0.0
    %4074 = vmatprep.subr.mxu0 0.0
    %4075 = vmatpush1.msra.mxu0 0.0
    %4076 = vmatprep.subr.mxu0 0.0
    %4077 = vmatpush1.msra.mxu0 0.0
    %4078 = vmatprep.mubr.f32.mxu0 0.0
    %4079 = vmatmul.mubr.f32.gmra.mrb[0].mxu0 %v364
    %v4080 = vpop.f32.mrb[0].mxu0
    %v4081 = vadd.f32 0.0, %v4080
    %v4082 = vpop.f32.mrb[0].mxu0
    %4083 = vdwg.mxu0
    %v4084 = vadd.f32 %v4002, %v4081
    %4085 = vmatprep.subr.mxu0 0.0
    %4086 = vmatpush1.msra.mxu0 %v4010
    %4087 = vmatprep.subr.mxu0 0.0
    %4088 = vmatpush1.msra.mxu0 %v4011
    %4089 = vmatprep.subr.mxu0 0.0
    %4090 = vmatpush1.msra.mxu0 %v4012
    %4091 = vmatprep.subr.mxu0 0.0
    %4092 = vmatpush1.msra.mxu0 %v4013
    %4093 = vmatprep.subr.mxu0 0.0
    %4094 = vmatpush1.msra.mxu0 0.0
    %4095 = vmatprep.subr.mxu0 0.0
    %4096 = vmatpush1.msra.mxu0 0.0
    %4097 = vmatprep.subr.mxu0 0.0
    %4098 = vmatpush1.msra.mxu0 0.0
    %4099 = vmatprep.subr.mxu0 0.0
    %4100 = vmatpush1.msra.mxu0 0.0
    %4101 = vmatprep.subr.mxu0 0.0
    %4102 = vmatpush1.msra.mxu0 0.0
    %4103 = vmatprep.subr.mxu0 0.0
    %4104 = vmatpush1.msra.mxu0 0.0
    %4105 = vmatprep.subr.mxu0 0.0
    %4106 = vmatpush1.msra.mxu0 0.0
    %4107 = vmatprep.subr.mxu0 0.0
    %4108 = vmatpush1.msra.mxu0 0.0
    %4109 = vmatprep.subr.mxu0 0.0
    %4110 = vmatpush1.msra.mxu0 0.0
    %4111 = vmatprep.subr.mxu0 0.0
    %4112 = vmatpush1.msra.mxu0 0.0
    %4113 = vmatprep.subr.mxu0 0.0
    %4114 = vmatpush1.msra.mxu0 0.0
    %4115 = vmatprep.subr.mxu0 0.0
    %4116 = vmatpush1.msra.mxu0 0.0
    %4117 = vmatprep.subr.mxu0 0.0
    %4118 = vmatpush1.msra.mxu0 0.0
    %4119 = vmatprep.subr.mxu0 0.0
    %4120 = vmatpush1.msra.mxu0 0.0
    %4121 = vmatprep.subr.mxu0 0.0
    %4122 = vmatpush1.msra.mxu0 0.0
    %4123 = vmatprep.subr.mxu0 0.0
    %4124 = vmatpush1.msra.mxu0 0.0
    %4125 = vmatprep.subr.mxu0 0.0
    %4126 = vmatpush1.msra.mxu0 0.0
    %4127 = vmatprep.subr.mxu0 0.0
    %4128 = vmatpush1.msra.mxu0 0.0
    %4129 = vmatprep.subr.mxu0 0.0
    %4130 = vmatpush1.msra.mxu0 0.0
    %4131 = vmatprep.subr.mxu0 0.0
    %4132 = vmatpush1.msra.mxu0 0.0
    %4133 = vmatprep.subr.mxu0 0.0
    %4134 = vmatpush1.msra.mxu0 0.0
    %4135 = vmatprep.subr.mxu0 0.0
    %4136 = vmatpush1.msra.mxu0 0.0
    %4137 = vmatprep.subr.mxu0 0.0
    %4138 = vmatpush1.msra.mxu0 0.0
    %4139 = vmatprep.subr.mxu0 0.0
    %4140 = vmatpush1.msra.mxu0 0.0
    %4141 = vmatprep.subr.mxu0 0.0
    %4142 = vmatpush1.msra.mxu0 0.0
    %4143 = vmatprep.subr.mxu0 0.0
    %4144 = vmatpush1.msra.mxu0 0.0
    %4145 = vmatprep.subr.mxu0 0.0
    %4146 = vmatpush1.msra.mxu0 0.0
    %4147 = vmatprep.subr.mxu0 0.0
    %4148 = vmatpush1.msra.mxu0 0.0
    %4149 = vmatprep.mubr.f32.mxu0 0.0
    %4150 = vmatmul.mubr.f32.gmra.mrb[0].mxu0 %v364
    %v4151 = vpop.f32.mrb[0].mxu0
    %v4152 = vadd.f32 0.0, %v4151
    %v4153 = vpop.f32.mrb[0].mxu0
    %4154 = vdwg.mxu0
    %v4156 = vrot.slane %v4152, 1
    %v4158 = vadd.f32 %v4004, %v4156
    %v4159 = vxor.u32 %v4084, 2147483648
    %v4160 = vmul.f32 %v4159, 1.442695
    %v4161 = vpow.pop %v4160
    %v4162 = vadd.f32 %v4161, 1.0
    %v4163 = vrcp.pop %v4162
    %v4164 = vmul.f32 1.0, %v4163
    %v4165 = vtanh.pop %v4084
    %v4166 = vmul.f32 %v4164, 0.0
    %4168 = vrot.lane.b32.xlu0 %v4165, 64
    %v4169 = vpop.permute.xlu0 %4168
    %v4171 = vmul.f32 %v4164, %v4169
    %4173 = vrot.lane.b32.xlu0 %v4171, 32
    %v4174 = vpop.permute.xlu0 %4173
    %v4176 = vadd.f32 %v4166, %v4174
    %v4177 = vtanh.pop %v4176
    %4179 = vrot.lane.b32.xlu0 %v4177, 64
    %v4180 = vpop.permute.xlu0 %4179
    %v4182 = vmul.f32 %v4164, %v4180
    %v4183 = vxor.u32 %v4158, 2147483648
    %v4184 = vmul.f32 %v4183, 1.442695
    %v4185 = vpow.pop %v4184
    %v4186 = vadd.f32 %v4185, 1.0
    %v4187 = vrcp.pop %v4186
    %v4188 = vmul.f32 1.0, %v4187
    %v4189 = vtanh.pop %v4158
    %v4190 = vmul.f32 %v4188, 0.0
    %4192 = vrot.lane.b32.xlu0 %v4189, 64
    %v4193 = vpop.permute.xlu0 %4192
    %v4195 = vmul.f32 %v4188, %v4193
    %4197 = vrot.lane.b32.xlu0 %v4195, 32
    %v4198 = vpop.permute.xlu0 %4197
    %v4200 = vadd.f32 %v4190, %v4198
    %v4201 = vtanh.pop %v4200
    %4203 = vrot.lane.b32.xlu0 %v4201, 64
    %v4204 = vpop.permute.xlu0 %4203
    %v4206 = vmul.f32 %v4188, %v4204
    %4208 = vrot.lane.b32.xlu0 %v4182, 32
    %v4209 = vpop.permute.xlu0 %4208
    %v4210 = vsel %vm280, %v4209, 0
    %4212 = vmatprep.subr.mxu0 0.0
    %4213 = vmatpush1.msra.mxu0 %v4006
    %4214 = vmatprep.subr.mxu0 0.0
    %4215 = vmatpush1.msra.mxu0 %v4007
    %4216 = vmatprep.subr.mxu0 0.0
    %4217 = vmatpush1.msra.mxu0 %v4008
    %4218 = vmatprep.subr.mxu0 0.0
    %4219 = vmatpush1.msra.mxu0 %v4009
    %4220 = vmatprep.subr.mxu0 0.0
    %4221 = vmatpush1.msra.mxu0 0.0
    %4222 = vmatprep.subr.mxu0 0.0
    %4223 = vmatpush1.msra.mxu0 0.0
    %4224 = vmatprep.subr.mxu0 0.0
    %4225 = vmatpush1.msra.mxu0 0.0
    %4226 = vmatprep.subr.mxu0 0.0
    %4227 = vmatpush1.msra.mxu0 0.0
    %4228 = vmatprep.subr.mxu0 0.0
    %4229 = vmatpush1.msra.mxu0 0.0
    %4230 = vmatprep.subr.mxu0 0.0
    %4231 = vmatpush1.msra.mxu0 0.0
    %4232 = vmatprep.subr.mxu0 0.0
    %4233 = vmatpush1.msra.mxu0 0.0
    %4234 = vmatprep.subr.mxu0 0.0
    %4235 = vmatpush1.msra.mxu0 0.0
    %4236 = vmatprep.subr.mxu0 0.0
    %4237 = vmatpush1.msra.mxu0 0.0
    %4238 = vmatprep.subr.mxu0 0.0
    %4239 = vmatpush1.msra.mxu0 0.0
    %4240 = vmatprep.subr.mxu0 0.0
    %4241 = vmatpush1.msra.mxu0 0.0
    %4242 = vmatprep.subr.mxu0 0.0
    %4243 = vmatpush1.msra.mxu0 0.0
    %4244 = vmatprep.subr.mxu0 0.0
    %4245 = vmatpush1.msra.mxu0 0.0
    %4246 = vmatprep.subr.mxu0 0.0
    %4247 = vmatpush1.msra.mxu0 0.0
    %4248 = vmatprep.subr.mxu0 0.0
    %4249 = vmatpush1.msra.mxu0 0.0
    %4250 = vmatprep.subr.mxu0 0.0
    %4251 = vmatpush1.msra.mxu0 0.0
    %4252 = vmatprep.subr.mxu0 0.0
    %4253 = vmatpush1.msra.mxu0 0.0
    %4254 = vmatprep.subr.mxu0 0.0
    %4255 = vmatpush1.msra.mxu0 0.0
    %4256 = vmatprep.subr.mxu0 0.0
    %4257 = vmatpush1.msra.mxu0 0.0
    %4258 = vmatprep.subr.mxu0 0.0
    %4259 = vmatpush1.msra.mxu0 0.0
    %4260 = vmatprep.subr.mxu0 0.0
    %4261 = vmatpush1.msra.mxu0 0.0
    %4262 = vmatprep.subr.mxu0 0.0
    %4263 = vmatpush1.msra.mxu0 0.0
    %4264 = vmatprep.subr.mxu0 0.0
    %4265 = vmatpush1.msra.mxu0 0.0
    %4266 = vmatprep.subr.mxu0 0.0
    %4267 = vmatpush1.msra.mxu0 0.0
    %4268 = vmatprep.subr.mxu0 0.0
    %4269 = vmatpush1.msra.mxu0 0.0
    %4270 = vmatprep.subr.mxu0 0.0
    %4271 = vmatpush1.msra.mxu0 0.0
    %4272 = vmatprep.subr.mxu0 0.0
    %4273 = vmatpush1.msra.mxu0 0.0
    %4274 = vmatprep.subr.mxu0 0.0
    %4275 = vmatpush1.msra.mxu0 0.0
    %4276 = vmatprep.mubr.f32.mxu0 0.0
    %4277 = vmatmul.mubr.f32.gmra.mrb[0].mxu0 %v4210
    %v4278 = vpop.f32.mrb[0].mxu0
    %v4279 = vadd.f32 0.0, %v4278
    %v4280 = vpop.f32.mrb[0].mxu0
    %4281 = vdwg.mxu0
    %v4283 = vrot.slane %v4279, 7
    %v4285 = vadd.f32 %v4002, %v4283
    %v4287 = vrot.slane %v4206, 7
    %4288 = vrot.lane.b32.xlu0 %v4287, 32
    %v4289 = vpop.permute.xlu0 %4288
    %v4290 = vsel %vm280, %v4289, 0
    %4292 = vmatprep.subr.mxu0 0.0
    %4293 = vmatpush1.msra.mxu0 %v4010
    %4294 = vmatprep.subr.mxu0 0.0
    %4295 = vmatpush1.msra.mxu0 %v4011
    %4296 = vmatprep.subr.mxu0 0.0
    %4297 = vmatpush1.msra.mxu0 %v4012
    %4298 = vmatprep.subr.mxu0 0.0
    %4299 = vmatpush1.msra.mxu0 %v4013
    %4300 = vmatprep.subr.mxu0 0.0
    %4301 = vmatpush1.msra.mxu0 0.0
    %4302 = vmatprep.subr.mxu0 0.0
    %4303 = vmatpush1.msra.mxu0 0.0
    %4304 = vmatprep.subr.mxu0 0.0
    %4305 = vmatpush1.msra.mxu0 0.0
    %4306 = vmatprep.subr.mxu0 0.0
    %4307 = vmatpush1.msra.mxu0 0.0
    %4308 = vmatprep.subr.mxu0 0.0
    %4309 = vmatpush1.msra.mxu0 0.0
    %4310 = vmatprep.subr.mxu0 0.0
    %4311 = vmatpush1.msra.mxu0 0.0
    %4312 = vmatprep.subr.mxu0 0.0
    %4313 = vmatpush1.msra.mxu0 0.0
    %4314 = vmatprep.subr.mxu0 0.0
    %4315 = vmatpush1.msra.mxu0 0.0
    %4316 = vmatprep.subr.mxu0 0.0
    %4317 = vmatpush1.msra.mxu0 0.0
    %4318 = vmatprep.subr.mxu0 0.0
    %4319 = vmatpush1.msra.mxu0 0.0
    %4320 = vmatprep.subr.mxu0 0.0
    %4321 = vmatpush1.msra.mxu0 0.0
    %4322 = vmatprep.subr.mxu0 0.0
    %4323 = vmatpush1.msra.mxu0 0.0
    %4324 = vmatprep.subr.mxu0 0.0
    %4325 = vmatpush1.msra.mxu0 0.0
    %4326 = vmatprep.subr.mxu0 0.0
    %4327 = vmatpush1.msra.mxu0 0.0
    %4328 = vmatprep.subr.mxu0 0.0
    %4329 = vmatpush1.msra.mxu0 0.0
    %4330 = vmatprep.subr.mxu0 0.0
    %4331 = vmatpush1.msra.mxu0 0.0
    %4332 = vmatprep.subr.mxu0 0.0
    %4333 = vmatpush1.msra.mxu0 0.0
    %4334 = vmatprep.subr.mxu0 0.0
    %4335 = vmatpush1.msra.mxu0 0.0
    %4336 = vmatprep.subr.mxu0 0.0
    %4337 = vmatpush1.msra.mxu0 0.0
    %4338 = vmatprep.subr.mxu0 0.0
    %4339 = vmatpush1.msra.mxu0 0.0
    %4340 = vmatprep.subr.mxu0 0.0
    %4341 = vmatpush1.msra.mxu0 0.0
    %4342 = vmatprep.subr.mxu0 0.0
    %4343 = vmatpush1.msra.mxu0 0.0
    %4344 = vmatprep.subr.mxu0 0.0
    %4345 = vmatpush1.msra.mxu0 0.0
    %4346 = vmatprep.subr.mxu0 0.0
    %4347 = vmatpush1.msra.mxu0 0.0
    %4348 = vmatprep.subr.mxu0 0.0
    %4349 = vmatpush1.msra.mxu0 0.0
    %4350 = vmatprep.subr.mxu0 0.0
    %4351 = vmatpush1.msra.mxu0 0.0
    %4352 = vmatprep.subr.mxu0 0.0
    %4353 = vmatpush1.msra.mxu0 0.0
    %4354 = vmatprep.subr.mxu0 0.0
    %4355 = vmatpush1.msra.mxu0 0.0
    %4356 = vmatprep.mubr.f32.mxu0 0.0
    %4357 = vmatmul.mubr.f32.gmra.mrb[0].mxu0 %v4290
    %v4358 = vpop.f32.mrb[0].mxu0
    %v4359 = vadd.f32 0.0, %v4358
    %v4360 = vpop.f32.mrb[0].mxu0
    %4361 = vdwg.mxu0
    %v4363 = vrot.slane %v4359, 2
    %v4365 = vadd.f32 %v4004, %v4363
    %v4366 = vxor.u32 %v4285, 2147483648
    %v4367 = vmul.f32 %v4366, 1.442695
    %v4368 = vpow.pop %v4367
    %v4369 = vadd.f32 %v4368, 1.0
    %v4370 = vrcp.pop %v4369
    %v4371 = vmul.f32 1.0, %v4370
    %v4372 = vtanh.pop %v4285
    %v4374 = vrot.slane %v4176, 7
    %v4376 = vmul.f32 %v4371, %v4374
    %4378 = vrot.lane.b32.xlu0 %v4372, 64
    %v4379 = vpop.permute.xlu0 %4378
    %v4381 = vmul.f32 %v4371, %v4379
    %4383 = vrot.lane.b32.xlu0 %v4381, 32
    %v4384 = vpop.permute.xlu0 %4383
    %v4386 = vadd.f32 %v4376, %v4384
    %v4387 = vtanh.pop %v4386
    %4389 = vrot.lane.b32.xlu0 %v4387, 64
    %v4390 = vpop.permute.xlu0 %4389
    %v4392 = vmul.f32 %v4371, %v4390
    %v4393 = vxor.u32 %v4365, 2147483648
    %v4394 = vmul.f32 %v4393, 1.442695
    %v4395 = vpow.pop %v4394
    %v4396 = vadd.f32 %v4395, 1.0
    %v4397 = vrcp.pop %v4396
    %v4398 = vmul.f32 1.0, %v4397
    %v4399 = vtanh.pop %v4365
    %v4401 = vrot.slane %v4200, 1
    %v4403 = vmul.f32 %v4398, %v4401
    %4405 = vrot.lane.b32.xlu0 %v4399, 64
    %v4406 = vpop.permute.xlu0 %4405
    %v4408 = vmul.f32 %v4398, %v4406
    %4410 = vrot.lane.b32.xlu0 %v4408, 32
    %v4411 = vpop.permute.xlu0 %4410
    %v4413 = vadd.f32 %v4403, %v4411
    %v4414 = vtanh.pop %v4413
    %4416 = vrot.lane.b32.xlu0 %v4414, 64
    %v4417 = vpop.permute.xlu0 %4416
    %v4419 = vmul.f32 %v4398, %v4417
    %v4421 = vrot.slane %v4392, 1
    %4422 = vrot.lane.b32.xlu0 %v4421, 32
    %v4423 = vpop.permute.xlu0 %4422
    %v4424 = vsel %vm280, %v4423, 0
    %4426 = vmatprep.subr.mxu0 0.0
    %4427 = vmatpush1.msra.mxu0 %v4006
    %4428 = vmatprep.subr.mxu0 0.0
    %4429 = vmatpush1.msra.mxu0 %v4007
    %4430 = vmatprep.subr.mxu0 0.0
    %4431 = vmatpush1.msra.mxu0 %v4008
    %4432 = vmatprep.subr.mxu0 0.0
    %4433 = vmatpush1.msra.mxu0 %v4009
    %4434 = vmatprep.subr.mxu0 0.0
    %4435 = vmatpush1.msra.mxu0 0.0
    %4436 = vmatprep.subr.mxu0 0.0
    %4437 = vmatpush1.msra.mxu0 0.0
    %4438 = vmatprep.subr.mxu0 0.0
    %4439 = vmatpush1.msra.mxu0 0.0
    %4440 = vmatprep.subr.mxu0 0.0
    %4441 = vmatpush1.msra.mxu0 0.0
    %4442 = vmatprep.subr.mxu0 0.0
    %4443 = vmatpush1.msra.mxu0 0.0
    %4444 = vmatprep.subr.mxu0 0.0
    %4445 = vmatpush1.msra.mxu0 0.0
    %4446 = vmatprep.subr.mxu0 0.0
    %4447 = vmatpush1.msra.mxu0 0.0
    %4448 = vmatprep.subr.mxu0 0.0
    %4449 = vmatpush1.msra.mxu0 0.0
    %4450 = vmatprep.subr.mxu0 0.0
    %4451 = vmatpush1.msra.mxu0 0.0
    %4452 = vmatprep.subr.mxu0 0.0
    %4453 = vmatpush1.msra.mxu0 0.0
    %4454 = vmatprep.subr.mxu0 0.0
    %4455 = vmatpush1.msra.mxu0 0.0
    %4456 = vmatprep.subr.mxu0 0.0
    %4457 = vmatpush1.msra.mxu0 0.0
    %4458 = vmatprep.subr.mxu0 0.0
    %4459 = vmatpush1.msra.mxu0 0.0
    %4460 = vmatprep.subr.mxu0 0.0
    %4461 = vmatpush1.msra.mxu0 0.0
    %4462 = vmatprep.subr.mxu0 0.0
    %4463 = vmatpush1.msra.mxu0 0.0
    %4464 = vmatprep.subr.mxu0 0.0
    %4465 = vmatpush1.msra.mxu0 0.0
    %4466 = vmatprep.subr.mxu0 0.0
    %4467 = vmatpush1.msra.mxu0 0.0
    %4468 = vmatprep.subr.mxu0 0.0
    %4469 = vmatpush1.msra.mxu0 0.0
    %4470 = vmatprep.subr.mxu0 0.0
    %4471 = vmatpush1.msra.mxu0 0.0
    %4472 = vmatprep.subr.mxu0 0.0
    %4473 = vmatpush1.msra.mxu0 0.0
    %4474 = vmatprep.subr.mxu0 0.0
    %4475 = vmatpush1.msra.mxu0 0.0
    %4476 = vmatprep.subr.mxu0 0.0
    %4477 = vmatpush1.msra.mxu0 0.0
    %4478 = vmatprep.subr.mxu0 0.0
    %4479 = vmatpush1.msra.mxu0 0.0
    %4480 = vmatprep.subr.mxu0 0.0
    %4481 = vmatpush1.msra.mxu0 0.0
    %4482 = vmatprep.subr.mxu0 0.0
    %4483 = vmatpush1.msra.mxu0 0.0
    %4484 = vmatprep.subr.mxu0 0.0
    %4485 = vmatpush1.msra.mxu0 0.0
    %4486 = vmatprep.subr.mxu0 0.0
    %4487 = vmatpush1.msra.mxu0 0.0
    %4488 = vmatprep.subr.mxu0 0.0
    %4489 = vmatpush1.msra.mxu0 0.0
    %4490 = vmatprep.mubr.f32.mxu0 0.0
    %4491 = vmatmul.mubr.f32.gmra.mrb[0].mxu0 %v4424
    %v4492 = vpop.f32.mrb[0].mxu0
    %v4493 = vadd.f32 0.0, %v4492
    %v4494 = vpop.f32.mrb[0].mxu0
    %4495 = vdwg.mxu0
    %v4497 = vrot.slane %v4493, 6
    %v4499 = vadd.f32 %v4002, %v4497
    %v4501 = vrot.slane %v4419, 6
    %4502 = vrot.lane.b32.xlu0 %v4501, 32
    %v4503 = vpop.permute.xlu0 %4502
    %v4504 = vsel %vm280, %v4503, 0
    %4506 = vmatprep.subr.mxu0 0.0
    %4507 = vmatpush1.msra.mxu0 %v4010
    %4508 = vmatprep.subr.mxu0 0.0
    %4509 = vmatpush1.msra.mxu0 %v4011
    %4510 = vmatprep.subr.mxu0 0.0
    %4511 = vmatpush1.msra.mxu0 %v4012
    %4512 = vmatprep.subr.mxu0 0.0
    %4513 = vmatpush1.msra.mxu0 %v4013
    %4514 = vmatprep.subr.mxu0 0.0
    %4515 = vmatpush1.msra.mxu0 0.0
    %4516 = vmatprep.subr.mxu0 0.0
    %4517 = vmatpush1.msra.mxu0 0.0
    %4518 = vmatprep.subr.mxu0 0.0
    %4519 = vmatpush1.msra.mxu0 0.0
    %4520 = vmatprep.subr.mxu0 0.0
    %4521 = vmatpush1.msra.mxu0 0.0
    %4522 = vmatprep.subr.mxu0 0.0
    %4523 = vmatpush1.msra.mxu0 0.0
    %4524 = vmatprep.subr.mxu0 0.0
    %4525 = vmatpush1.msra.mxu0 0.0
    %4526 = vmatprep.subr.mxu0 0.0
    %4527 = vmatpush1.msra.mxu0 0.0
    %4528 = vmatprep.subr.mxu0 0.0
    %4529 = vmatpush1.msra.mxu0 0.0
    %4530 = vmatprep.subr.mxu0 0.0
    %4531 = vmatpush1.msra.mxu0 0.0
    %4532 = vmatprep.subr.mxu0 0.0
    %4533 = vmatpush1.msra.mxu0 0.0
    %4534 = vmatprep.subr.mxu0 0.0
    %4535 = vmatpush1.msra.mxu0 0.0
    %4536 = vmatprep.subr.mxu0 0.0
    %4537 = vmatpush1.msra.mxu0 0.0
    %4538 = vmatprep.subr.mxu0 0.0
    %4539 = vmatpush1.msra.mxu0 0.0
    %4540 = vmatprep.subr.mxu0 0.0
    %4541 = vmatpush1.msra.mxu0 0.0
    %4542 = vmatprep.subr.mxu0 0.0
    %4543 = vmatpush1.msra.mxu0 0.0
    %4544 = vmatprep.subr.mxu0 0.0
    %4545 = vmatpush1.msra.mxu0 0.0
    %4546 = vmatprep.subr.mxu0 0.0
    %4547 = vmatpush1.msra.mxu0 0.0
    %4548 = vmatprep.subr.mxu0 0.0
    %4549 = vmatpush1.msra.mxu0 0.0
    %4550 = vmatprep.subr.mxu0 0.0
    %4551 = vmatpush1.msra.mxu0 0.0
    %4552 = vmatprep.subr.mxu0 0.0
    %4553 = vmatpush1.msra.mxu0 0.0
    %4554 = vmatprep.subr.mxu0 0.0
    %4555 = vmatpush1.msra.mxu0 0.0
    %4556 = vmatprep.subr.mxu0 0.0
    %4557 = vmatpush1.msra.mxu0 0.0
    %4558 = vmatprep.subr.mxu0 0.0
    %4559 = vmatpush1.msra.mxu0 0.0
    %4560 = vmatprep.subr.mxu0 0.0
    %4561 = vmatpush1.msra.mxu0 0.0
    %4562 = vmatprep.subr.mxu0 0.0
    %4563 = vmatpush1.msra.mxu0 0.0
    %4564 = vmatprep.subr.mxu0 0.0
    %4565 = vmatpush1.msra.mxu0 0.0
    %4566 = vmatprep.subr.mxu0 0.0
    %4567 = vmatpush1.msra.mxu0 0.0
    %4568 = vmatprep.subr.mxu0 0.0
    %4569 = vmatpush1.msra.mxu0 0.0
    %4570 = vmatprep.mubr.f32.mxu0 0.0
    %4571 = vmatmul.mubr.f32.gmra.mrb[0].mxu0 %v4504
    %v4572 = vpop.f32.mrb[0].mxu0
    %v4573 = vadd.f32 0.0, %v4572
    %v4574 = vpop.f32.mrb[0].mxu0
    %4575 = vdwg.mxu0
    %v4577 = vrot.slane %v4573, 3
    %v4579 = vadd.f32 %v4004, %v4577
    %v4580 = vxor.u32 %v4499, 2147483648
    %v4581 = vmul.f32 %v4580, 1.442695
    %v4582 = vpow.pop %v4581
    %v4583 = vadd.f32 %v4582, 1.0
    %v4584 = vrcp.pop %v4583
    %v4585 = vmul.f32 1.0, %v4584
    %v4586 = vtanh.pop %v4499
    %v4588 = vrot.slane %v4386, 7
    %v4590 = vmul.f32 %v4585, %v4588
    %4592 = vrot.lane.b32.xlu0 %v4586, 64
    %v4593 = vpop.permute.xlu0 %4592
    %v4595 = vmul.f32 %v4585, %v4593
    %4597 = vrot.lane.b32.xlu0 %v4595, 32
    %v4598 = vpop.permute.xlu0 %4597
    %v4600 = vadd.f32 %v4590, %v4598
    %v4601 = vtanh.pop %v4600
    %4603 = vrot.lane.b32.xlu0 %v4601, 64
    %v4604 = vpop.permute.xlu0 %4603
    %v4606 = vmul.f32 %v4585, %v4604
    %v4607 = vxor.u32 %v4579, 2147483648
    %v4608 = vmul.f32 %v4607, 1.442695
    %v4609 = vpow.pop %v4608
    %v4610 = vadd.f32 %v4609, 1.0
    %v4611 = vrcp.pop %v4610
    %v4612 = vmul.f32 1.0, %v4611
    %v4613 = vtanh.pop %v4579
    %v4615 = vrot.slane %v4413, 1
    %v4617 = vmul.f32 %v4612, %v4615
    %4619 = vrot.lane.b32.xlu0 %v4613, 64
    %v4620 = vpop.permute.xlu0 %4619
    %v4622 = vmul.f32 %v4612, %v4620
    %4624 = vrot.lane.b32.xlu0 %v4622, 32
    %v4625 = vpop.permute.xlu0 %4624
    %v4627 = vadd.f32 %v4617, %v4625
    %v4628 = vtanh.pop %v4627
    %4630 = vrot.lane.b32.xlu0 %v4628, 64
    %v4631 = vpop.permute.xlu0 %4630
    %v4633 = vmul.f32 %v4612, %v4631
    %v4635 = vrot.slane %v4606, 2
    %4636 = vrot.lane.b32.xlu0 %v4635, 32
    %v4637 = vpop.permute.xlu0 %4636
    %v4638 = vsel %vm280, %v4637, 0
    %4640 = vmatprep.subr.mxu0 0.0
    %4641 = vmatpush1.msra.mxu0 %v4006
    %4642 = vmatprep.subr.mxu0 0.0
    %4643 = vmatpush1.msra.mxu0 %v4007
    %4644 = vmatprep.subr.mxu0 0.0
    %4645 = vmatpush1.msra.mxu0 %v4008
    %4646 = vmatprep.subr.mxu0 0.0
    %4647 = vmatpush1.msra.mxu0 %v4009
    %4648 = vmatprep.subr.mxu0 0.0
    %4649 = vmatpush1.msra.mxu0 0.0
    %4650 = vmatprep.subr.mxu0 0.0
    %4651 = vmatpush1.msra.mxu0 0.0
    %4652 = vmatprep.subr.mxu0 0.0
    %4653 = vmatpush1.msra.mxu0 0.0
    %4654 = vmatprep.subr.mxu0 0.0
    %4655 = vmatpush1.msra.mxu0 0.0
    %4656 = vmatprep.subr.mxu0 0.0
    %4657 = vmatpush1.msra.mxu0 0.0
    %4658 = vmatprep.subr.mxu0 0.0
    %4659 = vmatpush1.msra.mxu0 0.0
    %4660 = vmatprep.subr.mxu0 0.0
    %4661 = vmatpush1.msra.mxu0 0.0
    %4662 = vmatprep.subr.mxu0 0.0
    %4663 = vmatpush1.msra.mxu0 0.0
    %4664 = vmatprep.subr.mxu0 0.0
    %4665 = vmatpush1.msra.mxu0 0.0
    %4666 = vmatprep.subr.mxu0 0.0
    %4667 = vmatpush1.msra.mxu0 0.0
    %4668 = vmatprep.subr.mxu0 0.0
    %4669 = vmatpush1.msra.mxu0 0.0
    %4670 = vmatprep.subr.mxu0 0.0
    %4671 = vmatpush1.msra.mxu0 0.0
    %4672 = vmatprep.subr.mxu0 0.0
    %4673 = vmatpush1.msra.mxu0 0.0
    %4674 = vmatprep.subr.mxu0 0.0
    %4675 = vmatpush1.msra.mxu0 0.0
    %4676 = vmatprep.subr.mxu0 0.0
    %4677 = vmatpush1.msra.mxu0 0.0
    %4678 = vmatprep.subr.mxu0 0.0
    %4679 = vmatpush1.msra.mxu0 0.0
    %4680 = vmatprep.subr.mxu0 0.0
    %4681 = vmatpush1.msra.mxu0 0.0
    %4682 = vmatprep.subr.mxu0 0.0
    %4683 = vmatpush1.msra.mxu0 0.0
    %4684 = vmatprep.subr.mxu0 0.0
    %4685 = vmatpush1.msra.mxu0 0.0
    %4686 = vmatprep.subr.mxu0 0.0
    %4687 = vmatpush1.msra.mxu0 0.0
    %4688 = vmatprep.subr.mxu0 0.0
    %4689 = vmatpush1.msra.mxu0 0.0
    %4690 = vmatprep.subr.mxu0 0.0
    %4691 = vmatpush1.msra.mxu0 0.0
    %4692 = vmatprep.subr.mxu0 0.0
    %4693 = vmatpush1.msra.mxu0 0.0
    %4694 = vmatprep.subr.mxu0 0.0
    %4695 = vmatpush1.msra.mxu0 0.0
    %4696 = vmatprep.subr.mxu0 0.0
    %4697 = vmatpush1.msra.mxu0 0.0
    %4698 = vmatprep.subr.mxu0 0.0
    %4699 = vmatpush1.msra.mxu0 0.0
    %4700 = vmatprep.subr.mxu0 0.0
    %4701 = vmatpush1.msra.mxu0 0.0
    %4702 = vmatprep.subr.mxu0 0.0
    %4703 = vmatpush1.msra.mxu0 0.0
    %4704 = vmatprep.mubr.f32.mxu0 0.0
    %4705 = vmatmul.mubr.f32.gmra.mrb[0].mxu0 %v4638
    %v4706 = vpop.f32.mrb[0].mxu0
    %v4707 = vadd.f32 0.0, %v4706
    %v4708 = vpop.f32.mrb[0].mxu0
    %4709 = vdwg.mxu0
    %v4711 = vrot.slane %v4707, 5
    %v4713 = vadd.f32 %v4002, %v4711
    %v4715 = vrot.slane %v4633, 5
    %4716 = vrot.lane.b32.xlu0 %v4715, 32
    %v4717 = vpop.permute.xlu0 %4716
    %v4718 = vsel %vm280, %v4717, 0
    %4720 = vmatprep.subr.mxu0 0.0
    %4721 = vmatpush1.msra.mxu0 %v4010
    %4722 = vmatprep.subr.mxu0 0.0
    %4723 = vmatpush1.msra.mxu0 %v4011
    %4724 = vmatprep.subr.mxu0 0.0
    %4725 = vmatpush1.msra.mxu0 %v4012
    %4726 = vmatprep.subr.mxu0 0.0
    %4727 = vmatpush1.msra.mxu0 %v4013
    %4728 = vmatprep.subr.mxu0 0.0
    %4729 = vmatpush1.msra.mxu0 0.0
    %4730 = vmatprep.subr.mxu0 0.0
    %4731 = vmatpush1.msra.mxu0 0.0
    %4732 = vmatprep.subr.mxu0 0.0
    %4733 = vmatpush1.msra.mxu0 0.0
    %4734 = vmatprep.subr.mxu0 0.0
    %4735 = vmatpush1.msra.mxu0 0.0
    %4736 = vmatprep.subr.mxu0 0.0
    %4737 = vmatpush1.msra.mxu0 0.0
    %4738 = vmatprep.subr.mxu0 0.0
    %4739 = vmatpush1.msra.mxu0 0.0
    %4740 = vmatprep.subr.mxu0 0.0
    %4741 = vmatpush1.msra.mxu0 0.0
    %4742 = vmatprep.subr.mxu0 0.0
    %4743 = vmatpush1.msra.mxu0 0.0
    %4744 = vmatprep.subr.mxu0 0.0
    %4745 = vmatpush1.msra.mxu0 0.0
    %4746 = vmatprep.subr.mxu0 0.0
    %4747 = vmatpush1.msra.mxu0 0.0
    %4748 = vmatprep.subr.mxu0 0.0
    %4749 = vmatpush1.msra.mxu0 0.0
    %4750 = vmatprep.subr.mxu0 0.0
    %4751 = vmatpush1.msra.mxu0 0.0
    %4752 = vmatprep.subr.mxu0 0.0
    %4753 = vmatpush1.msra.mxu0 0.0
    %4754 = vmatprep.subr.mxu0 0.0
    %4755 = vmatpush1.msra.mxu0 0.0
    %4756 = vmatprep.subr.mxu0 0.0
    %4757 = vmatpush1.msra.mxu0 0.0
    %4758 = vmatprep.subr.mxu0 0.0
    %4759 = vmatpush1.msra.mxu0 0.0
    %4760 = vmatprep.subr.mxu0 0.0
    %4761 = vmatpush1.msra.mxu0 0.0
    %4762 = vmatprep.subr.mxu0 0.0
    %4763 = vmatpush1.msra.mxu0 0.0
    %4764 = vmatprep.subr.mxu0 0.0
    %4765 = vmatpush1.msra.mxu0 0.0
    %4766 = vmatprep.subr.mxu0 0.0
    %4767 = vmatpush1.msra.mxu0 0.0
    %4768 = vmatprep.subr.mxu0 0.0
    %4769 = vmatpush1.msra.mxu0 0.0
    %4770 = vmatprep.subr.mxu0 0.0
    %4771 = vmatpush1.msra.mxu0 0.0
    %4772 = vmatprep.subr.mxu0 0.0
    %4773 = vmatpush1.msra.mxu0 0.0
    %4774 = vmatprep.subr.mxu0 0.0
    %4775 = vmatpush1.msra.mxu0 0.0
    %4776 = vmatprep.subr.mxu0 0.0
    %4777 = vmatpush1.msra.mxu0 0.0
    %4778 = vmatprep.subr.mxu0 0.0
    %4779 = vmatpush1.msra.mxu0 0.0
    %4780 = vmatprep.subr.mxu0 0.0
    %4781 = vmatpush1.msra.mxu0 0.0
    %4782 = vmatprep.subr.mxu0 0.0
    %4783 = vmatpush1.msra.mxu0 0.0
    %4784 = vmatprep.mubr.f32.mxu0 0.0
    %4785 = vmatmul.mubr.f32.gmra.mrb[0].mxu0 %v4718
    %v4786 = vpop.f32.mrb[0].mxu0
    %v4787 = vadd.f32 0.0, %v4786
    %v4788 = vpop.f32.mrb[0].mxu0
    %4789 = vdwg.mxu0
    %v4791 = vrot.slane %v4787, 4
    %v4793 = vadd.f32 %v4004, %v4791
    %v4794 = vxor.u32 %v4713, 2147483648
    %v4795 = vmul.f32 %v4794, 1.442695
    %v4796 = vpow.pop %v4795
    %v4797 = vadd.f32 %v4796, 1.0
    %v4798 = vrcp.pop %v4797
    %v4799 = vmul.f32 1.0, %v4798
    %v4800 = vtanh.pop %v4713
    %v4802 = vrot.slane %v4600, 7
    %v4804 = vmul.f32 %v4799, %v4802
    %4806 = vrot.lane.b32.xlu0 %v4800, 64
    %v4807 = vpop.permute.xlu0 %4806
    %v4809 = vmul.f32 %v4799, %v4807
    %4811 = vrot.lane.b32.xlu0 %v4809, 32
    %v4812 = vpop.permute.xlu0 %4811
    %v4814 = vadd.f32 %v4804, %v4812
    %v4815 = vtanh.pop %v4814
    %4817 = vrot.lane.b32.xlu0 %v4815, 64
    %v4818 = vpop.permute.xlu0 %4817
    %v4820 = vmul.f32 %v4799, %v4818
    %v4821 = vxor.u32 %v4793, 2147483648
    %v4822 = vmul.f32 %v4821, 1.442695
    %v4823 = vpow.pop %v4822
    %v4824 = vadd.f32 %v4823, 1.0
    %v4825 = vrcp.pop %v4824
    %v4826 = vmul.f32 1.0, %v4825
    %v4827 = vtanh.pop %v4793
    %v4829 = vrot.slane %v4627, 1
    %v4831 = vmul.f32 %v4826, %v4829
    %4833 = vrot.lane.b32.xlu0 %v4827, 64
    %v4834 = vpop.permute.xlu0 %4833
    %v4836 = vmul.f32 %v4826, %v4834
    %4838 = vrot.lane.b32.xlu0 %v4836, 32
    %v4839 = vpop.permute.xlu0 %4838
    %v4841 = vadd.f32 %v4831, %v4839
    %v4842 = vtanh.pop %v4841
    %4844 = vrot.lane.b32.xlu0 %v4842, 64
    %v4845 = vpop.permute.xlu0 %4844
    %v4847 = vmul.f32 %v4826, %v4845
    %v4849 = vrot.slane %v4820, 3
    %4850 = vrot.lane.b32.xlu0 %v4849, 32
    %v4851 = vpop.permute.xlu0 %4850
    %v4852 = vsel %vm280, %v4851, 0
    %4854 = vmatprep.subr.mxu0 0.0
    %4855 = vmatpush1.msra.mxu0 %v4006
    %4856 = vmatprep.subr.mxu0 0.0
    %4857 = vmatpush1.msra.mxu0 %v4007
    %4858 = vmatprep.subr.mxu0 0.0
    %4859 = vmatpush1.msra.mxu0 %v4008
    %4860 = vmatprep.subr.mxu0 0.0
    %4861 = vmatpush1.msra.mxu0 %v4009
    %4862 = vmatprep.subr.mxu0 0.0
    %4863 = vmatpush1.msra.mxu0 0.0
    %4864 = vmatprep.subr.mxu0 0.0
    %4865 = vmatpush1.msra.mxu0 0.0
    %4866 = vmatprep.subr.mxu0 0.0
    %4867 = vmatpush1.msra.mxu0 0.0
    %4868 = vmatprep.subr.mxu0 0.0
    %4869 = vmatpush1.msra.mxu0 0.0
    %4870 = vmatprep.subr.mxu0 0.0
    %4871 = vmatpush1.msra.mxu0 0.0
    %4872 = vmatprep.subr.mxu0 0.0
    %4873 = vmatpush1.msra.mxu0 0.0
    %4874 = vmatprep.subr.mxu0 0.0
    %4875 = vmatpush1.msra.mxu0 0.0
    %4876 = vmatprep.subr.mxu0 0.0
    %4877 = vmatpush1.msra.mxu0 0.0
    %4878 = vmatprep.subr.mxu0 0.0
    %4879 = vmatpush1.msra.mxu0 0.0
    %4880 = vmatprep.subr.mxu0 0.0
    %4881 = vmatpush1.msra.mxu0 0.0
    %4882 = vmatprep.subr.mxu0 0.0
    %4883 = vmatpush1.msra.mxu0 0.0
    %4884 = vmatprep.subr.mxu0 0.0
    %4885 = vmatpush1.msra.mxu0 0.0
    %4886 = vmatprep.subr.mxu0 0.0
    %4887 = vmatpush1.msra.mxu0 0.0
    %4888 = vmatprep.subr.mxu0 0.0
    %4889 = vmatpush1.msra.mxu0 0.0
    %4890 = vmatprep.subr.mxu0 0.0
    %4891 = vmatpush1.msra.mxu0 0.0
    %4892 = vmatprep.subr.mxu0 0.0
    %4893 = vmatpush1.msra.mxu0 0.0
    %4894 = vmatprep.subr.mxu0 0.0
    %4895 = vmatpush1.msra.mxu0 0.0
    %4896 = vmatprep.subr.mxu0 0.0
    %4897 = vmatpush1.msra.mxu0 0.0
    %4898 = vmatprep.subr.mxu0 0.0
    %4899 = vmatpush1.msra.mxu0 0.0
    %4900 = vmatprep.subr.mxu0 0.0
    %4901 = vmatpush1.msra.mxu0 0.0
    %4902 = vmatprep.subr.mxu0 0.0
    %4903 = vmatpush1.msra.mxu0 0.0
    %4904 = vmatprep.subr.mxu0 0.0
    %4905 = vmatpush1.msra.mxu0 0.0
    %4906 = vmatprep.subr.mxu0 0.0
    %4907 = vmatpush1.msra.mxu0 0.0
    %4908 = vmatprep.subr.mxu0 0.0
    %4909 = vmatpush1.msra.mxu0 0.0
    %4910 = vmatprep.subr.mxu0 0.0
    %4911 = vmatpush1.msra.mxu0 0.0
    %4912 = vmatprep.subr.mxu0 0.0
    %4913 = vmatpush1.msra.mxu0 0.0
    %4914 = vmatprep.subr.mxu0 0.0
    %4915 = vmatpush1.msra.mxu0 0.0
    %4916 = vmatprep.subr.mxu0 0.0
    %4917 = vmatpush1.msra.mxu0 0.0
    %4918 = vmatprep.mubr.f32.mxu0 0.0
    %4919 = vmatmul.mubr.f32.gmra.mrb[0].mxu0 %v4852
    %v4920 = vpop.f32.mrb[0].mxu0
    %v4921 = vadd.f32 0.0, %v4920
    %v4922 = vpop.f32.mrb[0].mxu0
    %4923 = vdwg.mxu0
    %v4925 = vrot.slane %v4921, 4
    %v4927 = vadd.f32 %v4002, %v4925
    %v4929 = vrot.slane %v4847, 4
    %4930 = vrot.lane.b32.xlu0 %v4929, 32
    %v4931 = vpop.permute.xlu0 %4930
    %v4932 = vsel %vm280, %v4931, 0
    %4934 = vmatprep.subr.mxu0 0.0
    %4935 = vmatpush1.msra.mxu0 %v4010
    %4936 = vmatprep.subr.mxu0 0.0
    %4937 = vmatpush1.msra.mxu0 %v4011
    %4938 = vmatprep.subr.mxu0 0.0
    %4939 = vmatpush1.msra.mxu0 %v4012
    %4940 = vmatprep.subr.mxu0 0.0
    %4941 = vmatpush1.msra.mxu0 %v4013
    %4942 = vmatprep.subr.mxu0 0.0
    %4943 = vmatpush1.msra.mxu0 0.0
    %4944 = vmatprep.subr.mxu0 0.0
    %4945 = vmatpush1.msra.mxu0 0.0
    %4946 = vmatprep.subr.mxu0 0.0
    %4947 = vmatpush1.msra.mxu0 0.0
    %4948 = vmatprep.subr.mxu0 0.0
    %4949 = vmatpush1.msra.mxu0 0.0
    %4950 = vmatprep.subr.mxu0 0.0
    %4951 = vmatpush1.msra.mxu0 0.0
    %4952 = vmatprep.subr.mxu0 0.0
    %4953 = vmatpush1.msra.mxu0 0.0
    %4954 = vmatprep.subr.mxu0 0.0
    %4955 = vmatpush1.msra.mxu0 0.0
    %4956 = vmatprep.subr.mxu0 0.0
    %4957 = vmatpush1.msra.mxu0 0.0
    %4958 = vmatprep.subr.mxu0 0.0
    %4959 = vmatpush1.msra.mxu0 0.0
    %4960 = vmatprep.subr.mxu0 0.0
    %4961 = vmatpush1.msra.mxu0 0.0
    %4962 = vmatprep.subr.mxu0 0.0
    %4963 = vmatpush1.msra.mxu0 0.0
    %4964 = vmatprep.subr.mxu0 0.0
    %4965 = vmatpush1.msra.mxu0 0.0
    %4966 = vmatprep.subr.mxu0 0.0
    %4967 = vmatpush1.msra.mxu0 0.0
    %4968 = vmatprep.subr.mxu0 0.0
    %4969 = vmatpush1.msra.mxu0 0.0
    %4970 = vmatprep.subr.mxu0 0.0
    %4971 = vmatpush1.msra.mxu0 0.0
    %4972 = vmatprep.subr.mxu0 0.0
    %4973 = vmatpush1.msra.mxu0 0.0
    %4974 = vmatprep.subr.mxu0 0.0
    %4975 = vmatpush1.msra.mxu0 0.0
    %4976 = vmatprep.subr.mxu0 0.0
    %4977 = vmatpush1.msra.mxu0 0.0
    %4978 = vmatprep.subr.mxu0 0.0
    %4979 = vmatpush1.msra.mxu0 0.0
    %4980 = vmatprep.subr.mxu0 0.0
    %4981 = vmatpush1.msra.mxu0 0.0
    %4982 = vmatprep.subr.mxu0 0.0
    %4983 = vmatpush1.msra.mxu0 0.0
    %4984 = vmatprep.subr.mxu0 0.0
    %4985 = vmatpush1.msra.mxu0 0.0
    %4986 = vmatprep.subr.mxu0 0.0
    %4987 = vmatpush1.msra.mxu0 0.0
    %4988 = vmatprep.subr.mxu0 0.0
    %4989 = vmatpush1.msra.mxu0 0.0
    %4990 = vmatprep.subr.mxu0 0.0
    %4991 = vmatpush1.msra.mxu0 0.0
    %4992 = vmatprep.subr.mxu0 0.0
    %4993 = vmatpush1.msra.mxu0 0.0
    %4994 = vmatprep.subr.mxu0 0.0
    %4995 = vmatpush1.msra.mxu0 0.0
    %4996 = vmatprep.subr.mxu0 0.0
    %4997 = vmatpush1.msra.mxu0 0.0
    %4998 = vmatprep.mubr.f32.mxu0 0.0
    %4999 = vmatmul.mubr.f32.gmra.mrb[0].mxu0 %v4932
    %v5000 = vpop.f32.mrb[0].mxu0
    %v5001 = vadd.f32 0.0, %v5000
    %v5002 = vpop.f32.mrb[0].mxu0
    %5003 = vdwg.mxu0
    %v5005 = vrot.slane %v5001, 5
    %v5007 = vadd.f32 %v4004, %v5005
    %v5008 = vxor.u32 %v4927, 2147483648
    %v5009 = vmul.f32 %v5008, 1.442695
    %v5010 = vpow.pop %v5009
    %v5011 = vadd.f32 %v5010, 1.0
    %v5012 = vrcp.pop %v5011
    %v5013 = vmul.f32 1.0, %v5012
    %v5014 = vtanh.pop %v4927
    %v5016 = vrot.slane %v4814, 7
    %v5018 = vmul.f32 %v5013, %v5016
    %5020 = vrot.lane.b32.xlu0 %v5014, 64
    %v5021 = vpop.permute.xlu0 %5020
    %v5023 = vmul.f32 %v5013, %v5021
    %5025 = vrot.lane.b32.xlu0 %v5023, 32
    %v5026 = vpop.permute.xlu0 %5025
    %v5028 = vadd.f32 %v5018, %v5026
    %v5029 = vtanh.pop %v5028
    %5031 = vrot.lane.b32.xlu0 %v5029, 64
    %v5032 = vpop.permute.xlu0 %5031
    %v5034 = vmul.f32 %v5013, %v5032
    %v5035 = vxor.u32 %v5007, 2147483648
    %v5036 = vmul.f32 %v5035, 1.442695
    %v5037 = vpow.pop %v5036
    %v5038 = vadd.f32 %v5037, 1.0
    %v5039 = vrcp.pop %v5038
    %v5040 = vmul.f32 1.0, %v5039
    %v5041 = vtanh.pop %v5007
    %v5043 = vrot.slane %v4841, 1
    %v5045 = vmul.f32 %v5040, %v5043
    %5047 = vrot.lane.b32.xlu0 %v5041, 64
    %v5048 = vpop.permute.xlu0 %5047
    %v5050 = vmul.f32 %v5040, %v5048
    %5052 = vrot.lane.b32.xlu0 %v5050, 32
    %v5053 = vpop.permute.xlu0 %5052
    %v5055 = vadd.f32 %v5045, %v5053
    %v5056 = vtanh.pop %v5055
    %5058 = vrot.lane.b32.xlu0 %v5056, 64
    %v5059 = vpop.permute.xlu0 %5058
    %v5061 = vmul.f32 %v5040, %v5059
    %v5063 = vrot.slane %v5034, 4
    %5064 = vrot.lane.b32.xlu0 %v5063, 32
    %v5065 = vpop.permute.xlu0 %5064
    %v5066 = vsel %vm280, %v5065, 0
    %5068 = vmatprep.subr.mxu0 0.0
    %5069 = vmatpush1.msra.mxu0 %v4006
    %5070 = vmatprep.subr.mxu0 0.0
    %5071 = vmatpush1.msra.mxu0 %v4007
    %5072 = vmatprep.subr.mxu0 0.0
    %5073 = vmatpush1.msra.mxu0 %v4008
    %5074 = vmatprep.subr.mxu0 0.0
    %5075 = vmatpush1.msra.mxu0 %v4009
    %5076 = vmatprep.subr.mxu0 0.0
    %5077 = vmatpush1.msra.mxu0 0.0
    %5078 = vmatprep.subr.mxu0 0.0
    %5079 = vmatpush1.msra.mxu0 0.0
    %5080 = vmatprep.subr.mxu0 0.0
    %5081 = vmatpush1.msra.mxu0 0.0
    %5082 = vmatprep.subr.mxu0 0.0
    %5083 = vmatpush1.msra.mxu0 0.0
    %5084 = vmatprep.subr.mxu0 0.0
    %5085 = vmatpush1.msra.mxu0 0.0
    %5086 = vmatprep.subr.mxu0 0.0
    %5087 = vmatpush1.msra.mxu0 0.0
    %5088 = vmatprep.subr.mxu0 0.0
    %5089 = vmatpush1.msra.mxu0 0.0
    %5090 = vmatprep.subr.mxu0 0.0
    %5091 = vmatpush1.msra.mxu0 0.0
    %5092 = vmatprep.subr.mxu0 0.0
    %5093 = vmatpush1.msra.mxu0 0.0
    %5094 = vmatprep.subr.mxu0 0.0
    %5095 = vmatpush1.msra.mxu0 0.0
    %5096 = vmatprep.subr.mxu0 0.0
    %5097 = vmatpush1.msra.mxu0 0.0
    %5098 = vmatprep.subr.mxu0 0.0
    %5099 = vmatpush1.msra.mxu0 0.0
    %5100 = vmatprep.subr.mxu0 0.0
    %5101 = vmatpush1.msra.mxu0 0.0
    %5102 = vmatprep.subr.mxu0 0.0
    %5103 = vmatpush1.msra.mxu0 0.0
    %5104 = vmatprep.subr.mxu0 0.0
    %5105 = vmatpush1.msra.mxu0 0.0
    %5106 = vmatprep.subr.mxu0 0.0
    %5107 = vmatpush1.msra.mxu0 0.0
    %5108 = vmatprep.subr.mxu0 0.0
    %5109 = vmatpush1.msra.mxu0 0.0
    %5110 = vmatprep.subr.mxu0 0.0
    %5111 = vmatpush1.msra.mxu0 0.0
    %5112 = vmatprep.subr.mxu0 0.0
    %5113 = vmatpush1.msra.mxu0 0.0
    %5114 = vmatprep.subr.mxu0 0.0
    %5115 = vmatpush1.msra.mxu0 0.0
    %5116 = vmatprep.subr.mxu0 0.0
    %5117 = vmatpush1.msra.mxu0 0.0
    %5118 = vmatprep.subr.mxu0 0.0
    %5119 = vmatpush1.msra.mxu0 0.0
    %5120 = vmatprep.subr.mxu0 0.0
    %5121 = vmatpush1.msra.mxu0 0.0
    %5122 = vmatprep.subr.mxu0 0.0
    %5123 = vmatpush1.msra.mxu0 0.0
    %5124 = vmatprep.subr.mxu0 0.0
    %5125 = vmatpush1.msra.mxu0 0.0
    %5126 = vmatprep.subr.mxu0 0.0
    %5127 = vmatpush1.msra.mxu0 0.0
    %5128 = vmatprep.subr.mxu0 0.0
    %5129 = vmatpush1.msra.mxu0 0.0
    %5130 = vmatprep.subr.mxu0 0.0
    %5131 = vmatpush1.msra.mxu0 0.0
    %5132 = vmatprep.mubr.f32.mxu0 0.0
    %5133 = vmatmul.mubr.f32.gmra.mrb[0].mxu0 %v5066
    %v5134 = vpop.f32.mrb[0].mxu0
    %v5135 = vadd.f32 0.0, %v5134
    %v5136 = vpop.f32.mrb[0].mxu0
    %5137 = vdwg.mxu0
    %v5139 = vrot.slane %v5135, 3
    %v5141 = vadd.f32 %v4002, %v5139
    %v5143 = vrot.slane %v5061, 3
    %5144 = vrot.lane.b32.xlu0 %v5143, 32
    %v5145 = vpop.permute.xlu0 %5144
    %v5146 = vsel %vm280, %v5145, 0
    %5148 = vmatprep.subr.mxu0 0.0
    %5149 = vmatpush1.msra.mxu0 %v4010
    %5150 = vmatprep.subr.mxu0 0.0
    %5151 = vmatpush1.msra.mxu0 %v4011
    %5152 = vmatprep.subr.mxu0 0.0
    %5153 = vmatpush1.msra.mxu0 %v4012
    %5154 = vmatprep.subr.mxu0 0.0
    %5155 = vmatpush1.msra.mxu0 %v4013
    %5156 = vmatprep.subr.mxu0 0.0
    %5157 = vmatpush1.msra.mxu0 0.0
    %5158 = vmatprep.subr.mxu0 0.0
    %5159 = vmatpush1.msra.mxu0 0.0
    %5160 = vmatprep.subr.mxu0 0.0
    %5161 = vmatpush1.msra.mxu0 0.0
    %5162 = vmatprep.subr.mxu0 0.0
    %5163 = vmatpush1.msra.mxu0 0.0
    %5164 = vmatprep.subr.mxu0 0.0
    %5165 = vmatpush1.msra.mxu0 0.0
    %5166 = vmatprep.subr.mxu0 0.0
    %5167 = vmatpush1.msra.mxu0 0.0
    %5168 = vmatprep.subr.mxu0 0.0
    %5169 = vmatpush1.msra.mxu0 0.0
    %5170 = vmatprep.subr.mxu0 0.0
    %5171 = vmatpush1.msra.mxu0 0.0
    %5172 = vmatprep.subr.mxu0 0.0
    %5173 = vmatpush1.msra.mxu0 0.0
    %5174 = vmatprep.subr.mxu0 0.0
    %5175 = vmatpush1.msra.mxu0 0.0
    %5176 = vmatprep.subr.mxu0 0.0
    %5177 = vmatpush1.msra.mxu0 0.0
    %5178 = vmatprep.subr.mxu0 0.0
    %5179 = vmatpush1.msra.mxu0 0.0
    %5180 = vmatprep.subr.mxu0 0.0
    %5181 = vmatpush1.msra.mxu0 0.0
    %5182 = vmatprep.subr.mxu0 0.0
    %5183 = vmatpush1.msra.mxu0 0.0
    %5184 = vmatprep.subr.mxu0 0.0
    %5185 = vmatpush1.msra.mxu0 0.0
    %5186 = vmatprep.subr.mxu0 0.0
    %5187 = vmatpush1.msra.mxu0 0.0
    %5188 = vmatprep.subr.mxu0 0.0
    %5189 = vmatpush1.msra.mxu0 0.0
    %5190 = vmatprep.subr.mxu0 0.0
    %5191 = vmatpush1.msra.mxu0 0.0
    %5192 = vmatprep.subr.mxu0 0.0
    %5193 = vmatpush1.msra.mxu0 0.0
    %5194 = vmatprep.subr.mxu0 0.0
    %5195 = vmatpush1.msra.mxu0 0.0
    %5196 = vmatprep.subr.mxu0 0.0
    %5197 = vmatpush1.msra.mxu0 0.0
    %5198 = vmatprep.subr.mxu0 0.0
    %5199 = vmatpush1.msra.mxu0 0.0
    %5200 = vmatprep.subr.mxu0 0.0
    %5201 = vmatpush1.msra.mxu0 0.0
    %5202 = vmatprep.subr.mxu0 0.0
    %5203 = vmatpush1.msra.mxu0 0.0
    %5204 = vmatprep.subr.mxu0 0.0
    %5205 = vmatpush1.msra.mxu0 0.0
    %5206 = vmatprep.subr.mxu0 0.0
    %5207 = vmatpush1.msra.mxu0 0.0
    %5208 = vmatprep.subr.mxu0 0.0
    %5209 = vmatpush1.msra.mxu0 0.0
    %5210 = vmatprep.subr.mxu0 0.0
    %5211 = vmatpush1.msra.mxu0 0.0
    %5212 = vmatprep.mubr.f32.mxu0 0.0
    %5213 = vmatmul.mubr.f32.gmra.mrb[0].mxu0 %v5146
    %v5214 = vpop.f32.mrb[0].mxu0
    %v5215 = vadd.f32 0.0, %v5214
    %v5216 = vpop.f32.mrb[0].mxu0
    %5217 = vdwg.mxu0
    %v5219 = vrot.slane %v5215, 6
    %v5221 = vadd.f32 %v4004, %v5219
    %v5222 = vxor.u32 %v5141, 2147483648
    %v5223 = vmul.f32 %v5222, 1.442695
    %v5224 = vpow.pop %v5223
    %v5225 = vadd.f32 %v5224, 1.0
    %v5226 = vrcp.pop %v5225
    %v5227 = vmul.f32 1.0, %v5226
    %v5228 = vtanh.pop %v5141
    %v5230 = vrot.slane %v5028, 7
    %v5232 = vmul.f32 %v5227, %v5230
    %5234 = vrot.lane.b32.xlu0 %v5228, 64
    %v5235 = vpop.permute.xlu0 %5234
    %v5237 = vmul.f32 %v5227, %v5235
    %5239 = vrot.lane.b32.xlu0 %v5237, 32
    %v5240 = vpop.permute.xlu0 %5239
    %v5242 = vadd.f32 %v5232, %v5240
    %v5243 = vtanh.pop %v5242
    %5245 = vrot.lane.b32.xlu0 %v5243, 64
    %v5246 = vpop.permute.xlu0 %5245
    %v5248 = vmul.f32 %v5227, %v5246
    %v5249 = vxor.u32 %v5221, 2147483648
    %v5250 = vmul.f32 %v5249, 1.442695
    %v5251 = vpow.pop %v5250
    %v5252 = vadd.f32 %v5251, 1.0
    %v5253 = vrcp.pop %v5252
    %v5254 = vmul.f32 1.0, %v5253
    %v5255 = vtanh.pop %v5221
    %v5257 = vrot.slane %v5055, 1
    %v5259 = vmul.f32 %v5254, %v5257
    %5261 = vrot.lane.b32.xlu0 %v5255, 64
    %v5262 = vpop.permute.xlu0 %5261
    %v5264 = vmul.f32 %v5254, %v5262
    %5266 = vrot.lane.b32.xlu0 %v5264, 32
    %v5267 = vpop.permute.xlu0 %5266
    %v5269 = vadd.f32 %v5259, %v5267
    %v5270 = vtanh.pop %v5269
    %5272 = vrot.lane.b32.xlu0 %v5270, 64
    %v5273 = vpop.permute.xlu0 %5272
    %v5275 = vmul.f32 %v5254, %v5273
    %v5277 = vrot.slane %v5248, 5
    %5278 = vrot.lane.b32.xlu0 %v5277, 32
    %v5279 = vpop.permute.xlu0 %5278
    %v5280 = vsel %vm280, %v5279, 0
    %5282 = vmatprep.subr.mxu0 0.0
    %5283 = vmatpush1.msra.mxu0 %v4006
    %5284 = vmatprep.subr.mxu0 0.0
    %5285 = vmatpush1.msra.mxu0 %v4007
    %5286 = vmatprep.subr.mxu0 0.0
    %5287 = vmatpush1.msra.mxu0 %v4008
    %5288 = vmatprep.subr.mxu0 0.0
    %5289 = vmatpush1.msra.mxu0 %v4009
    %5290 = vmatprep.subr.mxu0 0.0
    %5291 = vmatpush1.msra.mxu0 0.0
    %5292 = vmatprep.subr.mxu0 0.0
    %5293 = vmatpush1.msra.mxu0 0.0
    %5294 = vmatprep.subr.mxu0 0.0
    %5295 = vmatpush1.msra.mxu0 0.0
    %5296 = vmatprep.subr.mxu0 0.0
    %5297 = vmatpush1.msra.mxu0 0.0
    %5298 = vmatprep.subr.mxu0 0.0
    %5299 = vmatpush1.msra.mxu0 0.0
    %5300 = vmatprep.subr.mxu0 0.0
    %5301 = vmatpush1.msra.mxu0 0.0
    %5302 = vmatprep.subr.mxu0 0.0
    %5303 = vmatpush1.msra.mxu0 0.0
    %5304 = vmatprep.subr.mxu0 0.0
    %5305 = vmatpush1.msra.mxu0 0.0
    %5306 = vmatprep.subr.mxu0 0.0
    %5307 = vmatpush1.msra.mxu0 0.0
    %5308 = vmatprep.subr.mxu0 0.0
    %5309 = vmatpush1.msra.mxu0 0.0
    %5310 = vmatprep.subr.mxu0 0.0
    %5311 = vmatpush1.msra.mxu0 0.0
    %5312 = vmatprep.subr.mxu0 0.0
    %5313 = vmatpush1.msra.mxu0 0.0
    %5314 = vmatprep.subr.mxu0 0.0
    %5315 = vmatpush1.msra.mxu0 0.0
    %5316 = vmatprep.subr.mxu0 0.0
    %5317 = vmatpush1.msra.mxu0 0.0
    %5318 = vmatprep.subr.mxu0 0.0
    %5319 = vmatpush1.msra.mxu0 0.0
    %5320 = vmatprep.subr.mxu0 0.0
    %5321 = vmatpush1.msra.mxu0 0.0
    %5322 = vmatprep.subr.mxu0 0.0
    %5323 = vmatpush1.msra.mxu0 0.0
    %5324 = vmatprep.subr.mxu0 0.0
    %5325 = vmatpush1.msra.mxu0 0.0
    %5326 = vmatprep.subr.mxu0 0.0
    %5327 = vmatpush1.msra.mxu0 0.0
    %5328 = vmatprep.subr.mxu0 0.0
    %5329 = vmatpush1.msra.mxu0 0.0
    %5330 = vmatprep.subr.mxu0 0.0
    %5331 = vmatpush1.msra.mxu0 0.0
    %5332 = vmatprep.subr.mxu0 0.0
    %5333 = vmatpush1.msra.mxu0 0.0
    %5334 = vmatprep.subr.mxu0 0.0
    %5335 = vmatpush1.msra.mxu0 0.0
    %5336 = vmatprep.subr.mxu0 0.0
    %5337 = vmatpush1.msra.mxu0 0.0
    %5338 = vmatprep.subr.mxu0 0.0
    %5339 = vmatpush1.msra.mxu0 0.0
    %5340 = vmatprep.subr.mxu0 0.0
    %5341 = vmatpush1.msra.mxu0 0.0
    %5342 = vmatprep.subr.mxu0 0.0
    %5343 = vmatpush1.msra.mxu0 0.0
    %5344 = vmatprep.subr.mxu0 0.0
    %5345 = vmatpush1.msra.mxu0 0.0
    %5346 = vmatprep.mubr.f32.mxu0 0.0
    %5347 = vmatmul.mubr.f32.gmra.mrb[0].mxu0 %v5280
    %v5348 = vpop.f32.mrb[0].mxu0
    %v5349 = vadd.f32 0.0, %v5348
    %v5350 = vpop.f32.mrb[0].mxu0
    %5351 = vdwg.mxu0
    %v5353 = vrot.slane %v5349, 2
    %v5355 = vadd.f32 %v4002, %v5353
    %v5357 = vrot.slane %v5275, 2
    %5358 = vrot.lane.b32.xlu0 %v5357, 32
    %v5359 = vpop.permute.xlu0 %5358
    %v5360 = vsel %vm280, %v5359, 0
    %5362 = vmatprep.subr.mxu0 0.0
    %5363 = vmatpush1.msra.mxu0 %v4010
    %5364 = vmatprep.subr.mxu0 0.0
    %5365 = vmatpush1.msra.mxu0 %v4011
    %5366 = vmatprep.subr.mxu0 0.0
    %5367 = vmatpush1.msra.mxu0 %v4012
    %5368 = vmatprep.subr.mxu0 0.0
    %5369 = vmatpush1.msra.mxu0 %v4013
    %5370 = vmatprep.subr.mxu0 0.0
    %5371 = vmatpush1.msra.mxu0 0.0
    %5372 = vmatprep.subr.mxu0 0.0
    %5373 = vmatpush1.msra.mxu0 0.0
    %5374 = vmatprep.subr.mxu0 0.0
    %5375 = vmatpush1.msra.mxu0 0.0
    %5376 = vmatprep.subr.mxu0 0.0
    %5377 = vmatpush1.msra.mxu0 0.0
    %5378 = vmatprep.subr.mxu0 0.0
    %5379 = vmatpush1.msra.mxu0 0.0
    %5380 = vmatprep.subr.mxu0 0.0
    %5381 = vmatpush1.msra.mxu0 0.0
    %5382 = vmatprep.subr.mxu0 0.0
    %5383 = vmatpush1.msra.mxu0 0.0
    %5384 = vmatprep.subr.mxu0 0.0
    %5385 = vmatpush1.msra.mxu0 0.0
    %5386 = vmatprep.subr.mxu0 0.0
    %5387 = vmatpush1.msra.mxu0 0.0
    %5388 = vmatprep.subr.mxu0 0.0
    %5389 = vmatpush1.msra.mxu0 0.0
    %5390 = vmatprep.subr.mxu0 0.0
    %5391 = vmatpush1.msra.mxu0 0.0
    %5392 = vmatprep.subr.mxu0 0.0
    %5393 = vmatpush1.msra.mxu0 0.0
    %5394 = vmatprep.subr.mxu0 0.0
    %5395 = vmatpush1.msra.mxu0 0.0
    %5396 = vmatprep.subr.mxu0 0.0
    %5397 = vmatpush1.msra.mxu0 0.0
    %5398 = vmatprep.subr.mxu0 0.0
    %5399 = vmatpush1.msra.mxu0 0.0
    %5400 = vmatprep.subr.mxu0 0.0
    %5401 = vmatpush1.msra.mxu0 0.0
    %5402 = vmatprep.subr.mxu0 0.0
    %5403 = vmatpush1.msra.mxu0 0.0
    %5404 = vmatprep.subr.mxu0 0.0
    %5405 = vmatpush1.msra.mxu0 0.0
    %5406 = vmatprep.subr.mxu0 0.0
    %5407 = vmatpush1.msra.mxu0 0.0
    %5408 = vmatprep.subr.mxu0 0.0
    %5409 = vmatpush1.msra.mxu0 0.0
    %5410 = vmatprep.subr.mxu0 0.0
    %5411 = vmatpush1.msra.mxu0 0.0
    %5412 = vmatprep.subr.mxu0 0.0
    %5413 = vmatpush1.msra.mxu0 0.0
    %5414 = vmatprep.subr.mxu0 0.0
    %5415 = vmatpush1.msra.mxu0 0.0
    %5416 = vmatprep.subr.mxu0 0.0
    %5417 = vmatpush1.msra.mxu0 0.0
    %5418 = vmatprep.subr.mxu0 0.0
    %5419 = vmatpush1.msra.mxu0 0.0
    %5420 = vmatprep.subr.mxu0 0.0
    %5421 = vmatpush1.msra.mxu0 0.0
    %5422 = vmatprep.subr.mxu0 0.0
    %5423 = vmatpush1.msra.mxu0 0.0
    %5424 = vmatprep.subr.mxu0 0.0
    %5425 = vmatpush1.msra.mxu0 0.0
    %5426 = vmatprep.mubr.f32.mxu0 0.0
    %5427 = vmatmul.mubr.f32.gmra.mrb[0].mxu0 %v5360
    %v5428 = vpop.f32.mrb[0].mxu0
    %v5429 = vadd.f32 0.0, %v5428
    %v5430 = vpop.f32.mrb[0].mxu0
    %5431 = vdwg.mxu0
    %v5433 = vrot.slane %v5429, 7
    %v5435 = vadd.f32 %v4004, %v5433
    %v5436 = vxor.u32 %v5355, 2147483648
    %v5437 = vmul.f32 %v5436, 1.442695
    %v5438 = vpow.pop %v5437
    %v5439 = vadd.f32 %v5438, 1.0
    %v5440 = vrcp.pop %v5439
    %v5441 = vmul.f32 1.0, %v5440
    %v5442 = vtanh.pop %v5355
    %v5444 = vrot.slane %v5242, 7
    %v5446 = vmul.f32 %v5441, %v5444
    %5448 = vrot.lane.b32.xlu0 %v5442, 64
    %v5449 = vpop.permute.xlu0 %5448
    %v5451 = vmul.f32 %v5441, %v5449
    %5453 = vrot.lane.b32.xlu0 %v5451, 32
    %v5454 = vpop.permute.xlu0 %5453
    %v5456 = vadd.f32 %v5446, %v5454
    %v5457 = vtanh.pop %v5456
    %5459 = vrot.lane.b32.xlu0 %v5457, 64
    %v5460 = vpop.permute.xlu0 %5459
    %v5462 = vmul.f32 %v5441, %v5460
    %v5463 = vxor.u32 %v5435, 2147483648
    %v5464 = vmul.f32 %v5463, 1.442695
    %v5465 = vpow.pop %v5464
    %v5466 = vadd.f32 %v5465, 1.0
    %v5467 = vrcp.pop %v5466
    %v5468 = vmul.f32 1.0, %v5467
    %v5469 = vtanh.pop %v5435
    %v5471 = vrot.slane %v5269, 1
    %v5473 = vmul.f32 %v5468, %v5471
    %5475 = vrot.lane.b32.xlu0 %v5469, 64
    %v5476 = vpop.permute.xlu0 %5475
    %v5478 = vmul.f32 %v5468, %v5476
    %5480 = vrot.lane.b32.xlu0 %v5478, 32
    %v5481 = vpop.permute.xlu0 %5480
    %v5483 = vadd.f32 %v5473, %v5481
    %v5484 = vtanh.pop %v5483
    %5486 = vrot.lane.b32.xlu0 %v5484, 64
    %v5487 = vpop.permute.xlu0 %5486
    %v5489 = vmul.f32 %v5468, %v5487
    %v5491 = vrot.slane %v5462, 6
    %5492 = vrot.lane.b32.xlu0 %v5491, 32
    %v5493 = vpop.permute.xlu0 %5492
    %v5494 = vsel %vm280, %v5493, 0
    %5496 = vmatprep.subr.mxu0 0.0
    %5497 = vmatpush1.msra.mxu0 %v4006
    %5498 = vmatprep.subr.mxu0 0.0
    %5499 = vmatpush1.msra.mxu0 %v4007
    %5500 = vmatprep.subr.mxu0 0.0
    %5501 = vmatpush1.msra.mxu0 %v4008
    %5502 = vmatprep.subr.mxu0 0.0
    %5503 = vmatpush1.msra.mxu0 %v4009
    %5504 = vmatprep.subr.mxu0 0.0
    %5505 = vmatpush1.msra.mxu0 0.0
    %5506 = vmatprep.subr.mxu0 0.0
    %5507 = vmatpush1.msra.mxu0 0.0
    %5508 = vmatprep.subr.mxu0 0.0
    %5509 = vmatpush1.msra.mxu0 0.0
    %5510 = vmatprep.subr.mxu0 0.0
    %5511 = vmatpush1.msra.mxu0 0.0
    %5512 = vmatprep.subr.mxu0 0.0
    %5513 = vmatpush1.msra.mxu0 0.0
    %5514 = vmatprep.subr.mxu0 0.0
    %5515 = vmatpush1.msra.mxu0 0.0
    %5516 = vmatprep.subr.mxu0 0.0
    %5517 = vmatpush1.msra.mxu0 0.0
    %5518 = vmatprep.subr.mxu0 0.0
    %5519 = vmatpush1.msra.mxu0 0.0
    %5520 = vmatprep.subr.mxu0 0.0
    %5521 = vmatpush1.msra.mxu0 0.0
    %5522 = vmatprep.subr.mxu0 0.0
    %5523 = vmatpush1.msra.mxu0 0.0
    %5524 = vmatprep.subr.mxu0 0.0
    %5525 = vmatpush1.msra.mxu0 0.0
    %5526 = vmatprep.subr.mxu0 0.0
    %5527 = vmatpush1.msra.mxu0 0.0
    %5528 = vmatprep.subr.mxu0 0.0
    %5529 = vmatpush1.msra.mxu0 0.0
    %5530 = vmatprep.subr.mxu0 0.0
    %5531 = vmatpush1.msra.mxu0 0.0
    %5532 = vmatprep.subr.mxu0 0.0
    %5533 = vmatpush1.msra.mxu0 0.0
    %5534 = vmatprep.subr.mxu0 0.0
    %5535 = vmatpush1.msra.mxu0 0.0
    %5536 = vmatprep.subr.mxu0 0.0
    %5537 = vmatpush1.msra.mxu0 0.0
    %5538 = vmatprep.subr.mxu0 0.0
    %5539 = vmatpush1.msra.mxu0 0.0
    %5540 = vmatprep.subr.mxu0 0.0
    %5541 = vmatpush1.msra.mxu0 0.0
    %5542 = vmatprep.subr.mxu0 0.0
    %5543 = vmatpush1.msra.mxu0 0.0
    %5544 = vmatprep.subr.mxu0 0.0
    %5545 = vmatpush1.msra.mxu0 0.0
    %5546 = vmatprep.subr.mxu0 0.0
    %5547 = vmatpush1.msra.mxu0 0.0
    %5548 = vmatprep.subr.mxu0 0.0
    %5549 = vmatpush1.msra.mxu0 0.0
    %5550 = vmatprep.subr.mxu0 0.0
    %5551 = vmatpush1.msra.mxu0 0.0
    %5552 = vmatprep.subr.mxu0 0.0
    %5553 = vmatpush1.msra.mxu0 0.0
    %5554 = vmatprep.subr.mxu0 0.0
    %5555 = vmatpush1.msra.mxu0 0.0
    %5556 = vmatprep.subr.mxu0 0.0
    %5557 = vmatpush1.msra.mxu0 0.0
    %5558 = vmatprep.subr.mxu0 0.0
    %5559 = vmatpush1.msra.mxu0 0.0
    %5560 = vmatprep.mubr.f32.mxu0 0.0
    %5561 = vmatmul.mubr.f32.gmra.mrb[0].mxu0 %v5494
    %v5562 = vpop.f32.mrb[0].mxu0
    %v5563 = vadd.f32 0.0, %v5562
    %v5564 = vpop.f32.mrb[0].mxu0
    %5565 = vdwg.mxu0
    %v5567 = vrot.slane %v5563, 1
    %v5569 = vadd.f32 %v4002, %v5567
    %v5571 = vrot.slane %v5489, 1
    %5572 = vrot.lane.b32.xlu0 %v5571, 32
    %v5573 = vpop.permute.xlu0 %5572
    %v5574 = vsel %vm280, %v5573, 0
    %5576 = vmatprep.subr.mxu0 0.0
    %5577 = vmatpush1.msra.mxu0 %v4010
    %5578 = vmatprep.subr.mxu0 0.0
    %5579 = vmatpush1.msra.mxu0 %v4011
    %5580 = vmatprep.subr.mxu0 0.0
    %5581 = vmatpush1.msra.mxu0 %v4012
    %5582 = vmatprep.subr.mxu0 0.0
    %5583 = vmatpush1.msra.mxu0 %v4013
    %5584 = vmatprep.subr.mxu0 0.0
    %5585 = vmatpush1.msra.mxu0 0.0
    %5586 = vmatprep.subr.mxu0 0.0
    %5587 = vmatpush1.msra.mxu0 0.0
    %5588 = vmatprep.subr.mxu0 0.0
    %5589 = vmatpush1.msra.mxu0 0.0
    %5590 = vmatprep.subr.mxu0 0.0
    %5591 = vmatpush1.msra.mxu0 0.0
    %5592 = vmatprep.subr.mxu0 0.0
    %5593 = vmatpush1.msra.mxu0 0.0
    %5594 = vmatprep.subr.mxu0 0.0
    %5595 = vmatpush1.msra.mxu0 0.0
    %5596 = vmatprep.subr.mxu0 0.0
    %5597 = vmatpush1.msra.mxu0 0.0
    %5598 = vmatprep.subr.mxu0 0.0
    %5599 = vmatpush1.msra.mxu0 0.0
    %5600 = vmatprep.subr.mxu0 0.0
    %5601 = vmatpush1.msra.mxu0 0.0
    %5602 = vmatprep.subr.mxu0 0.0
    %5603 = vmatpush1.msra.mxu0 0.0
    %5604 = vmatprep.subr.mxu0 0.0
    %5605 = vmatpush1.msra.mxu0 0.0
    %5606 = vmatprep.subr.mxu0 0.0
    %5607 = vmatpush1.msra.mxu0 0.0
    %5608 = vmatprep.subr.mxu0 0.0
    %5609 = vmatpush1.msra.mxu0 0.0
    %5610 = vmatprep.subr.mxu0 0.0
    %5611 = vmatpush1.msra.mxu0 0.0
    %5612 = vmatprep.subr.mxu0 0.0
    %5613 = vmatpush1.msra.mxu0 0.0
    %5614 = vmatprep.subr.mxu0 0.0
    %5615 = vmatpush1.msra.mxu0 0.0
    %5616 = vmatprep.subr.mxu0 0.0
    %5617 = vmatpush1.msra.mxu0 0.0
    %5618 = vmatprep.subr.mxu0 0.0
    %5619 = vmatpush1.msra.mxu0 0.0
    %5620 = vmatprep.subr.mxu0 0.0
    %5621 = vmatpush1.msra.mxu0 0.0
    %5622 = vmatprep.subr.mxu0 0.0
    %5623 = vmatpush1.msra.mxu0 0.0
    %5624 = vmatprep.subr.mxu0 0.0
    %5625 = vmatpush1.msra.mxu0 0.0
    %5626 = vmatprep.subr.mxu0 0.0
    %5627 = vmatpush1.msra.mxu0 0.0
    %5628 = vmatprep.subr.mxu0 0.0
    %5629 = vmatpush1.msra.mxu0 0.0
    %5630 = vmatprep.subr.mxu0 0.0
    %5631 = vmatpush1.msra.mxu0 0.0
    %5632 = vmatprep.subr.mxu0 0.0
    %5633 = vmatpush1.msra.mxu0 0.0
    %5634 = vmatprep.subr.mxu0 0.0
    %5635 = vmatpush1.msra.mxu0 0.0
    %5636 = vmatprep.subr.mxu0 0.0
    %5637 = vmatpush1.msra.mxu0 0.0
    %5638 = vmatprep.subr.mxu0 0.0
    %5639 = vmatpush1.msra.mxu0 0.0
    %5640 = vmatprep.mubr.f32.mxu0 0.0
    %5641 = vmatmul.mubr.f32.gmra.mrb[0].mxu0 %v5574
    %v5642 = vpop.f32.mrb[0].mxu0
    %v5643 = vadd.f32 0.0, %v5642
    %v5644 = vpop.f32.mrb[0].mxu0
    %5645 = vdwg.mxu0
    %v5646 = vadd.f32 %v4004, %v5643
    %v5647 = vxor.u32 %v5569, 2147483648
    %v5648 = vmul.f32 %v5647, 1.442695
    %v5649 = vpow.pop %v5648
    %v5650 = vadd.f32 %v5649, 1.0
    %v5651 = vrcp.pop %v5650
    %v5652 = vmul.f32 1.0, %v5651
    %v5653 = vtanh.pop %v5569
    %v5655 = vrot.slane %v5456, 7
    %v5657 = vmul.f32 %v5652, %v5655
    %5659 = vrot.lane.b32.xlu0 %v5653, 64
    %v5660 = vpop.permute.xlu0 %5659
    %v5662 = vmul.f32 %v5652, %v5660
    %5664 = vrot.lane.b32.xlu0 %v5662, 32
    %v5665 = vpop.permute.xlu0 %5664
    %v5667 = vadd.f32 %v5657, %v5665
    %v5668 = vtanh.pop %v5667
    %5670 = vrot.lane.b32.xlu0 %v5668, 64
    %v5671 = vpop.permute.xlu0 %5670
    %v5673 = vmul.f32 %v5652, %v5671
    %v5674 = vxor.u32 %v5646, 2147483648
    %v5675 = vmul.f32 %v5674, 1.442695
    %v5676 = vpow.pop %v5675
    %v5677 = vadd.f32 %v5676, 1.0
    %v5678 = vrcp.pop %v5677
    %v5679 = vmul.f32 1.0, %v5678
    %v5680 = vtanh.pop %v5646
    %v5682 = vrot.slane %v5483, 1
    %v5684 = vmul.f32 %v5679, %v5682
    %5686 = vrot.lane.b32.xlu0 %v5680, 64
    %v5687 = vpop.permute.xlu0 %5686
    %v5689 = vmul.f32 %v5679, %v5687
    %5691 = vrot.lane.b32.xlu0 %v5689, 32
    %v5692 = vpop.permute.xlu0 %5691
    %v5694 = vadd.f32 %v5684, %v5692
    %v5695 = vtanh.pop %v5694
    %5697 = vrot.lane.b32.xlu0 %v5695, 64
    %v5698 = vpop.permute.xlu0 %5697
    %v5700 = vmul.f32 %v5679, %v5698
    %v5701 = vsel %vm2053, %v4182, %v4392
    %v5702 = vsel %vm2055, %v5701, %v4606
    %v5703 = vsel %vm2057, %v5702, %v4820
    %v5704 = vsel %vm2059, %v5703, %v5034
    %v5705 = vsel %vm2061, %v5704, %v5248
    %v5706 = vsel %vm2063, %v5705, %v5462
    %v5707 = vsel %vm2065, %v5706, %v5673
    %v5708 = vsel %vm2053, %v5700, %v5489
    %v5709 = vsel %vm2055, %v5708, %v5275
    %v5710 = vsel %vm2057, %v5709, %v5061
    %v5711 = vsel %vm2059, %v5710, %v4847
    %v5712 = vsel %vm2061, %v5711, %v4633
    %v5713 = vsel %vm2063, %v5712, %v4419
    %v5714 = vsel %vm2065, %v5713, %v4206
    %5716 = vrot.lane.b32.xlu0 %v5707, 32
    %v5717 = vpop.permute.xlu0 %5716
    %5720 = vrot.lane.b32.xlu0 %v5714, 64
    %v5721 = vpop.permute.xlu0 %5720
    %v5723 = vsel %vm280, %v5717, %v5721
    %v5724 = vld [vmem:[%s3] sm:$0xff]
    %v5725 = vld [vmem:[%s3 + $0x8] sm:$0xff]
    %v5726 = vld [vmem:[%s3 + $0x10] sm:$0xff]
    %v5727 = vld [vmem:[%s3 + $0x18] sm:$0xff]
    %v5728 = vld [vmem:[%s3 + $0x20] sm:$0xff]
    %v5729 = vld [vmem:[%s3 + $0x28] sm:$0xff]
    %v5730 = vld [vmem:[%s3 + $0x30] sm:$0xff]
    %v5731 = vld [vmem:[%s3 + $0x38] sm:$0xff]
    %v5732 = vld [vmem:[#allocation2] sm:$0x1]
    %v5734 = vlaneseq
    %v5735 = vshrl.u32 %v5734, 7
    %v5736 = vsub.s32 0, %v5735
    %v5737 = vrot.slane %v5732, %v5736
    %v5740 = vsel %vm2111, %v5723, 0
    %5742 = vmatprep.subr.mxu0 0.0
    %5743 = vmatpush1.msra.mxu0 %v5724
    %5744 = vmatprep.subr.mxu0 0.0
    %5745 = vmatpush1.msra.mxu0 %v5725
    %5746 = vmatprep.subr.mxu0 0.0
    %5747 = vmatpush1.msra.mxu0 %v5726
    %5748 = vmatprep.subr.mxu0 0.0
    %5749 = vmatpush1.msra.mxu0 %v5727
    %5750 = vmatprep.subr.mxu0 0.0
    %5751 = vmatpush1.msra.mxu0 %v5728
    %5752 = vmatprep.subr.mxu0 0.0
    %5753 = vmatpush1.msra.mxu0 %v5729
    %5754 = vmatprep.subr.mxu0 0.0
    %5755 = vmatpush1.msra.mxu0 %v5730
    %5756 = vmatprep.subr.mxu0 0.0
    %5757 = vmatpush1.msra.mxu0 %v5731
    %5758 = vmatprep.subr.mxu0 0.0
    %5759 = vmatpush1.msra.mxu0 0.0
    %5760 = vmatprep.subr.mxu0 0.0
    %5761 = vmatpush1.msra.mxu0 0.0
    %5762 = vmatprep.subr.mxu0 0.0
    %5763 = vmatpush1.msra.mxu0 0.0
    %5764 = vmatprep.subr.mxu0 0.0
    %5765 = vmatpush1.msra.mxu0 0.0
    %5766 = vmatprep.subr.mxu0 0.0
    %5767 = vmatpush1.msra.mxu0 0.0
    %5768 = vmatprep.subr.mxu0 0.0
    %5769 = vmatpush1.msra.mxu0 0.0
    %5770 = vmatprep.subr.mxu0 0.0
    %5771 = vmatpush1.msra.mxu0 0.0
    %5772 = vmatprep.subr.mxu0 0.0
    %5773 = vmatpush1.msra.mxu0 0.0
    %5774 = vmatprep.subr.mxu0 0.0
    %5775 = vmatpush1.msra.mxu0 0.0
    %5776 = vmatprep.subr.mxu0 0.0
    %5777 = vmatpush1.msra.mxu0 0.0
    %5778 = vmatprep.subr.mxu0 0.0
    %5779 = vmatpush1.msra.mxu0 0.0
    %5780 = vmatprep.subr.mxu0 0.0
    %5781 = vmatpush1.msra.mxu0 0.0
    %5782 = vmatprep.subr.mxu0 0.0
    %5783 = vmatpush1.msra.mxu0 0.0
    %5784 = vmatprep.subr.mxu0 0.0
    %5785 = vmatpush1.msra.mxu0 0.0
    %5786 = vmatprep.subr.mxu0 0.0
    %5787 = vmatpush1.msra.mxu0 0.0
    %5788 = vmatprep.subr.mxu0 0.0
    %5789 = vmatpush1.msra.mxu0 0.0
    %5790 = vmatprep.subr.mxu0 0.0
    %5791 = vmatpush1.msra.mxu0 0.0
    %5792 = vmatprep.subr.mxu0 0.0
    %5793 = vmatpush1.msra.mxu0 0.0
    %5794 = vmatprep.subr.mxu0 0.0
    %5795 = vmatpush1.msra.mxu0 0.0
    %5796 = vmatprep.subr.mxu0 0.0
    %5797 = vmatpush1.msra.mxu0 0.0
    %5798 = vmatprep.subr.mxu0 0.0
    %5799 = vmatpush1.msra.mxu0 0.0
    %5800 = vmatprep.subr.mxu0 0.0
    %5801 = vmatpush1.msra.mxu0 0.0
    %5802 = vmatprep.subr.mxu0 0.0
    %5803 = vmatpush1.msra.mxu0 0.0
    %5804 = vmatprep.subr.mxu0 0.0
    %5805 = vmatpush1.msra.mxu0 0.0
    %5806 = vmatprep.mubr.f32.mxu0 0.0
    %5807 = vmatmul.mubr.f32.gmra.mrb[0].mxu0 %v5740
    %v5808 = vpop.f32.mrb[0].mxu0
    %v5809 = vadd.f32 %v5737, %v5808
    %v5810 = vpop.f32.mrb[0].mxu0
    %5811 = vdwg.mxu0
    %v5812 = vmax.f32 %v5809, 0.0
    %vm5813 = vcmask 7168
    %5814 = vst.msk [vmem:[%s17] sm:$0xff] %vm5813, %v5812
    // Predicated region
    $region106: #{bilstm_forward.1} parent=1 // pred_check
      _
    $region107: #{bilstm_forward.1} parent=1 // pred_check_branch
      %5816 = sbr.rel (0) target = $region109
    $region108: #{bilstm_forward.1} parent=1 // pred_region
      _
    $region109: #{bilstm_forward.1} parent=1 // pred_fallthru
      _
    // Predicated region
    $region110: #{bilstm_forward.1} parent=1 // pred_check
      _
    $region111: #{bilstm_forward.1} parent=1 // pred_check_branch
      %5818 = sbr.rel (0) target = $region113
    $region112: #{bilstm_forward.1} parent=1 // pred_region
      _
    $region113: #{bilstm_forward.1} parent=1 // pred_fallthru
      _
    %5819 = vsyncpa [#allocation4], 1
    %5820 = vsyncpa [#allocation6], 1
    %5821 = vsyncpa [#allocation9], 1
    %5822 = vsyncpa [#allocation12], 1
    %5823 = vsyncpa [#allocation15], 1

</llo_original>
